<compile_context>
chip_gen: v5e
topology: v5e:2x2
jax: 0.10.0
libtpu: 0.0.40
codegen_flags: <defaults>
</compile_context>

<pallas_src>
import functools
import math

import jax
import jax.numpy as jnp
from jax.experimental import pallas as pl
from jax.experimental.pallas import tpu as pltpu


# ----------------------------------------------------------------------------
# Helpers
# ----------------------------------------------------------------------------

def _row_tile(m, cap=512):
    """Pick a sublane-aligned row tile. Prefer 2 grid steps (v7x has 2 TCs)."""
    if m % 16 == 0 and m // 2 <= cap:
        return m // 2
    if m % 8 == 0:
        for t in (cap, 256, 128, 64, 32, 16, 8):
            if t <= m and m % t == 0:
                return t
    return m


def _erf_f32(x):
    # Abramowitz & Stegun 7.1.26 rational approximation, |err| < 1.5e-7
    # (effectively exact at f32; avoids depending on a lax.erf Mosaic lowering).
    p = 0.3275911
    a1, a2, a3, a4, a5 = (0.254829592, -0.284496736, 1.421413741,
                          -1.453152027, 1.061405429)
    ax = jnp.abs(x)
    t = 1.0 / (1.0 + p * ax)
    poly = ((((a5 * t + a4) * t + a3) * t + a2) * t + a1) * t
    y = 1.0 - poly * jnp.exp(-ax * ax)
    return jnp.where(x >= 0, y, -y)


def _gelu_exact(x):
    # erf-based GELU, matching nn.GELU() (exact, not tanh-approx).
    return 0.5 * x * (1.0 + _erf_f32(x * 0.7071067811865476))


def _bf16(x):
    return x.astype(jnp.bfloat16)


# ----------------------------------------------------------------------------
# Pallas kernels
# ----------------------------------------------------------------------------

def _linear_kernel(x_ref, w_ref, b_ref, o_ref, *, act_in, act_out):
    x = x_ref[...]
    if act_in == "relu":
        x = jnp.maximum(x, 0.0)
    y = jnp.dot(_bf16(x), _bf16(w_ref[...]),
                preferred_element_type=jnp.float32) + b_ref[...]
    if act_out == "relu":
        y = jnp.maximum(y, 0.0)
    o_ref[...] = y


def linear(x, w, b, act_in="none", act_out="none"):
    """(M, K) @ (K, N) + b, optional ReLU on input/output."""
    M, K = x.shape
    N = w.shape[1]
    TM = _row_tile(M)
    return pl.pallas_call(
        functools.partial(_linear_kernel, act_in=act_in, act_out=act_out),
        out_shape=jax.ShapeDtypeStruct((M, N), jnp.float32),
        grid=(M // TM,),
        in_specs=[
            pl.BlockSpec((TM, K), lambda i: (i, 0)),
            pl.BlockSpec((K, N), lambda i: (0, 0)),
            pl.BlockSpec((1, N), lambda i: (0, 0)),
        ],
        out_specs=pl.BlockSpec((TM, N), lambda i: (i, 0)),
        compiler_params=pltpu.CompilerParams(dimension_semantics=("parallel",)),
    )(x, w, b.reshape(1, N))


def _layernorm_kernel(x_ref, g_ref, b_ref, o_ref, *, eps):
    x = x_ref[...]
    mu = jnp.mean(x, axis=-1, keepdims=True)
    xc = x - mu
    var = jnp.mean(xc * xc, axis=-1, keepdims=True)
    o_ref[...] = xc * jax.lax.rsqrt(var + eps) * g_ref[...] + b_ref[...]


def layernorm(x, gamma, beta, eps=1e-5):
    """Torch-style LayerNorm over last dim (biased variance)."""
    M, C = x.shape
    TM = _row_tile(M)
    return pl.pallas_call(
        functools.partial(_layernorm_kernel, eps=eps),
        out_shape=jax.ShapeDtypeStruct((M, C), jnp.float32),
        grid=(M // TM,),
        in_specs=[
            pl.BlockSpec((TM, C), lambda i: (i, 0)),
            pl.BlockSpec((1, C), lambda i: (0, 0)),
            pl.BlockSpec((1, C), lambda i: (0, 0)),
        ],
        out_specs=pl.BlockSpec((TM, C), lambda i: (i, 0)),
        compiler_params=pltpu.CompilerParams(dimension_semantics=("parallel",)),
    )(x, gamma.reshape(1, C), beta.reshape(1, C))


def _ln_linear_kernel(x_ref, g_ref, b_ref, w_ref, bias_ref, o_ref, *, eps):
    x = x_ref[...]
    mu = jnp.mean(x, axis=-1, keepdims=True)
    xc = x - mu
    var = jnp.mean(xc * xc, axis=-1, keepdims=True)
    xn = xc * jax.lax.rsqrt(var + eps) * g_ref[...] + b_ref[...]
    o_ref[...] = jnp.dot(_bf16(xn), _bf16(w_ref[...]),
                         preferred_element_type=jnp.float32) + bias_ref[...]


def ln_linear(x, gamma, beta, w, bias, eps=1e-5):
    """Fused LayerNorm(x) @ w + bias (e.g. LN -> Q proj, LN -> fused KV proj)."""
    M, K = x.shape
    N = w.shape[1]
    TM = _row_tile(M)
    return pl.pallas_call(
        functools.partial(_ln_linear_kernel, eps=eps),
        out_shape=jax.ShapeDtypeStruct((M, N), jnp.float32),
        grid=(M // TM,),
        in_specs=[
            pl.BlockSpec((TM, K), lambda i: (i, 0)),
            pl.BlockSpec((1, K), lambda i: (0, 0)),
            pl.BlockSpec((1, K), lambda i: (0, 0)),
            pl.BlockSpec((K, N), lambda i: (0, 0)),
            pl.BlockSpec((1, N), lambda i: (0, 0)),
        ],
        out_specs=pl.BlockSpec((TM, N), lambda i: (i, 0)),
        compiler_params=pltpu.CompilerParams(dimension_semantics=("parallel",)),
    )(x, gamma.reshape(1, K), beta.reshape(1, K), w, bias.reshape(1, N))


def _mha_kernel(q_ref, k_ref, v_ref, o_ref, *, scale, causal):
    q = _bf16(q_ref[...])                                  # (GT, L, D)
    k = _bf16(k_ref[...])                                  # (GT, S, D)
    v = _bf16(v_ref[...])
    s = jnp.einsum("bld,bsd->bls", q, k,
                   preferred_element_type=jnp.float32) * scale
    if causal:
        row = jax.lax.broadcasted_iota(jnp.int32, s.shape, 1)
        col = jax.lax.broadcasted_iota(jnp.int32, s.shape, 2)
        s = jnp.where(col > row, -1e30, s)
    m = jnp.max(s, axis=-1, keepdims=True)
    p = jnp.exp(s - m)
    denom = jnp.sum(p, axis=-1, keepdims=True)
    p = p * pl.reciprocal(denom, approx=True)
    o_ref[...] = jnp.einsum("bls,bsd->bld", _bf16(p), v,
                            preferred_element_type=jnp.float32)


def mha_core(qh, kh, vh, causal):
    """qh: (G, L, D), kh/vh: (G, S, D) with G = batch*heads; all heads batched."""
    G, L, D = qh.shape
    S = kh.shape[1]
    GT = G // 2 if (G % 2 == 0 and G >= 2) else G          # >=2 grid steps (v7x)
    scale = 1.0 / math.sqrt(D)
    return pl.pallas_call(
        functools.partial(_mha_kernel, scale=scale, causal=causal),
        out_shape=jax.ShapeDtypeStruct((G, L, D), jnp.float32),
        grid=(G // GT,),
        in_specs=[
            pl.BlockSpec((GT, L, D), lambda i: (i, 0, 0)),
            pl.BlockSpec((GT, S, D), lambda i: (i, 0, 0)),
            pl.BlockSpec((GT, S, D), lambda i: (i, 0, 0)),
        ],
        out_specs=pl.BlockSpec((GT, L, D), lambda i: (i, 0, 0)),
        compiler_params=pltpu.CompilerParams(dimension_semantics=("parallel",)),
    )(qh, kh, vh)


def _attn_mlp_kernel(x_ref, ctx_ref, wo_ref, bo_ref, g3_ref, b3_ref,
                     w1_ref, b1_ref, w2_ref, b2_ref, o_ref, *, eps):
    # out-proj + residual + LN3 + MLP(GELU) + residual, all in one pass.
    x = x_ref[...]
    attn = jnp.dot(_bf16(ctx_ref[...]), _bf16(wo_ref[...]),
                   preferred_element_type=jnp.float32) + bo_ref[...]
    xr = x + attn
    mu = jnp.mean(xr, axis=-1, keepdims=True)
    xc = xr - mu
    var = jnp.mean(xc * xc, axis=-1, keepdims=True)
    xn = xc * jax.lax.rsqrt(var + eps) * g3_ref[...] + b3_ref[...]
    h = jnp.dot(_bf16(xn), _bf16(w1_ref[...]),
                preferred_element_type=jnp.float32) + b1_ref[...]
    h = _gelu_exact(h)
    y = jnp.dot(_bf16(h), _bf16(w2_ref[...]),
                preferred_element_type=jnp.float32) + b2_ref[...]
    o_ref[...] = xr + y


def attn_mlp(x, ctx, wo, bo, g3, b3, w1, b1, w2, b2, eps=1e-5):
    M, C = x.shape
    H = w1.shape[1]
    TM = _row_tile(M)
    return pl.pallas_call(
        functools.partial(_attn_mlp_kernel, eps=eps),
        out_shape=jax.ShapeDtypeStruct((M, C), jnp.float32),
        grid=(M // TM,),
        in_specs=[
            pl.BlockSpec((TM, C), lambda i: (i, 0)),       # x (residual base)
            pl.BlockSpec((TM, C), lambda i: (i, 0)),       # merged attention context
            pl.BlockSpec((C, C), lambda i: (0, 0)),        # wo
            pl.BlockSpec((1, C), lambda i: (0, 0)),        # bo
            pl.BlockSpec((1, C), lambda i: (0, 0)),        # ln3 gamma
            pl.BlockSpec((1, C), lambda i: (0, 0)),        # ln3 beta
            pl.BlockSpec((C, H), lambda i: (0, 0)),        # w1
            pl.BlockSpec((1, H), lambda i: (0, 0)),        # b1
            pl.BlockSpec((H, C), lambda i: (0, 0)),        # w2
            pl.BlockSpec((1, C), lambda i: (0, 0)),        # b2
        ],
        out_specs=pl.BlockSpec((TM, C), lambda i: (i, 0)),
        compiler_params=pltpu.CompilerParams(dimension_semantics=("parallel",)),
    )(x, ctx, wo, bo.reshape(1, C), g3.reshape(1, C), b3.reshape(1, C),
      w1, b1.reshape(1, H), w2, b2.reshape(1, C))


def _value_mlp_kernel(x_ref, w1_ref, b1_ref, w2_ref, b2_ref, w3_ref, b3_ref,
                      wf_ref, bf_ref, o_ref):
    def lin(h, w_ref, b_ref, relu):
        y = jnp.dot(_bf16(h), _bf16(w_ref[...]),
                    preferred_element_type=jnp.float32) + b_ref[...]
        return jnp.maximum(y, 0.0) if relu else y
    h = lin(x_ref[...], w1_ref, b1_ref, True)
    h = lin(h, w2_ref, b2_ref, True)
    h = lin(h, w3_ref, b3_ref, True)
    o_ref[...] = lin(h, wf_ref, bf_ref, False)


def value_mlp(pooled, p):
    """Fused 4-layer value-head MLP on the mean-pooled embedding (B, c)."""
    B, C = pooled.shape
    d = p["w1"].shape[1]
    return pl.pallas_call(
        _value_mlp_kernel,
        out_shape=jax.ShapeDtypeStruct((B, 1), jnp.float32),
        grid=(1,),
        in_specs=[
            pl.BlockSpec((B, C), lambda i: (0, 0)),
            pl.BlockSpec((C, d), lambda i: (0, 0)),
            pl.BlockSpec((1, d), lambda i: (0, 0)),
            pl.BlockSpec((d, d), lambda i: (0, 0)),
            pl.BlockSpec((1, d), lambda i: (0, 0)),
            pl.BlockSpec((d, d), lambda i: (0, 0)),
            pl.BlockSpec((1, d), lambda i: (0, 0)),
            pl.BlockSpec((d, 1), lambda i: (0, 0)),
            pl.BlockSpec((1, 1), lambda i: (0, 0)),
        ],
        out_specs=pl.BlockSpec((B, 1), lambda i: (0, 0)),
    )(pooled, p["w1"], p["b1"].reshape(1, d), p["w2"], p["b2"].reshape(1, d),
      p["w3"], p["b3"].reshape(1, d), p["wf"], p["bf"].reshape(1, 1))


# ----------------------------------------------------------------------------
# Model building blocks (orchestration in plain JAX, compute in Pallas kernels)
# ----------------------------------------------------------------------------

def attention_block(p, x, y, causal, nheads):
    """Attention.forward: pre-LN -> MHA -> residual -> LN/MLP -> residual."""
    B, L, c1 = x.shape
    S, c2 = y.shape[1], y.shape[2]
    xf = x.reshape(-1, c1)
    yf = y.reshape(-1, c2)

    q = ln_linear(xf, p["ln1_g"], p["ln1_b"], p["wq"], p["bq"])        # (B*L, c1)
    kv = ln_linear(yf, p["ln2_g"], p["ln2_b"], p["wkv"], p["bkv"])     # (B*S, 2*c1)
    k, v = kv[:, :c1], kv[:, c1:]

    dh = c1 // nheads
    qh = q.reshape(B, L, nheads, dh).transpose(0, 2, 1, 3).reshape(B * nheads, L, dh)
    kh = k.reshape(B, S, nheads, dh).transpose(0, 2, 1, 3).reshape(B * nheads, S, dh)
    vh = v.reshape(B, S, nheads, dh).transpose(0, 2, 1, 3).reshape(B * nheads, S, dh)

    ctx = mha_core(qh, kh, vh, causal)                                  # (B*H, L, dh)
    ctx = ctx.reshape(B, nheads, L, dh).transpose(0, 2, 1, 3).reshape(B * L, c1)

    out = attn_mlp(xf, ctx, p["wo"], p["bo"], p["ln3_g"], p["ln3_b"],
                   p["w1"], p["b1"], p["w2"], p["b2"])
    return out.reshape(B, L, c1)


def attentive_modes(p, x1, x2, x3, s, c):
    # NOTE: the three (m1, m2) updates are sequentially dependent, so they cannot
    # be batched into one call.
    g = [x1, x2, x3]
    for m1, m2 in [(0, 1), (2, 0), (1, 2)]:
        a = jnp.concatenate([g[m1], jnp.swapaxes(g[m2], 1, 2)], axis=2)  # (B, s, 2s, c)
        B = a.shape[0]
        aflat = a.reshape(B * s, 2 * s, c)
        cc = attention_block(p["attention"], aflat, aflat, causal=False,
                             nheads=8).reshape(B, s, 2 * s, c)
        g[m1] = cc[:, :, :s, :]
        g[m2] = jnp.swapaxes(cc[:, :, s:, :], 1, 2)
    return g


def torso(p, x, s, c):
    B = x.shape[0]
    x1 = x
    x2 = jnp.transpose(x, (0, 2, 3, 1))
    x3 = jnp.transpose(x, (0, 3, 1, 2))

    # Batch the three independent l1 projections into one Pallas call.
    stacked = jnp.stack([x1, x2, x3], axis=0).reshape(-1, s)            # (3*B*s*s, s)
    proj = linear(stacked, p["l1_w"], p["l1_b"]).reshape(3, B, s, s, c)
    x1, x2, x3 = proj[0], proj[1], proj[2]

    for am in p["attentive_modes"]:
        x1, x2, x3 = attentive_modes(am, x1, x2, x3, s, c)
    e = jnp.stack([x1, x2, x3], axis=2).reshape(B, 3 * s * s, c)
    return e


def value_head(p, e):
    pooled = jnp.mean(e, axis=1)            # (B, c) -- tiny reduction, plain JAX
    return value_mlp(pooled, p)             # (B, 1)


def policy_head_train(p, e, g, nsteps, nheads, start_tok):
    B = g.shape[0]
    start = jnp.full((B, 1), start_tok, dtype=g.dtype)
    a = jnp.concatenate([start, g[:, :-1]], axis=1)                     # (B, Nsteps)
    x = p["tok_emb"][a]                                                 # (B, Nsteps, E)
    x = x + p["pos_emb"][jnp.arange(nsteps)][None]
    E = x.shape[-1]
    for lyr in p["layers"]:
        x = layernorm(x.reshape(-1, E), lyr["ln1_g"], lyr["ln1_b"]).reshape(B, nsteps, E)
        c = attention_block(lyr["self_attn"], x, x, causal=True, nheads=nheads)
        x = x + c                                                       # dropout == id
        x = layernorm(x.reshape(-1, E), lyr["ln2_g"], lyr["ln2_b"]).reshape(B, nsteps, E)
        c = attention_block(lyr["cross_attn"], x, e, causal=False, nheads=nheads)
        x = x + c                                                       # dropout == id
    o = linear(x.reshape(-1, E), p["lf_w"], p["lf_b"], act_in="relu")
    return o.reshape(B, nsteps, -1)


def alphatensor184_forward(params, cfg, x, g):
    e = torso(params["torso"], x, cfg["s"], cfg["c"])
    q = value_head(params["value_head"], e)
    logits = policy_head_train(params["policy_head"], e, g,
                               cfg["nsteps"], cfg["np_heads"],
                               params["policy_head"]["start_tok"])
    return q, logits


# ----------------------------------------------------------------------------
# Deterministic parameter initialization
# ----------------------------------------------------------------------------

def _w(key, shape, scale=0.02):
    return scale * jax.random.normal(key, shape, dtype=jnp.float32)


def init_attention_params(key, c1, c2, w=4):
    ks = jax.random.split(key, 7)
    f32 = jnp.float32
    return dict(
        ln1_g=jnp.ones((c1,), f32), ln1_b=jnp.zeros((c1,), f32),
        ln2_g=jnp.ones((c2,), f32), ln2_b=jnp.zeros((c2,), f32),
        wq=_w(ks[0], (c1, c1)), bq=_w(ks[1], (c1,)),
        wkv=_w(ks[2], (c2, 2 * c1)), bkv=_w(ks[3], (2 * c1,)),   # fused K|V proj
        wo=_w(ks[4], (c1, c1)), bo=jnp.zeros((c1,), f32),
        ln3_g=jnp.ones((c1,), f32), ln3_b=jnp.zeros((c1,), f32),
        w1=_w(ks[5], (c1, c1 * w)), b1=jnp.zeros((c1 * w,), f32),
        w2=_w(ks[6], (c1 * w, c1)), b2=jnp.zeros((c1,), f32),
    )


def init_params(key, cfg):
    s, c, d = cfg["s"], cfg["c"], cfg["d"]
    nlogits = (cfg["elmnt_range"][1] - cfg["elmnt_range"][0] + 1) ** 3
    embed = cfg["np_feat"] * cfg["np_heads"]
    kt, kv, kp = jax.random.split(key, 3)

    # Torso
    kt_l1, *kt_ams = jax.random.split(kt, 1 + cfg["torso_iters"])
    torso_p = dict(
        l1_w=_w(kt_l1, (s, c)), l1_b=jnp.zeros((c,), jnp.float32),
        attentive_modes=[dict(attention=init_attention_params(k, c, c))
                         for k in kt_ams],
    )

    # Value head
    kv1, kv2, kv3, kvf = jax.random.split(kv, 4)
    value_p = dict(
        w1=_w(kv1, (c, d)), b1=jnp.zeros((d,), jnp.float32),
        w2=_w(kv2, (d, d)), b2=jnp.zeros((d,), jnp.float32),
        w3=_w(kv3, (d, d)), b3=jnp.zeros((d,), jnp.float32),
        wf=_w(kvf, (d, 1)), bf=jnp.zeros((1,), jnp.float32),
    )

    # Policy head
    kp_tok, kp_pos, kp_lf, *kp_layers = jax.random.split(kp, 3 + cfg["np_layers"])
    layers = []
    for k in kp_layers:
        ksa, kca = jax.random.split(k, 2)
        layers.append(dict(
            ln1_g=jnp.ones((embed,), jnp.float32), ln1_b=jnp.zeros((embed,), jnp.float32),
            ln2_g=jnp.ones((embed,), jnp.float32), ln2_b=jnp.zeros((embed,), jnp.float32),
            self_attn=init_attention_params(ksa, embed, embed),
            cross_attn=init_attention_params(kca, embed, c),
        ))
    policy_p = dict(
        start_tok=nlogits,
        tok_emb=_w(kp_tok, (nlogits + 1, embed)),
        pos_emb=_w(kp_pos, (cfg["nsteps"], embed)),
        lf_w=_w(kp_lf, (embed, nlogits)), lf_b=jnp.zeros((nlogits,), jnp.float32),
        layers=layers,
    )

    return dict(torso=torso_p, value_head=value_p, policy_head=policy_p)


# ----------------------------------------------------------------------------
# Main
# ----------------------------------------------------------------------------

if __name__ == "__main__":
    cfg = dict(
        s=4, c=64, d=32,
        elmnt_range=(-1, 1),      # -> 27 policy logits
        nsteps=4,
        torso_iters=2,
        np_feat=8, np_heads=4,    # policy embed dim = 32
        np_layers=2,
        batch=2,
    )

    key = jax.random.PRNGKey(0)
    k_params, k_x, k_g = jax.random.split(key, 3)

    params = init_params(k_params, cfg)

    x = jax.random.normal(k_x, (cfg["batch"], cfg["s"], cfg["s"], cfg["s"]),
                          dtype=jnp.float32)
    nlogits = (cfg["elmnt_range"][1] - cfg["elmnt_range"][0] + 1) ** 3
    g = jax.random.randint(k_g, (cfg["batch"], cfg["nsteps"]), 0, nlogits,
                           dtype=jnp.int32)

    @jax.jit
    def fwd(x, g):
        return alphatensor184_forward(params, cfg, x, g)

    q, logits = fwd(x, g)
    jax.block_until_ready((q, logits))

    assert q.shape == (cfg["batch"], 1)
    assert logits.shape == (cfg["batch"], cfg["nsteps"], nlogits)
    print("KERNEL_OK")
</pallas_src>

<mosaic_0001>
module attributes {stable_mosaic.version = 11 : i64} {
  func.func @_layernorm_kernel(%arg0: i32, %arg1: memref<8x32xf32, #tpu.memory_space<vmem>>, %arg2: memref<1x32xf32, #tpu.memory_space<vmem>>, %arg3: memref<1x32xf32, #tpu.memory_space<vmem>>, %arg4: memref<8x32xf32, #tpu.memory_space<vmem>>) attributes {dimension_semantics = [#tpu.dimension_semantics<parallel>], iteration_bounds = array<i64: 1>, scalar_prefetch = 0 : i64, scratch_operands = 0 : i64, tpu.core_type = #tpu.core_type<tc>, window_params = [{transform_indices = @transform_0, window_bounds = array<i64: 8, 32>}, {pipeline_mode = #tpu.pipeline_mode<synchronous>, transform_indices = @transform_1, window_bounds = array<i64: 1, 32>}, {pipeline_mode = #tpu.pipeline_mode<synchronous>, transform_indices = @transform_2, window_bounds = array<i64: 1, 32>}, {transform_indices = @transform_3, window_bounds = array<i64: 8, 32>}]} {
    %c0 = arith.constant 0 : index
    %c0_0 = arith.constant 0 : index
    %0 = vector.load %arg1[%c0, %c0_0] : memref<8x32xf32, #tpu.memory_space<vmem>>, vector<8x32xf32>
    %cst = arith.constant dense<0.000000e+00> : vector<8xf32>
    %1 = vector.multi_reduction <add>, %0, %cst [1] : vector<8x32xf32> to vector<8xf32>
    %2 = vector.shape_cast %1 : vector<8xf32> to vector<8x1xf32>
    %cst_1 = arith.constant 3.200000e+01 : f32
    %3 = vector.broadcast %cst_1 : f32 to vector<8x1xf32>
    %4 = arith.divf %2, %3 : vector<8x1xf32>
    %5 = vector.broadcast %4 : vector<8x1xf32> to vector<8x32xf32>
    %6 = arith.subf %0, %5 : vector<8x32xf32>
    %7 = arith.mulf %6, %6 : vector<8x32xf32>
    %cst_2 = arith.constant dense<0.000000e+00> : vector<8xf32>
    %8 = vector.multi_reduction <add>, %7, %cst_2 [1] : vector<8x32xf32> to vector<8xf32>
    %9 = vector.shape_cast %8 : vector<8xf32> to vector<8x1xf32>
    %cst_3 = arith.constant 3.200000e+01 : f32
    %10 = vector.broadcast %cst_3 : f32 to vector<8x1xf32>
    %11 = arith.divf %9, %10 : vector<8x1xf32>
    %cst_4 = arith.constant 9.99999974E-6 : f32
    %12 = vector.broadcast %cst_4 : f32 to vector<8x1xf32>
    %13 = arith.addf %11, %12 : vector<8x1xf32>
    %14 = math.rsqrt %13 : vector<8x1xf32>
    %15 = vector.broadcast %14 : vector<8x1xf32> to vector<8x32xf32>
    %16 = arith.mulf %6, %15 : vector<8x32xf32>
    %c0_5 = arith.constant 0 : index
    %c0_6 = arith.constant 0 : index
    %17 = vector.load %arg2[%c0_5, %c0_6] : memref<1x32xf32, #tpu.memory_space<vmem>>, vector<1x32xf32>
    %18 = vector.broadcast %17 : vector<1x32xf32> to vector<8x32xf32>
    %19 = arith.mulf %16, %18 : vector<8x32xf32>
    %c0_7 = arith.constant 0 : index
    %c0_8 = arith.constant 0 : index
    %20 = vector.load %arg3[%c0_7, %c0_8] : memref<1x32xf32, #tpu.memory_space<vmem>>, vector<1x32xf32>
    %21 = vector.broadcast %20 : vector<1x32xf32> to vector<8x32xf32>
    %22 = arith.addf %19, %21 : vector<8x32xf32>
    %c0_9 = arith.constant 0 : index
    %c0_10 = arith.constant 0 : index
    %23 = vector.load %arg4[%c0_9, %c0_10] : memref<8x32xf32, #tpu.memory_space<vmem>>, vector<8x32xf32>
    tpu.vector_store %arg4[%c0_9, %c0_10], %22 {strides = array<i32>} : memref<8x32xf32, #tpu.memory_space<vmem>>, vector<8x32xf32>,
    return
  }
  func.func @transform_0(%arg0: i32) -> (i32, i32) {
    %c0_i32 = arith.constant 0 : i32
    %c0_i32_0 = arith.constant 0 : i32
    return %arg0, %c0_i32 : i32, i32
  }
  func.func @transform_1(%arg0: i32) -> (i32, i32) {
    %c0_i32 = arith.constant 0 : i32
    %c0_i32_0 = arith.constant 0 : i32
    %c0_i32_1 = arith.constant 0 : i32
    return %c0_i32, %c0_i32_0 : i32, i32
  }
  func.func @transform_2(%arg0: i32) -> (i32, i32) {
    %c0_i32 = arith.constant 0 : i32
    %c0_i32_0 = arith.constant 0 : i32
    %c0_i32_1 = arith.constant 0 : i32
    return %c0_i32, %c0_i32_0 : i32, i32
  }
  func.func @transform_3(%arg0: i32) -> (i32, i32) {
    %c0_i32 = arith.constant 0 : i32
    %c0_i32_0 = arith.constant 0 : i32
    return %arg0, %c0_i32 : i32, i32
  }
}

module attributes {stable_mosaic.version = 11 : i64} {
  func.func @_ln_linear_kernel(%arg0: i32, %arg1: memref<8x32xf32, #tpu.memory_space<vmem>>, %arg2: memref<1x32xf32, #tpu.memory_space<vmem>>, %arg3: memref<1x32xf32, #tpu.memory_space<vmem>>, %arg4: memref<32x32xf32, #tpu.memory_space<vmem>>, %arg5: memref<1x32xf32, #tpu.memory_space<vmem>>, %arg6: memref<8x32xf32, #tpu.memory_space<vmem>>) attributes {dimension_semantics = [#tpu.dimension_semantics<parallel>], iteration_bounds = array<i64: 1>, scalar_prefetch = 0 : i64, scratch_operands = 0 : i64, tpu.core_type = #tpu.core_type<tc>, window_params = [{transform_indices = @transform_0, window_bounds = array<i64: 8, 32>}, {pipeline_mode = #tpu.pipeline_mode<synchronous>, transform_indices = @transform_1, window_bounds = array<i64: 1, 32>}, {pipeline_mode = #tpu.pipeline_mode<synchronous>, transform_indices = @transform_2, window_bounds = array<i64: 1, 32>}, {pipeline_mode = #tpu.pipeline_mode<synchronous>, transform_indices = @transform_3, window_bounds = array<i64: 32, 32>}, {pipeline_mode = #tpu.pipeline_mode<synchronous>, transform_indices = @transform_4, window_bounds = array<i64: 1, 32>}, {transform_indices = @transform_5, window_bounds = array<i64: 8, 32>}]} {
    %c0 = arith.constant 0 : index
    %c0_0 = arith.constant 0 : index
    %0 = vector.load %arg1[%c0, %c0_0] : memref<8x32xf32, #tpu.memory_space<vmem>>, vector<8x32xf32>
    %cst = arith.constant dense<0.000000e+00> : vector<8xf32>
    %1 = vector.multi_reduction <add>, %0, %cst [1] : vector<8x32xf32> to vector<8xf32>
    %2 = vector.shape_cast %1 : vector<8xf32> to vector<8x1xf32>
    %cst_1 = arith.constant 3.200000e+01 : f32
    %3 = vector.broadcast %cst_1 : f32 to vector<8x1xf32>
    %4 = arith.divf %2, %3 : vector<8x1xf32>
    %5 = vector.broadcast %4 : vector<8x1xf32> to vector<8x32xf32>
    %6 = arith.subf %0, %5 : vector<8x32xf32>
    %7 = arith.mulf %6, %6 : vector<8x32xf32>
    %cst_2 = arith.constant dense<0.000000e+00> : vector<8xf32>
    %8 = vector.multi_reduction <add>, %7, %cst_2 [1] : vector<8x32xf32> to vector<8xf32>
    %9 = vector.shape_cast %8 : vector<8xf32> to vector<8x1xf32>
    %cst_3 = arith.constant 3.200000e+01 : f32
    %10 = vector.broadcast %cst_3 : f32 to vector<8x1xf32>
    %11 = arith.divf %9, %10 : vector<8x1xf32>
    %cst_4 = arith.constant 9.99999974E-6 : f32
    %12 = vector.broadcast %cst_4 : f32 to vector<8x1xf32>
    %13 = arith.addf %11, %12 : vector<8x1xf32>
    %14 = math.rsqrt %13 : vector<8x1xf32>
    %15 = vector.broadcast %14 : vector<8x1xf32> to vector<8x32xf32>
    %16 = arith.mulf %6, %15 : vector<8x32xf32>
    %c0_5 = arith.constant 0 : index
    %c0_6 = arith.constant 0 : index
    %17 = vector.load %arg2[%c0_5, %c0_6] : memref<1x32xf32, #tpu.memory_space<vmem>>, vector<1x32xf32>
    %18 = vector.broadcast %17 : vector<1x32xf32> to vector<8x32xf32>
    %19 = arith.mulf %16, %18 : vector<8x32xf32>
    %c0_7 = arith.constant 0 : index
    %c0_8 = arith.constant 0 : index
    %20 = vector.load %arg3[%c0_7, %c0_8] : memref<1x32xf32, #tpu.memory_space<vmem>>, vector<1x32xf32>
    %21 = vector.broadcast %20 : vector<1x32xf32> to vector<8x32xf32>
    %22 = arith.addf %19, %21 : vector<8x32xf32>
    %23 = arith.truncf %22 : vector<8x32xf32> to vector<8x32xbf16>
    %c0_9 = arith.constant 0 : index
    %c0_10 = arith.constant 0 : index
    %24 = vector.load %arg4[%c0_9, %c0_10] : memref<32x32xf32, #tpu.memory_space<vmem>>, vector<32x32xf32>
    %25 = arith.truncf %24 : vector<32x32xf32> to vector<32x32xbf16>
    %cst_11 = arith.constant dense<0.000000e+00> : vector<8x32xf32>
    %26 = tpu.matmul %23, %25, %cst_11 {dimension_numbers = #tpu.dot_dimension_numbers<[1], [0], [0], [1], [0, 0, 1, 1], [], []>} : vector<8x32xbf16>, vector<32x32xbf16>, vector<8x32xf32> -> vector<8x32xf32>
    %c0_12 = arith.constant 0 : index
    %c0_13 = arith.constant 0 : index
    %27 = vector.load %arg5[%c0_12, %c0_13] : memref<1x32xf32, #tpu.memory_space<vmem>>, vector<1x32xf32>
    %28 = vector.broadcast %27 : vector<1x32xf32> to vector<8x32xf32>
    %29 = arith.addf %26, %28 : vector<8x32xf32>
    %c0_14 = arith.constant 0 : index
    %c0_15 = arith.constant 0 : index
    %30 = vector.load %arg6[%c0_14, %c0_15] : memref<8x32xf32, #tpu.memory_space<vmem>>, vector<8x32xf32>
    tpu.vector_store %arg6[%c0_14, %c0_15], %29 {strides = array<i32>} : memref<8x32xf32, #tpu.memory_space<vmem>>, vector<8x32xf32>,
    return
  }
  func.func @transform_0(%arg0: i32) -> (i32, i32) {
    %c0_i32 = arith.constant 0 : i32
    %c0_i32_0 = arith.constant 0 : i32
    return %arg0, %c0_i32 : i32, i32
  }
  func.func @transform_1(%arg0: i32) -> (i32, i32) {
    %c0_i32 = arith.constant 0 : i32
    %c0_i32_0 = arith.constant 0 : i32
    %c0_i32_1 = arith.constant 0 : i32
    return %c0_i32, %c0_i32_0 : i32, i32
  }
  func.func @transform_2(%arg0: i32) -> (i32, i32) {
    %c0_i32 = arith.constant 0 : i32
    %c0_i32_0 = arith.constant 0 : i32
    %c0_i32_1 = arith.constant 0 : i32
    return %c0_i32, %c0_i32_0 : i32, i32
  }
  func.func @transform_3(%arg0: i32) -> (i32, i32) {
    %c0_i32 = arith.constant 0 : i32
    %c0_i32_0 = arith.constant 0 : i32
    %c0_i32_1 = arith.constant 0 : i32
    return %c0_i32, %c0_i32_0 : i32, i32
  }
  func.func @transform_4(%arg0: i32) -> (i32, i32) {
    %c0_i32 = arith.constant 0 : i32
    %c0_i32_0 = arith.constant 0 : i32
    %c0_i32_1 = arith.constant 0 : i32
    return %c0_i32, %c0_i32_0 : i32, i32
  }
  func.func @transform_5(%arg0: i32) -> (i32, i32) {
    %c0_i32 = arith.constant 0 : i32
    %c0_i32_0 = arith.constant 0 : i32
    return %arg0, %c0_i32 : i32, i32
  }
}

module attributes {stable_mosaic.version = 11 : i64} {
  func.func @_ln_linear_kernel(%arg0: i32, %arg1: memref<8x32xf32, #tpu.memory_space<vmem>>, %arg2: memref<1x32xf32, #tpu.memory_space<vmem>>, %arg3: memref<1x32xf32, #tpu.memory_space<vmem>>, %arg4: memref<32x64xf32, #tpu.memory_space<vmem>>, %arg5: memref<1x64xf32, #tpu.memory_space<vmem>>, %arg6: memref<8x64xf32, #tpu.memory_space<vmem>>) attributes {dimension_semantics = [#tpu.dimension_semantics<parallel>], iteration_bounds = array<i64: 1>, scalar_prefetch = 0 : i64, scratch_operands = 0 : i64, tpu.core_type = #tpu.core_type<tc>, window_params = [{transform_indices = @transform_0, window_bounds = array<i64: 8, 32>}, {pipeline_mode = #tpu.pipeline_mode<synchronous>, transform_indices = @transform_1, window_bounds = array<i64: 1, 32>}, {pipeline_mode = #tpu.pipeline_mode<synchronous>, transform_indices = @transform_2, window_bounds = array<i64: 1, 32>}, {pipeline_mode = #tpu.pipeline_mode<synchronous>, transform_indices = @transform_3, window_bounds = array<i64: 32, 64>}, {pipeline_mode = #tpu.pipeline_mode<synchronous>, transform_indices = @transform_4, window_bounds = array<i64: 1, 64>}, {transform_indices = @transform_5, window_bounds = array<i64: 8, 64>}]} {
    %c0 = arith.constant 0 : index
    %c0_0 = arith.constant 0 : index
    %0 = vector.load %arg1[%c0, %c0_0] : memref<8x32xf32, #tpu.memory_space<vmem>>, vector<8x32xf32>
    %cst = arith.constant dense<0.000000e+00> : vector<8xf32>
    %1 = vector.multi_reduction <add>, %0, %cst [1] : vector<8x32xf32> to vector<8xf32>
    %2 = vector.shape_cast %1 : vector<8xf32> to vector<8x1xf32>
    %cst_1 = arith.constant 3.200000e+01 : f32
    %3 = vector.broadcast %cst_1 : f32 to vector<8x1xf32>
    %4 = arith.divf %2, %3 : vector<8x1xf32>
    %5 = vector.broadcast %4 : vector<8x1xf32> to vector<8x32xf32>
    %6 = arith.subf %0, %5 : vector<8x32xf32>
    %7 = arith.mulf %6, %6 : vector<8x32xf32>
    %cst_2 = arith.constant dense<0.000000e+00> : vector<8xf32>
    %8 = vector.multi_reduction <add>, %7, %cst_2 [1] : vector<8x32xf32> to vector<8xf32>
    %9 = vector.shape_cast %8 : vector<8xf32> to vector<8x1xf32>
    %cst_3 = arith.constant 3.200000e+01 : f32
    %10 = vector.broadcast %cst_3 : f32 to vector<8x1xf32>
    %11 = arith.divf %9, %10 : vector<8x1xf32>
    %cst_4 = arith.constant 9.99999974E-6 : f32
    %12 = vector.broadcast %cst_4 : f32 to vector<8x1xf32>
    %13 = arith.addf %11, %12 : vector<8x1xf32>
    %14 = math.rsqrt %13 : vector<8x1xf32>
    %15 = vector.broadcast %14 : vector<8x1xf32> to vector<8x32xf32>
    %16 = arith.mulf %6, %15 : vector<8x32xf32>
    %c0_5 = arith.constant 0 : index
    %c0_6 = arith.constant 0 : index
    %17 = vector.load %arg2[%c0_5, %c0_6] : memref<1x32xf32, #tpu.memory_space<vmem>>, vector<1x32xf32>
    %18 = vector.broadcast %17 : vector<1x32xf32> to vector<8x32xf32>
    %19 = arith.mulf %16, %18 : vector<8x32xf32>
    %c0_7 = arith.constant 0 : index
    %c0_8 = arith.constant 0 : index
    %20 = vector.load %arg3[%c0_7, %c0_8] : memref<1x32xf32, #tpu.memory_space<vmem>>, vector<1x32xf32>
    %21 = vector.broadcast %20 : vector<1x32xf32> to vector<8x32xf32>
    %22 = arith.addf %19, %21 : vector<8x32xf32>
    %23 = arith.truncf %22 : vector<8x32xf32> to vector<8x32xbf16>
    %c0_9 = arith.constant 0 : index
    %c0_10 = arith.constant 0 : index
    %24 = vector.load %arg4[%c0_9, %c0_10] : memref<32x64xf32, #tpu.memory_space<vmem>>, vector<32x64xf32>
    %25 = arith.truncf %24 : vector<32x64xf32> to vector<32x64xbf16>
    %cst_11 = arith.constant dense<0.000000e+00> : vector<8x64xf32>
    %26 = tpu.matmul %23, %25, %cst_11 {dimension_numbers = #tpu.dot_dimension_numbers<[1], [0], [0], [1], [0, 0, 1, 1], [], []>} : vector<8x32xbf16>, vector<32x64xbf16>, vector<8x64xf32> -> vector<8x64xf32>
    %c0_12 = arith.constant 0 : index
    %c0_13 = arith.constant 0 : index
    %27 = vector.load %arg5[%c0_12, %c0_13] : memref<1x64xf32, #tpu.memory_space<vmem>>, vector<1x64xf32>
    %28 = vector.broadcast %27 : vector<1x64xf32> to vector<8x64xf32>
    %29 = arith.addf %26, %28 : vector<8x64xf32>
    %c0_14 = arith.constant 0 : index
    %c0_15 = arith.constant 0 : index
    %30 = vector.load %arg6[%c0_14, %c0_15] : memref<8x64xf32, #tpu.memory_space<vmem>>, vector<8x64xf32>
    tpu.vector_store %arg6[%c0_14, %c0_15], %29 {strides = array<i32>} : memref<8x64xf32, #tpu.memory_space<vmem>>, vector<8x64xf32>,
    return
  }
  func.func @transform_0(%arg0: i32) -> (i32, i32) {
    %c0_i32 = arith.constant 0 : i32
    %c0_i32_0 = arith.constant 0 : i32
    return %arg0, %c0_i32 : i32, i32
  }
  func.func @transform_1(%arg0: i32) -> (i32, i32) {
    %c0_i32 = arith.constant 0 : i32
    %c0_i32_0 = arith.constant 0 : i32
    %c0_i32_1 = arith.constant 0 : i32
    return %c0_i32, %c0_i32_0 : i32, i32
  }
  func.func @transform_2(%arg0: i32) -> (i32, i32) {
    %c0_i32 = arith.constant 0 : i32
    %c0_i32_0 = arith.constant 0 : i32
    %c0_i32_1 = arith.constant 0 : i32
    return %c0_i32, %c0_i32_0 : i32, i32
  }
  func.func @transform_3(%arg0: i32) -> (i32, i32) {
    %c0_i32 = arith.constant 0 : i32
    %c0_i32_0 = arith.constant 0 : i32
    %c0_i32_1 = arith.constant 0 : i32
    return %c0_i32, %c0_i32_0 : i32, i32
  }
  func.func @transform_4(%arg0: i32) -> (i32, i32) {
    %c0_i32 = arith.constant 0 : i32
    %c0_i32_0 = arith.constant 0 : i32
    %c0_i32_1 = arith.constant 0 : i32
    return %c0_i32, %c0_i32_0 : i32, i32
  }
  func.func @transform_5(%arg0: i32) -> (i32, i32) {
    %c0_i32 = arith.constant 0 : i32
    %c0_i32_0 = arith.constant 0 : i32
    return %arg0, %c0_i32 : i32, i32
  }
}

module attributes {stable_mosaic.version = 11 : i64} {
  func.func @_mha_kernel(%arg0: i32, %arg1: memref<4x4x8xf32, #tpu.memory_space<vmem>>, %arg2: memref<4x4x8xf32, #tpu.memory_space<vmem>>, %arg3: memref<4x4x8xf32, #tpu.memory_space<vmem>>, %arg4: memref<4x4x8xf32, #tpu.memory_space<vmem>>) attributes {dimension_semantics = [#tpu.dimension_semantics<parallel>], iteration_bounds = array<i64: 2>, scalar_prefetch = 0 : i64, scratch_operands = 0 : i64, tpu.core_type = #tpu.core_type<tc>, window_params = [{transform_indices = @transform_0, window_bounds = array<i64: 4, 4, 8>}, {transform_indices = @transform_1, window_bounds = array<i64: 4, 4, 8>}, {transform_indices = @transform_2, window_bounds = array<i64: 4, 4, 8>}, {transform_indices = @transform_3, window_bounds = array<i64: 4, 4, 8>}]} {
    %c0 = arith.constant 0 : index
    %c0_0 = arith.constant 0 : index
    %c0_1 = arith.constant 0 : index
    %0 = vector.load %arg1[%c0, %c0_0, %c0_1] : memref<4x4x8xf32, #tpu.memory_space<vmem>>, vector<4x4x8xf32>
    %1 = arith.truncf %0 : vector<4x4x8xf32> to vector<4x4x8xbf16>
    %c0_2 = arith.constant 0 : index
    %c0_3 = arith.constant 0 : index
    %c0_4 = arith.constant 0 : index
    %2 = vector.load %arg2[%c0_2, %c0_3, %c0_4] : memref<4x4x8xf32, #tpu.memory_space<vmem>>, vector<4x4x8xf32>
    %3 = arith.truncf %2 : vector<4x4x8xf32> to vector<4x4x8xbf16>
    %c0_5 = arith.constant 0 : index
    %c0_6 = arith.constant 0 : index
    %c0_7 = arith.constant 0 : index
    %4 = vector.load %arg3[%c0_5, %c0_6, %c0_7] : memref<4x4x8xf32, #tpu.memory_space<vmem>>, vector<4x4x8xf32>
    %5 = arith.truncf %4 : vector<4x4x8xf32> to vector<4x4x8xbf16>
    "tpu.trace_start"() <{level = 10 : i32, message = "bld,bsd->bls"}> : () -> ()
    %cst = arith.constant dense<0.000000e+00> : vector<4x4x4xf32>
    %6 = tpu.matmul %1, %3, %cst {dimension_numbers = #tpu.dot_dimension_numbers<[2], [2], [1], [1], [0, 0, 0, 1, 1, 1], [0], [0]>} : vector<4x4x8xbf16>, vector<4x4x8xbf16>, vector<4x4x4xf32> -> vector<4x4x4xf32>
    "tpu.trace_stop"() : () -> ()
    %cst_8 = arith.constant 0.353553385 : f32
    %7 = vector.broadcast %cst_8 : f32 to vector<4x4x4xf32>
    %8 = arith.mulf %6, %7 : vector<4x4x4xf32>
    %9 = tpu.iota {dimensions = array<i32: 1>} : vector<4x4x4xi32>
    %10 = tpu.iota {dimensions = array<i32: 2>} : vector<4x4x4xi32>
    %11 = arith.cmpi sgt, %10, %9 : vector<4x4x4xi32>
    %cst_9 = arith.constant -1.000000e+30 : f32
    %12 = vector.broadcast %cst_9 : f32 to vector<4x4x4xf32>
    %13 = arith.select %11, %12, %8 : vector<4x4x4xi1>, vector<4x4x4xf32>
    %cst_10 = arith.constant dense<0xFF800000> : vector<4x4xf32>
    %14 = vector.multi_reduction <maximumf>, %13, %cst_10 [2] : vector<4x4x4xf32> to vector<4x4xf32>
    %15 = vector.shape_cast %14 : vector<4x4xf32> to vector<4x4x1xf32>
    %16 = vector.broadcast %15 : vector<4x4x1xf32> to vector<4x4x4xf32>
    %17 = arith.subf %13, %16 : vector<4x4x4xf32>
    %18 = math.exp %17 : vector<4x4x4xf32>
    %cst_11 = arith.constant dense<0.000000e+00> : vector<4x4xf32>
    %19 = vector.multi_reduction <add>, %18, %cst_11 [2] : vector<4x4x4xf32> to vector<4x4xf32>
    %20 = vector.shape_cast %19 : vector<4x4xf32> to vector<4x4x1xf32>
    %21 = tpu.reciprocal %20 {approx = true} : vector<4x4x1xf32> -> vector<4x4x1xf32>
    %22 = vector.broadcast %21 : vector<4x4x1xf32> to vector<4x4x4xf32>
    %23 = arith.mulf %18, %22 : vector<4x4x4xf32>
    %24 = arith.truncf %23 : vector<4x4x4xf32> to vector<4x4x4xbf16>
    "tpu.trace_start"() <{level = 10 : i32, message = "bls,bsd->bld"}> : () -> ()
    %cst_12 = arith.constant dense<0.000000e+00> : vector<4x4x8xf32>
    %25 = tpu.matmul %24, %5, %cst_12 {dimension_numbers = #tpu.dot_dimension_numbers<[2], [1], [1], [2], [0, 0, 0, 1, 1, 2], [0], [0]>} : vector<4x4x4xbf16>, vector<4x4x8xbf16>, vector<4x4x8xf32> -> vector<4x4x8xf32>
    "tpu.trace_stop"() : () -> ()
    %c0_13 = arith.constant 0 : index
    %c0_14 = arith.constant 0 : index
    %c0_15 = arith.constant 0 : index
    %26 = vector.load %arg4[%c0_13, %c0_14, %c0_15] : memref<4x4x8xf32, #tpu.memory_space<vmem>>, vector<4x4x8xf32>
    tpu.vector_store %arg4[%c0_13, %c0_14, %c0_15], %25 {strides = array<i32>} : memref<4x4x8xf32, #tpu.memory_space<vmem>>, vector<4x4x8xf32>,
    return
  }
  func.func @transform_0(%arg0: i32) -> (i32, i32, i32) {
    %c0_i32 = arith.constant 0 : i32
    %c0_i32_0 = arith.constant 0 : i32
    %c0_i32_1 = arith.constant 0 : i32
    return %arg0, %c0_i32, %c0_i32_0 : i32, i32, i32
  }
  func.func @transform_1(%arg0: i32) -> (i32, i32, i32) {
    %c0_i32 = arith.constant 0 : i32
    %c0_i32_0 = arith.constant 0 : i32
    %c0_i32_1 = arith.constant 0 : i32
    return %arg0, %c0_i32, %c0_i32_0 : i32, i32, i32
  }
  func.func @transform_2(%arg0: i32) -> (i32, i32, i32) {
    %c0_i32 = arith.constant 0 : i32
    %c0_i32_0 = arith.constant 0 : i32
    %c0_i32_1 = arith.constant 0 : i32
    return %arg0, %c0_i32, %c0_i32_0 : i32, i32, i32
  }
  func.func @transform_3(%arg0: i32) -> (i32, i32, i32) {
    %c0_i32 = arith.constant 0 : i32
    %c0_i32_0 = arith.constant 0 : i32
    %c0_i32_1 = arith.constant 0 : i32
    return %arg0, %c0_i32, %c0_i32_0 : i32, i32, i32
  }
}

module attributes {stable_mosaic.version = 11 : i64} {
  func.func @_attn_mlp_kernel(%arg0: i32, %arg1: memref<8x32xf32, #tpu.memory_space<vmem>>, %arg2: memref<8x32xf32, #tpu.memory_space<vmem>>, %arg3: memref<32x32xf32, #tpu.memory_space<vmem>>, %arg4: memref<1x32xf32, #tpu.memory_space<vmem>>, %arg5: memref<1x32xf32, #tpu.memory_space<vmem>>, %arg6: memref<1x32xf32, #tpu.memory_space<vmem>>, %arg7: memref<32x128xf32, #tpu.memory_space<vmem>>, %arg8: memref<1x128xf32, #tpu.memory_space<vmem>>, %arg9: memref<128x32xf32, #tpu.memory_space<vmem>>, %arg10: memref<1x32xf32, #tpu.memory_space<vmem>>, %arg11: memref<8x32xf32, #tpu.memory_space<vmem>>) attributes {dimension_semantics = [#tpu.dimension_semantics<parallel>], iteration_bounds = array<i64: 1>, scalar_prefetch = 0 : i64, scratch_operands = 0 : i64, tpu.core_type = #tpu.core_type<tc>, window_params = [{transform_indices = @transform_0, window_bounds = array<i64: 8, 32>}, {transform_indices = @transform_1, window_bounds = array<i64: 8, 32>}, {pipeline_mode = #tpu.pipeline_mode<synchronous>, transform_indices = @transform_2, window_bounds = array<i64: 32, 32>}, {pipeline_mode = #tpu.pipeline_mode<synchronous>, transform_indices = @transform_3, window_bounds = array<i64: 1, 32>}, {pipeline_mode = #tpu.pipeline_mode<synchronous>, transform_indices = @transform_4, window_bounds = array<i64: 1, 32>}, {pipeline_mode = #tpu.pipeline_mode<synchronous>, transform_indices = @transform_5, window_bounds = array<i64: 1, 32>}, {pipeline_mode = #tpu.pipeline_mode<synchronous>, transform_indices = @transform_6, window_bounds = array<i64: 32, 128>}, {pipeline_mode = #tpu.pipeline_mode<synchronous>, transform_indices = @transform_7, window_bounds = array<i64: 1, 128>}, {pipeline_mode = #tpu.pipeline_mode<synchronous>, transform_indices = @transform_8, window_bounds = array<i64: 128, 32>}, {pipeline_mode = #tpu.pipeline_mode<synchronous>, transform_indices = @transform_9, window_bounds = array<i64: 1, 32>}, {transform_indices = @transform_10, window_bounds = array<i64: 8, 32>}]} {
    %c0 = arith.constant 0 : index
    %c0_0 = arith.constant 0 : index
    %0 = vector.load %arg1[%c0, %c0_0] : memref<8x32xf32, #tpu.memory_space<vmem>>, vector<8x32xf32>
    %c0_1 = arith.constant 0 : index
    %c0_2 = arith.constant 0 : index
    %1 = vector.load %arg2[%c0_1, %c0_2] : memref<8x32xf32, #tpu.memory_space<vmem>>, vector<8x32xf32>
    %2 = arith.truncf %1 : vector<8x32xf32> to vector<8x32xbf16>
    %c0_3 = arith.constant 0 : index
    %c0_4 = arith.constant 0 : index
    %3 = vector.load %arg3[%c0_3, %c0_4] : memref<32x32xf32, #tpu.memory_space<vmem>>, vector<32x32xf32>
    %4 = arith.truncf %3 : vector<32x32xf32> to vector<32x32xbf16>
    %cst = arith.constant dense<0.000000e+00> : vector<8x32xf32>
    %5 = tpu.matmul %2, %4, %cst {dimension_numbers = #tpu.dot_dimension_numbers<[1], [0], [0], [1], [0, 0, 1, 1], [], []>} : vector<8x32xbf16>, vector<32x32xbf16>, vector<8x32xf32> -> vector<8x32xf32>
    %c0_5 = arith.constant 0 : index
    %c0_6 = arith.constant 0 : index
    %6 = vector.load %arg4[%c0_5, %c0_6] : memref<1x32xf32, #tpu.memory_space<vmem>>, vector<1x32xf32>
    %7 = vector.broadcast %6 : vector<1x32xf32> to vector<8x32xf32>
    %8 = arith.addf %5, %7 : vector<8x32xf32>
    %9 = arith.addf %0, %8 : vector<8x32xf32>
    %cst_7 = arith.constant dense<0.000000e+00> : vector<8xf32>
    %10 = vector.multi_reduction <add>, %9, %cst_7 [1] : vector<8x32xf32> to vector<8xf32>
    %11 = vector.shape_cast %10 : vector<8xf32> to vector<8x1xf32>
    %cst_8 = arith.constant 3.200000e+01 : f32
    %12 = vector.broadcast %cst_8 : f32 to vector<8x1xf32>
    %13 = arith.divf %11, %12 : vector<8x1xf32>
    %14 = vector.broadcast %13 : vector<8x1xf32> to vector<8x32xf32>
    %15 = arith.subf %9, %14 : vector<8x32xf32>
    %16 = arith.mulf %15, %15 : vector<8x32xf32>
    %cst_9 = arith.constant dense<0.000000e+00> : vector<8xf32>
    %17 = vector.multi_reduction <add>, %16, %cst_9 [1] : vector<8x32xf32> to vector<8xf32>
    %18 = vector.shape_cast %17 : vector<8xf32> to vector<8x1xf32>
    %cst_10 = arith.constant 3.200000e+01 : f32
    %19 = vector.broadcast %cst_10 : f32 to vector<8x1xf32>
    %20 = arith.divf %18, %19 : vector<8x1xf32>
    %cst_11 = arith.constant 9.99999974E-6 : f32
    %21 = vector.broadcast %cst_11 : f32 to vector<8x1xf32>
    %22 = arith.addf %20, %21 : vector<8x1xf32>
    %23 = math.rsqrt %22 : vector<8x1xf32>
    %24 = vector.broadcast %23 : vector<8x1xf32> to vector<8x32xf32>
    %25 = arith.mulf %15, %24 : vector<8x32xf32>
    %c0_12 = arith.constant 0 : index
    %c0_13 = arith.constant 0 : index
    %26 = vector.load %arg5[%c0_12, %c0_13] : memref<1x32xf32, #tpu.memory_space<vmem>>, vector<1x32xf32>
    %27 = vector.broadcast %26 : vector<1x32xf32> to vector<8x32xf32>
    %28 = arith.mulf %25, %27 : vector<8x32xf32>
    %c0_14 = arith.constant 0 : index
    %c0_15 = arith.constant 0 : index
    %29 = vector.load %arg6[%c0_14, %c0_15] : memref<1x32xf32, #tpu.memory_space<vmem>>, vector<1x32xf32>
    %30 = vector.broadcast %29 : vector<1x32xf32> to vector<8x32xf32>
    %31 = arith.addf %28, %30 : vector<8x32xf32>
    %32 = arith.truncf %31 : vector<8x32xf32> to vector<8x32xbf16>
    %c0_16 = arith.constant 0 : index
    %c0_17 = arith.constant 0 : index
    %33 = vector.load %arg7[%c0_16, %c0_17] : memref<32x128xf32, #tpu.memory_space<vmem>>, vector<32x128xf32>
    %34 = arith.truncf %33 : vector<32x128xf32> to vector<32x128xbf16>
    %cst_18 = arith.constant dense<0.000000e+00> : vector<8x128xf32>
    %35 = tpu.matmul %32, %34, %cst_18 {dimension_numbers = #tpu.dot_dimension_numbers<[1], [0], [0], [1], [0, 0, 1, 1], [], []>} : vector<8x32xbf16>, vector<32x128xbf16>, vector<8x128xf32> -> vector<8x128xf32>
    %c0_19 = arith.constant 0 : index
    %c0_20 = arith.constant 0 : index
    %36 = vector.load %arg8[%c0_19, %c0_20] : memref<1x128xf32, #tpu.memory_space<vmem>>, vector<1x128xf32>
    %37 = vector.broadcast %36 : vector<1x128xf32> to vector<8x128xf32>
    %38 = arith.addf %35, %37 : vector<8x128xf32>
    %cst_21 = arith.constant 5.000000e-01 : f32
    %39 = vector.broadcast %cst_21 : f32 to vector<8x128xf32>
    %40 = arith.mulf %39, %38 : vector<8x128xf32>
    %cst_22 = arith.constant 0.707106769 : f32
    %41 = vector.broadcast %cst_22 : f32 to vector<8x128xf32>
    %42 = arith.mulf %38, %41 : vector<8x128xf32>
    %43 = math.absf %42 : vector<8x128xf32>
    %cst_23 = arith.constant 0.327591091 : f32
    %44 = vector.broadcast %cst_23 : f32 to vector<8x128xf32>
    %45 = arith.mulf %44, %43 : vector<8x128xf32>
    %cst_24 = arith.constant 1.000000e+00 : f32
    %46 = vector.broadcast %cst_24 : f32 to vector<8x128xf32>
    %47 = arith.addf %46, %45 : vector<8x128xf32>
    %cst_25 = arith.constant 1.000000e+00 : f32
    %48 = vector.broadcast %cst_25 : f32 to vector<8x128xf32>
    %49 = arith.divf %48, %47 : vector<8x128xf32>
    %cst_26 = arith.constant 1.06140542 : f32
    %50 = vector.broadcast %cst_26 : f32 to vector<8x128xf32>
    %51 = arith.mulf %50, %49 : vector<8x128xf32>
    %cst_27 = arith.constant -1.45315206 : f32
    %52 = vector.broadcast %cst_27 : f32 to vector<8x128xf32>
    %53 = arith.addf %51, %52 : vector<8x128xf32>
    %54 = arith.mulf %53, %49 : vector<8x128xf32>
    %cst_28 = arith.constant 1.42141378 : f32
    %55 = vector.broadcast %cst_28 : f32 to vector<8x128xf32>
    %56 = arith.addf %54, %55 : vector<8x128xf32>
    %57 = arith.mulf %56, %49 : vector<8x128xf32>
    %cst_29 = arith.constant -0.284496725 : f32
    %58 = vector.broadcast %cst_29 : f32 to vector<8x128xf32>
    %59 = arith.addf %57, %58 : vector<8x128xf32>
    %60 = arith.mulf %59, %49 : vector<8x128xf32>
    %cst_30 = arith.constant 0.254829586 : f32
    %61 = vector.broadcast %cst_30 : f32 to vector<8x128xf32>
    %62 = arith.addf %60, %61 : vector<8x128xf32>
    %63 = arith.mulf %62, %49 : vector<8x128xf32>
    %cst_31 = arith.constant 0.000000e+00 : f32
    %64 = vector.broadcast %cst_31 : f32 to vector<8x128xf32>
    %65 = arith.subf %64, %43 : vector<8x128xf32>
    %66 = arith.mulf %65, %43 : vector<8x128xf32>
    %67 = math.exp %66 : vector<8x128xf32>
    %68 = arith.mulf %63, %67 : vector<8x128xf32>
    %cst_32 = arith.constant 1.000000e+00 : f32
    %69 = vector.broadcast %cst_32 : f32 to vector<8x128xf32>
    %70 = arith.subf %69, %68 : vector<8x128xf32>
    %cst_33 = arith.constant 0.000000e+00 : f32
    %71 = vector.broadcast %cst_33 : f32 to vector<8x128xf32>
    %72 = arith.cmpf oge, %42, %71 : vector<8x128xf32>
    %cst_34 = arith.constant 0.000000e+00 : f32
    %73 = vector.broadcast %cst_34 : f32 to vector<8x128xf32>
    %74 = arith.subf %73, %70 : vector<8x128xf32>
    %75 = arith.select %72, %70, %74 : vector<8x128xi1>, vector<8x128xf32>
    %cst_35 = arith.constant 1.000000e+00 : f32
    %76 = vector.broadcast %cst_35 : f32 to vector<8x128xf32>
    %77 = arith.addf %76, %75 : vector<8x128xf32>
    %78 = arith.mulf %40, %77 : vector<8x128xf32>
    %79 = arith.truncf %78 : vector<8x128xf32> to vector<8x128xbf16>
    %c0_36 = arith.constant 0 : index
    %c0_37 = arith.constant 0 : index
    %80 = vector.load %arg9[%c0_36, %c0_37] : memref<128x32xf32, #tpu.memory_space<vmem>>, vector<128x32xf32>
    %81 = arith.truncf %80 : vector<128x32xf32> to vector<128x32xbf16>
    %cst_38 = arith.constant dense<0.000000e+00> : vector<8x32xf32>
    %82 = tpu.matmul %79, %81, %cst_38 {dimension_numbers = #tpu.dot_dimension_numbers<[1], [0], [0], [1], [0, 0, 1, 1], [], []>} : vector<8x128xbf16>, vector<128x32xbf16>, vector<8x32xf32> -> vector<8x32xf32>
    %c0_39 = arith.constant 0 : index
    %c0_40 = arith.constant 0 : index
    %83 = vector.load %arg10[%c0_39, %c0_40] : memref<1x32xf32, #tpu.memory_space<vmem>>, vector<1x32xf32>
    %84 = vector.broadcast %83 : vector<1x32xf32> to vector<8x32xf32>
    %85 = arith.addf %82, %84 : vector<8x32xf32>
    %86 = arith.addf %9, %85 : vector<8x32xf32>
    %c0_41 = arith.constant 0 : index
    %c0_42 = arith.constant 0 : index
    %87 = vector.load %arg11[%c0_41, %c0_42] : memref<8x32xf32, #tpu.memory_space<vmem>>, vector<8x32xf32>
    tpu.vector_store %arg11[%c0_41, %c0_42], %86 {strides = array<i32>} : memref<8x32xf32, #tpu.memory_space<vmem>>, vector<8x32xf32>,
    return
  }
  func.func @transform_0(%arg0: i32) -> (i32, i32) {
    %c0_i32 = arith.constant 0 : i32
    %c0_i32_0 = arith.constant 0 : i32
    return %arg0, %c0_i32 : i32, i32
  }
  func.func @transform_1(%arg0: i32) -> (i32, i32) {
    %c0_i32 = arith.constant 0 : i32
    %c0_i32_0 = arith.constant 0 : i32
    return %arg0, %c0_i32 : i32, i32
  }
  func.func @transform_2(%arg0: i32) -> (i32, i32) {
    %c0_i32 = arith.constant 0 : i32
    %c0_i32_0 = arith.constant 0 : i32
    %c0_i32_1 = arith.constant 0 : i32
    return %c0_i32, %c0_i32_0 : i32, i32
  }
  func.func @transform_3(%arg0: i32) -> (i32, i32) {
    %c0_i32 = arith.constant 0 : i32
    %c0_i32_0 = arith.constant 0 : i32
    %c0_i32_1 = arith.constant 0 : i32
    return %c0_i32, %c0_i32_0 : i32, i32
  }
  func.func @transform_4(%arg0: i32) -> (i32, i32) {
    %c0_i32 = arith.constant 0 : i32
    %c0_i32_0 = arith.constant 0 : i32
    %c0_i32_1 = arith.constant 0 : i32
    return %c0_i32, %c0_i32_0 : i32, i32
  }
  func.func @transform_5(%arg0: i32) -> (i32, i32) {
    %c0_i32 = arith.constant 0 : i32
    %c0_i32_0 = arith.constant 0 : i32
    %c0_i32_1 = arith.constant 0 : i32
    return %c0_i32, %c0_i32_0 : i32, i32
  }
  func.func @transform_6(%arg0: i32) -> (i32, i32) {
    %c0_i32 = arith.constant 0 : i32
    %c0_i32_0 = arith.constant 0 : i32
    %c0_i32_1 = arith.constant 0 : i32
    return %c0_i32, %c0_i32_0 : i32, i32
  }
  func.func @transform_7(%arg0: i32) -> (i32, i32) {
    %c0_i32 = arith.constant 0 : i32
    %c0_i32_0 = arith.constant 0 : i32
    %c0_i32_1 = arith.constant 0 : i32
    return %c0_i32, %c0_i32_0 : i32, i32
  }
  func.func @transform_8(%arg0: i32) -> (i32, i32) {
    %c0_i32 = arith.constant 0 : i32
    %c0_i32_0 = arith.constant 0 : i32
    %c0_i32_1 = arith.constant 0 : i32
    return %c0_i32, %c0_i32_0 : i32, i32
  }
  func.func @transform_9(%arg0: i32) -> (i32, i32) {
    %c0_i32 = arith.constant 0 : i32
    %c0_i32_0 = arith.constant 0 : i32
    %c0_i32_1 = arith.constant 0 : i32
    return %c0_i32, %c0_i32_0 : i32, i32
  }
  func.func @transform_10(%arg0: i32) -> (i32, i32) {
    %c0_i32 = arith.constant 0 : i32
    %c0_i32_0 = arith.constant 0 : i32
    return %arg0, %c0_i32 : i32, i32
  }
}

module attributes {stable_mosaic.version = 11 : i64} {
  func.func @_linear_kernel(%arg0: i32, %arg1: memref<48x4xf32, #tpu.memory_space<vmem>>, %arg2: memref<4x64xf32, #tpu.memory_space<vmem>>, %arg3: memref<1x64xf32, #tpu.memory_space<vmem>>, %arg4: memref<48x64xf32, #tpu.memory_space<vmem>>) attributes {dimension_semantics = [#tpu.dimension_semantics<parallel>], iteration_bounds = array<i64: 2>, scalar_prefetch = 0 : i64, scratch_operands = 0 : i64, tpu.core_type = #tpu.core_type<tc>, window_params = [{transform_indices = @transform_0, window_bounds = array<i64: 48, 4>}, {pipeline_mode = #tpu.pipeline_mode<synchronous>, transform_indices = @transform_1, window_bounds = array<i64: 4, 64>}, {pipeline_mode = #tpu.pipeline_mode<synchronous>, transform_indices = @transform_2, window_bounds = array<i64: 1, 64>}, {transform_indices = @transform_3, window_bounds = array<i64: 48, 64>}]} {
    %c0 = arith.constant 0 : index
    %c0_0 = arith.constant 0 : index
    %0 = vector.load %arg1[%c0, %c0_0] : memref<48x4xf32, #tpu.memory_space<vmem>>, vector<48x4xf32>
    %1 = arith.truncf %0 : vector<48x4xf32> to vector<48x4xbf16>
    %c0_1 = arith.constant 0 : index
    %c0_2 = arith.constant 0 : index
    %2 = vector.load %arg2[%c0_1, %c0_2] : memref<4x64xf32, #tpu.memory_space<vmem>>, vector<4x64xf32>
    %3 = arith.truncf %2 : vector<4x64xf32> to vector<4x64xbf16>
    %cst = arith.constant dense<0.000000e+00> : vector<48x64xf32>
    %4 = tpu.matmul %1, %3, %cst {dimension_numbers = #tpu.dot_dimension_numbers<[1], [0], [0], [1], [0, 0, 1, 1], [], []>} : vector<48x4xbf16>, vector<4x64xbf16>, vector<48x64xf32> -> vector<48x64xf32>
    %c0_3 = arith.constant 0 : index
    %c0_4 = arith.constant 0 : index
    %5 = vector.load %arg3[%c0_3, %c0_4] : memref<1x64xf32, #tpu.memory_space<vmem>>, vector<1x64xf32>
    %6 = vector.broadcast %5 : vector<1x64xf32> to vector<48x64xf32>
    %7 = arith.addf %4, %6 : vector<48x64xf32>
    %c0_5 = arith.constant 0 : index
    %c0_6 = arith.constant 0 : index
    %8 = vector.load %arg4[%c0_5, %c0_6] : memref<48x64xf32, #tpu.memory_space<vmem>>, vector<48x64xf32>
    tpu.vector_store %arg4[%c0_5, %c0_6], %7 {strides = array<i32>} : memref<48x64xf32, #tpu.memory_space<vmem>>, vector<48x64xf32>,
    return
  }
  func.func @transform_0(%arg0: i32) -> (i32, i32) {
    %c0_i32 = arith.constant 0 : i32
    %c0_i32_0 = arith.constant 0 : i32
    return %arg0, %c0_i32 : i32, i32
  }
  func.func @transform_1(%arg0: i32) -> (i32, i32) {
    %c0_i32 = arith.constant 0 : i32
    %c0_i32_0 = arith.constant 0 : i32
    %c0_i32_1 = arith.constant 0 : i32
    return %c0_i32, %c0_i32_0 : i32, i32
  }
  func.func @transform_2(%arg0: i32) -> (i32, i32) {
    %c0_i32 = arith.constant 0 : i32
    %c0_i32_0 = arith.constant 0 : i32
    %c0_i32_1 = arith.constant 0 : i32
    return %c0_i32, %c0_i32_0 : i32, i32
  }
  func.func @transform_3(%arg0: i32) -> (i32, i32) {
    %c0_i32 = arith.constant 0 : i32
    %c0_i32_0 = arith.constant 0 : i32
    return %arg0, %c0_i32 : i32, i32
  }
}

module attributes {stable_mosaic.version = 11 : i64} {
  func.func @_ln_linear_kernel(%arg0: i32, %arg1: memref<32x64xf32, #tpu.memory_space<vmem>>, %arg2: memref<1x64xf32, #tpu.memory_space<vmem>>, %arg3: memref<1x64xf32, #tpu.memory_space<vmem>>, %arg4: memref<64x128xf32, #tpu.memory_space<vmem>>, %arg5: memref<1x128xf32, #tpu.memory_space<vmem>>, %arg6: memref<32x128xf32, #tpu.memory_space<vmem>>) attributes {dimension_semantics = [#tpu.dimension_semantics<parallel>], iteration_bounds = array<i64: 2>, scalar_prefetch = 0 : i64, scratch_operands = 0 : i64, tpu.core_type = #tpu.core_type<tc>, window_params = [{transform_indices = @transform_0, window_bounds = array<i64: 32, 64>}, {pipeline_mode = #tpu.pipeline_mode<synchronous>, transform_indices = @transform_1, window_bounds = array<i64: 1, 64>}, {pipeline_mode = #tpu.pipeline_mode<synchronous>, transform_indices = @transform_2, window_bounds = array<i64: 1, 64>}, {pipeline_mode = #tpu.pipeline_mode<synchronous>, transform_indices = @transform_3, window_bounds = array<i64: 64, 128>}, {pipeline_mode = #tpu.pipeline_mode<synchronous>, transform_indices = @transform_4, window_bounds = array<i64: 1, 128>}, {transform_indices = @transform_5, window_bounds = array<i64: 32, 128>}]} {
    %c0 = arith.constant 0 : index
    %c0_0 = arith.constant 0 : index
    %0 = vector.load %arg1[%c0, %c0_0] : memref<32x64xf32, #tpu.memory_space<vmem>>, vector<32x64xf32>
    %cst = arith.constant dense<0.000000e+00> : vector<32xf32>
    %1 = vector.multi_reduction <add>, %0, %cst [1] : vector<32x64xf32> to vector<32xf32>
    %2 = vector.shape_cast %1 : vector<32xf32> to vector<32x1xf32>
    %cst_1 = arith.constant 6.400000e+01 : f32
    %3 = vector.broadcast %cst_1 : f32 to vector<32x1xf32>
    %4 = arith.divf %2, %3 : vector<32x1xf32>
    %5 = vector.broadcast %4 : vector<32x1xf32> to vector<32x64xf32>
    %6 = arith.subf %0, %5 : vector<32x64xf32>
    %7 = arith.mulf %6, %6 : vector<32x64xf32>
    %cst_2 = arith.constant dense<0.000000e+00> : vector<32xf32>
    %8 = vector.multi_reduction <add>, %7, %cst_2 [1] : vector<32x64xf32> to vector<32xf32>
    %9 = vector.shape_cast %8 : vector<32xf32> to vector<32x1xf32>
    %cst_3 = arith.constant 6.400000e+01 : f32
    %10 = vector.broadcast %cst_3 : f32 to vector<32x1xf32>
    %11 = arith.divf %9, %10 : vector<32x1xf32>
    %cst_4 = arith.constant 9.99999974E-6 : f32
    %12 = vector.broadcast %cst_4 : f32 to vector<32x1xf32>
    %13 = arith.addf %11, %12 : vector<32x1xf32>
    %14 = math.rsqrt %13 : vector<32x1xf32>
    %15 = vector.broadcast %14 : vector<32x1xf32> to vector<32x64xf32>
    %16 = arith.mulf %6, %15 : vector<32x64xf32>
    %c0_5 = arith.constant 0 : index
    %c0_6 = arith.constant 0 : index
    %17 = vector.load %arg2[%c0_5, %c0_6] : memref<1x64xf32, #tpu.memory_space<vmem>>, vector<1x64xf32>
    %18 = vector.broadcast %17 : vector<1x64xf32> to vector<32x64xf32>
    %19 = arith.mulf %16, %18 : vector<32x64xf32>
    %c0_7 = arith.constant 0 : index
    %c0_8 = arith.constant 0 : index
    %20 = vector.load %arg3[%c0_7, %c0_8] : memref<1x64xf32, #tpu.memory_space<vmem>>, vector<1x64xf32>
    %21 = vector.broadcast %20 : vector<1x64xf32> to vector<32x64xf32>
    %22 = arith.addf %19, %21 : vector<32x64xf32>
    %23 = arith.truncf %22 : vector<32x64xf32> to vector<32x64xbf16>
    %c0_9 = arith.constant 0 : index
    %c0_10 = arith.constant 0 : index
    %24 = vector.load %arg4[%c0_9, %c0_10] : memref<64x128xf32, #tpu.memory_space<vmem>>, vector<64x128xf32>
    %25 = arith.truncf %24 : vector<64x128xf32> to vector<64x128xbf16>
    %cst_11 = arith.constant dense<0.000000e+00> : vector<32x128xf32>
    %26 = tpu.matmul %23, %25, %cst_11 {dimension_numbers = #tpu.dot_dimension_numbers<[1], [0], [0], [1], [0, 0, 1, 1], [], []>} : vector<32x64xbf16>, vector<64x128xbf16>, vector<32x128xf32> -> vector<32x128xf32>
    %c0_12 = arith.constant 0 : index
    %c0_13 = arith.constant 0 : index
    %27 = vector.load %arg5[%c0_12, %c0_13] : memref<1x128xf32, #tpu.memory_space<vmem>>, vector<1x128xf32>
    %28 = vector.broadcast %27 : vector<1x128xf32> to vector<32x128xf32>
    %29 = arith.addf %26, %28 : vector<32x128xf32>
    %c0_14 = arith.constant 0 : index
    %c0_15 = arith.constant 0 : index
    %30 = vector.load %arg6[%c0_14, %c0_15] : memref<32x128xf32, #tpu.memory_space<vmem>>, vector<32x128xf32>
    tpu.vector_store %arg6[%c0_14, %c0_15], %29 {strides = array<i32>} : memref<32x128xf32, #tpu.memory_space<vmem>>, vector<32x128xf32>,
    return
  }
  func.func @transform_0(%arg0: i32) -> (i32, i32) {
    %c0_i32 = arith.constant 0 : i32
    %c0_i32_0 = arith.constant 0 : i32
    return %arg0, %c0_i32 : i32, i32
  }
  func.func @transform_1(%arg0: i32) -> (i32, i32) {
    %c0_i32 = arith.constant 0 : i32
    %c0_i32_0 = arith.constant 0 : i32
    %c0_i32_1 = arith.constant 0 : i32
    return %c0_i32, %c0_i32_0 : i32, i32
  }
  func.func @transform_2(%arg0: i32) -> (i32, i32) {
    %c0_i32 = arith.constant 0 : i32
    %c0_i32_0 = arith.constant 0 : i32
    %c0_i32_1 = arith.constant 0 : i32
    return %c0_i32, %c0_i32_0 : i32, i32
  }
  func.func @transform_3(%arg0: i32) -> (i32, i32) {
    %c0_i32 = arith.constant 0 : i32
    %c0_i32_0 = arith.constant 0 : i32
    %c0_i32_1 = arith.constant 0 : i32
    return %c0_i32, %c0_i32_0 : i32, i32
  }
  func.func @transform_4(%arg0: i32) -> (i32, i32) {
    %c0_i32 = arith.constant 0 : i32
    %c0_i32_0 = arith.constant 0 : i32
    %c0_i32_1 = arith.constant 0 : i32
    return %c0_i32, %c0_i32_0 : i32, i32
  }
  func.func @transform_5(%arg0: i32) -> (i32, i32) {
    %c0_i32 = arith.constant 0 : i32
    %c0_i32_0 = arith.constant 0 : i32
    return %arg0, %c0_i32 : i32, i32
  }
}

module attributes {stable_mosaic.version = 11 : i64} {
  func.func @_ln_linear_kernel(%arg0: i32, %arg1: memref<32x64xf32, #tpu.memory_space<vmem>>, %arg2: memref<1x64xf32, #tpu.memory_space<vmem>>, %arg3: memref<1x64xf32, #tpu.memory_space<vmem>>, %arg4: memref<64x64xf32, #tpu.memory_space<vmem>>, %arg5: memref<1x64xf32, #tpu.memory_space<vmem>>, %arg6: memref<32x64xf32, #tpu.memory_space<vmem>>) attributes {dimension_semantics = [#tpu.dimension_semantics<parallel>], iteration_bounds = array<i64: 2>, scalar_prefetch = 0 : i64, scratch_operands = 0 : i64, tpu.core_type = #tpu.core_type<tc>, window_params = [{transform_indices = @transform_0, window_bounds = array<i64: 32, 64>}, {pipeline_mode = #tpu.pipeline_mode<synchronous>, transform_indices = @transform_1, window_bounds = array<i64: 1, 64>}, {pipeline_mode = #tpu.pipeline_mode<synchronous>, transform_indices = @transform_2, window_bounds = array<i64: 1, 64>}, {pipeline_mode = #tpu.pipeline_mode<synchronous>, transform_indices = @transform_3, window_bounds = array<i64: 64, 64>}, {pipeline_mode = #tpu.pipeline_mode<synchronous>, transform_indices = @transform_4, window_bounds = array<i64: 1, 64>}, {transform_indices = @transform_5, window_bounds = array<i64: 32, 64>}]} {
    %c0 = arith.constant 0 : index
    %c0_0 = arith.constant 0 : index
    %0 = vector.load %arg1[%c0, %c0_0] : memref<32x64xf32, #tpu.memory_space<vmem>>, vector<32x64xf32>
    %cst = arith.constant dense<0.000000e+00> : vector<32xf32>
    %1 = vector.multi_reduction <add>, %0, %cst [1] : vector<32x64xf32> to vector<32xf32>
    %2 = vector.shape_cast %1 : vector<32xf32> to vector<32x1xf32>
    %cst_1 = arith.constant 6.400000e+01 : f32
    %3 = vector.broadcast %cst_1 : f32 to vector<32x1xf32>
    %4 = arith.divf %2, %3 : vector<32x1xf32>
    %5 = vector.broadcast %4 : vector<32x1xf32> to vector<32x64xf32>
    %6 = arith.subf %0, %5 : vector<32x64xf32>
    %7 = arith.mulf %6, %6 : vector<32x64xf32>
    %cst_2 = arith.constant dense<0.000000e+00> : vector<32xf32>
    %8 = vector.multi_reduction <add>, %7, %cst_2 [1] : vector<32x64xf32> to vector<32xf32>
    %9 = vector.shape_cast %8 : vector<32xf32> to vector<32x1xf32>
    %cst_3 = arith.constant 6.400000e+01 : f32
    %10 = vector.broadcast %cst_3 : f32 to vector<32x1xf32>
    %11 = arith.divf %9, %10 : vector<32x1xf32>
    %cst_4 = arith.constant 9.99999974E-6 : f32
    %12 = vector.broadcast %cst_4 : f32 to vector<32x1xf32>
    %13 = arith.addf %11, %12 : vector<32x1xf32>
    %14 = math.rsqrt %13 : vector<32x1xf32>
    %15 = vector.broadcast %14 : vector<32x1xf32> to vector<32x64xf32>
    %16 = arith.mulf %6, %15 : vector<32x64xf32>
    %c0_5 = arith.constant 0 : index
    %c0_6 = arith.constant 0 : index
    %17 = vector.load %arg2[%c0_5, %c0_6] : memref<1x64xf32, #tpu.memory_space<vmem>>, vector<1x64xf32>
    %18 = vector.broadcast %17 : vector<1x64xf32> to vector<32x64xf32>
    %19 = arith.mulf %16, %18 : vector<32x64xf32>
    %c0_7 = arith.constant 0 : index
    %c0_8 = arith.constant 0 : index
    %20 = vector.load %arg3[%c0_7, %c0_8] : memref<1x64xf32, #tpu.memory_space<vmem>>, vector<1x64xf32>
    %21 = vector.broadcast %20 : vector<1x64xf32> to vector<32x64xf32>
    %22 = arith.addf %19, %21 : vector<32x64xf32>
    %23 = arith.truncf %22 : vector<32x64xf32> to vector<32x64xbf16>
    %c0_9 = arith.constant 0 : index
    %c0_10 = arith.constant 0 : index
    %24 = vector.load %arg4[%c0_9, %c0_10] : memref<64x64xf32, #tpu.memory_space<vmem>>, vector<64x64xf32>
    %25 = arith.truncf %24 : vector<64x64xf32> to vector<64x64xbf16>
    %cst_11 = arith.constant dense<0.000000e+00> : vector<32x64xf32>
    %26 = tpu.matmul %23, %25, %cst_11 {dimension_numbers = #tpu.dot_dimension_numbers<[1], [0], [0], [1], [0, 0, 1, 1], [], []>} : vector<32x64xbf16>, vector<64x64xbf16>, vector<32x64xf32> -> vector<32x64xf32>
    %c0_12 = arith.constant 0 : index
    %c0_13 = arith.constant 0 : index
    %27 = vector.load %arg5[%c0_12, %c0_13] : memref<1x64xf32, #tpu.memory_space<vmem>>, vector<1x64xf32>
    %28 = vector.broadcast %27 : vector<1x64xf32> to vector<32x64xf32>
    %29 = arith.addf %26, %28 : vector<32x64xf32>
    %c0_14 = arith.constant 0 : index
    %c0_15 = arith.constant 0 : index
    %30 = vector.load %arg6[%c0_14, %c0_15] : memref<32x64xf32, #tpu.memory_space<vmem>>, vector<32x64xf32>
    tpu.vector_store %arg6[%c0_14, %c0_15], %29 {strides = array<i32>} : memref<32x64xf32, #tpu.memory_space<vmem>>, vector<32x64xf32>,
    return
  }
  func.func @transform_0(%arg0: i32) -> (i32, i32) {
    %c0_i32 = arith.constant 0 : i32
    %c0_i32_0 = arith.constant 0 : i32
    return %arg0, %c0_i32 : i32, i32
  }
  func.func @transform_1(%arg0: i32) -> (i32, i32) {
    %c0_i32 = arith.constant 0 : i32
    %c0_i32_0 = arith.constant 0 : i32
    %c0_i32_1 = arith.constant 0 : i32
    return %c0_i32, %c0_i32_0 : i32, i32
  }
  func.func @transform_2(%arg0: i32) -> (i32, i32) {
    %c0_i32 = arith.constant 0 : i32
    %c0_i32_0 = arith.constant 0 : i32
    %c0_i32_1 = arith.constant 0 : i32
    return %c0_i32, %c0_i32_0 : i32, i32
  }
  func.func @transform_3(%arg0: i32) -> (i32, i32) {
    %c0_i32 = arith.constant 0 : i32
    %c0_i32_0 = arith.constant 0 : i32
    %c0_i32_1 = arith.constant 0 : i32
    return %c0_i32, %c0_i32_0 : i32, i32
  }
  func.func @transform_4(%arg0: i32) -> (i32, i32) {
    %c0_i32 = arith.constant 0 : i32
    %c0_i32_0 = arith.constant 0 : i32
    %c0_i32_1 = arith.constant 0 : i32
    return %c0_i32, %c0_i32_0 : i32, i32
  }
  func.func @transform_5(%arg0: i32) -> (i32, i32) {
    %c0_i32 = arith.constant 0 : i32
    %c0_i32_0 = arith.constant 0 : i32
    return %arg0, %c0_i32 : i32, i32
  }
}

module attributes {stable_mosaic.version = 11 : i64} {
  func.func @_mha_kernel(%arg0: i32, %arg1: memref<32x8x8xf32, #tpu.memory_space<vmem>>, %arg2: memref<32x8x8xf32, #tpu.memory_space<vmem>>, %arg3: memref<32x8x8xf32, #tpu.memory_space<vmem>>, %arg4: memref<32x8x8xf32, #tpu.memory_space<vmem>>) attributes {dimension_semantics = [#tpu.dimension_semantics<parallel>], iteration_bounds = array<i64: 2>, scalar_prefetch = 0 : i64, scratch_operands = 0 : i64, tpu.core_type = #tpu.core_type<tc>, window_params = [{transform_indices = @transform_0, window_bounds = array<i64: 32, 8, 8>}, {transform_indices = @transform_1, window_bounds = array<i64: 32, 8, 8>}, {transform_indices = @transform_2, window_bounds = array<i64: 32, 8, 8>}, {transform_indices = @transform_3, window_bounds = array<i64: 32, 8, 8>}]} {
    %c0 = arith.constant 0 : index
    %c0_0 = arith.constant 0 : index
    %c0_1 = arith.constant 0 : index
    %0 = vector.load %arg1[%c0, %c0_0, %c0_1] : memref<32x8x8xf32, #tpu.memory_space<vmem>>, vector<32x8x8xf32>
    %1 = arith.truncf %0 : vector<32x8x8xf32> to vector<32x8x8xbf16>
    %c0_2 = arith.constant 0 : index
    %c0_3 = arith.constant 0 : index
    %c0_4 = arith.constant 0 : index
    %2 = vector.load %arg2[%c0_2, %c0_3, %c0_4] : memref<32x8x8xf32, #tpu.memory_space<vmem>>, vector<32x8x8xf32>
    %3 = arith.truncf %2 : vector<32x8x8xf32> to vector<32x8x8xbf16>
    %c0_5 = arith.constant 0 : index
    %c0_6 = arith.constant 0 : index
    %c0_7 = arith.constant 0 : index
    %4 = vector.load %arg3[%c0_5, %c0_6, %c0_7] : memref<32x8x8xf32, #tpu.memory_space<vmem>>, vector<32x8x8xf32>
    %5 = arith.truncf %4 : vector<32x8x8xf32> to vector<32x8x8xbf16>
    "tpu.trace_start"() <{level = 10 : i32, message = "bld,bsd->bls"}> : () -> ()
    %cst = arith.constant dense<0.000000e+00> : vector<32x8x8xf32>
    %6 = tpu.matmul %1, %3, %cst {dimension_numbers = #tpu.dot_dimension_numbers<[2], [2], [1], [1], [0, 0, 0, 1, 1, 1], [0], [0]>} : vector<32x8x8xbf16>, vector<32x8x8xbf16>, vector<32x8x8xf32> -> vector<32x8x8xf32>
    "tpu.trace_stop"() : () -> ()
    %cst_8 = arith.constant 0.353553385 : f32
    %7 = vector.broadcast %cst_8 : f32 to vector<32x8x8xf32>
    %8 = arith.mulf %6, %7 : vector<32x8x8xf32>
    %cst_9 = arith.constant dense<0xFF800000> : vector<32x8xf32>
    %9 = vector.multi_reduction <maximumf>, %8, %cst_9 [2] : vector<32x8x8xf32> to vector<32x8xf32>
    %10 = vector.shape_cast %9 : vector<32x8xf32> to vector<32x8x1xf32>
    %11 = vector.broadcast %10 : vector<32x8x1xf32> to vector<32x8x8xf32>
    %12 = arith.subf %8, %11 : vector<32x8x8xf32>
    %13 = math.exp %12 : vector<32x8x8xf32>
    %cst_10 = arith.constant dense<0.000000e+00> : vector<32x8xf32>
    %14 = vector.multi_reduction <add>, %13, %cst_10 [2] : vector<32x8x8xf32> to vector<32x8xf32>
    %15 = vector.shape_cast %14 : vector<32x8xf32> to vector<32x8x1xf32>
    %16 = tpu.reciprocal %15 {approx = true} : vector<32x8x1xf32> -> vector<32x8x1xf32>
    %17 = vector.broadcast %16 : vector<32x8x1xf32> to vector<32x8x8xf32>
    %18 = arith.mulf %13, %17 : vector<32x8x8xf32>
    %19 = arith.truncf %18 : vector<32x8x8xf32> to vector<32x8x8xbf16>
    "tpu.trace_start"() <{level = 10 : i32, message = "bls,bsd->bld"}> : () -> ()
    %cst_11 = arith.constant dense<0.000000e+00> : vector<32x8x8xf32>
    %20 = tpu.matmul %19, %5, %cst_11 {dimension_numbers = #tpu.dot_dimension_numbers<[2], [1], [1], [2], [0, 0, 0, 1, 1, 2], [0], [0]>} : vector<32x8x8xbf16>, vector<32x8x8xbf16>, vector<32x8x8xf32> -> vector<32x8x8xf32>
    "tpu.trace_stop"() : () -> ()
    %c0_12 = arith.constant 0 : index
    %c0_13 = arith.constant 0 : index
    %c0_14 = arith.constant 0 : index
    %21 = vector.load %arg4[%c0_12, %c0_13, %c0_14] : memref<32x8x8xf32, #tpu.memory_space<vmem>>, vector<32x8x8xf32>
    tpu.vector_store %arg4[%c0_12, %c0_13, %c0_14], %20 {strides = array<i32>} : memref<32x8x8xf32, #tpu.memory_space<vmem>>, vector<32x8x8xf32>,
    return
  }
  func.func @transform_0(%arg0: i32) -> (i32, i32, i32) {
    %c0_i32 = arith.constant 0 : i32
    %c0_i32_0 = arith.constant 0 : i32
    %c0_i32_1 = arith.constant 0 : i32
    return %arg0, %c0_i32, %c0_i32_0 : i32, i32, i32
  }
  func.func @transform_1(%arg0: i32) -> (i32, i32, i32) {
    %c0_i32 = arith.constant 0 : i32
    %c0_i32_0 = arith.constant 0 : i32
    %c0_i32_1 = arith.constant 0 : i32
    return %arg0, %c0_i32, %c0_i32_0 : i32, i32, i32
  }
  func.func @transform_2(%arg0: i32) -> (i32, i32, i32) {
    %c0_i32 = arith.constant 0 : i32
    %c0_i32_0 = arith.constant 0 : i32
    %c0_i32_1 = arith.constant 0 : i32
    return %arg0, %c0_i32, %c0_i32_0 : i32, i32, i32
  }
  func.func @transform_3(%arg0: i32) -> (i32, i32, i32) {
    %c0_i32 = arith.constant 0 : i32
    %c0_i32_0 = arith.constant 0 : i32
    %c0_i32_1 = arith.constant 0 : i32
    return %arg0, %c0_i32, %c0_i32_0 : i32, i32, i32
  }
}

module attributes {stable_mosaic.version = 11 : i64} {
  func.func @_attn_mlp_kernel(%arg0: i32, %arg1: memref<32x64xf32, #tpu.memory_space<vmem>>, %arg2: memref<32x64xf32, #tpu.memory_space<vmem>>, %arg3: memref<64x64xf32, #tpu.memory_space<vmem>>, %arg4: memref<1x64xf32, #tpu.memory_space<vmem>>, %arg5: memref<1x64xf32, #tpu.memory_space<vmem>>, %arg6: memref<1x64xf32, #tpu.memory_space<vmem>>, %arg7: memref<64x256xf32, #tpu.memory_space<vmem>>, %arg8: memref<1x256xf32, #tpu.memory_space<vmem>>, %arg9: memref<256x64xf32, #tpu.memory_space<vmem>>, %arg10: memref<1x64xf32, #tpu.memory_space<vmem>>, %arg11: memref<32x64xf32, #tpu.memory_space<vmem>>) attributes {dimension_semantics = [#tpu.dimension_semantics<parallel>], iteration_bounds = array<i64: 2>, scalar_prefetch = 0 : i64, scratch_operands = 0 : i64, tpu.core_type = #tpu.core_type<tc>, window_params = [{transform_indices = @transform_0, window_bounds = array<i64: 32, 64>}, {transform_indices = @transform_1, window_bounds = array<i64: 32, 64>}, {pipeline_mode = #tpu.pipeline_mode<synchronous>, transform_indices = @transform_2, window_bounds = array<i64: 64, 64>}, {pipeline_mode = #tpu.pipeline_mode<synchronous>, transform_indices = @transform_3, window_bounds = array<i64: 1, 64>}, {pipeline_mode = #tpu.pipeline_mode<synchronous>, transform_indices = @transform_4, window_bounds = array<i64: 1, 64>}, {pipeline_mode = #tpu.pipeline_mode<synchronous>, transform_indices = @transform_5, window_bounds = array<i64: 1, 64>}, {pipeline_mode = #tpu.pipeline_mode<synchronous>, transform_indices = @transform_6, window_bounds = array<i64: 64, 256>}, {pipeline_mode = #tpu.pipeline_mode<synchronous>, transform_indices = @transform_7, window_bounds = array<i64: 1, 256>}, {pipeline_mode = #tpu.pipeline_mode<synchronous>, transform_indices = @transform_8, window_bounds = array<i64: 256, 64>}, {pipeline_mode = #tpu.pipeline_mode<synchronous>, transform_indices = @transform_9, window_bounds = array<i64: 1, 64>}, {transform_indices = @transform_10, window_bounds = array<i64: 32, 64>}]} {
    %c0 = arith.constant 0 : index
    %c0_0 = arith.constant 0 : index
    %0 = vector.load %arg1[%c0, %c0_0] : memref<32x64xf32, #tpu.memory_space<vmem>>, vector<32x64xf32>
    %c0_1 = arith.constant 0 : index
    %c0_2 = arith.constant 0 : index
    %1 = vector.load %arg2[%c0_1, %c0_2] : memref<32x64xf32, #tpu.memory_space<vmem>>, vector<32x64xf32>
    %2 = arith.truncf %1 : vector<32x64xf32> to vector<32x64xbf16>
    %c0_3 = arith.constant 0 : index
    %c0_4 = arith.constant 0 : index
    %3 = vector.load %arg3[%c0_3, %c0_4] : memref<64x64xf32, #tpu.memory_space<vmem>>, vector<64x64xf32>
    %4 = arith.truncf %3 : vector<64x64xf32> to vector<64x64xbf16>
    %cst = arith.constant dense<0.000000e+00> : vector<32x64xf32>
    %5 = tpu.matmul %2, %4, %cst {dimension_numbers = #tpu.dot_dimension_numbers<[1], [0], [0], [1], [0, 0, 1, 1], [], []>} : vector<32x64xbf16>, vector<64x64xbf16>, vector<32x64xf32> -> vector<32x64xf32>
    %c0_5 = arith.constant 0 : index
    %c0_6 = arith.constant 0 : index
    %6 = vector.load %arg4[%c0_5, %c0_6] : memref<1x64xf32, #tpu.memory_space<vmem>>, vector<1x64xf32>
    %7 = vector.broadcast %6 : vector<1x64xf32> to vector<32x64xf32>
    %8 = arith.addf %5, %7 : vector<32x64xf32>
    %9 = arith.addf %0, %8 : vector<32x64xf32>
    %cst_7 = arith.constant dense<0.000000e+00> : vector<32xf32>
    %10 = vector.multi_reduction <add>, %9, %cst_7 [1] : vector<32x64xf32> to vector<32xf32>
    %11 = vector.shape_cast %10 : vector<32xf32> to vector<32x1xf32>
    %cst_8 = arith.constant 6.400000e+01 : f32
    %12 = vector.broadcast %cst_8 : f32 to vector<32x1xf32>
    %13 = arith.divf %11, %12 : vector<32x1xf32>
    %14 = vector.broadcast %13 : vector<32x1xf32> to vector<32x64xf32>
    %15 = arith.subf %9, %14 : vector<32x64xf32>
    %16 = arith.mulf %15, %15 : vector<32x64xf32>
    %cst_9 = arith.constant dense<0.000000e+00> : vector<32xf32>
    %17 = vector.multi_reduction <add>, %16, %cst_9 [1] : vector<32x64xf32> to vector<32xf32>
    %18 = vector.shape_cast %17 : vector<32xf32> to vector<32x1xf32>
    %cst_10 = arith.constant 6.400000e+01 : f32
    %19 = vector.broadcast %cst_10 : f32 to vector<32x1xf32>
    %20 = arith.divf %18, %19 : vector<32x1xf32>
    %cst_11 = arith.constant 9.99999974E-6 : f32
    %21 = vector.broadcast %cst_11 : f32 to vector<32x1xf32>
    %22 = arith.addf %20, %21 : vector<32x1xf32>
    %23 = math.rsqrt %22 : vector<32x1xf32>
    %24 = vector.broadcast %23 : vector<32x1xf32> to vector<32x64xf32>
    %25 = arith.mulf %15, %24 : vector<32x64xf32>
    %c0_12 = arith.constant 0 : index
    %c0_13 = arith.constant 0 : index
    %26 = vector.load %arg5[%c0_12, %c0_13] : memref<1x64xf32, #tpu.memory_space<vmem>>, vector<1x64xf32>
    %27 = vector.broadcast %26 : vector<1x64xf32> to vector<32x64xf32>
    %28 = arith.mulf %25, %27 : vector<32x64xf32>
    %c0_14 = arith.constant 0 : index
    %c0_15 = arith.constant 0 : index
    %29 = vector.load %arg6[%c0_14, %c0_15] : memref<1x64xf32, #tpu.memory_space<vmem>>, vector<1x64xf32>
    %30 = vector.broadcast %29 : vector<1x64xf32> to vector<32x64xf32>
    %31 = arith.addf %28, %30 : vector<32x64xf32>
    %32 = arith.truncf %31 : vector<32x64xf32> to vector<32x64xbf16>
    %c0_16 = arith.constant 0 : index
    %c0_17 = arith.constant 0 : index
    %33 = vector.load %arg7[%c0_16, %c0_17] : memref<64x256xf32, #tpu.memory_space<vmem>>, vector<64x256xf32>
    %34 = arith.truncf %33 : vector<64x256xf32> to vector<64x256xbf16>
    %cst_18 = arith.constant dense<0.000000e+00> : vector<32x256xf32>
    %35 = tpu.matmul %32, %34, %cst_18 {dimension_numbers = #tpu.dot_dimension_numbers<[1], [0], [0], [1], [0, 0, 1, 1], [], []>} : vector<32x64xbf16>, vector<64x256xbf16>, vector<32x256xf32> -> vector<32x256xf32>
    %c0_19 = arith.constant 0 : index
    %c0_20 = arith.constant 0 : index
    %36 = vector.load %arg8[%c0_19, %c0_20] : memref<1x256xf32, #tpu.memory_space<vmem>>, vector<1x256xf32>
    %37 = vector.broadcast %36 : vector<1x256xf32> to vector<32x256xf32>
    %38 = arith.addf %35, %37 : vector<32x256xf32>
    %cst_21 = arith.constant 5.000000e-01 : f32
    %39 = vector.broadcast %cst_21 : f32 to vector<32x256xf32>
    %40 = arith.mulf %39, %38 : vector<32x256xf32>
    %cst_22 = arith.constant 0.707106769 : f32
    %41 = vector.broadcast %cst_22 : f32 to vector<32x256xf32>
    %42 = arith.mulf %38, %41 : vector<32x256xf32>
    %43 = math.absf %42 : vector<32x256xf32>
    %cst_23 = arith.constant 0.327591091 : f32
    %44 = vector.broadcast %cst_23 : f32 to vector<32x256xf32>
    %45 = arith.mulf %44, %43 : vector<32x256xf32>
    %cst_24 = arith.constant 1.000000e+00 : f32
    %46 = vector.broadcast %cst_24 : f32 to vector<32x256xf32>
    %47 = arith.addf %46, %45 : vector<32x256xf32>
    %cst_25 = arith.constant 1.000000e+00 : f32
    %48 = vector.broadcast %cst_25 : f32 to vector<32x256xf32>
    %49 = arith.divf %48, %47 : vector<32x256xf32>
    %cst_26 = arith.constant 1.06140542 : f32
    %50 = vector.broadcast %cst_26 : f32 to vector<32x256xf32>
    %51 = arith.mulf %50, %49 : vector<32x256xf32>
    %cst_27 = arith.constant -1.45315206 : f32
    %52 = vector.broadcast %cst_27 : f32 to vector<32x256xf32>
    %53 = arith.addf %51, %52 : vector<32x256xf32>
    %54 = arith.mulf %53, %49 : vector<32x256xf32>
    %cst_28 = arith.constant 1.42141378 : f32
    %55 = vector.broadcast %cst_28 : f32 to vector<32x256xf32>
    %56 = arith.addf %54, %55 : vector<32x256xf32>
    %57 = arith.mulf %56, %49 : vector<32x256xf32>
    %cst_29 = arith.constant -0.284496725 : f32
    %58 = vector.broadcast %cst_29 : f32 to vector<32x256xf32>
    %59 = arith.addf %57, %58 : vector<32x256xf32>
    %60 = arith.mulf %59, %49 : vector<32x256xf32>
    %cst_30 = arith.constant 0.254829586 : f32
    %61 = vector.broadcast %cst_30 : f32 to vector<32x256xf32>
    %62 = arith.addf %60, %61 : vector<32x256xf32>
    %63 = arith.mulf %62, %49 : vector<32x256xf32>
    %cst_31 = arith.constant 0.000000e+00 : f32
    %64 = vector.broadcast %cst_31 : f32 to vector<32x256xf32>
    %65 = arith.subf %64, %43 : vector<32x256xf32>
    %66 = arith.mulf %65, %43 : vector<32x256xf32>
    %67 = math.exp %66 : vector<32x256xf32>
    %68 = arith.mulf %63, %67 : vector<32x256xf32>
    %cst_32 = arith.constant 1.000000e+00 : f32
    %69 = vector.broadcast %cst_32 : f32 to vector<32x256xf32>
    %70 = arith.subf %69, %68 : vector<32x256xf32>
    %cst_33 = arith.constant 0.000000e+00 : f32
    %71 = vector.broadcast %cst_33 : f32 to vector<32x256xf32>
    %72 = arith.cmpf oge, %42, %71 : vector<32x256xf32>
    %cst_34 = arith.constant 0.000000e+00 : f32
    %73 = vector.broadcast %cst_34 : f32 to vector<32x256xf32>
    %74 = arith.subf %73, %70 : vector<32x256xf32>
    %75 = arith.select %72, %70, %74 : vector<32x256xi1>, vector<32x256xf32>
    %cst_35 = arith.constant 1.000000e+00 : f32
    %76 = vector.broadcast %cst_35 : f32 to vector<32x256xf32>
    %77 = arith.addf %76, %75 : vector<32x256xf32>
    %78 = arith.mulf %40, %77 : vector<32x256xf32>
    %79 = arith.truncf %78 : vector<32x256xf32> to vector<32x256xbf16>
    %c0_36 = arith.constant 0 : index
    %c0_37 = arith.constant 0 : index
    %80 = vector.load %arg9[%c0_36, %c0_37] : memref<256x64xf32, #tpu.memory_space<vmem>>, vector<256x64xf32>
    %81 = arith.truncf %80 : vector<256x64xf32> to vector<256x64xbf16>
    %cst_38 = arith.constant dense<0.000000e+00> : vector<32x64xf32>
    %82 = tpu.matmul %79, %81, %cst_38 {dimension_numbers = #tpu.dot_dimension_numbers<[1], [0], [0], [1], [0, 0, 1, 1], [], []>} : vector<32x256xbf16>, vector<256x64xbf16>, vector<32x64xf32> -> vector<32x64xf32>
    %c0_39 = arith.constant 0 : index
    %c0_40 = arith.constant 0 : index
    %83 = vector.load %arg10[%c0_39, %c0_40] : memref<1x64xf32, #tpu.memory_space<vmem>>, vector<1x64xf32>
    %84 = vector.broadcast %83 : vector<1x64xf32> to vector<32x64xf32>
    %85 = arith.addf %82, %84 : vector<32x64xf32>
    %86 = arith.addf %9, %85 : vector<32x64xf32>
    %c0_41 = arith.constant 0 : index
    %c0_42 = arith.constant 0 : index
    %87 = vector.load %arg11[%c0_41, %c0_42] : memref<32x64xf32, #tpu.memory_space<vmem>>, vector<32x64xf32>
    tpu.vector_store %arg11[%c0_41, %c0_42], %86 {strides = array<i32>} : memref<32x64xf32, #tpu.memory_space<vmem>>, vector<32x64xf32>,
    return
  }
  func.func @transform_0(%arg0: i32) -> (i32, i32) {
    %c0_i32 = arith.constant 0 : i32
    %c0_i32_0 = arith.constant 0 : i32
    return %arg0, %c0_i32 : i32, i32
  }
  func.func @transform_1(%arg0: i32) -> (i32, i32) {
    %c0_i32 = arith.constant 0 : i32
    %c0_i32_0 = arith.constant 0 : i32
    return %arg0, %c0_i32 : i32, i32
  }
  func.func @transform_2(%arg0: i32) -> (i32, i32) {
    %c0_i32 = arith.constant 0 : i32
    %c0_i32_0 = arith.constant 0 : i32
    %c0_i32_1 = arith.constant 0 : i32
    return %c0_i32, %c0_i32_0 : i32, i32
  }
  func.func @transform_3(%arg0: i32) -> (i32, i32) {
    %c0_i32 = arith.constant 0 : i32
    %c0_i32_0 = arith.constant 0 : i32
    %c0_i32_1 = arith.constant 0 : i32
    return %c0_i32, %c0_i32_0 : i32, i32
  }
  func.func @transform_4(%arg0: i32) -> (i32, i32) {
    %c0_i32 = arith.constant 0 : i32
    %c0_i32_0 = arith.constant 0 : i32
    %c0_i32_1 = arith.constant 0 : i32
    return %c0_i32, %c0_i32_0 : i32, i32
  }
  func.func @transform_5(%arg0: i32) -> (i32, i32) {
    %c0_i32 = arith.constant 0 : i32
    %c0_i32_0 = arith.constant 0 : i32
    %c0_i32_1 = arith.constant 0 : i32
    return %c0_i32, %c0_i32_0 : i32, i32
  }
  func.func @transform_6(%arg0: i32) -> (i32, i32) {
    %c0_i32 = arith.constant 0 : i32
    %c0_i32_0 = arith.constant 0 : i32
    %c0_i32_1 = arith.constant 0 : i32
    return %c0_i32, %c0_i32_0 : i32, i32
  }
  func.func @transform_7(%arg0: i32) -> (i32, i32) {
    %c0_i32 = arith.constant 0 : i32
    %c0_i32_0 = arith.constant 0 : i32
    %c0_i32_1 = arith.constant 0 : i32
    return %c0_i32, %c0_i32_0 : i32, i32
  }
  func.func @transform_8(%arg0: i32) -> (i32, i32) {
    %c0_i32 = arith.constant 0 : i32
    %c0_i32_0 = arith.constant 0 : i32
    %c0_i32_1 = arith.constant 0 : i32
    return %c0_i32, %c0_i32_0 : i32, i32
  }
  func.func @transform_9(%arg0: i32) -> (i32, i32) {
    %c0_i32 = arith.constant 0 : i32
    %c0_i32_0 = arith.constant 0 : i32
    %c0_i32_1 = arith.constant 0 : i32
    return %c0_i32, %c0_i32_0 : i32, i32
  }
  func.func @transform_10(%arg0: i32) -> (i32, i32) {
    %c0_i32 = arith.constant 0 : i32
    %c0_i32_0 = arith.constant 0 : i32
    return %arg0, %c0_i32 : i32, i32
  }
}

module attributes {stable_mosaic.version = 11 : i64} {
  func.func @_value_mlp_kernel(%arg0: i32, %arg1: memref<2x64xf32, #tpu.memory_space<vmem>>, %arg2: memref<64x32xf32, #tpu.memory_space<vmem>>, %arg3: memref<1x32xf32, #tpu.memory_space<vmem>>, %arg4: memref<32x32xf32, #tpu.memory_space<vmem>>, %arg5: memref<1x32xf32, #tpu.memory_space<vmem>>, %arg6: memref<32x32xf32, #tpu.memory_space<vmem>>, %arg7: memref<1x32xf32, #tpu.memory_space<vmem>>, %arg8: memref<32x1xf32, #tpu.memory_space<vmem>>, %arg9: memref<1x1xf32, #tpu.memory_space<vmem>>, %arg10: memref<2x1xf32, #tpu.memory_space<vmem>>) attributes {dimension_semantics = [#tpu.dimension_semantics<arbitrary>], iteration_bounds = array<i64: 1>, scalar_prefetch = 0 : i64, scratch_operands = 0 : i64, tpu.core_type = #tpu.core_type<tc>, window_params = [{pipeline_mode = #tpu.pipeline_mode<synchronous>, transform_indices = @transform_0, window_bounds = array<i64: 2, 64>}, {pipeline_mode = #tpu.pipeline_mode<synchronous>, transform_indices = @transform_1, window_bounds = array<i64: 64, 32>}, {pipeline_mode = #tpu.pipeline_mode<synchronous>, transform_indices = @transform_2, window_bounds = array<i64: 1, 32>}, {pipeline_mode = #tpu.pipeline_mode<synchronous>, transform_indices = @transform_3, window_bounds = array<i64: 32, 32>}, {pipeline_mode = #tpu.pipeline_mode<synchronous>, transform_indices = @transform_4, window_bounds = array<i64: 1, 32>}, {pipeline_mode = #tpu.pipeline_mode<synchronous>, transform_indices = @transform_5, window_bounds = array<i64: 32, 32>}, {pipeline_mode = #tpu.pipeline_mode<synchronous>, transform_indices = @transform_6, window_bounds = array<i64: 1, 32>}, {pipeline_mode = #tpu.pipeline_mode<synchronous>, transform_indices = @transform_7, window_bounds = array<i64: 32, 1>}, {pipeline_mode = #tpu.pipeline_mode<synchronous>, transform_indices = @transform_8, window_bounds = array<i64: 1, 1>}, {pipeline_mode = #tpu.pipeline_mode<synchronous>, transform_indices = @transform_9, window_bounds = array<i64: 2, 1>}]} {
    %c0 = arith.constant 0 : index
    %c0_0 = arith.constant 0 : index
    %0 = vector.load %arg1[%c0, %c0_0] : memref<2x64xf32, #tpu.memory_space<vmem>>, vector<2x64xf32>
    %1 = arith.truncf %0 : vector<2x64xf32> to vector<2x64xbf16>
    %c0_1 = arith.constant 0 : index
    %c0_2 = arith.constant 0 : index
    %2 = vector.load %arg2[%c0_1, %c0_2] : memref<64x32xf32, #tpu.memory_space<vmem>>, vector<64x32xf32>
    %3 = arith.truncf %2 : vector<64x32xf32> to vector<64x32xbf16>
    %cst = arith.constant dense<0.000000e+00> : vector<2x32xf32>
    %4 = tpu.matmul %1, %3, %cst {dimension_numbers = #tpu.dot_dimension_numbers<[1], [0], [0], [1], [0, 0, 1, 1], [], []>} : vector<2x64xbf16>, vector<64x32xbf16>, vector<2x32xf32> -> vector<2x32xf32>
    %c0_3 = arith.constant 0 : index
    %c0_4 = arith.constant 0 : index
    %5 = vector.load %arg3[%c0_3, %c0_4] : memref<1x32xf32, #tpu.memory_space<vmem>>, vector<1x32xf32>
    %6 = vector.broadcast %5 : vector<1x32xf32> to vector<2x32xf32>
    %7 = arith.addf %4, %6 : vector<2x32xf32>
    %cst_5 = arith.constant 0.000000e+00 : f32
    %8 = vector.broadcast %cst_5 : f32 to vector<2x32xf32>
    %9 = arith.maximumf %7, %8 : vector<2x32xf32>
    %10 = arith.truncf %9 : vector<2x32xf32> to vector<2x32xbf16>
    %c0_6 = arith.constant 0 : index
    %c0_7 = arith.constant 0 : index
    %11 = vector.load %arg4[%c0_6, %c0_7] : memref<32x32xf32, #tpu.memory_space<vmem>>, vector<32x32xf32>
    %12 = arith.truncf %11 : vector<32x32xf32> to vector<32x32xbf16>
    %cst_8 = arith.constant dense<0.000000e+00> : vector<2x32xf32>
    %13 = tpu.matmul %10, %12, %cst_8 {dimension_numbers = #tpu.dot_dimension_numbers<[1], [0], [0], [1], [0, 0, 1, 1], [], []>} : vector<2x32xbf16>, vector<32x32xbf16>, vector<2x32xf32> -> vector<2x32xf32>
    %c0_9 = arith.constant 0 : index
    %c0_10 = arith.constant 0 : index
    %14 = vector.load %arg5[%c0_9, %c0_10] : memref<1x32xf32, #tpu.memory_space<vmem>>, vector<1x32xf32>
    %15 = vector.broadcast %14 : vector<1x32xf32> to vector<2x32xf32>
    %16 = arith.addf %13, %15 : vector<2x32xf32>
    %cst_11 = arith.constant 0.000000e+00 : f32
    %17 = vector.broadcast %cst_11 : f32 to vector<2x32xf32>
    %18 = arith.maximumf %16, %17 : vector<2x32xf32>
    %19 = arith.truncf %18 : vector<2x32xf32> to vector<2x32xbf16>
    %c0_12 = arith.constant 0 : index
    %c0_13 = arith.constant 0 : index
    %20 = vector.load %arg6[%c0_12, %c0_13] : memref<32x32xf32, #tpu.memory_space<vmem>>, vector<32x32xf32>
    %21 = arith.truncf %20 : vector<32x32xf32> to vector<32x32xbf16>
    %cst_14 = arith.constant dense<0.000000e+00> : vector<2x32xf32>
    %22 = tpu.matmul %19, %21, %cst_14 {dimension_numbers = #tpu.dot_dimension_numbers<[1], [0], [0], [1], [0, 0, 1, 1], [], []>} : vector<2x32xbf16>, vector<32x32xbf16>, vector<2x32xf32> -> vector<2x32xf32>
    %c0_15 = arith.constant 0 : index
    %c0_16 = arith.constant 0 : index
    %23 = vector.load %arg7[%c0_15, %c0_16] : memref<1x32xf32, #tpu.memory_space<vmem>>, vector<1x32xf32>
    %24 = vector.broadcast %23 : vector<1x32xf32> to vector<2x32xf32>
    %25 = arith.addf %22, %24 : vector<2x32xf32>
    %cst_17 = arith.constant 0.000000e+00 : f32
    %26 = vector.broadcast %cst_17 : f32 to vector<2x32xf32>
    %27 = arith.maximumf %25, %26 : vector<2x32xf32>
    %28 = arith.truncf %27 : vector<2x32xf32> to vector<2x32xbf16>
    %c0_18 = arith.constant 0 : index
    %c0_19 = arith.constant 0 : index
    %29 = vector.load %arg8[%c0_18, %c0_19] : memref<32x1xf32, #tpu.memory_space<vmem>>, vector<32x1xf32>
    %30 = arith.truncf %29 : vector<32x1xf32> to vector<32x1xbf16>
    %cst_20 = arith.constant dense<0.000000e+00> : vector<2x1xf32>
    %31 = tpu.matmul %28, %30, %cst_20 {dimension_numbers = #tpu.dot_dimension_numbers<[1], [0], [0], [1], [0, 0, 1, 1], [], []>} : vector<2x32xbf16>, vector<32x1xbf16>, vector<2x1xf32> -> vector<2x1xf32>
    %c0_21 = arith.constant 0 : index
    %c0_22 = arith.constant 0 : index
    %32 = vector.load %arg9[%c0_21, %c0_22] : memref<1x1xf32, #tpu.memory_space<vmem>>, vector<1x1xf32>
    %33 = vector.broadcast %32 : vector<1x1xf32> to vector<2x1xf32>
    %34 = arith.addf %31, %33 : vector<2x1xf32>
    %c0_23 = arith.constant 0 : index
    %c0_24 = arith.constant 0 : index
    %35 = vector.load %arg10[%c0_23, %c0_24] : memref<2x1xf32, #tpu.memory_space<vmem>>, vector<2x1xf32>
    tpu.vector_store %arg10[%c0_23, %c0_24], %34 {strides = array<i32>} : memref<2x1xf32, #tpu.memory_space<vmem>>, vector<2x1xf32>,
    return
  }
  func.func @transform_0(%arg0: i32) -> (i32, i32) {
    %c0_i32 = arith.constant 0 : i32
    %c0_i32_0 = arith.constant 0 : i32
    %c0_i32_1 = arith.constant 0 : i32
    return %c0_i32, %c0_i32_0 : i32, i32
  }
  func.func @transform_1(%arg0: i32) -> (i32, i32) {
    %c0_i32 = arith.constant 0 : i32
    %c0_i32_0 = arith.constant 0 : i32
    %c0_i32_1 = arith.constant 0 : i32
    return %c0_i32, %c0_i32_0 : i32, i32
  }
  func.func @transform_2(%arg0: i32) -> (i32, i32) {
    %c0_i32 = arith.constant 0 : i32
    %c0_i32_0 = arith.constant 0 : i32
    %c0_i32_1 = arith.constant 0 : i32
    return %c0_i32, %c0_i32_0 : i32, i32
  }
  func.func @transform_3(%arg0: i32) -> (i32, i32) {
    %c0_i32 = arith.constant 0 : i32
    %c0_i32_0 = arith.constant 0 : i32
    %c0_i32_1 = arith.constant 0 : i32
    return %c0_i32, %c0_i32_0 : i32, i32
  }
  func.func @transform_4(%arg0: i32) -> (i32, i32) {
    %c0_i32 = arith.constant 0 : i32
    %c0_i32_0 = arith.constant 0 : i32
    %c0_i32_1 = arith.constant 0 : i32
    return %c0_i32, %c0_i32_0 : i32, i32
  }
  func.func @transform_5(%arg0: i32) -> (i32, i32) {
    %c0_i32 = arith.constant 0 : i32
    %c0_i32_0 = arith.constant 0 : i32
    %c0_i32_1 = arith.constant 0 : i32
    return %c0_i32, %c0_i32_0 : i32, i32
  }
  func.func @transform_6(%arg0: i32) -> (i32, i32) {
    %c0_i32 = arith.constant 0 : i32
    %c0_i32_0 = arith.constant 0 : i32
    %c0_i32_1 = arith.constant 0 : i32
    return %c0_i32, %c0_i32_0 : i32, i32
  }
  func.func @transform_7(%arg0: i32) -> (i32, i32) {
    %c0_i32 = arith.constant 0 : i32
    %c0_i32_0 = arith.constant 0 : i32
    %c0_i32_1 = arith.constant 0 : i32
    return %c0_i32, %c0_i32_0 : i32, i32
  }
  func.func @transform_8(%arg0: i32) -> (i32, i32) {
    %c0_i32 = arith.constant 0 : i32
    %c0_i32_0 = arith.constant 0 : i32
    %c0_i32_1 = arith.constant 0 : i32
    return %c0_i32, %c0_i32_0 : i32, i32
  }
  func.func @transform_9(%arg0: i32) -> (i32, i32) {
    %c0_i32 = arith.constant 0 : i32
    %c0_i32_0 = arith.constant 0 : i32
    %c0_i32_1 = arith.constant 0 : i32
    return %c0_i32, %c0_i32_0 : i32, i32
  }
}

module attributes {stable_mosaic.version = 11 : i64} {
  func.func @_ln_linear_kernel(%arg0: i32, %arg1: memref<48x64xf32, #tpu.memory_space<vmem>>, %arg2: memref<1x64xf32, #tpu.memory_space<vmem>>, %arg3: memref<1x64xf32, #tpu.memory_space<vmem>>, %arg4: memref<64x64xf32, #tpu.memory_space<vmem>>, %arg5: memref<1x64xf32, #tpu.memory_space<vmem>>, %arg6: memref<48x64xf32, #tpu.memory_space<vmem>>) attributes {dimension_semantics = [#tpu.dimension_semantics<parallel>], iteration_bounds = array<i64: 2>, scalar_prefetch = 0 : i64, scratch_operands = 0 : i64, tpu.core_type = #tpu.core_type<tc>, window_params = [{transform_indices = @transform_0, window_bounds = array<i64: 48, 64>}, {pipeline_mode = #tpu.pipeline_mode<synchronous>, transform_indices = @transform_1, window_bounds = array<i64: 1, 64>}, {pipeline_mode = #tpu.pipeline_mode<synchronous>, transform_indices = @transform_2, window_bounds = array<i64: 1, 64>}, {pipeline_mode = #tpu.pipeline_mode<synchronous>, transform_indices = @transform_3, window_bounds = array<i64: 64, 64>}, {pipeline_mode = #tpu.pipeline_mode<synchronous>, transform_indices = @transform_4, window_bounds = array<i64: 1, 64>}, {transform_indices = @transform_5, window_bounds = array<i64: 48, 64>}]} {
    %c0 = arith.constant 0 : index
    %c0_0 = arith.constant 0 : index
    %0 = vector.load %arg1[%c0, %c0_0] : memref<48x64xf32, #tpu.memory_space<vmem>>, vector<48x64xf32>
    %cst = arith.constant dense<0.000000e+00> : vector<48xf32>
    %1 = vector.multi_reduction <add>, %0, %cst [1] : vector<48x64xf32> to vector<48xf32>
    %2 = vector.shape_cast %1 : vector<48xf32> to vector<48x1xf32>
    %cst_1 = arith.constant 6.400000e+01 : f32
    %3 = vector.broadcast %cst_1 : f32 to vector<48x1xf32>
    %4 = arith.divf %2, %3 : vector<48x1xf32>
    %5 = vector.broadcast %4 : vector<48x1xf32> to vector<48x64xf32>
    %6 = arith.subf %0, %5 : vector<48x64xf32>
    %7 = arith.mulf %6, %6 : vector<48x64xf32>
    %cst_2 = arith.constant dense<0.000000e+00> : vector<48xf32>
    %8 = vector.multi_reduction <add>, %7, %cst_2 [1] : vector<48x64xf32> to vector<48xf32>
    %9 = vector.shape_cast %8 : vector<48xf32> to vector<48x1xf32>
    %cst_3 = arith.constant 6.400000e+01 : f32
    %10 = vector.broadcast %cst_3 : f32 to vector<48x1xf32>
    %11 = arith.divf %9, %10 : vector<48x1xf32>
    %cst_4 = arith.constant 9.99999974E-6 : f32
    %12 = vector.broadcast %cst_4 : f32 to vector<48x1xf32>
    %13 = arith.addf %11, %12 : vector<48x1xf32>
    %14 = math.rsqrt %13 : vector<48x1xf32>
    %15 = vector.broadcast %14 : vector<48x1xf32> to vector<48x64xf32>
    %16 = arith.mulf %6, %15 : vector<48x64xf32>
    %c0_5 = arith.constant 0 : index
    %c0_6 = arith.constant 0 : index
    %17 = vector.load %arg2[%c0_5, %c0_6] : memref<1x64xf32, #tpu.memory_space<vmem>>, vector<1x64xf32>
    %18 = vector.broadcast %17 : vector<1x64xf32> to vector<48x64xf32>
    %19 = arith.mulf %16, %18 : vector<48x64xf32>
    %c0_7 = arith.constant 0 : index
    %c0_8 = arith.constant 0 : index
    %20 = vector.load %arg3[%c0_7, %c0_8] : memref<1x64xf32, #tpu.memory_space<vmem>>, vector<1x64xf32>
    %21 = vector.broadcast %20 : vector<1x64xf32> to vector<48x64xf32>
    %22 = arith.addf %19, %21 : vector<48x64xf32>
    %23 = arith.truncf %22 : vector<48x64xf32> to vector<48x64xbf16>
    %c0_9 = arith.constant 0 : index
    %c0_10 = arith.constant 0 : index
    %24 = vector.load %arg4[%c0_9, %c0_10] : memref<64x64xf32, #tpu.memory_space<vmem>>, vector<64x64xf32>
    %25 = arith.truncf %24 : vector<64x64xf32> to vector<64x64xbf16>
    %cst_11 = arith.constant dense<0.000000e+00> : vector<48x64xf32>
    %26 = tpu.matmul %23, %25, %cst_11 {dimension_numbers = #tpu.dot_dimension_numbers<[1], [0], [0], [1], [0, 0, 1, 1], [], []>} : vector<48x64xbf16>, vector<64x64xbf16>, vector<48x64xf32> -> vector<48x64xf32>
    %c0_12 = arith.constant 0 : index
    %c0_13 = arith.constant 0 : index
    %27 = vector.load %arg5[%c0_12, %c0_13] : memref<1x64xf32, #tpu.memory_space<vmem>>, vector<1x64xf32>
    %28 = vector.broadcast %27 : vector<1x64xf32> to vector<48x64xf32>
    %29 = arith.addf %26, %28 : vector<48x64xf32>
    %c0_14 = arith.constant 0 : index
    %c0_15 = arith.constant 0 : index
    %30 = vector.load %arg6[%c0_14, %c0_15] : memref<48x64xf32, #tpu.memory_space<vmem>>, vector<48x64xf32>
    tpu.vector_store %arg6[%c0_14, %c0_15], %29 {strides = array<i32>} : memref<48x64xf32, #tpu.memory_space<vmem>>, vector<48x64xf32>,
    return
  }
  func.func @transform_0(%arg0: i32) -> (i32, i32) {
    %c0_i32 = arith.constant 0 : i32
    %c0_i32_0 = arith.constant 0 : i32
    return %arg0, %c0_i32 : i32, i32
  }
  func.func @transform_1(%arg0: i32) -> (i32, i32) {
    %c0_i32 = arith.constant 0 : i32
    %c0_i32_0 = arith.constant 0 : i32
    %c0_i32_1 = arith.constant 0 : i32
    return %c0_i32, %c0_i32_0 : i32, i32
  }
  func.func @transform_2(%arg0: i32) -> (i32, i32) {
    %c0_i32 = arith.constant 0 : i32
    %c0_i32_0 = arith.constant 0 : i32
    %c0_i32_1 = arith.constant 0 : i32
    return %c0_i32, %c0_i32_0 : i32, i32
  }
  func.func @transform_3(%arg0: i32) -> (i32, i32) {
    %c0_i32 = arith.constant 0 : i32
    %c0_i32_0 = arith.constant 0 : i32
    %c0_i32_1 = arith.constant 0 : i32
    return %c0_i32, %c0_i32_0 : i32, i32
  }
  func.func @transform_4(%arg0: i32) -> (i32, i32) {
    %c0_i32 = arith.constant 0 : i32
    %c0_i32_0 = arith.constant 0 : i32
    %c0_i32_1 = arith.constant 0 : i32
    return %c0_i32, %c0_i32_0 : i32, i32
  }
  func.func @transform_5(%arg0: i32) -> (i32, i32) {
    %c0_i32 = arith.constant 0 : i32
    %c0_i32_0 = arith.constant 0 : i32
    return %arg0, %c0_i32 : i32, i32
  }
}

module attributes {stable_mosaic.version = 11 : i64} {
  func.func @_linear_kernel(%arg0: i32, %arg1: memref<8x32xf32, #tpu.memory_space<vmem>>, %arg2: memref<32x27xf32, #tpu.memory_space<vmem>>, %arg3: memref<1x27xf32, #tpu.memory_space<vmem>>, %arg4: memref<8x27xf32, #tpu.memory_space<vmem>>) attributes {dimension_semantics = [#tpu.dimension_semantics<parallel>], iteration_bounds = array<i64: 1>, scalar_prefetch = 0 : i64, scratch_operands = 0 : i64, tpu.core_type = #tpu.core_type<tc>, window_params = [{transform_indices = @transform_0, window_bounds = array<i64: 8, 32>}, {pipeline_mode = #tpu.pipeline_mode<synchronous>, transform_indices = @transform_1, window_bounds = array<i64: 32, 27>}, {pipeline_mode = #tpu.pipeline_mode<synchronous>, transform_indices = @transform_2, window_bounds = array<i64: 1, 27>}, {transform_indices = @transform_3, window_bounds = array<i64: 8, 27>}]} {
    %c0 = arith.constant 0 : index
    %c0_0 = arith.constant 0 : index
    %0 = vector.load %arg1[%c0, %c0_0] : memref<8x32xf32, #tpu.memory_space<vmem>>, vector<8x32xf32>
    %cst = arith.constant 0.000000e+00 : f32
    %1 = vector.broadcast %cst : f32 to vector<8x32xf32>
    %2 = arith.maximumf %0, %1 : vector<8x32xf32>
    %3 = arith.truncf %2 : vector<8x32xf32> to vector<8x32xbf16>
    %c0_1 = arith.constant 0 : index
    %c0_2 = arith.constant 0 : index
    %4 = vector.load %arg2[%c0_1, %c0_2] : memref<32x27xf32, #tpu.memory_space<vmem>>, vector<32x27xf32>
    %5 = arith.truncf %4 : vector<32x27xf32> to vector<32x27xbf16>
    %cst_3 = arith.constant dense<0.000000e+00> : vector<8x27xf32>
    %6 = tpu.matmul %3, %5, %cst_3 {dimension_numbers = #tpu.dot_dimension_numbers<[1], [0], [0], [1], [0, 0, 1, 1], [], []>} : vector<8x32xbf16>, vector<32x27xbf16>, vector<8x27xf32> -> vector<8x27xf32>
    %c0_4 = arith.constant 0 : index
    %c0_5 = arith.constant 0 : index
    %7 = vector.load %arg3[%c0_4, %c0_5] : memref<1x27xf32, #tpu.memory_space<vmem>>, vector<1x27xf32>
    %8 = vector.broadcast %7 : vector<1x27xf32> to vector<8x27xf32>
    %9 = arith.addf %6, %8 : vector<8x27xf32>
    %c0_6 = arith.constant 0 : index
    %c0_7 = arith.constant 0 : index
    %10 = vector.load %arg4[%c0_6, %c0_7] : memref<8x27xf32, #tpu.memory_space<vmem>>, vector<8x27xf32>
    tpu.vector_store %arg4[%c0_6, %c0_7], %9 {strides = array<i32>} : memref<8x27xf32, #tpu.memory_space<vmem>>, vector<8x27xf32>,
    return
  }
  func.func @transform_0(%arg0: i32) -> (i32, i32) {
    %c0_i32 = arith.constant 0 : i32
    %c0_i32_0 = arith.constant 0 : i32
    return %arg0, %c0_i32 : i32, i32
  }
  func.func @transform_1(%arg0: i32) -> (i32, i32) {
    %c0_i32 = arith.constant 0 : i32
    %c0_i32_0 = arith.constant 0 : i32
    %c0_i32_1 = arith.constant 0 : i32
    return %c0_i32, %c0_i32_0 : i32, i32
  }
  func.func @transform_2(%arg0: i32) -> (i32, i32) {
    %c0_i32 = arith.constant 0 : i32
    %c0_i32_0 = arith.constant 0 : i32
    %c0_i32_1 = arith.constant 0 : i32
    return %c0_i32, %c0_i32_0 : i32, i32
  }
  func.func @transform_3(%arg0: i32) -> (i32, i32) {
    %c0_i32 = arith.constant 0 : i32
    %c0_i32_0 = arith.constant 0 : i32
    return %arg0, %c0_i32 : i32, i32
  }
}

module attributes {stable_mosaic.version = 11 : i64} {
  func.func @_mha_kernel(%arg0: i32, %arg1: memref<4x4x8xf32, #tpu.memory_space<vmem>>, %arg2: memref<4x48x8xf32, #tpu.memory_space<vmem>>, %arg3: memref<4x48x8xf32, #tpu.memory_space<vmem>>, %arg4: memref<4x4x8xf32, #tpu.memory_space<vmem>>) attributes {dimension_semantics = [#tpu.dimension_semantics<parallel>], iteration_bounds = array<i64: 2>, scalar_prefetch = 0 : i64, scratch_operands = 0 : i64, tpu.core_type = #tpu.core_type<tc>, window_params = [{transform_indices = @transform_0, window_bounds = array<i64: 4, 4, 8>}, {transform_indices = @transform_1, window_bounds = array<i64: 4, 48, 8>}, {transform_indices = @transform_2, window_bounds = array<i64: 4, 48, 8>}, {transform_indices = @transform_3, window_bounds = array<i64: 4, 4, 8>}]} {
    %c0 = arith.constant 0 : index
    %c0_0 = arith.constant 0 : index
    %c0_1 = arith.constant 0 : index
    %0 = vector.load %arg1[%c0, %c0_0, %c0_1] : memref<4x4x8xf32, #tpu.memory_space<vmem>>, vector<4x4x8xf32>
    %1 = arith.truncf %0 : vector<4x4x8xf32> to vector<4x4x8xbf16>
    %c0_2 = arith.constant 0 : index
    %c0_3 = arith.constant 0 : index
    %c0_4 = arith.constant 0 : index
    %2 = vector.load %arg2[%c0_2, %c0_3, %c0_4] : memref<4x48x8xf32, #tpu.memory_space<vmem>>, vector<4x48x8xf32>
    %3 = arith.truncf %2 : vector<4x48x8xf32> to vector<4x48x8xbf16>
    %c0_5 = arith.constant 0 : index
    %c0_6 = arith.constant 0 : index
    %c0_7 = arith.constant 0 : index
    %4 = vector.load %arg3[%c0_5, %c0_6, %c0_7] : memref<4x48x8xf32, #tpu.memory_space<vmem>>, vector<4x48x8xf32>
    %5 = arith.truncf %4 : vector<4x48x8xf32> to vector<4x48x8xbf16>
    "tpu.trace_start"() <{level = 10 : i32, message = "bld,bsd->bls"}> : () -> ()
    %cst = arith.constant dense<0.000000e+00> : vector<4x4x48xf32>
    %6 = tpu.matmul %1, %3, %cst {dimension_numbers = #tpu.dot_dimension_numbers<[2], [2], [1], [1], [0, 0, 0, 1, 1, 1], [0], [0]>} : vector<4x4x8xbf16>, vector<4x48x8xbf16>, vector<4x4x48xf32> -> vector<4x4x48xf32>
    "tpu.trace_stop"() : () -> ()
    %cst_8 = arith.constant 0.353553385 : f32
    %7 = vector.broadcast %cst_8 : f32 to vector<4x4x48xf32>
    %8 = arith.mulf %6, %7 : vector<4x4x48xf32>
    %cst_9 = arith.constant dense<0xFF800000> : vector<4x4xf32>
    %9 = vector.multi_reduction <maximumf>, %8, %cst_9 [2] : vector<4x4x48xf32> to vector<4x4xf32>
    %10 = vector.shape_cast %9 : vector<4x4xf32> to vector<4x4x1xf32>
    %11 = vector.broadcast %10 : vector<4x4x1xf32> to vector<4x4x48xf32>
    %12 = arith.subf %8, %11 : vector<4x4x48xf32>
    %13 = math.exp %12 : vector<4x4x48xf32>
    %cst_10 = arith.constant dense<0.000000e+00> : vector<4x4xf32>
    %14 = vector.multi_reduction <add>, %13, %cst_10 [2] : vector<4x4x48xf32> to vector<4x4xf32>
    %15 = vector.shape_cast %14 : vector<4x4xf32> to vector<4x4x1xf32>
    %16 = tpu.reciprocal %15 {approx = true} : vector<4x4x1xf32> -> vector<4x4x1xf32>
    %17 = vector.broadcast %16 : vector<4x4x1xf32> to vector<4x4x48xf32>
    %18 = arith.mulf %13, %17 : vector<4x4x48xf32>
    %19 = arith.truncf %18 : vector<4x4x48xf32> to vector<4x4x48xbf16>
    "tpu.trace_start"() <{level = 10 : i32, message = "bls,bsd->bld"}> : () -> ()
    %cst_11 = arith.constant dense<0.000000e+00> : vector<4x4x8xf32>
    %20 = tpu.matmul %19, %5, %cst_11 {dimension_numbers = #tpu.dot_dimension_numbers<[2], [1], [1], [2], [0, 0, 0, 1, 1, 2], [0], [0]>} : vector<4x4x48xbf16>, vector<4x48x8xbf16>, vector<4x4x8xf32> -> vector<4x4x8xf32>
    "tpu.trace_stop"() : () -> ()
    %c0_12 = arith.constant 0 : index
    %c0_13 = arith.constant 0 : index
    %c0_14 = arith.constant 0 : index
    %21 = vector.load %arg4[%c0_12, %c0_13, %c0_14] : memref<4x4x8xf32, #tpu.memory_space<vmem>>, vector<4x4x8xf32>
    tpu.vector_store %arg4[%c0_12, %c0_13, %c0_14], %20 {strides = array<i32>} : memref<4x4x8xf32, #tpu.memory_space<vmem>>, vector<4x4x8xf32>,
    return
  }
  func.func @transform_0(%arg0: i32) -> (i32, i32, i32) {
    %c0_i32 = arith.constant 0 : i32
    %c0_i32_0 = arith.constant 0 : i32
    %c0_i32_1 = arith.constant 0 : i32
    return %arg0, %c0_i32, %c0_i32_0 : i32, i32, i32
  }
  func.func @transform_1(%arg0: i32) -> (i32, i32, i32) {
    %c0_i32 = arith.constant 0 : i32
    %c0_i32_0 = arith.constant 0 : i32
    %c0_i32_1 = arith.constant 0 : i32
    return %arg0, %c0_i32, %c0_i32_0 : i32, i32, i32
  }
  func.func @transform_2(%arg0: i32) -> (i32, i32, i32) {
    %c0_i32 = arith.constant 0 : i32
    %c0_i32_0 = arith.constant 0 : i32
    %c0_i32_1 = arith.constant 0 : i32
    return %arg0, %c0_i32, %c0_i32_0 : i32, i32, i32
  }
  func.func @transform_3(%arg0: i32) -> (i32, i32, i32) {
    %c0_i32 = arith.constant 0 : i32
    %c0_i32_0 = arith.constant 0 : i32
    %c0_i32_1 = arith.constant 0 : i32
    return %arg0, %c0_i32, %c0_i32_0 : i32, i32, i32
  }
}

</mosaic_0001>

<llo_original>
// kernel: fwd.73
$region0: #{fwd.73}
  #allocation0 [shape = 'u32[]', space=smem, size = 0x4, offset = 0x4, fixed_abs, tag = 'smem constant byte address 0x4 - core index']
  #allocation1 [shape = 'u32[72,128]{1,0:T(1,128)}', space=vmem, size = 0x9000, scoped, tag = 'internal scratch']
  %s0 = inlined_call_operand.vmem [shape: f32[8,32], index: 0, kind: input, shape index: {}]
  %s1 = inlined_call_operand.vmem [shape: f32[1,32], index: 1, kind: input, shape index: {}]
  %s2 = inlined_call_operand.vmem [shape: f32[1,32], index: 2, kind: input, shape index: {}]
  %s3 = inlined_call_operand.vmem [shape: f32[8,32], index: 3, kind: output, shape index: {}]
  %s4 = sld [smem:[#allocation0]]
  $region22: #{fwd.73} parent=0
    _
  %s6 = ssub.s32 1, %s4
  %s7 = scalar_select 0, %s6, %s4
  // Predicated region
  $region2: #{fwd.73} parent=0 // pred_check
    _
  $region3: #{fwd.73} parent=0 // pred_check_branch
    %9 = sbr.rel (0) target = $region5
  $region4: #{fwd.73} parent=0 // pred_region
    _
  $region5: #{fwd.73} parent=0 // pred_fallthru
    _
  // Predicated region
  $region6: #{fwd.73} parent=0 // pred_check
    _
  $region7: #{fwd.73} parent=0 // pred_check_branch
    %11 = sbr.rel (0) target = $region9
  $region8: #{fwd.73} parent=0 // pred_region
    _
  $region9: #{fwd.73} parent=0 // pred_fallthru
    _
  // Predicated region
  $region10: #{fwd.73} parent=0 // pred_check
    _
  $region11: #{fwd.73} parent=0 // pred_check_branch
    %13 = sbr.rel (0) target = $region13
  $region12: #{fwd.73} parent=0 // pred_region
    _
  $region13: #{fwd.73} parent=0 // pred_fallthru
    _
  %v14 = vld [vmem:[%s0] sm:$0xff]
  %vm15 = vcmask 261120
  %v16 = vsel %vm15, %v14, 0.0
  %17 = vadd.xlane.f32.xlu0 %v16
  %v18 = vpop.xlane.xlu0 %17
  %v19 = vrcp.pop 32.0
  %v20 = vmul.f32 32.0, %v19
  %v21 = vsub.f32 1.0, %v20
  %v22 = vmul.f32 %v19, %v21
  %v23 = vadd.f32 %v19, %v22
  %vm24 = vweird.f32 %v19
  %v25 = vsel %vm24, %v19, %v23
  %v26 = vmul.f32 %v18, %v25
  %v27 = vsub.f32 %v14, %v26
  %v28 = vmul.f32 %v27, %v27
  %v29 = vsel %vm15, %v28, 0.0
  %30 = vadd.xlane.f32.xlu0 %v29
  %v31 = vpop.xlane.xlu0 %30
  %v32 = vmul.f32 %v31, %v25
  %v33 = vadd.f32 %v32, 1e-05
  %v34 = vrsqrt.pop %v33
  %v35 = vmul.f32 %v34, %v33
  %v36 = vmul.f32 %v35, %v34
  %v37 = vmul.f32 0.5, %v36
  %v38 = vsub.f32 1.5, %v37
  %v39 = vmul.f32 %v34, %v38
  %vm40 = vweird.f32 %v33
  %vm41 = vweird.f32 %v34
  %vm42 = vmor %vm40, %vm41
  %v43 = vsel %vm42, %v34, %v39
  %v44 = vmul.f32 %v27, %v43
  %v45 = vld [vmem:[%s1] sm:$0x1]
  %v47 = vperm.slane %v45, 0
  %v49 = vmul.f32 %v44, %v47
  %v50 = vld [vmem:[%s2] sm:$0x1]
  %v52 = vperm.slane %v50, 0
  %v54 = vadd.f32 %v49, %v52
  %55 = vst.msk [vmem:[%s3] sm:$0xff] %vm15, %v54
  // Predicated region
  $region14: #{fwd.73} parent=0 // pred_check
    _
  $region15: #{fwd.73} parent=0 // pred_check_branch
    %57 = sbr.rel (0) target = $region17
  $region16: #{fwd.73} parent=0 // pred_region
    _
  $region17: #{fwd.73} parent=0 // pred_fallthru
    _
  // Predicated region
  $region18: #{fwd.73} parent=0 // pred_check
    _
  $region19: #{fwd.73} parent=0 // pred_check_branch
    %59 = sbr.rel (0) target = $region21
  $region20: #{fwd.73} parent=0 // pred_region
    _
  $region21: #{fwd.73} parent=0 // pred_fallthru
    _

// kernel: fwd.74
$region0: #{fwd.74}
  #allocation0 [shape = 'u32[]', space=smem, size = 0x4, offset = 0x4, fixed_abs, tag = 'smem constant byte address 0x4 - core index']
  #allocation1 [shape = 'u32[72,128]{1,0:T(1,128)}', space=vmem, size = 0x9000, scoped, tag = 'internal scratch']
  %s0 = inlined_call_operand.vmem [shape: f32[8,32], index: 0, kind: input, shape index: {}]
  %s1 = inlined_call_operand.vmem [shape: f32[1,32], index: 1, kind: input, shape index: {}]
  %s2 = inlined_call_operand.vmem [shape: f32[1,32], index: 2, kind: input, shape index: {}]
  %s3 = inlined_call_operand.vmem [shape: f32[32,32], index: 3, kind: input, shape index: {}]
  %s4 = inlined_call_operand.vmem [shape: f32[1,32], index: 4, kind: input, shape index: {}]
  %s5 = inlined_call_operand.vmem [shape: f32[8,32], index: 5, kind: output, shape index: {}]
  %s6 = sld [smem:[#allocation0]]
  $region30: #{fwd.74} parent=0
    _
  %s8 = ssub.s32 1, %s6
  %s9 = scalar_select 0, %s8, %s6
  // Predicated region
  $region2: #{fwd.74} parent=0 // pred_check
    _
  $region3: #{fwd.74} parent=0 // pred_check_branch
    %11 = sbr.rel (0) target = $region5
  $region4: #{fwd.74} parent=0 // pred_region
    _
  $region5: #{fwd.74} parent=0 // pred_fallthru
    _
  // Predicated region
  $region6: #{fwd.74} parent=0 // pred_check
    _
  $region7: #{fwd.74} parent=0 // pred_check_branch
    %13 = sbr.rel (0) target = $region9
  $region8: #{fwd.74} parent=0 // pred_region
    _
  $region9: #{fwd.74} parent=0 // pred_fallthru
    _
  // Predicated region
  $region10: #{fwd.74} parent=0 // pred_check
    _
  $region11: #{fwd.74} parent=0 // pred_check_branch
    %15 = sbr.rel (0) target = $region13
  $region12: #{fwd.74} parent=0 // pred_region
    _
  $region13: #{fwd.74} parent=0 // pred_fallthru
    _
  // Predicated region
  $region14: #{fwd.74} parent=0 // pred_check
    _
  $region15: #{fwd.74} parent=0 // pred_check_branch
    %17 = sbr.rel (0) target = $region17
  $region16: #{fwd.74} parent=0 // pred_region
    _
  $region17: #{fwd.74} parent=0 // pred_fallthru
    _
  // Predicated region
  $region18: #{fwd.74} parent=0 // pred_check
    _
  $region19: #{fwd.74} parent=0 // pred_check_branch
    %19 = sbr.rel (0) target = $region21
  $region20: #{fwd.74} parent=0 // pred_region
    _
  $region21: #{fwd.74} parent=0 // pred_fallthru
    _
  %v21 = vld [vmem:[%s0] sm:$0xff]
  %vm22 = vcmask 261120
  %v23 = vsel %vm22, %v21, 0.0
  %24 = vadd.xlane.f32.xlu0 %v23
  %v25 = vpop.xlane.xlu0 %24
  %v26 = vrcp.pop 32.0
  %v27 = vmul.f32 32.0, %v26
  %v28 = vsub.f32 1.0, %v27
  %v29 = vmul.f32 %v26, %v28
  %v30 = vadd.f32 %v26, %v29
  %vm31 = vweird.f32 %v26
  %v32 = vsel %vm31, %v26, %v30
  %v33 = vmul.f32 %v25, %v32
  %v34 = vsub.f32 %v21, %v33
  %v35 = vmul.f32 %v34, %v34
  %v36 = vsel %vm22, %v35, 0.0
  %37 = vadd.xlane.f32.xlu0 %v36
  %v38 = vpop.xlane.xlu0 %37
  %v39 = vmul.f32 %v38, %v32
  %v40 = vadd.f32 %v39, 1e-05
  %v41 = vrsqrt.pop %v40
  %v42 = vmul.f32 %v41, %v40
  %v43 = vmul.f32 %v42, %v41
  %v44 = vmul.f32 0.5, %v43
  %v45 = vsub.f32 1.5, %v44
  %v46 = vmul.f32 %v41, %v45
  %vm47 = vweird.f32 %v40
  %vm48 = vweird.f32 %v41
  %vm49 = vmor %vm47, %vm48
  %v50 = vsel %vm49, %v41, %v46
  %v51 = vmul.f32 %v34, %v50
  %v52 = vld [vmem:[%s1] sm:$0x1]
  %v54 = vperm.slane %v52, 0
  %v56 = vmul.f32 %v51, %v54
  %v57 = vld [vmem:[%s2] sm:$0x1]
  %v59 = vperm.slane %v57, 0
  %v61 = vadd.f32 %v56, %v59
  %v62 = vpack.c.bf16 %v61, %v61
  %v63 = vld [vmem:[%s3] sm:$0xff]
  %v64 = vld [vmem:[%s3 + $0x8] sm:$0xff]
  %v65 = vld [vmem:[%s3 + $0x10] sm:$0xff]
  %v66 = vld [vmem:[%s3 + $0x18] sm:$0xff]
  %v67 = vpack.c.bf16 %v64, %v63
  %v68 = vpack.c.bf16 %v66, %v65
  %v69 = vld [vmem:[%s4] sm:$0x1]
  %v71 = vperm.slane %v69, 0
  %v74 = vsel %vm22, %v62, 0
  %76 = vmatpush.bf16.msra.mxu0 0
  %77 = vmatpush.bf16.msra.mxu0 0
  %78 = vmatpush.bf16.msra.mxu0 0
  %79 = vmatpush.bf16.msra.mxu0 0
  %80 = vmatpush.bf16.msra.mxu0 0
  %81 = vmatpush.bf16.msra.mxu0 0
  %82 = vmatpush.bf16.msra.mxu0 %v68
  %83 = vmatpush.bf16.msra.mxu0 %v67
  %84 = vmatmul.bf16.gmra.mxu0 %v74
  %v85 = vpop.f32.mrf.mxu0
  %v86 = vadd.f32 %v71, %v85
  %v87 = vpop.f32.mrf.mxu0
  %88 = vdwg.mxu0
  %89 = vst.msk [vmem:[%s5] sm:$0xff] %vm22, %v86
  // Predicated region
  $region22: #{fwd.74} parent=0 // pred_check
    _
  $region23: #{fwd.74} parent=0 // pred_check_branch
    %91 = sbr.rel (0) target = $region25
  $region24: #{fwd.74} parent=0 // pred_region
    _
  $region25: #{fwd.74} parent=0 // pred_fallthru
    _
  // Predicated region
  $region26: #{fwd.74} parent=0 // pred_check
    _
  $region27: #{fwd.74} parent=0 // pred_check_branch
    %93 = sbr.rel (0) target = $region29
  $region28: #{fwd.74} parent=0 // pred_region
    _
  $region29: #{fwd.74} parent=0 // pred_fallthru
    _

// kernel: fwd.75
$region0: #{fwd.75}
  #allocation0 [shape = 'u32[]', space=smem, size = 0x4, offset = 0x4, fixed_abs, tag = 'smem constant byte address 0x4 - core index']
  #allocation1 [shape = 'u32[72,128]{1,0:T(1,128)}', space=vmem, size = 0x9000, scoped, tag = 'internal scratch']
  %s0 = inlined_call_operand.vmem [shape: f32[8,32], index: 0, kind: input, shape index: {}]
  %s1 = inlined_call_operand.vmem [shape: f32[1,32], index: 1, kind: input, shape index: {}]
  %s2 = inlined_call_operand.vmem [shape: f32[1,32], index: 2, kind: input, shape index: {}]
  %s3 = inlined_call_operand.vmem [shape: f32[32,64], index: 3, kind: input, shape index: {}]
  %s4 = inlined_call_operand.vmem [shape: f32[1,64], index: 4, kind: input, shape index: {}]
  %s5 = inlined_call_operand.vmem [shape: f32[8,64], index: 5, kind: output, shape index: {}]
  %s6 = sld [smem:[#allocation0]]
  $region30: #{fwd.75} parent=0
    _
  %s8 = ssub.s32 1, %s6
  %s9 = scalar_select 0, %s8, %s6
  // Predicated region
  $region2: #{fwd.75} parent=0 // pred_check
    _
  $region3: #{fwd.75} parent=0 // pred_check_branch
    %11 = sbr.rel (0) target = $region5
  $region4: #{fwd.75} parent=0 // pred_region
    _
  $region5: #{fwd.75} parent=0 // pred_fallthru
    _
  // Predicated region
  $region6: #{fwd.75} parent=0 // pred_check
    _
  $region7: #{fwd.75} parent=0 // pred_check_branch
    %13 = sbr.rel (0) target = $region9
  $region8: #{fwd.75} parent=0 // pred_region
    _
  $region9: #{fwd.75} parent=0 // pred_fallthru
    _
  // Predicated region
  $region10: #{fwd.75} parent=0 // pred_check
    _
  $region11: #{fwd.75} parent=0 // pred_check_branch
    %15 = sbr.rel (0) target = $region13
  $region12: #{fwd.75} parent=0 // pred_region
    _
  $region13: #{fwd.75} parent=0 // pred_fallthru
    _
  // Predicated region
  $region14: #{fwd.75} parent=0 // pred_check
    _
  $region15: #{fwd.75} parent=0 // pred_check_branch
    %17 = sbr.rel (0) target = $region17
  $region16: #{fwd.75} parent=0 // pred_region
    _
  $region17: #{fwd.75} parent=0 // pred_fallthru
    _
  // Predicated region
  $region18: #{fwd.75} parent=0 // pred_check
    _
  $region19: #{fwd.75} parent=0 // pred_check_branch
    %19 = sbr.rel (0) target = $region21
  $region20: #{fwd.75} parent=0 // pred_region
    _
  $region21: #{fwd.75} parent=0 // pred_fallthru
    _
  %v21 = vld [vmem:[%s0] sm:$0xff]
  %vm22 = vcmask 261120
  %v23 = vsel %vm22, %v21, 0.0
  %24 = vadd.xlane.f32.xlu0 %v23
  %v25 = vpop.xlane.xlu0 %24
  %v26 = vrcp.pop 32.0
  %v27 = vmul.f32 32.0, %v26
  %v28 = vsub.f32 1.0, %v27
  %v29 = vmul.f32 %v26, %v28
  %v30 = vadd.f32 %v26, %v29
  %vm31 = vweird.f32 %v26
  %v32 = vsel %vm31, %v26, %v30
  %v33 = vmul.f32 %v25, %v32
  %v34 = vsub.f32 %v21, %v33
  %v35 = vmul.f32 %v34, %v34
  %v36 = vsel %vm22, %v35, 0.0
  %37 = vadd.xlane.f32.xlu0 %v36
  %v38 = vpop.xlane.xlu0 %37
  %v39 = vmul.f32 %v38, %v32
  %v40 = vadd.f32 %v39, 1e-05
  %v41 = vrsqrt.pop %v40
  %v42 = vmul.f32 %v41, %v40
  %v43 = vmul.f32 %v42, %v41
  %v44 = vmul.f32 0.5, %v43
  %v45 = vsub.f32 1.5, %v44
  %v46 = vmul.f32 %v41, %v45
  %vm47 = vweird.f32 %v40
  %vm48 = vweird.f32 %v41
  %vm49 = vmor %vm47, %vm48
  %v50 = vsel %vm49, %v41, %v46
  %v51 = vmul.f32 %v34, %v50
  %v52 = vld [vmem:[%s1] sm:$0x1]
  %v54 = vperm.slane %v52, 0
  %v56 = vmul.f32 %v51, %v54
  %v57 = vld [vmem:[%s2] sm:$0x1]
  %v59 = vperm.slane %v57, 0
  %v61 = vadd.f32 %v56, %v59
  %v62 = vpack.c.bf16 %v61, %v61
  %v63 = vld [vmem:[%s3] sm:$0xff]
  %v64 = vld [vmem:[%s3 + $0x8] sm:$0xff]
  %v65 = vld [vmem:[%s3 + $0x10] sm:$0xff]
  %v66 = vld [vmem:[%s3 + $0x18] sm:$0xff]
  %v67 = vpack.c.bf16 %v64, %v63
  %v68 = vpack.c.bf16 %v66, %v65
  %v69 = vld [vmem:[%s4] sm:$0x1]
  %v71 = vperm.slane %v69, 0
  %v74 = vsel %vm22, %v62, 0
  %76 = vmatpush.bf16.msra.mxu0 0
  %77 = vmatpush.bf16.msra.mxu0 0
  %78 = vmatpush.bf16.msra.mxu0 0
  %79 = vmatpush.bf16.msra.mxu0 0
  %80 = vmatpush.bf16.msra.mxu0 0
  %81 = vmatpush.bf16.msra.mxu0 0
  %82 = vmatpush.bf16.msra.mxu0 %v68
  %83 = vmatpush.bf16.msra.mxu0 %v67
  %84 = vmatmul.bf16.gmra.mxu0 %v74
  %v85 = vpop.f32.mrf.mxu0
  %v86 = vadd.f32 %v71, %v85
  %v87 = vpop.f32.mrf.mxu0
  %88 = vdwg.mxu0
  %vm89 = vcmask 523264
  %90 = vst.msk [vmem:[%s5] sm:$0xff] %vm89, %v86
  // Predicated region
  $region22: #{fwd.75} parent=0 // pred_check
    _
  $region23: #{fwd.75} parent=0 // pred_check_branch
    %92 = sbr.rel (0) target = $region25
  $region24: #{fwd.75} parent=0 // pred_region
    _
  $region25: #{fwd.75} parent=0 // pred_fallthru
    _
  // Predicated region
  $region26: #{fwd.75} parent=0 // pred_check
    _
  $region27: #{fwd.75} parent=0 // pred_check_branch
    %94 = sbr.rel (0) target = $region29
  $region28: #{fwd.75} parent=0 // pred_region
    _
  $region29: #{fwd.75} parent=0 // pred_fallthru
    _

// kernel: fwd.76
$region0: #{fwd.76}
  #allocation0 [shape = 'u32[]', space=smem, size = 0x4, offset = 0x4, fixed_abs, tag = 'smem constant byte address 0x4 - core index']
  #allocation1 [shape = 'u32[72,128]{1,0:T(1,128)}', space=vmem, size = 0x9000, scoped, tag = 'internal scratch']
  %s0 = inlined_call_operand.vmem [shape: f32[8,4,8], index: 0, kind: input, shape index: {}]
  %s1 = inlined_call_operand.vmem [shape: f32[8,4,8], index: 1, kind: input, shape index: {}]
  %s2 = inlined_call_operand.vmem [shape: f32[8,4,8], index: 2, kind: input, shape index: {}]
  %s3 = inlined_call_operand.vmem [shape: f32[8,4,8], index: 3, kind: output, shape index: {}]
  %s4 = sld [smem:[#allocation0]]
  $region45: #{fwd.76} parent=0
    _
  %s6 = ssub.s32 1, %s4
  %s7 = scalar_select 0, %s6, %s4
  loop: start=0, step=1, limit=4
  $region2: #{fwd.76} parent=0 // loop_pre_header
    _
  $region3: #{fwd.76} parent=0 // loop_header
    %s9 = sphi 0, %s13
    %p10 = scmp.ge.s32.totalorder %s9, 4
    %s19 = sphi 0, %s21
    %s22 = sphi 0, %s19
    %s23 = sphi 0, %s22
    %s39 = sphi 0, %s23
    %s45 = sphi 0, %s47
    %s48 = sphi 0, %s45
    %s49 = sphi 0, %s48
    %s65 = sphi 0, %s49
    %s71 = sphi 0, %s73
    %s74 = sphi 0, %s71
    %s75 = sphi 0, %s74
    %s91 = sphi 0, %s75
    %s97 = sphi 0, %s99
    %s100 = sphi 0, %s97
    %s101 = sphi 0, %s100
    %s117 = sphi 0, %s101
  $region4: #{fwd.76} parent=0 // loop_header_branch
    %12 = sbr.rel (%p10) target = $region8
  $region5: #{fwd.76} parent=0 // loop_body
    %s14 = ssub.s32 %s9, 1
    %s15 = ssub.s32 %s9, 2
    %s16 = sadd.s32 %s9, 1
    %s17 = ssub.s32 %s9, %s16
    %p18 = scmp.eq.s32.totalorder %s17, 0
    %s20 = sadd.s32 %s19, 1
    %s21 = scalar_select %p18, %s19, %s20
    %p24 = pneg %p18
    %p25 = scmp.eq.s32.totalorder %s9, 1
    %p26 = por %p24, %p25
    %p27 = scmp.ne.s32.totalorder %s19, %s22
    %p28 = scmp.eq.s32.totalorder %s9, 0
    %p29 = por %p27, %p28
    %p30 = scmp.ne.s32.totalorder %s19, %s22
    %p31 = scmp.eq.s32.totalorder %s14, 1
    %p32 = por %p30, %p31
    %p33 = scmp.ne.s32.totalorder %s22, %s23
    %p34 = scmp.eq.s32.totalorder %s14, 0
    %p35 = por %p33, %p34
    %p36 = scmp.ne.s32.totalorder %s22, %s23
    %p37 = scmp.eq.s32.totalorder %s15, 1
    %p38 = por %p36, %p37
    %p40 = scmp.ne.s32.totalorder %s23, %s39
    %p41 = scmp.eq.s32.totalorder %s15, 0
    %p42 = por %p40, %p41
    %s43 = ssub.s32 %s9, %s16
    %p44 = scmp.eq.s32.totalorder %s43, 0
    %s46 = sadd.s32 %s45, 1
    %s47 = scalar_select %p44, %s45, %s46
    %p50 = pneg %p44
    %p51 = scmp.eq.s32.totalorder %s9, 1
    %p52 = por %p50, %p51
    %p53 = scmp.ne.s32.totalorder %s45, %s48
    %p54 = scmp.eq.s32.totalorder %s9, 0
    %p55 = por %p53, %p54
    %p56 = scmp.ne.s32.totalorder %s45, %s48
    %p57 = scmp.eq.s32.totalorder %s14, 1
    %p58 = por %p56, %p57
    %p59 = scmp.ne.s32.totalorder %s48, %s49
    %p60 = scmp.eq.s32.totalorder %s14, 0
    %p61 = por %p59, %p60
    %p62 = scmp.ne.s32.totalorder %s48, %s49
    %p63 = scmp.eq.s32.totalorder %s15, 1
    %p64 = por %p62, %p63
    %p66 = scmp.ne.s32.totalorder %s49, %s65
    %p67 = scmp.eq.s32.totalorder %s15, 0
    %p68 = por %p66, %p67
    %s69 = ssub.s32 %s9, %s16
    %p70 = scmp.eq.s32.totalorder %s69, 0
    %s72 = sadd.s32 %s71, 1
    %s73 = scalar_select %p70, %s71, %s72
    %p76 = pneg %p70
    %p77 = scmp.eq.s32.totalorder %s9, 1
    %p78 = por %p76, %p77
    %p79 = scmp.ne.s32.totalorder %s71, %s74
    %p80 = scmp.eq.s32.totalorder %s9, 0
    %p81 = por %p79, %p80
    %p82 = scmp.ne.s32.totalorder %s71, %s74
    %p83 = scmp.eq.s32.totalorder %s14, 1
    %p84 = por %p82, %p83
    %p85 = scmp.ne.s32.totalorder %s74, %s75
    %p86 = scmp.eq.s32.totalorder %s14, 0
    %p87 = por %p85, %p86
    %p88 = scmp.ne.s32.totalorder %s74, %s75
    %p89 = scmp.eq.s32.totalorder %s15, 1
    %p90 = por %p88, %p89
    %p92 = scmp.ne.s32.totalorder %s75, %s91
    %p93 = scmp.eq.s32.totalorder %s15, 0
    %p94 = por %p92, %p93
    %s95 = ssub.s32 %s9, %s16
    %p96 = scmp.eq.s32.totalorder %s95, 0
    %s98 = sadd.s32 %s97, 1
    %s99 = scalar_select %p96, %s97, %s98
    %p102 = pneg %p96
    %p103 = scmp.eq.s32.totalorder %s9, 1
    %p104 = por %p102, %p103
    %p105 = scmp.ne.s32.totalorder %s97, %s100
    %p106 = scmp.eq.s32.totalorder %s9, 0
    %p107 = por %p105, %p106
    %p108 = scmp.ne.s32.totalorder %s97, %s100
    %p109 = scmp.eq.s32.totalorder %s14, 1
    %p110 = por %p108, %p109
    %p111 = scmp.ne.s32.totalorder %s100, %s101
    %p112 = scmp.eq.s32.totalorder %s14, 0
    %p113 = por %p111, %p112
    %p114 = scmp.ne.s32.totalorder %s100, %s101
    %p115 = scmp.eq.s32.totalorder %s15, 1
    %p116 = por %p114, %p115
    %p118 = scmp.ne.s32.totalorder %s101, %s117
    %p119 = scmp.eq.s32.totalorder %s15, 0
    %p120 = por %p118, %p119
    %p121 = scmp.le.s32.totalorder 1, %s9
    %p122 = scmp.lt.s32.totalorder %s9, 3
    %p123 = pnand %p121, %p122
    %p124 = pneg %p123
    // Predicated region
    $region9: #{fwd.76} parent=5 // pred_check
      _
    $region10: #{fwd.76} parent=5 // pred_check_branch
      %126 = sbr.rel (%p123) target = $region12
    $region11: #{fwd.76} parent=5 // pred_region
      %s127 = ssub.s32 %s9, 1
    $region12: #{fwd.76} parent=5 // pred_fallthru
      _
    %p128 = scmp.lt.s32.totalorder %s9, 2
    // Predicated region
    $region13: #{fwd.76} parent=5 // pred_check
      %p129 = pneg %p128
    $region14: #{fwd.76} parent=5 // pred_check_branch
      %131 = sbr.rel (%p129) target = $region16
    $region15: #{fwd.76} parent=5 // pred_region
      // Predicated region
      $region17: #{fwd.76} parent=15 // pred_check
        %p132 = pneg %p29
      $region18: #{fwd.76} parent=15 // pred_check_branch
        %134 = sbr.rel (%p132) target = $region20
      $region19: #{fwd.76} parent=15 // pred_region
        %s135 = smul.u32 4, %s9
        %p136 = scmp.lt.s32.totalorder %s135, 7
        %s137 = scalar_select %p136, %s135, 7
        %s138 = smul.addr %s137, 4
        %s139 = scalar_lea.vmem %s0, %s138
        %s140 = smul.u32 4, %s9
      $region20: #{fwd.76} parent=15 // pred_fallthru
        _
      // Predicated region
      $region21: #{fwd.76} parent=15 // pred_check
        %p141 = pneg %p55
      $region22: #{fwd.76} parent=15 // pred_check_branch
        %143 = sbr.rel (%p141) target = $region24
      $region23: #{fwd.76} parent=15 // pred_region
        %s144 = smul.u32 4, %s9
        %p145 = scmp.lt.s32.totalorder %s144, 7
        %s146 = scalar_select %p145, %s144, 7
        %s147 = smul.addr %s146, 4
        %s148 = scalar_lea.vmem %s1, %s147
        %s149 = smul.u32 4, %s9
      $region24: #{fwd.76} parent=15 // pred_fallthru
        _
      // Predicated region
      $region25: #{fwd.76} parent=15 // pred_check
        %p150 = pneg %p81
      $region26: #{fwd.76} parent=15 // pred_check_branch
        %152 = sbr.rel (%p150) target = $region28
      $region27: #{fwd.76} parent=15 // pred_region
        %s153 = smul.u32 4, %s9
        %p154 = scmp.lt.s32.totalorder %s153, 7
        %s155 = scalar_select %p154, %s153, 7
        %s156 = smul.addr %s155, 4
        %s157 = scalar_lea.vmem %s2, %s156
        %s158 = smul.u32 4, %s9
      $region28: #{fwd.76} parent=15 // pred_fallthru
        _
    $region16: #{fwd.76} parent=5 // pred_fallthru
      _
    %p159 = scmp.le.s32.totalorder 1, %s9
    %p160 = scmp.lt.s32.totalorder %s9, 3
    %p161 = pnand %p159, %p160
    %p162 = pneg %p161
    // Predicated region
    $region29: #{fwd.76} parent=5 // pred_check
      _
    $region30: #{fwd.76} parent=5 // pred_check_branch
      %164 = sbr.rel (%p161) target = $region32
    $region31: #{fwd.76} parent=5 // pred_region
      %s165 = ssub.s32 %s9, 1
      %s166 = smul.u32 4, %s14
      %p167 = scmp.lt.s32.totalorder %s166, 7
      %s168 = scalar_select %p167, %s166, 7
      %s169 = smul.addr %s168, 4
      %s170 = scalar_lea.vmem %s0, %s169
      %p171 = pneg %p35
      %p172 = pneg %p32
      %s173 = smul.u32 4, %s14
      %p174 = scmp.lt.s32.totalorder %s173, 7
      %s175 = scalar_select %p174, %s173, 7
      %s176 = smul.addr %s175, 4
      %s177 = scalar_lea.vmem %s1, %s176
      %p178 = pneg %p61
      %p179 = pneg %p58
      %s180 = smul.u32 4, %s14
      %p181 = scmp.lt.s32.totalorder %s180, 7
      %s182 = scalar_select %p181, %s180, 7
      %s183 = smul.addr %s182, 4
      %s184 = scalar_lea.vmem %s2, %s183
      %p185 = pneg %p87
      %p186 = pneg %p84
      %p187 = pneg %p113
      %p188 = pneg %p110
      %s189 = smul.u32 4, %s14
      %p190 = scmp.lt.s32.totalorder %s189, 7
      %s191 = scalar_select %p190, %s189, 7
      %s192 = smul.addr %s191, 4
      %s193 = scalar_lea.vmem %s3, %s192
      %s194 = smul.u32 4, %s14
      %p195 = scmp.lt.s32.totalorder %s194, 7
      %s196 = scalar_select %p195, %s194, 7
      %s197 = smul.addr %s196, 4
      %s198 = scalar_lea.vmem %s0, %s197
      %s199 = smul.u32 4, %s14
      %s200 = smul.u32 4, %s14
      %p201 = scmp.lt.s32.totalorder %s200, 7
      %s202 = scalar_select %p201, %s200, 7
      %s203 = smul.addr %s202, 4
      %s204 = scalar_lea.vmem %s1, %s203
      %s205 = smul.u32 4, %s14
      %s206 = smul.u32 4, %s14
      %p207 = scmp.lt.s32.totalorder %s206, 7
      %s208 = scalar_select %p207, %s206, 7
      %s209 = smul.addr %s208, 4
      %s210 = scalar_lea.vmem %s2, %s209
      %s211 = smul.u32 4, %s14
      %s212 = smul.u32 4, %s14
      %p213 = scmp.lt.s32.totalorder %s212, 7
      %s214 = scalar_select %p213, %s212, 7
      %s215 = smul.addr %s214, 4
      %s216 = scalar_lea.vmem %s3, %s215
      %s217 = smul.u32 4, %s14
      %v219 = vld [vmem:[%s198] sm:$0xf]
      %v220 = vld [vmem:[%s198 + $0x4] sm:$0xf]
      %v221 = vld [vmem:[%s198 + $0x8] sm:$0xf]
      %v222 = vld [vmem:[%s198 + $0xc] sm:$0xf]
      %v223 = vpack.c.bf16 %v219, %v219
      %v224 = vpack.c.bf16 %v220, %v220
      %v225 = vpack.c.bf16 %v221, %v221
      %v226 = vpack.c.bf16 %v222, %v222
      %v227 = vld [vmem:[%s204] sm:$0xf]
      %v228 = vld [vmem:[%s204 + $0x4] sm:$0xf]
      %v229 = vld [vmem:[%s204 + $0x8] sm:$0xf]
      %v230 = vld [vmem:[%s204 + $0xc] sm:$0xf]
      %v231 = vpack.c.bf16 %v227, %v227
      %v232 = vpack.c.bf16 %v228, %v228
      %v233 = vpack.c.bf16 %v229, %v229
      %v234 = vpack.c.bf16 %v230, %v230
      %v235 = vld [vmem:[%s210] sm:$0xf]
      %v236 = vld [vmem:[%s210 + $0x4] sm:$0xf]
      %v237 = vld [vmem:[%s210 + $0x8] sm:$0xf]
      %v238 = vld [vmem:[%s210 + $0xc] sm:$0xf]
      %v239 = vpack.c.bf16 %v235, %v235
      %v240 = vpack.c.bf16 %v236, %v236
      %v241 = vpack.c.bf16 %v237, %v237
      %v242 = vpack.c.bf16 %v238, %v238
      %vm243 = vcmask 64512
      %v245 = vsel %vm243, %v223, 0
      %v248 = vsel %vm243, %v231, 0
      %250 = vmatpush.bf16.xpose.msra.mxu0 0
      %251 = vmatpush.bf16.xpose.msra.mxu0 0
      %252 = vmatpush.bf16.xpose.msra.mxu0 0
      %253 = vmatpush.bf16.xpose.msra.mxu0 0
      %254 = vmatpush.bf16.xpose.msra.mxu0 0
      %255 = vmatpush.bf16.xpose.msra.mxu0 0
      %256 = vmatpush.bf16.xpose.msra.mxu0 0
      %257 = vmatpush.bf16.xpose.msra.mxu0 %v248
      %258 = vmatmul.bf16.gmra.mxu0 %v245
      %v259 = vpop.f32.mrf.mxu0
      %v260 = vadd.f32 0.0, %v259
      %v261 = vpop.f32.mrf.mxu0
      %262 = vdwg.mxu0
      %v264 = vsel %vm243, %v224, 0
      %v267 = vsel %vm243, %v232, 0
      %269 = vmatpush.bf16.xpose.msra.mxu0 0
      %270 = vmatpush.bf16.xpose.msra.mxu0 0
      %271 = vmatpush.bf16.xpose.msra.mxu0 0
      %272 = vmatpush.bf16.xpose.msra.mxu0 0
      %273 = vmatpush.bf16.xpose.msra.mxu0 0
      %274 = vmatpush.bf16.xpose.msra.mxu0 0
      %275 = vmatpush.bf16.xpose.msra.mxu0 0
      %276 = vmatpush.bf16.xpose.msra.mxu0 %v267
      %277 = vmatmul.bf16.gmra.mxu0 %v264
      %v278 = vpop.f32.mrf.mxu0
      %v279 = vadd.f32 0.0, %v278
      %v280 = vpop.f32.mrf.mxu0
      %281 = vdwg.mxu0
      %v283 = vsel %vm243, %v225, 0
      %v286 = vsel %vm243, %v233, 0
      %288 = vmatpush.bf16.xpose.msra.mxu0 0
      %289 = vmatpush.bf16.xpose.msra.mxu0 0
      %290 = vmatpush.bf16.xpose.msra.mxu0 0
      %291 = vmatpush.bf16.xpose.msra.mxu0 0
      %292 = vmatpush.bf16.xpose.msra.mxu0 0
      %293 = vmatpush.bf16.xpose.msra.mxu0 0
      %294 = vmatpush.bf16.xpose.msra.mxu0 0
      %295 = vmatpush.bf16.xpose.msra.mxu0 %v286
      %296 = vmatmul.bf16.gmra.mxu0 %v283
      %v297 = vpop.f32.mrf.mxu0
      %v298 = vadd.f32 0.0, %v297
      %v299 = vpop.f32.mrf.mxu0
      %300 = vdwg.mxu0
      %v302 = vsel %vm243, %v226, 0
      %v305 = vsel %vm243, %v234, 0
      %307 = vmatpush.bf16.xpose.msra.mxu0 0
      %308 = vmatpush.bf16.xpose.msra.mxu0 0
      %309 = vmatpush.bf16.xpose.msra.mxu0 0
      %310 = vmatpush.bf16.xpose.msra.mxu0 0
      %311 = vmatpush.bf16.xpose.msra.mxu0 0
      %312 = vmatpush.bf16.xpose.msra.mxu0 0
      %313 = vmatpush.bf16.xpose.msra.mxu0 0
      %314 = vmatpush.bf16.xpose.msra.mxu0 %v305
      %315 = vmatmul.bf16.gmra.mxu0 %v302
      %v316 = vpop.f32.mrf.mxu0
      %v317 = vadd.f32 0.0, %v316
      %v318 = vpop.f32.mrf.mxu0
      %319 = vdwg.mxu0
      %v320 = vmul.f32 %v260, 0.35355338
      %v321 = vmul.f32 %v279, 0.35355338
      %v322 = vmul.f32 %v298, 0.35355338
      %v323 = vmul.f32 %v317, 0.35355338
      %v324 = vlaneseq
      %v325 = vshrl.u32 %v324, 7
      %v326 = vlaneseq
      %v327 = vand.u32 %v326, 127
      %vm328 = vcmp.gt.s32.totalorder %v327, %v325
      %v329 = vsel %vm328, -1e+30, %v320
      %v330 = vsel %vm328, -1e+30, %v321
      %v331 = vsel %vm328, -1e+30, %v322
      %v332 = vsel %vm328, -1e+30, %v323
      %vm333 = vcmask 27648
      %v334 = vsel %vm333, %v329, -inf
      %335 = vmax.xlane.f32.xlu0 %v334
      %v336 = vpop.xlane.xlu0 %335
      %v337 = vsel %vm333, %v330, -inf
      %338 = vmax.xlane.f32.xlu0 %v337
      %v339 = vpop.xlane.xlu0 %338
      %v340 = vsel %vm333, %v331, -inf
      %341 = vmax.xlane.f32.xlu0 %v340
      %v342 = vpop.xlane.xlu0 %341
      %v343 = vsel %vm333, %v332, -inf
      %344 = vmax.xlane.f32.xlu0 %v343
      %v345 = vpop.xlane.xlu0 %344
      %v346 = vsub.f32 %v329, %v336
      %v347 = vsub.f32 %v330, %v339
      %v348 = vsub.f32 %v331, %v342
      %v349 = vsub.f32 %v332, %v345
      %v350 = vmul.f32 %v346, 1.442695
      %v351 = vpow.pop %v350
      %v352 = vmul.f32 %v347, 1.442695
      %v353 = vpow.pop %v352
      %v354 = vmul.f32 %v348, 1.442695
      %v355 = vpow.pop %v354
      %v356 = vmul.f32 %v349, 1.442695
      %v357 = vpow.pop %v356
      %v358 = vsel %vm333, %v351, 0.0
      %359 = vadd.xlane.f32.xlu0 %v358
      %v360 = vpop.xlane.xlu0 %359
      %v361 = vsel %vm333, %v353, 0.0
      %362 = vadd.xlane.f32.xlu0 %v361
      %v363 = vpop.xlane.xlu0 %362
      %v364 = vsel %vm333, %v355, 0.0
      %365 = vadd.xlane.f32.xlu0 %v364
      %v366 = vpop.xlane.xlu0 %365
      %v367 = vsel %vm333, %v357, 0.0
      %368 = vadd.xlane.f32.xlu0 %v367
      %v369 = vpop.xlane.xlu0 %368
      %v370 = vrcp.pop %v360
      %v371 = vrcp.pop %v363
      %v372 = vrcp.pop %v366
      %v373 = vrcp.pop %v369
      %v374 = vmul.f32 %v351, %v370
      %v375 = vmul.f32 %v353, %v371
      %v376 = vmul.f32 %v355, %v372
      %v377 = vmul.f32 %v357, %v373
      %v378 = vpack.c.bf16 %v374, %v374
      %v379 = vpack.c.bf16 %v375, %v375
      %v380 = vpack.c.bf16 %v376, %v376
      %v381 = vpack.c.bf16 %v377, %v377
      %vm382 = vcmask 31744
      %v384 = vsel %vm382, %v378, 0
      %vm386 = vcmask 1041408
      %v388 = vsel %vm386, %v239, 0
      %390 = vmatpush.bf16.msra.mxu0 0
      %391 = vmatpush.bf16.msra.mxu0 0
      %392 = vmatpush.bf16.msra.mxu0 0
      %393 = vmatpush.bf16.msra.mxu0 0
      %394 = vmatpush.bf16.msra.mxu0 0
      %395 = vmatpush.bf16.msra.mxu0 0
      %396 = vmatpush.bf16.msra.mxu0 0
      %397 = vmatpush.bf16.msra.mxu0 %v388
      %398 = vmatmul.bf16.gmra.mxu0 %v384
      %v399 = vpop.f32.mrf.mxu0
      %v400 = vadd.f32 0.0, %v399
      %v401 = vpop.f32.mrf.mxu0
      %402 = vdwg.mxu0
      %v404 = vsel %vm382, %v379, 0
      %v407 = vsel %vm386, %v240, 0
      %409 = vmatpush.bf16.msra.mxu0 0
      %410 = vmatpush.bf16.msra.mxu0 0
      %411 = vmatpush.bf16.msra.mxu0 0
      %412 = vmatpush.bf16.msra.mxu0 0
      %413 = vmatpush.bf16.msra.mxu0 0
      %414 = vmatpush.bf16.msra.mxu0 0
      %415 = vmatpush.bf16.msra.mxu0 0
      %416 = vmatpush.bf16.msra.mxu0 %v407
      %417 = vmatmul.bf16.gmra.mxu0 %v404
      %v418 = vpop.f32.mrf.mxu0
      %v419 = vadd.f32 0.0, %v418
      %v420 = vpop.f32.mrf.mxu0
      %421 = vdwg.mxu0
      %v423 = vsel %vm382, %v380, 0
      %v426 = vsel %vm386, %v241, 0
      %428 = vmatpush.bf16.msra.mxu0 0
      %429 = vmatpush.bf16.msra.mxu0 0
      %430 = vmatpush.bf16.msra.mxu0 0
      %431 = vmatpush.bf16.msra.mxu0 0
      %432 = vmatpush.bf16.msra.mxu0 0
      %433 = vmatpush.bf16.msra.mxu0 0
      %434 = vmatpush.bf16.msra.mxu0 0
      %435 = vmatpush.bf16.msra.mxu0 %v426
      %436 = vmatmul.bf16.gmra.mxu0 %v423
      %v437 = vpop.f32.mrf.mxu0
      %v438 = vadd.f32 0.0, %v437
      %v439 = vpop.f32.mrf.mxu0
      %440 = vdwg.mxu0
      %v442 = vsel %vm382, %v381, 0
      %v445 = vsel %vm386, %v242, 0
      %447 = vmatpush.bf16.msra.mxu0 0
      %448 = vmatpush.bf16.msra.mxu0 0
      %449 = vmatpush.bf16.msra.mxu0 0
      %450 = vmatpush.bf16.msra.mxu0 0
      %451 = vmatpush.bf16.msra.mxu0 0
      %452 = vmatpush.bf16.msra.mxu0 0
      %453 = vmatpush.bf16.msra.mxu0 0
      %454 = vmatpush.bf16.msra.mxu0 %v445
      %455 = vmatmul.bf16.gmra.mxu0 %v442
      %v456 = vpop.f32.mrf.mxu0
      %v457 = vadd.f32 0.0, %v456
      %v458 = vpop.f32.mrf.mxu0
      %459 = vdwg.mxu0
      %vm460 = vcmask 60416
      %461 = vst.msk [vmem:[%s216] sm:$0xf] %vm460, %v400
      %462 = vst.msk [vmem:[%s216 + $0x4] sm:$0xf] %vm460, %v419
      %463 = vst.msk [vmem:[%s216 + $0x8] sm:$0xf] %vm460, %v438
      %464 = vst.msk [vmem:[%s216 + $0xc] sm:$0xf] %vm460, %v457
      %s465 = smul.u32 4, %s14
      %p466 = scmp.lt.s32.totalorder %s465, 7
      %s467 = scalar_select %p466, %s465, 7
      %s468 = smul.addr %s467, 4
      %s469 = scalar_lea.vmem %s3, %s468
      // Predicated region
      $region33: #{fwd.76} parent=31 // pred_check
        %p470 = pneg %p110
      $region34: #{fwd.76} parent=31 // pred_check_branch
        %472 = sbr.rel (%p470) target = $region36
      $region35: #{fwd.76} parent=31 // pred_region
        %s473 = smul.u32 4, %s14
      $region36: #{fwd.76} parent=31 // pred_fallthru
        _
    $region32: #{fwd.76} parent=5 // pred_fallthru
      _
    %p474 = scmp.le.s32.totalorder 2, %s9
    // Predicated region
    $region37: #{fwd.76} parent=5 // pred_check
      %p475 = pneg %p474
    $region38: #{fwd.76} parent=5 // pred_check_branch
      %477 = sbr.rel (%p475) target = $region40
    $region39: #{fwd.76} parent=5 // pred_region
      %s478 = ssub.s32 %s9, 2
      // Predicated region
      $region41: #{fwd.76} parent=39 // pred_check
        %p479 = pneg %p116
      $region42: #{fwd.76} parent=39 // pred_check_branch
        %481 = sbr.rel (%p479) target = $region44
      $region43: #{fwd.76} parent=39 // pred_region
        %s482 = smul.u32 4, %s15
        %p483 = scmp.lt.s32.totalorder %s482, 7
        %s484 = scalar_select %p483, %s482, 7
        %s485 = smul.addr %s484, 4
        %s486 = scalar_lea.vmem %s3, %s485
      $region44: #{fwd.76} parent=39 // pred_fallthru
        _
    $region40: #{fwd.76} parent=5 // pred_fallthru
      _
  $region6: #{fwd.76} parent=0 // loop_footer
    %s13 = sadd.s32 1, %s9
  $region7: #{fwd.76} parent=0 // loop_footer_branch
    %8 = sbr.rel target = $region3
  $region8: #{fwd.76} parent=0 // loop_exit
    _

// kernel: fwd.77
$region0: #{fwd.77}
  #allocation0 [shape = 'u32[]', space=smem, size = 0x4, offset = 0x4, fixed_abs, tag = 'smem constant byte address 0x4 - core index']
  #allocation1 [shape = 'u32[72,128]{1,0:T(1,128)}', space=vmem, size = 0x9000, scoped, tag = 'internal scratch']
  %s0 = inlined_call_operand.vmem [shape: f32[8,32], index: 0, kind: input, shape index: {}]
  %s1 = inlined_call_operand.vmem [shape: f32[8,32], index: 1, kind: input, shape index: {}]
  %s2 = inlined_call_operand.vmem [shape: f32[32,32], index: 2, kind: input, shape index: {}]
  %s3 = inlined_call_operand.vmem [shape: f32[1,32], index: 3, kind: input, shape index: {}, may-alias: {3,5,9}]
  %s4 = inlined_call_operand.vmem [shape: f32[1,32], index: 4, kind: input, shape index: {}]
  %s5 = inlined_call_operand.vmem [shape: f32[1,32], index: 5, kind: input, shape index: {}, may-alias: {3,5,9}]
  %s6 = inlined_call_operand.vmem [shape: f32[32,128], index: 6, kind: input, shape index: {}]
  %s7 = inlined_call_operand.vmem [shape: f32[1,128], index: 7, kind: input, shape index: {}]
  %s8 = inlined_call_operand.vmem [shape: f32[128,32], index: 8, kind: input, shape index: {}]
  %s9 = inlined_call_operand.vmem [shape: f32[1,32], index: 9, kind: input, shape index: {}, may-alias: {3,5,9}]
  %s10 = inlined_call_operand.vmem [shape: f32[8,32], index: 10, kind: output, shape index: {}]
  %s11 = sld [smem:[#allocation0]]
  $region50: #{fwd.77} parent=0
    _
  %s13 = ssub.s32 1, %s11
  %s14 = scalar_select 0, %s13, %s11
  // Predicated region
  $region2: #{fwd.77} parent=0 // pred_check
    _
  $region3: #{fwd.77} parent=0 // pred_check_branch
    %16 = sbr.rel (0) target = $region5
  $region4: #{fwd.77} parent=0 // pred_region
    _
  $region5: #{fwd.77} parent=0 // pred_fallthru
    _
  // Predicated region
  $region6: #{fwd.77} parent=0 // pred_check
    _
  $region7: #{fwd.77} parent=0 // pred_check_branch
    %18 = sbr.rel (0) target = $region9
  $region8: #{fwd.77} parent=0 // pred_region
    _
  $region9: #{fwd.77} parent=0 // pred_fallthru
    _
  // Predicated region
  $region10: #{fwd.77} parent=0 // pred_check
    _
  $region11: #{fwd.77} parent=0 // pred_check_branch
    %20 = sbr.rel (0) target = $region13
  $region12: #{fwd.77} parent=0 // pred_region
    _
  $region13: #{fwd.77} parent=0 // pred_fallthru
    _
  // Predicated region
  $region14: #{fwd.77} parent=0 // pred_check
    _
  $region15: #{fwd.77} parent=0 // pred_check_branch
    %22 = sbr.rel (0) target = $region17
  $region16: #{fwd.77} parent=0 // pred_region
    _
  $region17: #{fwd.77} parent=0 // pred_fallthru
    _
  // Predicated region
  $region18: #{fwd.77} parent=0 // pred_check
    _
  $region19: #{fwd.77} parent=0 // pred_check_branch
    %24 = sbr.rel (0) target = $region21
  $region20: #{fwd.77} parent=0 // pred_region
    _
  $region21: #{fwd.77} parent=0 // pred_fallthru
    _
  // Predicated region
  $region22: #{fwd.77} parent=0 // pred_check
    _
  $region23: #{fwd.77} parent=0 // pred_check_branch
    %26 = sbr.rel (0) target = $region25
  $region24: #{fwd.77} parent=0 // pred_region
    _
  $region25: #{fwd.77} parent=0 // pred_fallthru
    _
  // Predicated region
  $region26: #{fwd.77} parent=0 // pred_check
    _
  $region27: #{fwd.77} parent=0 // pred_check_branch
    %28 = sbr.rel (0) target = $region29
  $region28: #{fwd.77} parent=0 // pred_region
    _
  $region29: #{fwd.77} parent=0 // pred_fallthru
    _
  // Predicated region
  $region30: #{fwd.77} parent=0 // pred_check
    _
  $region31: #{fwd.77} parent=0 // pred_check_branch
    %30 = sbr.rel (0) target = $region33
  $region32: #{fwd.77} parent=0 // pred_region
    _
  $region33: #{fwd.77} parent=0 // pred_fallthru
    _
  // Predicated region
  $region34: #{fwd.77} parent=0 // pred_check
    _
  $region35: #{fwd.77} parent=0 // pred_check_branch
    %32 = sbr.rel (0) target = $region37
  $region36: #{fwd.77} parent=0 // pred_region
    _
  $region37: #{fwd.77} parent=0 // pred_fallthru
    _
  // Predicated region
  $region38: #{fwd.77} parent=0 // pred_check
    _
  $region39: #{fwd.77} parent=0 // pred_check_branch
    %34 = sbr.rel (0) target = $region41
  $region40: #{fwd.77} parent=0 // pred_region
    _
  $region41: #{fwd.77} parent=0 // pred_fallthru
    _
  %v36 = vld [vmem:[%s0] sm:$0xff]
  %v37 = vld [vmem:[%s1] sm:$0xff]
  %v38 = vpack.c.bf16 %v37, %v37
  %v39 = vld [vmem:[%s2] sm:$0xff]
  %v40 = vld [vmem:[%s2 + $0x8] sm:$0xff]
  %v41 = vld [vmem:[%s2 + $0x10] sm:$0xff]
  %v42 = vld [vmem:[%s2 + $0x18] sm:$0xff]
  %v43 = vpack.c.bf16 %v40, %v39
  %v44 = vpack.c.bf16 %v42, %v41
  %v45 = vld [vmem:[%s3] sm:$0x1]
  %v47 = vperm.slane %v45, 0
  %vm49 = vcmask 261120
  %v51 = vsel %vm49, %v38, 0
  %53 = vmatpush.bf16.msra.mxu0 0
  %54 = vmatpush.bf16.msra.mxu0 0
  %55 = vmatpush.bf16.msra.mxu0 0
  %56 = vmatpush.bf16.msra.mxu0 0
  %57 = vmatpush.bf16.msra.mxu0 0
  %58 = vmatpush.bf16.msra.mxu0 0
  %59 = vmatpush.bf16.msra.mxu0 %v44
  %60 = vmatpush.bf16.msra.mxu0 %v43
  %61 = vmatmul.bf16.gmra.mxu0 %v51
  %v62 = vpop.f32.mrf.mxu0
  %v63 = vadd.f32 %v47, %v62
  %v64 = vpop.f32.mrf.mxu0
  %65 = vdwg.mxu0
  %v66 = vadd.f32 %v36, %v63
  %v67 = vsel %vm49, %v66, 0.0
  %68 = vadd.xlane.f32.xlu0 %v67
  %v69 = vpop.xlane.xlu0 %68
  %v70 = vrcp.pop 32.0
  %v71 = vmul.f32 32.0, %v70
  %v72 = vsub.f32 1.0, %v71
  %v73 = vmul.f32 %v70, %v72
  %v74 = vadd.f32 %v70, %v73
  %vm75 = vweird.f32 %v70
  %v76 = vsel %vm75, %v70, %v74
  %v77 = vmul.f32 %v69, %v76
  %v78 = vsub.f32 %v66, %v77
  %v79 = vmul.f32 %v78, %v78
  %v80 = vsel %vm49, %v79, 0.0
  %81 = vadd.xlane.f32.xlu0 %v80
  %v82 = vpop.xlane.xlu0 %81
  %v83 = vmul.f32 %v82, %v76
  %v84 = vadd.f32 %v83, 1e-05
  %v85 = vrsqrt.pop %v84
  %v86 = vmul.f32 %v85, %v84
  %v87 = vmul.f32 %v86, %v85
  %v88 = vmul.f32 0.5, %v87
  %v89 = vsub.f32 1.5, %v88
  %v90 = vmul.f32 %v85, %v89
  %vm91 = vweird.f32 %v84
  %vm92 = vweird.f32 %v85
  %vm93 = vmor %vm91, %vm92
  %v94 = vsel %vm93, %v85, %v90
  %v95 = vmul.f32 %v78, %v94
  %v96 = vld [vmem:[%s4] sm:$0x1]
  %v98 = vperm.slane %v96, 0
  %v100 = vmul.f32 %v95, %v98
  %v101 = vld [vmem:[%s5] sm:$0x1]
  %v103 = vperm.slane %v101, 0
  %v105 = vadd.f32 %v100, %v103
  %v106 = vpack.c.bf16 %v105, %v105
  %v107 = vld [vmem:[%s6] sm:$0xff]
  %v108 = vld [vmem:[%s6 + $0x8] sm:$0xff]
  %v109 = vld [vmem:[%s6 + $0x10] sm:$0xff]
  %v110 = vld [vmem:[%s6 + $0x18] sm:$0xff]
  %v111 = vpack.c.bf16 %v108, %v107
  %v112 = vpack.c.bf16 %v110, %v109
  %v113 = vld [vmem:[%s7] sm:$0x1]
  %v115 = vperm.slane %v113, 0
  %v118 = vsel %vm49, %v106, 0
  %120 = vmatpush.bf16.msra.mxu0 0
  %121 = vmatpush.bf16.msra.mxu0 0
  %122 = vmatpush.bf16.msra.mxu0 0
  %123 = vmatpush.bf16.msra.mxu0 0
  %124 = vmatpush.bf16.msra.mxu0 0
  %125 = vmatpush.bf16.msra.mxu0 0
  %126 = vmatpush.bf16.msra.mxu0 %v112
  %127 = vmatpush.bf16.msra.mxu0 %v111
  %128 = vmatmul.bf16.gmra.mxu0 %v118
  %v129 = vpop.f32.mrf.mxu0
  %v130 = vadd.f32 %v115, %v129
  %v131 = vpop.f32.mrf.mxu0
  %132 = vdwg.mxu0
  %v133 = vmul.f32 %v130, 0.5
  %v134 = vmul.f32 %v130, 0.70710677
  %v135 = vand.u32 2147483647, %v134
  %v136 = vmul.f32 %v135, 0.3275911
  %v137 = vadd.f32 %v136, 1.0
  %v138 = vrcp.pop %v137
  %v139 = vmul.f32 %v137, %v138
  %v140 = vsub.f32 1.0, %v139
  %v141 = vmul.f32 %v138, %v140
  %v142 = vadd.f32 %v138, %v141
  %vm143 = vweird.f32 %v137
  %vm144 = vweird.f32 %v138
  %vm145 = vmor %vm143, %vm144
  %v146 = vsel %vm145, %v138, %v142
  %v147 = vand.u32 2147483647, %v137
  %vm148 = vcmp.eq.f32.partialorder %v147, 8.507059e+37
  %v149 = vand.u32 %v137, 2147483648
  %v150 = vor.u32 1.1754944e-38, %v149
  %v151 = vsel %vm148, %v150, %v146
  %v152 = vmul.f32 1.0, %v151
  %v153 = vmul.f32 %v152, 1.0614054
  %v154 = vadd.f32 %v153, -1.4531521
  %v155 = vmul.f32 %v154, %v152
  %v156 = vadd.f32 %v155, 1.4214138
  %v157 = vmul.f32 %v156, %v152
  %v158 = vadd.f32 %v157, -0.28449672
  %v159 = vmul.f32 %v158, %v152
  %v160 = vadd.f32 %v159, 0.2548296
  %v161 = vmul.f32 %v160, %v152
  %v162 = vsub.f32 0.0, %v135
  %v163 = vmul.f32 %v162, %v135
  %v164 = vmul.f32 %v163, 1.442695
  %v165 = vpow.pop %v164
  %v166 = vmul.f32 %v161, %v165
  %v167 = vsub.f32 1.0, %v166
  %vm168 = vcmp.ge.f32.partialorder %v134, 0.0
  %v169 = vsub.f32 0.0, %v167
  %v170 = vsel %vm168, %v167, %v169
  %v171 = vadd.f32 %v170, 1.0
  %v172 = vmul.f32 %v133, %v171
  %v173 = vpack.c.bf16 %v172, %v172
  %v174 = vld [vmem:[%s8] sm:$0xff]
  %v175 = vld [vmem:[%s8 + $0x8] sm:$0xff]
  %v176 = vld [vmem:[%s8 + $0x10] sm:$0xff]
  %v177 = vld [vmem:[%s8 + $0x18] sm:$0xff]
  %v178 = vld [vmem:[%s8 + $0x20] sm:$0xff]
  %v179 = vld [vmem:[%s8 + $0x28] sm:$0xff]
  %v180 = vld [vmem:[%s8 + $0x30] sm:$0xff]
  %v181 = vld [vmem:[%s8 + $0x38] sm:$0xff]
  %v182 = vld [vmem:[%s8 + $0x40] sm:$0xff]
  %v183 = vld [vmem:[%s8 + $0x48] sm:$0xff]
  %v184 = vld [vmem:[%s8 + $0x50] sm:$0xff]
  %v185 = vld [vmem:[%s8 + $0x58] sm:$0xff]
  %v186 = vld [vmem:[%s8 + $0x60] sm:$0xff]
  %v187 = vld [vmem:[%s8 + $0x68] sm:$0xff]
  %v188 = vld [vmem:[%s8 + $0x70] sm:$0xff]
  %v189 = vld [vmem:[%s8 + $0x78] sm:$0xff]
  %v190 = vpack.c.bf16 %v175, %v174
  %v191 = vpack.c.bf16 %v177, %v176
  %v192 = vpack.c.bf16 %v179, %v178
  %v193 = vpack.c.bf16 %v181, %v180
  %v194 = vpack.c.bf16 %v183, %v182
  %v195 = vpack.c.bf16 %v185, %v184
  %v196 = vpack.c.bf16 %v187, %v186
  %v197 = vpack.c.bf16 %v189, %v188
  %v198 = vld [vmem:[%s9] sm:$0x1]
  %v200 = vperm.slane %v198, 0
  %202 = vmatpush.bf16.msra.mxu0 %v197
  %203 = vmatpush.bf16.msra.mxu0 %v196
  %204 = vmatpush.bf16.msra.mxu0 %v195
  %205 = vmatpush.bf16.msra.mxu0 %v194
  %206 = vmatpush.bf16.msra.mxu0 %v193
  %207 = vmatpush.bf16.msra.mxu0 %v192
  %208 = vmatpush.bf16.msra.mxu0 %v191
  %209 = vmatpush.bf16.msra.mxu0 %v190
  %210 = vmatmul.bf16.gmra.mxu0 %v173
  %v211 = vpop.f32.mrf.mxu0
  %v212 = vadd.f32 %v200, %v211
  %v213 = vpop.f32.mrf.mxu0
  %214 = vdwg.mxu0
  %v215 = vadd.f32 %v66, %v212
  %216 = vst.msk [vmem:[%s10] sm:$0xff] %vm49, %v215
  // Predicated region
  $region42: #{fwd.77} parent=0 // pred_check
    _
  $region43: #{fwd.77} parent=0 // pred_check_branch
    %218 = sbr.rel (0) target = $region45
  $region44: #{fwd.77} parent=0 // pred_region
    _
  $region45: #{fwd.77} parent=0 // pred_fallthru
    _
  // Predicated region
  $region46: #{fwd.77} parent=0 // pred_check
    _
  $region47: #{fwd.77} parent=0 // pred_check_branch
    %220 = sbr.rel (0) target = $region49
  $region48: #{fwd.77} parent=0 // pred_region
    _
  $region49: #{fwd.77} parent=0 // pred_fallthru
    _

// kernel: fwd.47
$region0: #{fwd.47}
  #allocation0 [shape = 'u32[]', space=smem, size = 0x4, offset = 0x4, fixed_abs, tag = 'smem constant byte address 0x4 - core index']
  #allocation1 [shape = 'u32[72,128]{1,0:T(1,128)}', space=vmem, size = 0x9000, scoped, tag = 'internal scratch']
  %s0 = inlined_call_operand.vmem [shape: f32[96,4], index: 0, kind: input, shape index: {}]
  %s1 = inlined_call_operand.vmem [shape: f32[4,64], index: 1, kind: input, shape index: {}]
  %s2 = inlined_call_operand.vmem [shape: f32[1,64], index: 2, kind: input, shape index: {}]
  %s3 = inlined_call_operand.vmem [shape: f32[96,64], index: 3, kind: output, shape index: {}]
  %s4 = sld [smem:[#allocation0]]
  $region45: #{fwd.47} parent=0
    _
  %s6 = ssub.s32 1, %s4
  %s7 = scalar_select 0, %s6, %s4
  loop: start=0, step=1, limit=4
  $region2: #{fwd.47} parent=0 // loop_pre_header
    _
  $region3: #{fwd.47} parent=0 // loop_header
    %s9 = sphi 0, %s13
    %p10 = scmp.ge.s32.totalorder %s9, 4
    %s19 = sphi 0, %s21
    %s22 = sphi 0, %s19
    %s23 = sphi 0, %s22
    %s39 = sphi 0, %s23
    %s43 = sphi 0, %s43
    %s45 = sphi 0, %s43
    %s46 = sphi 0, %s45
    %s60 = sphi 0, %s46
    %s64 = sphi 0, %s64
    %s66 = sphi 0, %s64
    %s67 = sphi 0, %s66
    %s81 = sphi 0, %s67
    %s87 = sphi 0, %s89
    %s90 = sphi 0, %s87
    %s91 = sphi 0, %s90
    %s107 = sphi 0, %s91
  $region4: #{fwd.47} parent=0 // loop_header_branch
    %12 = sbr.rel (%p10) target = $region8
  $region5: #{fwd.47} parent=0 // loop_body
    %s14 = ssub.s32 %s9, 1
    %s15 = ssub.s32 %s9, 2
    %s16 = sadd.s32 %s9, 1
    %s17 = ssub.s32 %s9, %s16
    %p18 = scmp.eq.s32.totalorder %s17, 0
    %s20 = sadd.s32 %s19, 1
    %s21 = scalar_select %p18, %s19, %s20
    %p24 = pneg %p18
    %p25 = scmp.eq.s32.totalorder %s9, 1
    %p26 = por %p24, %p25
    %p27 = scmp.ne.s32.totalorder %s19, %s22
    %p28 = scmp.eq.s32.totalorder %s9, 0
    %p29 = por %p27, %p28
    %p30 = scmp.ne.s32.totalorder %s19, %s22
    %p31 = scmp.eq.s32.totalorder %s14, 1
    %p32 = por %p30, %p31
    %p33 = scmp.ne.s32.totalorder %s22, %s23
    %p34 = scmp.eq.s32.totalorder %s14, 0
    %p35 = por %p33, %p34
    %p36 = scmp.ne.s32.totalorder %s22, %s23
    %p37 = scmp.eq.s32.totalorder %s15, 1
    %p38 = por %p36, %p37
    %p40 = scmp.ne.s32.totalorder %s23, %s39
    %p41 = scmp.eq.s32.totalorder %s15, 0
    %p42 = por %p40, %p41
    %s44 = sadd.s32 %s43, 1
    %p47 = scmp.eq.s32.totalorder %s9, 1
    %p48 = scmp.ne.s32.totalorder %s43, %s45
    %p49 = scmp.eq.s32.totalorder %s9, 0
    %p50 = por %p48, %p49
    %p51 = scmp.ne.s32.totalorder %s43, %s45
    %p52 = scmp.eq.s32.totalorder %s14, 1
    %p53 = por %p51, %p52
    %p54 = scmp.ne.s32.totalorder %s45, %s46
    %p55 = scmp.eq.s32.totalorder %s14, 0
    %p56 = por %p54, %p55
    %p57 = scmp.ne.s32.totalorder %s45, %s46
    %p58 = scmp.eq.s32.totalorder %s15, 1
    %p59 = por %p57, %p58
    %p61 = scmp.ne.s32.totalorder %s46, %s60
    %p62 = scmp.eq.s32.totalorder %s15, 0
    %p63 = por %p61, %p62
    %s65 = sadd.s32 %s64, 1
    %p68 = scmp.eq.s32.totalorder %s9, 1
    %p69 = scmp.ne.s32.totalorder %s64, %s66
    %p70 = scmp.eq.s32.totalorder %s9, 0
    %p71 = por %p69, %p70
    %p72 = scmp.ne.s32.totalorder %s64, %s66
    %p73 = scmp.eq.s32.totalorder %s14, 1
    %p74 = por %p72, %p73
    %p75 = scmp.ne.s32.totalorder %s66, %s67
    %p76 = scmp.eq.s32.totalorder %s14, 0
    %p77 = por %p75, %p76
    %p78 = scmp.ne.s32.totalorder %s66, %s67
    %p79 = scmp.eq.s32.totalorder %s15, 1
    %p80 = por %p78, %p79
    %p82 = scmp.ne.s32.totalorder %s67, %s81
    %p83 = scmp.eq.s32.totalorder %s15, 0
    %p84 = por %p82, %p83
    %s85 = ssub.s32 %s9, %s16
    %p86 = scmp.eq.s32.totalorder %s85, 0
    %s88 = sadd.s32 %s87, 1
    %s89 = scalar_select %p86, %s87, %s88
    %p92 = pneg %p86
    %p93 = scmp.eq.s32.totalorder %s9, 1
    %p94 = por %p92, %p93
    %p95 = scmp.ne.s32.totalorder %s87, %s90
    %p96 = scmp.eq.s32.totalorder %s9, 0
    %p97 = por %p95, %p96
    %p98 = scmp.ne.s32.totalorder %s87, %s90
    %p99 = scmp.eq.s32.totalorder %s14, 1
    %p100 = por %p98, %p99
    %p101 = scmp.ne.s32.totalorder %s90, %s91
    %p102 = scmp.eq.s32.totalorder %s14, 0
    %p103 = por %p101, %p102
    %p104 = scmp.ne.s32.totalorder %s90, %s91
    %p105 = scmp.eq.s32.totalorder %s15, 1
    %p106 = por %p104, %p105
    %p108 = scmp.ne.s32.totalorder %s91, %s107
    %p109 = scmp.eq.s32.totalorder %s15, 0
    %p110 = por %p108, %p109
    %p111 = scmp.le.s32.totalorder 1, %s9
    %p112 = scmp.lt.s32.totalorder %s9, 3
    %p113 = pnand %p111, %p112
    %p114 = pneg %p113
    // Predicated region
    $region9: #{fwd.47} parent=5 // pred_check
      _
    $region10: #{fwd.47} parent=5 // pred_check_branch
      %116 = sbr.rel (%p113) target = $region12
    $region11: #{fwd.47} parent=5 // pred_region
      %s117 = ssub.s32 %s9, 1
      // Predicated region
      $region13: #{fwd.47} parent=11 // pred_check
        %p118 = pneg %p56
      $region14: #{fwd.47} parent=11 // pred_check_branch
        %120 = sbr.rel (%p118) target = $region16
      $region15: #{fwd.47} parent=11 // pred_region
        _
      $region16: #{fwd.47} parent=11 // pred_fallthru
        _
      // Predicated region
      $region17: #{fwd.47} parent=11 // pred_check
        %p121 = pneg %p77
      $region18: #{fwd.47} parent=11 // pred_check_branch
        %123 = sbr.rel (%p121) target = $region20
      $region19: #{fwd.47} parent=11 // pred_region
        _
      $region20: #{fwd.47} parent=11 // pred_fallthru
        _
    $region12: #{fwd.47} parent=5 // pred_fallthru
      _
    %p124 = scmp.lt.s32.totalorder %s9, 2
    // Predicated region
    $region21: #{fwd.47} parent=5 // pred_check
      %p125 = pneg %p124
    $region22: #{fwd.47} parent=5 // pred_check_branch
      %127 = sbr.rel (%p125) target = $region24
    $region23: #{fwd.47} parent=5 // pred_region
      // Predicated region
      $region25: #{fwd.47} parent=23 // pred_check
        %p128 = pneg %p29
      $region26: #{fwd.47} parent=23 // pred_check_branch
        %130 = sbr.rel (%p128) target = $region28
      $region27: #{fwd.47} parent=23 // pred_region
        %s131 = smul.u32 6, %s9
        %p132 = scmp.lt.s32.totalorder %s131, 11
        %s133 = scalar_select %p132, %s131, 11
        %s134 = smul.addr %s133, 8
        %s135 = scalar_lea.vmem %s0, %s134
        %s136 = smul.u32 6, %s9
      $region28: #{fwd.47} parent=23 // pred_fallthru
        _
    $region24: #{fwd.47} parent=5 // pred_fallthru
      _
    %p137 = scmp.le.s32.totalorder 1, %s9
    %p138 = scmp.lt.s32.totalorder %s9, 3
    %p139 = pnand %p137, %p138
    %p140 = pneg %p139
    // Predicated region
    $region29: #{fwd.47} parent=5 // pred_check
      _
    $region30: #{fwd.47} parent=5 // pred_check_branch
      %142 = sbr.rel (%p139) target = $region32
    $region31: #{fwd.47} parent=5 // pred_region
      %s143 = ssub.s32 %s9, 1
      %s144 = smul.u32 6, %s14
      %p145 = scmp.lt.s32.totalorder %s144, 11
      %s146 = scalar_select %p145, %s144, 11
      %s147 = smul.addr %s146, 8
      %s148 = scalar_lea.vmem %s0, %s147
      %p149 = pneg %p35
      %p150 = pneg %p32
      %p151 = pneg %p56
      %p152 = pneg %p53
      %p153 = pneg %p77
      %p154 = pneg %p74
      %p155 = pneg %p103
      %p156 = pneg %p100
      %s157 = smul.u32 6, %s14
      %p158 = scmp.lt.s32.totalorder %s157, 11
      %s159 = scalar_select %p158, %s157, 11
      %s160 = smul.addr %s159, 8
      %s161 = scalar_lea.vmem %s3, %s160
      %s162 = smul.u32 6, %s14
      %p163 = scmp.lt.s32.totalorder %s162, 11
      %s164 = scalar_select %p163, %s162, 11
      %s165 = smul.addr %s164, 8
      %s166 = scalar_lea.vmem %s0, %s165
      %s167 = smul.u32 6, %s14
      %s168 = smul.u32 6, %s14
      %p169 = scmp.lt.s32.totalorder %s168, 11
      %s170 = scalar_select %p169, %s168, 11
      %s171 = smul.addr %s170, 8
      %s172 = scalar_lea.vmem %s3, %s171
      %s173 = smul.u32 6, %s14
      %v175 = vld [vmem:[%s166] sm:$0xff]
      %v176 = vld [vmem:[%s166 + $0x8] sm:$0xff]
      %v177 = vld [vmem:[%s166 + $0x10] sm:$0xff]
      %v178 = vld [vmem:[%s166 + $0x18] sm:$0xff]
      %v179 = vld [vmem:[%s166 + $0x20] sm:$0xff]
      %v180 = vld [vmem:[%s166 + $0x28] sm:$0xff]
      %v181 = vpack.c.bf16 %v176, %v175
      %v182 = vpack.c.bf16 %v178, %v177
      %v183 = vpack.c.bf16 %v180, %v179
      %v184 = vld [vmem:[%s1] sm:$0xf]
      %v185 = vpack.c.bf16 %v184, %v184
      %v186 = vld [vmem:[%s2] sm:$0x1]
      %v188 = vperm.slane %v186, 0
      %vm190 = vcmask 31744
      %v192 = vsel %vm190, %v181, 0
      %v195 = vsel %vm190, %v182, 0
      %v198 = vsel %vm190, %v183, 0
      %vm200 = vcmask 1041408
      %v202 = vsel %vm200, %v185, 0
      %204 = vmatpush.bf16.msra.mxu0 0
      %205 = vmatpush.bf16.msra.mxu0 0
      %206 = vmatpush.bf16.msra.mxu0 0
      %207 = vmatpush.bf16.msra.mxu0 0
      %208 = vmatpush.bf16.msra.mxu0 0
      %209 = vmatpush.bf16.msra.mxu0 0
      %210 = vmatpush.bf16.msra.mxu0 0
      %211 = vmatpush.bf16.msra.mxu0 %v202
      %212 = vmatmul.bf16.gmra.mxu0 %v192
      %v213 = vpop.f32.mrf.mxu0
      %v214 = vadd.f32 %v188, %v213
      %v215 = vpop.f32.mrf.mxu0
      %v216 = vadd.f32 %v188, %v215
      %217 = vmatmul.bf16.gmra.mxu0 %v195
      %v218 = vpop.f32.mrf.mxu0
      %v219 = vadd.f32 %v188, %v218
      %v220 = vpop.f32.mrf.mxu0
      %v221 = vadd.f32 %v188, %v220
      %222 = vmatmul.bf16.gmra.mxu0 %v198
      %v223 = vpop.f32.mrf.mxu0
      %v224 = vadd.f32 %v188, %v223
      %v225 = vpop.f32.mrf.mxu0
      %v226 = vadd.f32 %v188, %v225
      %227 = vdwg.mxu0
      %vm228 = vcmask 523264
      %229 = vst.msk [vmem:[%s172] sm:$0xff] %vm228, %v214
      %230 = vst.msk [vmem:[%s172 + $0x8] sm:$0xff] %vm228, %v216
      %231 = vst.msk [vmem:[%s172 + $0x10] sm:$0xff] %vm228, %v219
      %232 = vst.msk [vmem:[%s172 + $0x18] sm:$0xff] %vm228, %v221
      %233 = vst.msk [vmem:[%s172 + $0x20] sm:$0xff] %vm228, %v224
      %234 = vst.msk [vmem:[%s172 + $0x28] sm:$0xff] %vm228, %v226
      %s235 = smul.u32 6, %s14
      %p236 = scmp.lt.s32.totalorder %s235, 11
      %s237 = scalar_select %p236, %s235, 11
      %s238 = smul.addr %s237, 8
      %s239 = scalar_lea.vmem %s3, %s238
      // Predicated region
      $region33: #{fwd.47} parent=31 // pred_check
        %p240 = pneg %p100
      $region34: #{fwd.47} parent=31 // pred_check_branch
        %242 = sbr.rel (%p240) target = $region36
      $region35: #{fwd.47} parent=31 // pred_region
        %s243 = smul.u32 6, %s14
      $region36: #{fwd.47} parent=31 // pred_fallthru
        _
    $region32: #{fwd.47} parent=5 // pred_fallthru
      _
    %p244 = scmp.le.s32.totalorder 2, %s9
    // Predicated region
    $region37: #{fwd.47} parent=5 // pred_check
      %p245 = pneg %p244
    $region38: #{fwd.47} parent=5 // pred_check_branch
      %247 = sbr.rel (%p245) target = $region40
    $region39: #{fwd.47} parent=5 // pred_region
      %s248 = ssub.s32 %s9, 2
      // Predicated region
      $region41: #{fwd.47} parent=39 // pred_check
        %p249 = pneg %p106
      $region42: #{fwd.47} parent=39 // pred_check_branch
        %251 = sbr.rel (%p249) target = $region44
      $region43: #{fwd.47} parent=39 // pred_region
        %s252 = smul.u32 6, %s15
        %p253 = scmp.lt.s32.totalorder %s252, 11
        %s254 = scalar_select %p253, %s252, 11
        %s255 = smul.addr %s254, 8
        %s256 = scalar_lea.vmem %s3, %s255
      $region44: #{fwd.47} parent=39 // pred_fallthru
        _
    $region40: #{fwd.47} parent=5 // pred_fallthru
      _
  $region6: #{fwd.47} parent=0 // loop_footer
    %s13 = sadd.s32 1, %s9
  $region7: #{fwd.47} parent=0 // loop_footer_branch
    %8 = sbr.rel target = $region3
  $region8: #{fwd.47} parent=0 // loop_exit
    _

// kernel: fwd.48
$region0: #{fwd.48}
  #allocation0 [shape = 'u32[]', space=smem, size = 0x4, offset = 0x4, fixed_abs, tag = 'smem constant byte address 0x4 - core index']
  #allocation1 [shape = 'u32[72,128]{1,0:T(1,128)}', space=vmem, size = 0x9000, scoped, tag = 'internal scratch']
  %s0 = inlined_call_operand.vmem [shape: f32[64,64], index: 0, kind: input, shape index: {}]
  %s1 = inlined_call_operand.vmem [shape: f32[1,64], index: 1, kind: input, shape index: {}]
  %s2 = inlined_call_operand.vmem [shape: f32[1,64], index: 2, kind: input, shape index: {}]
  %s3 = inlined_call_operand.vmem [shape: f32[64,64], index: 3, kind: input, shape index: {}]
  %s4 = inlined_call_operand.vmem [shape: f32[1,64], index: 4, kind: input, shape index: {}]
  %s5 = inlined_call_operand.vmem [shape: f32[64,64], index: 5, kind: output, shape index: {}]
  %s6 = sld [smem:[#allocation0]]
  $region53: #{fwd.48} parent=0
    _
  %s8 = ssub.s32 1, %s6
  %s9 = scalar_select 0, %s8, %s6
  loop: start=0, step=1, limit=4
  $region2: #{fwd.48} parent=0 // loop_pre_header
    _
  $region3: #{fwd.48} parent=0 // loop_header
    %s11 = sphi 0, %s15
    %p12 = scmp.ge.s32.totalorder %s11, 4
    %s21 = sphi 0, %s23
    %s24 = sphi 0, %s21
    %s25 = sphi 0, %s24
    %s41 = sphi 0, %s25
    %s45 = sphi 0, %s45
    %s47 = sphi 0, %s45
    %s48 = sphi 0, %s47
    %s62 = sphi 0, %s48
    %s66 = sphi 0, %s66
    %s68 = sphi 0, %s66
    %s69 = sphi 0, %s68
    %s83 = sphi 0, %s69
    %s87 = sphi 0, %s87
    %s89 = sphi 0, %s87
    %s90 = sphi 0, %s89
    %s104 = sphi 0, %s90
    %s108 = sphi 0, %s108
    %s110 = sphi 0, %s108
    %s111 = sphi 0, %s110
    %s125 = sphi 0, %s111
    %s131 = sphi 0, %s133
    %s134 = sphi 0, %s131
    %s135 = sphi 0, %s134
    %s151 = sphi 0, %s135
  $region4: #{fwd.48} parent=0 // loop_header_branch
    %14 = sbr.rel (%p12) target = $region8
  $region5: #{fwd.48} parent=0 // loop_body
    %s16 = ssub.s32 %s11, 1
    %s17 = ssub.s32 %s11, 2
    %s18 = sadd.s32 %s11, 1
    %s19 = ssub.s32 %s11, %s18
    %p20 = scmp.eq.s32.totalorder %s19, 0
    %s22 = sadd.s32 %s21, 1
    %s23 = scalar_select %p20, %s21, %s22
    %p26 = pneg %p20
    %p27 = scmp.eq.s32.totalorder %s11, 1
    %p28 = por %p26, %p27
    %p29 = scmp.ne.s32.totalorder %s21, %s24
    %p30 = scmp.eq.s32.totalorder %s11, 0
    %p31 = por %p29, %p30
    %p32 = scmp.ne.s32.totalorder %s21, %s24
    %p33 = scmp.eq.s32.totalorder %s16, 1
    %p34 = por %p32, %p33
    %p35 = scmp.ne.s32.totalorder %s24, %s25
    %p36 = scmp.eq.s32.totalorder %s16, 0
    %p37 = por %p35, %p36
    %p38 = scmp.ne.s32.totalorder %s24, %s25
    %p39 = scmp.eq.s32.totalorder %s17, 1
    %p40 = por %p38, %p39
    %p42 = scmp.ne.s32.totalorder %s25, %s41
    %p43 = scmp.eq.s32.totalorder %s17, 0
    %p44 = por %p42, %p43
    %s46 = sadd.s32 %s45, 1
    %p49 = scmp.eq.s32.totalorder %s11, 1
    %p50 = scmp.ne.s32.totalorder %s45, %s47
    %p51 = scmp.eq.s32.totalorder %s11, 0
    %p52 = por %p50, %p51
    %p53 = scmp.ne.s32.totalorder %s45, %s47
    %p54 = scmp.eq.s32.totalorder %s16, 1
    %p55 = por %p53, %p54
    %p56 = scmp.ne.s32.totalorder %s47, %s48
    %p57 = scmp.eq.s32.totalorder %s16, 0
    %p58 = por %p56, %p57
    %p59 = scmp.ne.s32.totalorder %s47, %s48
    %p60 = scmp.eq.s32.totalorder %s17, 1
    %p61 = por %p59, %p60
    %p63 = scmp.ne.s32.totalorder %s48, %s62
    %p64 = scmp.eq.s32.totalorder %s17, 0
    %p65 = por %p63, %p64
    %s67 = sadd.s32 %s66, 1
    %p70 = scmp.eq.s32.totalorder %s11, 1
    %p71 = scmp.ne.s32.totalorder %s66, %s68
    %p72 = scmp.eq.s32.totalorder %s11, 0
    %p73 = por %p71, %p72
    %p74 = scmp.ne.s32.totalorder %s66, %s68
    %p75 = scmp.eq.s32.totalorder %s16, 1
    %p76 = por %p74, %p75
    %p77 = scmp.ne.s32.totalorder %s68, %s69
    %p78 = scmp.eq.s32.totalorder %s16, 0
    %p79 = por %p77, %p78
    %p80 = scmp.ne.s32.totalorder %s68, %s69
    %p81 = scmp.eq.s32.totalorder %s17, 1
    %p82 = por %p80, %p81
    %p84 = scmp.ne.s32.totalorder %s69, %s83
    %p85 = scmp.eq.s32.totalorder %s17, 0
    %p86 = por %p84, %p85
    %s88 = sadd.s32 %s87, 1
    %p91 = scmp.eq.s32.totalorder %s11, 1
    %p92 = scmp.ne.s32.totalorder %s87, %s89
    %p93 = scmp.eq.s32.totalorder %s11, 0
    %p94 = por %p92, %p93
    %p95 = scmp.ne.s32.totalorder %s87, %s89
    %p96 = scmp.eq.s32.totalorder %s16, 1
    %p97 = por %p95, %p96
    %p98 = scmp.ne.s32.totalorder %s89, %s90
    %p99 = scmp.eq.s32.totalorder %s16, 0
    %p100 = por %p98, %p99
    %p101 = scmp.ne.s32.totalorder %s89, %s90
    %p102 = scmp.eq.s32.totalorder %s17, 1
    %p103 = por %p101, %p102
    %p105 = scmp.ne.s32.totalorder %s90, %s104
    %p106 = scmp.eq.s32.totalorder %s17, 0
    %p107 = por %p105, %p106
    %s109 = sadd.s32 %s108, 1
    %p112 = scmp.eq.s32.totalorder %s11, 1
    %p113 = scmp.ne.s32.totalorder %s108, %s110
    %p114 = scmp.eq.s32.totalorder %s11, 0
    %p115 = por %p113, %p114
    %p116 = scmp.ne.s32.totalorder %s108, %s110
    %p117 = scmp.eq.s32.totalorder %s16, 1
    %p118 = por %p116, %p117
    %p119 = scmp.ne.s32.totalorder %s110, %s111
    %p120 = scmp.eq.s32.totalorder %s16, 0
    %p121 = por %p119, %p120
    %p122 = scmp.ne.s32.totalorder %s110, %s111
    %p123 = scmp.eq.s32.totalorder %s17, 1
    %p124 = por %p122, %p123
    %p126 = scmp.ne.s32.totalorder %s111, %s125
    %p127 = scmp.eq.s32.totalorder %s17, 0
    %p128 = por %p126, %p127
    %s129 = ssub.s32 %s11, %s18
    %p130 = scmp.eq.s32.totalorder %s129, 0
    %s132 = sadd.s32 %s131, 1
    %s133 = scalar_select %p130, %s131, %s132
    %p136 = pneg %p130
    %p137 = scmp.eq.s32.totalorder %s11, 1
    %p138 = por %p136, %p137
    %p139 = scmp.ne.s32.totalorder %s131, %s134
    %p140 = scmp.eq.s32.totalorder %s11, 0
    %p141 = por %p139, %p140
    %p142 = scmp.ne.s32.totalorder %s131, %s134
    %p143 = scmp.eq.s32.totalorder %s16, 1
    %p144 = por %p142, %p143
    %p145 = scmp.ne.s32.totalorder %s134, %s135
    %p146 = scmp.eq.s32.totalorder %s16, 0
    %p147 = por %p145, %p146
    %p148 = scmp.ne.s32.totalorder %s134, %s135
    %p149 = scmp.eq.s32.totalorder %s17, 1
    %p150 = por %p148, %p149
    %p152 = scmp.ne.s32.totalorder %s135, %s151
    %p153 = scmp.eq.s32.totalorder %s17, 0
    %p154 = por %p152, %p153
    %p155 = scmp.le.s32.totalorder 1, %s11
    %p156 = scmp.lt.s32.totalorder %s11, 3
    %p157 = pnand %p155, %p156
    %p158 = pneg %p157
    // Predicated region
    $region9: #{fwd.48} parent=5 // pred_check
      _
    $region10: #{fwd.48} parent=5 // pred_check_branch
      %160 = sbr.rel (%p157) target = $region12
    $region11: #{fwd.48} parent=5 // pred_region
      %s161 = ssub.s32 %s11, 1
      // Predicated region
      $region13: #{fwd.48} parent=11 // pred_check
        %p162 = pneg %p58
      $region14: #{fwd.48} parent=11 // pred_check_branch
        %164 = sbr.rel (%p162) target = $region16
      $region15: #{fwd.48} parent=11 // pred_region
        _
      $region16: #{fwd.48} parent=11 // pred_fallthru
        _
      // Predicated region
      $region17: #{fwd.48} parent=11 // pred_check
        %p165 = pneg %p79
      $region18: #{fwd.48} parent=11 // pred_check_branch
        %167 = sbr.rel (%p165) target = $region20
      $region19: #{fwd.48} parent=11 // pred_region
        _
      $region20: #{fwd.48} parent=11 // pred_fallthru
        _
      // Predicated region
      $region21: #{fwd.48} parent=11 // pred_check
        %p168 = pneg %p100
      $region22: #{fwd.48} parent=11 // pred_check_branch
        %170 = sbr.rel (%p168) target = $region24
      $region23: #{fwd.48} parent=11 // pred_region
        _
      $region24: #{fwd.48} parent=11 // pred_fallthru
        _
      // Predicated region
      $region25: #{fwd.48} parent=11 // pred_check
        %p171 = pneg %p121
      $region26: #{fwd.48} parent=11 // pred_check_branch
        %173 = sbr.rel (%p171) target = $region28
      $region27: #{fwd.48} parent=11 // pred_region
        _
      $region28: #{fwd.48} parent=11 // pred_fallthru
        _
    $region12: #{fwd.48} parent=5 // pred_fallthru
      _
    %p174 = scmp.lt.s32.totalorder %s11, 2
    // Predicated region
    $region29: #{fwd.48} parent=5 // pred_check
      %p175 = pneg %p174
    $region30: #{fwd.48} parent=5 // pred_check_branch
      %177 = sbr.rel (%p175) target = $region32
    $region31: #{fwd.48} parent=5 // pred_region
      // Predicated region
      $region33: #{fwd.48} parent=31 // pred_check
        %p178 = pneg %p31
      $region34: #{fwd.48} parent=31 // pred_check_branch
        %180 = sbr.rel (%p178) target = $region36
      $region35: #{fwd.48} parent=31 // pred_region
        %s181 = smul.u32 4, %s11
        %p182 = scmp.lt.s32.totalorder %s181, 7
        %s183 = scalar_select %p182, %s181, 7
        %s184 = smul.addr %s183, 8
        %s185 = scalar_lea.vmem %s0, %s184
        %s186 = smul.u32 4, %s11
      $region36: #{fwd.48} parent=31 // pred_fallthru
        _
    $region32: #{fwd.48} parent=5 // pred_fallthru
      _
    %p187 = scmp.le.s32.totalorder 1, %s11
    %p188 = scmp.lt.s32.totalorder %s11, 3
    %p189 = pnand %p187, %p188
    %p190 = pneg %p189
    // Predicated region
    $region37: #{fwd.48} parent=5 // pred_check
      _
    $region38: #{fwd.48} parent=5 // pred_check_branch
      %192 = sbr.rel (%p189) target = $region40
    $region39: #{fwd.48} parent=5 // pred_region
      %s193 = ssub.s32 %s11, 1
      %s194 = smul.u32 4, %s16
      %p195 = scmp.lt.s32.totalorder %s194, 7
      %s196 = scalar_select %p195, %s194, 7
      %s197 = smul.addr %s196, 8
      %s198 = scalar_lea.vmem %s0, %s197
      %p199 = pneg %p37
      %p200 = pneg %p34
      %p201 = pneg %p58
      %p202 = pneg %p55
      %p203 = pneg %p79
      %p204 = pneg %p76
      %p205 = pneg %p100
      %p206 = pneg %p97
      %p207 = pneg %p121
      %p208 = pneg %p118
      %p209 = pneg %p147
      %p210 = pneg %p144
      %s211 = smul.u32 4, %s16
      %p212 = scmp.lt.s32.totalorder %s211, 7
      %s213 = scalar_select %p212, %s211, 7
      %s214 = smul.addr %s213, 8
      %s215 = scalar_lea.vmem %s5, %s214
      %s216 = smul.u32 4, %s16
      %p217 = scmp.lt.s32.totalorder %s216, 7
      %s218 = scalar_select %p217, %s216, 7
      %s219 = smul.addr %s218, 8
      %s220 = scalar_lea.vmem %s0, %s219
      %s221 = smul.u32 4, %s16
      %s222 = smul.u32 4, %s16
      %p223 = scmp.lt.s32.totalorder %s222, 7
      %s224 = scalar_select %p223, %s222, 7
      %s225 = smul.addr %s224, 8
      %s226 = scalar_lea.vmem %s5, %s225
      %s227 = smul.u32 4, %s16
      %v229 = vld [vmem:[%s220] sm:$0xff]
      %v230 = vld [vmem:[%s220 + $0x8] sm:$0xff]
      %v231 = vld [vmem:[%s220 + $0x10] sm:$0xff]
      %v232 = vld [vmem:[%s220 + $0x18] sm:$0xff]
      %vm233 = vcmask 523264
      %v234 = vsel %vm233, %v229, 0.0
      %235 = vadd.xlane.f32.xlu0 %v234
      %v236 = vpop.xlane.xlu0 %235
      %v237 = vsel %vm233, %v230, 0.0
      %238 = vadd.xlane.f32.xlu0 %v237
      %v239 = vpop.xlane.xlu0 %238
      %v240 = vsel %vm233, %v231, 0.0
      %241 = vadd.xlane.f32.xlu0 %v240
      %v242 = vpop.xlane.xlu0 %241
      %v243 = vsel %vm233, %v232, 0.0
      %244 = vadd.xlane.f32.xlu0 %v243
      %v245 = vpop.xlane.xlu0 %244
      %v246 = vrcp.pop 64.0
      %v247 = vmul.f32 64.0, %v246
      %v248 = vsub.f32 1.0, %v247
      %v249 = vmul.f32 %v246, %v248
      %v250 = vadd.f32 %v246, %v249
      %vm251 = vweird.f32 %v246
      %v252 = vsel %vm251, %v246, %v250
      %v253 = vmul.f32 %v236, %v252
      %v254 = vmul.f32 %v239, %v252
      %v255 = vmul.f32 %v242, %v252
      %v256 = vmul.f32 %v245, %v252
      %v257 = vsub.f32 %v229, %v253
      %v258 = vsub.f32 %v230, %v254
      %v259 = vsub.f32 %v231, %v255
      %v260 = vsub.f32 %v232, %v256
      %v261 = vmul.f32 %v257, %v257
      %v262 = vmul.f32 %v258, %v258
      %v263 = vmul.f32 %v259, %v259
      %v264 = vmul.f32 %v260, %v260
      %v265 = vsel %vm233, %v261, 0.0
      %266 = vadd.xlane.f32.xlu0 %v265
      %v267 = vpop.xlane.xlu0 %266
      %v268 = vsel %vm233, %v262, 0.0
      %269 = vadd.xlane.f32.xlu0 %v268
      %v270 = vpop.xlane.xlu0 %269
      %v271 = vsel %vm233, %v263, 0.0
      %272 = vadd.xlane.f32.xlu0 %v271
      %v273 = vpop.xlane.xlu0 %272
      %v274 = vsel %vm233, %v264, 0.0
      %275 = vadd.xlane.f32.xlu0 %v274
      %v276 = vpop.xlane.xlu0 %275
      %v277 = vmul.f32 %v267, %v252
      %v278 = vmul.f32 %v270, %v252
      %v279 = vmul.f32 %v273, %v252
      %v280 = vmul.f32 %v276, %v252
      %v281 = vadd.f32 %v277, 1e-05
      %v282 = vadd.f32 %v278, 1e-05
      %v283 = vadd.f32 %v279, 1e-05
      %v284 = vadd.f32 %v280, 1e-05
      %v285 = vrsqrt.pop %v281
      %v286 = vmul.f32 %v285, %v281
      %v287 = vmul.f32 %v286, %v285
      %v288 = vmul.f32 0.5, %v287
      %v289 = vsub.f32 1.5, %v288
      %v290 = vmul.f32 %v285, %v289
      %vm291 = vweird.f32 %v281
      %vm292 = vweird.f32 %v285
      %vm293 = vmor %vm291, %vm292
      %v294 = vsel %vm293, %v285, %v290
      %v295 = vrsqrt.pop %v282
      %v296 = vmul.f32 %v295, %v282
      %v297 = vmul.f32 %v296, %v295
      %v298 = vmul.f32 0.5, %v297
      %v299 = vsub.f32 1.5, %v298
      %v300 = vmul.f32 %v295, %v299
      %vm301 = vweird.f32 %v282
      %vm302 = vweird.f32 %v295
      %vm303 = vmor %vm301, %vm302
      %v304 = vsel %vm303, %v295, %v300
      %v305 = vrsqrt.pop %v283
      %v306 = vmul.f32 %v305, %v283
      %v307 = vmul.f32 %v306, %v305
      %v308 = vmul.f32 0.5, %v307
      %v309 = vsub.f32 1.5, %v308
      %v310 = vmul.f32 %v305, %v309
      %vm311 = vweird.f32 %v283
      %vm312 = vweird.f32 %v305
      %vm313 = vmor %vm311, %vm312
      %v314 = vsel %vm313, %v305, %v310
      %v315 = vrsqrt.pop %v284
      %v316 = vmul.f32 %v315, %v284
      %v317 = vmul.f32 %v316, %v315
      %v318 = vmul.f32 0.5, %v317
      %v319 = vsub.f32 1.5, %v318
      %v320 = vmul.f32 %v315, %v319
      %vm321 = vweird.f32 %v284
      %vm322 = vweird.f32 %v315
      %vm323 = vmor %vm321, %vm322
      %v324 = vsel %vm323, %v315, %v320
      %v325 = vmul.f32 %v257, %v294
      %v326 = vmul.f32 %v258, %v304
      %v327 = vmul.f32 %v259, %v314
      %v328 = vmul.f32 %v260, %v324
      %v329 = vld [vmem:[%s1] sm:$0x1]
      %v331 = vperm.slane %v329, 0
      %v333 = vmul.f32 %v325, %v331
      %v334 = vmul.f32 %v326, %v331
      %v335 = vmul.f32 %v327, %v331
      %v336 = vmul.f32 %v328, %v331
      %v337 = vld [vmem:[%s2] sm:$0x1]
      %v339 = vperm.slane %v337, 0
      %v341 = vadd.f32 %v333, %v339
      %v342 = vadd.f32 %v334, %v339
      %v343 = vadd.f32 %v335, %v339
      %v344 = vadd.f32 %v336, %v339
      %v345 = vpack.c.bf16 %v342, %v341
      %v346 = vpack.c.bf16 %v344, %v343
      %v347 = vld [vmem:[%s3] sm:$0xff]
      %v348 = vld [vmem:[%s3 + $0x8] sm:$0xff]
      %v349 = vld [vmem:[%s3 + $0x10] sm:$0xff]
      %v350 = vld [vmem:[%s3 + $0x18] sm:$0xff]
      %v351 = vld [vmem:[%s3 + $0x20] sm:$0xff]
      %v352 = vld [vmem:[%s3 + $0x28] sm:$0xff]
      %v353 = vld [vmem:[%s3 + $0x30] sm:$0xff]
      %v354 = vld [vmem:[%s3 + $0x38] sm:$0xff]
      %v355 = vpack.c.bf16 %v348, %v347
      %v356 = vpack.c.bf16 %v350, %v349
      %v357 = vpack.c.bf16 %v352, %v351
      %v358 = vpack.c.bf16 %v354, %v353
      %v359 = vld [vmem:[%s4] sm:$0x1]
      %v361 = vperm.slane %v359, 0
      %v364 = vsel %vm233, %v345, 0
      %v367 = vsel %vm233, %v346, 0
      %369 = vmatpush.bf16.msra.mxu0 0
      %370 = vmatpush.bf16.msra.mxu0 0
      %371 = vmatpush.bf16.msra.mxu0 0
      %372 = vmatpush.bf16.msra.mxu0 0
      %373 = vmatpush.bf16.msra.mxu0 %v358
      %374 = vmatpush.bf16.msra.mxu0 %v357
      %375 = vmatpush.bf16.msra.mxu0 %v356
      %376 = vmatpush.bf16.msra.mxu0 %v355
      %377 = vmatmul.bf16.gmra.mxu0 %v364
      %v378 = vpop.f32.mrf.mxu0
      %v379 = vadd.f32 %v361, %v378
      %v380 = vpop.f32.mrf.mxu0
      %v381 = vadd.f32 %v361, %v380
      %382 = vmatmul.bf16.gmra.mxu0 %v367
      %v383 = vpop.f32.mrf.mxu0
      %v384 = vadd.f32 %v361, %v383
      %v385 = vpop.f32.mrf.mxu0
      %v386 = vadd.f32 %v361, %v385
      %387 = vdwg.mxu0
      %388 = vst.msk [vmem:[%s226] sm:$0xff] %vm233, %v379
      %389 = vst.msk [vmem:[%s226 + $0x8] sm:$0xff] %vm233, %v381
      %390 = vst.msk [vmem:[%s226 + $0x10] sm:$0xff] %vm233, %v384
      %391 = vst.msk [vmem:[%s226 + $0x18] sm:$0xff] %vm233, %v386
      %s392 = smul.u32 4, %s16
      %p393 = scmp.lt.s32.totalorder %s392, 7
      %s394 = scalar_select %p393, %s392, 7
      %s395 = smul.addr %s394, 8
      %s396 = scalar_lea.vmem %s5, %s395
      // Predicated region
      $region41: #{fwd.48} parent=39 // pred_check
        %p397 = pneg %p144
      $region42: #{fwd.48} parent=39 // pred_check_branch
        %399 = sbr.rel (%p397) target = $region44
      $region43: #{fwd.48} parent=39 // pred_region
        %s400 = smul.u32 4, %s16
      $region44: #{fwd.48} parent=39 // pred_fallthru
        _
    $region40: #{fwd.48} parent=5 // pred_fallthru
      _
    %p401 = scmp.le.s32.totalorder 2, %s11
    // Predicated region
    $region45: #{fwd.48} parent=5 // pred_check
      %p402 = pneg %p401
    $region46: #{fwd.48} parent=5 // pred_check_branch
      %404 = sbr.rel (%p402) target = $region48
    $region47: #{fwd.48} parent=5 // pred_region
      %s405 = ssub.s32 %s11, 2
      // Predicated region
      $region49: #{fwd.48} parent=47 // pred_check
        %p406 = pneg %p150
      $region50: #{fwd.48} parent=47 // pred_check_branch
        %408 = sbr.rel (%p406) target = $region52
      $region51: #{fwd.48} parent=47 // pred_region
        %s409 = smul.u32 4, %s17
        %p410 = scmp.lt.s32.totalorder %s409, 7
        %s411 = scalar_select %p410, %s409, 7
        %s412 = smul.addr %s411, 8
        %s413 = scalar_lea.vmem %s5, %s412
      $region52: #{fwd.48} parent=47 // pred_fallthru
        _
    $region48: #{fwd.48} parent=5 // pred_fallthru
      _
  $region6: #{fwd.48} parent=0 // loop_footer
    %s15 = sadd.s32 1, %s11
  $region7: #{fwd.48} parent=0 // loop_footer_branch
    %10 = sbr.rel target = $region3
  $region8: #{fwd.48} parent=0 // loop_exit
    _

// kernel: fwd.49
$region0: #{fwd.49}
  #allocation0 [shape = 'u32[]', space=smem, size = 0x4, offset = 0x4, fixed_abs, tag = 'smem constant byte address 0x4 - core index']
  #allocation1 [shape = 'u32[72,128]{1,0:T(1,128)}', space=vmem, size = 0x9000, scoped, tag = 'internal scratch']
  %s0 = inlined_call_operand.vmem [shape: f32[64,64], index: 0, kind: input, shape index: {}]
  %s1 = inlined_call_operand.vmem [shape: f32[1,64], index: 1, kind: input, shape index: {}]
  %s2 = inlined_call_operand.vmem [shape: f32[1,64], index: 2, kind: input, shape index: {}]
  %s3 = inlined_call_operand.vmem [shape: f32[64,128], index: 3, kind: input, shape index: {}]
  %s4 = inlined_call_operand.vmem [shape: f32[1,128], index: 4, kind: input, shape index: {}]
  %s5 = inlined_call_operand.vmem [shape: f32[64,128], index: 5, kind: output, shape index: {}]
  %s6 = sld [smem:[#allocation0]]
  $region53: #{fwd.49} parent=0
    _
  %s8 = ssub.s32 1, %s6
  %s9 = scalar_select 0, %s8, %s6
  loop: start=0, step=1, limit=4
  $region2: #{fwd.49} parent=0 // loop_pre_header
    _
  $region3: #{fwd.49} parent=0 // loop_header
    %s11 = sphi 0, %s15
    %p12 = scmp.ge.s32.totalorder %s11, 4
    %s21 = sphi 0, %s23
    %s24 = sphi 0, %s21
    %s25 = sphi 0, %s24
    %s41 = sphi 0, %s25
    %s45 = sphi 0, %s45
    %s47 = sphi 0, %s45
    %s48 = sphi 0, %s47
    %s62 = sphi 0, %s48
    %s66 = sphi 0, %s66
    %s68 = sphi 0, %s66
    %s69 = sphi 0, %s68
    %s83 = sphi 0, %s69
    %s87 = sphi 0, %s87
    %s89 = sphi 0, %s87
    %s90 = sphi 0, %s89
    %s104 = sphi 0, %s90
    %s108 = sphi 0, %s108
    %s110 = sphi 0, %s108
    %s111 = sphi 0, %s110
    %s125 = sphi 0, %s111
    %s131 = sphi 0, %s133
    %s134 = sphi 0, %s131
    %s135 = sphi 0, %s134
    %s151 = sphi 0, %s135
  $region4: #{fwd.49} parent=0 // loop_header_branch
    %14 = sbr.rel (%p12) target = $region8
  $region5: #{fwd.49} parent=0 // loop_body
    %s16 = ssub.s32 %s11, 1
    %s17 = ssub.s32 %s11, 2
    %s18 = sadd.s32 %s11, 1
    %s19 = ssub.s32 %s11, %s18
    %p20 = scmp.eq.s32.totalorder %s19, 0
    %s22 = sadd.s32 %s21, 1
    %s23 = scalar_select %p20, %s21, %s22
    %p26 = pneg %p20
    %p27 = scmp.eq.s32.totalorder %s11, 1
    %p28 = por %p26, %p27
    %p29 = scmp.ne.s32.totalorder %s21, %s24
    %p30 = scmp.eq.s32.totalorder %s11, 0
    %p31 = por %p29, %p30
    %p32 = scmp.ne.s32.totalorder %s21, %s24
    %p33 = scmp.eq.s32.totalorder %s16, 1
    %p34 = por %p32, %p33
    %p35 = scmp.ne.s32.totalorder %s24, %s25
    %p36 = scmp.eq.s32.totalorder %s16, 0
    %p37 = por %p35, %p36
    %p38 = scmp.ne.s32.totalorder %s24, %s25
    %p39 = scmp.eq.s32.totalorder %s17, 1
    %p40 = por %p38, %p39
    %p42 = scmp.ne.s32.totalorder %s25, %s41
    %p43 = scmp.eq.s32.totalorder %s17, 0
    %p44 = por %p42, %p43
    %s46 = sadd.s32 %s45, 1
    %p49 = scmp.eq.s32.totalorder %s11, 1
    %p50 = scmp.ne.s32.totalorder %s45, %s47
    %p51 = scmp.eq.s32.totalorder %s11, 0
    %p52 = por %p50, %p51
    %p53 = scmp.ne.s32.totalorder %s45, %s47
    %p54 = scmp.eq.s32.totalorder %s16, 1
    %p55 = por %p53, %p54
    %p56 = scmp.ne.s32.totalorder %s47, %s48
    %p57 = scmp.eq.s32.totalorder %s16, 0
    %p58 = por %p56, %p57
    %p59 = scmp.ne.s32.totalorder %s47, %s48
    %p60 = scmp.eq.s32.totalorder %s17, 1
    %p61 = por %p59, %p60
    %p63 = scmp.ne.s32.totalorder %s48, %s62
    %p64 = scmp.eq.s32.totalorder %s17, 0
    %p65 = por %p63, %p64
    %s67 = sadd.s32 %s66, 1
    %p70 = scmp.eq.s32.totalorder %s11, 1
    %p71 = scmp.ne.s32.totalorder %s66, %s68
    %p72 = scmp.eq.s32.totalorder %s11, 0
    %p73 = por %p71, %p72
    %p74 = scmp.ne.s32.totalorder %s66, %s68
    %p75 = scmp.eq.s32.totalorder %s16, 1
    %p76 = por %p74, %p75
    %p77 = scmp.ne.s32.totalorder %s68, %s69
    %p78 = scmp.eq.s32.totalorder %s16, 0
    %p79 = por %p77, %p78
    %p80 = scmp.ne.s32.totalorder %s68, %s69
    %p81 = scmp.eq.s32.totalorder %s17, 1
    %p82 = por %p80, %p81
    %p84 = scmp.ne.s32.totalorder %s69, %s83
    %p85 = scmp.eq.s32.totalorder %s17, 0
    %p86 = por %p84, %p85
    %s88 = sadd.s32 %s87, 1
    %p91 = scmp.eq.s32.totalorder %s11, 1
    %p92 = scmp.ne.s32.totalorder %s87, %s89
    %p93 = scmp.eq.s32.totalorder %s11, 0
    %p94 = por %p92, %p93
    %p95 = scmp.ne.s32.totalorder %s87, %s89
    %p96 = scmp.eq.s32.totalorder %s16, 1
    %p97 = por %p95, %p96
    %p98 = scmp.ne.s32.totalorder %s89, %s90
    %p99 = scmp.eq.s32.totalorder %s16, 0
    %p100 = por %p98, %p99
    %p101 = scmp.ne.s32.totalorder %s89, %s90
    %p102 = scmp.eq.s32.totalorder %s17, 1
    %p103 = por %p101, %p102
    %p105 = scmp.ne.s32.totalorder %s90, %s104
    %p106 = scmp.eq.s32.totalorder %s17, 0
    %p107 = por %p105, %p106
    %s109 = sadd.s32 %s108, 1
    %p112 = scmp.eq.s32.totalorder %s11, 1
    %p113 = scmp.ne.s32.totalorder %s108, %s110
    %p114 = scmp.eq.s32.totalorder %s11, 0
    %p115 = por %p113, %p114
    %p116 = scmp.ne.s32.totalorder %s108, %s110
    %p117 = scmp.eq.s32.totalorder %s16, 1
    %p118 = por %p116, %p117
    %p119 = scmp.ne.s32.totalorder %s110, %s111
    %p120 = scmp.eq.s32.totalorder %s16, 0
    %p121 = por %p119, %p120
    %p122 = scmp.ne.s32.totalorder %s110, %s111
    %p123 = scmp.eq.s32.totalorder %s17, 1
    %p124 = por %p122, %p123
    %p126 = scmp.ne.s32.totalorder %s111, %s125
    %p127 = scmp.eq.s32.totalorder %s17, 0
    %p128 = por %p126, %p127
    %s129 = ssub.s32 %s11, %s18
    %p130 = scmp.eq.s32.totalorder %s129, 0
    %s132 = sadd.s32 %s131, 1
    %s133 = scalar_select %p130, %s131, %s132
    %p136 = pneg %p130
    %p137 = scmp.eq.s32.totalorder %s11, 1
    %p138 = por %p136, %p137
    %p139 = scmp.ne.s32.totalorder %s131, %s134
    %p140 = scmp.eq.s32.totalorder %s11, 0
    %p141 = por %p139, %p140
    %p142 = scmp.ne.s32.totalorder %s131, %s134
    %p143 = scmp.eq.s32.totalorder %s16, 1
    %p144 = por %p142, %p143
    %p145 = scmp.ne.s32.totalorder %s134, %s135
    %p146 = scmp.eq.s32.totalorder %s16, 0
    %p147 = por %p145, %p146
    %p148 = scmp.ne.s32.totalorder %s134, %s135
    %p149 = scmp.eq.s32.totalorder %s17, 1
    %p150 = por %p148, %p149
    %p152 = scmp.ne.s32.totalorder %s135, %s151
    %p153 = scmp.eq.s32.totalorder %s17, 0
    %p154 = por %p152, %p153
    %p155 = scmp.le.s32.totalorder 1, %s11
    %p156 = scmp.lt.s32.totalorder %s11, 3
    %p157 = pnand %p155, %p156
    %p158 = pneg %p157
    // Predicated region
    $region9: #{fwd.49} parent=5 // pred_check
      _
    $region10: #{fwd.49} parent=5 // pred_check_branch
      %160 = sbr.rel (%p157) target = $region12
    $region11: #{fwd.49} parent=5 // pred_region
      %s161 = ssub.s32 %s11, 1
      // Predicated region
      $region13: #{fwd.49} parent=11 // pred_check
        %p162 = pneg %p58
      $region14: #{fwd.49} parent=11 // pred_check_branch
        %164 = sbr.rel (%p162) target = $region16
      $region15: #{fwd.49} parent=11 // pred_region
        _
      $region16: #{fwd.49} parent=11 // pred_fallthru
        _
      // Predicated region
      $region17: #{fwd.49} parent=11 // pred_check
        %p165 = pneg %p79
      $region18: #{fwd.49} parent=11 // pred_check_branch
        %167 = sbr.rel (%p165) target = $region20
      $region19: #{fwd.49} parent=11 // pred_region
        _
      $region20: #{fwd.49} parent=11 // pred_fallthru
        _
      // Predicated region
      $region21: #{fwd.49} parent=11 // pred_check
        %p168 = pneg %p100
      $region22: #{fwd.49} parent=11 // pred_check_branch
        %170 = sbr.rel (%p168) target = $region24
      $region23: #{fwd.49} parent=11 // pred_region
        _
      $region24: #{fwd.49} parent=11 // pred_fallthru
        _
      // Predicated region
      $region25: #{fwd.49} parent=11 // pred_check
        %p171 = pneg %p121
      $region26: #{fwd.49} parent=11 // pred_check_branch
        %173 = sbr.rel (%p171) target = $region28
      $region27: #{fwd.49} parent=11 // pred_region
        _
      $region28: #{fwd.49} parent=11 // pred_fallthru
        _
    $region12: #{fwd.49} parent=5 // pred_fallthru
      _
    %p174 = scmp.lt.s32.totalorder %s11, 2
    // Predicated region
    $region29: #{fwd.49} parent=5 // pred_check
      %p175 = pneg %p174
    $region30: #{fwd.49} parent=5 // pred_check_branch
      %177 = sbr.rel (%p175) target = $region32
    $region31: #{fwd.49} parent=5 // pred_region
      // Predicated region
      $region33: #{fwd.49} parent=31 // pred_check
        %p178 = pneg %p31
      $region34: #{fwd.49} parent=31 // pred_check_branch
        %180 = sbr.rel (%p178) target = $region36
      $region35: #{fwd.49} parent=31 // pred_region
        %s181 = smul.u32 4, %s11
        %p182 = scmp.lt.s32.totalorder %s181, 7
        %s183 = scalar_select %p182, %s181, 7
        %s184 = smul.addr %s183, 8
        %s185 = scalar_lea.vmem %s0, %s184
        %s186 = smul.u32 4, %s11
      $region36: #{fwd.49} parent=31 // pred_fallthru
        _
    $region32: #{fwd.49} parent=5 // pred_fallthru
      _
    %p187 = scmp.le.s32.totalorder 1, %s11
    %p188 = scmp.lt.s32.totalorder %s11, 3
    %p189 = pnand %p187, %p188
    %p190 = pneg %p189
    // Predicated region
    $region37: #{fwd.49} parent=5 // pred_check
      _
    $region38: #{fwd.49} parent=5 // pred_check_branch
      %192 = sbr.rel (%p189) target = $region40
    $region39: #{fwd.49} parent=5 // pred_region
      %s193 = ssub.s32 %s11, 1
      %s194 = smul.u32 4, %s16
      %p195 = scmp.lt.s32.totalorder %s194, 7
      %s196 = scalar_select %p195, %s194, 7
      %s197 = smul.addr %s196, 8
      %s198 = scalar_lea.vmem %s0, %s197
      %p199 = pneg %p37
      %p200 = pneg %p34
      %p201 = pneg %p58
      %p202 = pneg %p55
      %p203 = pneg %p79
      %p204 = pneg %p76
      %p205 = pneg %p100
      %p206 = pneg %p97
      %p207 = pneg %p121
      %p208 = pneg %p118
      %p209 = pneg %p147
      %p210 = pneg %p144
      %s211 = smul.u32 4, %s16
      %p212 = scmp.lt.s32.totalorder %s211, 7
      %s213 = scalar_select %p212, %s211, 7
      %s214 = smul.addr %s213, 8
      %s215 = scalar_lea.vmem %s5, %s214
      %s216 = smul.u32 4, %s16
      %p217 = scmp.lt.s32.totalorder %s216, 7
      %s218 = scalar_select %p217, %s216, 7
      %s219 = smul.addr %s218, 8
      %s220 = scalar_lea.vmem %s0, %s219
      %s221 = smul.u32 4, %s16
      %s222 = smul.u32 4, %s16
      %p223 = scmp.lt.s32.totalorder %s222, 7
      %s224 = scalar_select %p223, %s222, 7
      %s225 = smul.addr %s224, 8
      %s226 = scalar_lea.vmem %s5, %s225
      %s227 = smul.u32 4, %s16
      %v229 = vld [vmem:[%s220] sm:$0xff]
      %v230 = vld [vmem:[%s220 + $0x8] sm:$0xff]
      %v231 = vld [vmem:[%s220 + $0x10] sm:$0xff]
      %v232 = vld [vmem:[%s220 + $0x18] sm:$0xff]
      %vm233 = vcmask 523264
      %v234 = vsel %vm233, %v229, 0.0
      %235 = vadd.xlane.f32.xlu0 %v234
      %v236 = vpop.xlane.xlu0 %235
      %v237 = vsel %vm233, %v230, 0.0
      %238 = vadd.xlane.f32.xlu0 %v237
      %v239 = vpop.xlane.xlu0 %238
      %v240 = vsel %vm233, %v231, 0.0
      %241 = vadd.xlane.f32.xlu0 %v240
      %v242 = vpop.xlane.xlu0 %241
      %v243 = vsel %vm233, %v232, 0.0
      %244 = vadd.xlane.f32.xlu0 %v243
      %v245 = vpop.xlane.xlu0 %244
      %v246 = vrcp.pop 64.0
      %v247 = vmul.f32 64.0, %v246
      %v248 = vsub.f32 1.0, %v247
      %v249 = vmul.f32 %v246, %v248
      %v250 = vadd.f32 %v246, %v249
      %vm251 = vweird.f32 %v246
      %v252 = vsel %vm251, %v246, %v250
      %v253 = vmul.f32 %v236, %v252
      %v254 = vmul.f32 %v239, %v252
      %v255 = vmul.f32 %v242, %v252
      %v256 = vmul.f32 %v245, %v252
      %v257 = vsub.f32 %v229, %v253
      %v258 = vsub.f32 %v230, %v254
      %v259 = vsub.f32 %v231, %v255
      %v260 = vsub.f32 %v232, %v256
      %v261 = vmul.f32 %v257, %v257
      %v262 = vmul.f32 %v258, %v258
      %v263 = vmul.f32 %v259, %v259
      %v264 = vmul.f32 %v260, %v260
      %v265 = vsel %vm233, %v261, 0.0
      %266 = vadd.xlane.f32.xlu0 %v265
      %v267 = vpop.xlane.xlu0 %266
      %v268 = vsel %vm233, %v262, 0.0
      %269 = vadd.xlane.f32.xlu0 %v268
      %v270 = vpop.xlane.xlu0 %269
      %v271 = vsel %vm233, %v263, 0.0
      %272 = vadd.xlane.f32.xlu0 %v271
      %v273 = vpop.xlane.xlu0 %272
      %v274 = vsel %vm233, %v264, 0.0
      %275 = vadd.xlane.f32.xlu0 %v274
      %v276 = vpop.xlane.xlu0 %275
      %v277 = vmul.f32 %v267, %v252
      %v278 = vmul.f32 %v270, %v252
      %v279 = vmul.f32 %v273, %v252
      %v280 = vmul.f32 %v276, %v252
      %v281 = vadd.f32 %v277, 1e-05
      %v282 = vadd.f32 %v278, 1e-05
      %v283 = vadd.f32 %v279, 1e-05
      %v284 = vadd.f32 %v280, 1e-05
      %v285 = vrsqrt.pop %v281
      %v286 = vmul.f32 %v285, %v281
      %v287 = vmul.f32 %v286, %v285
      %v288 = vmul.f32 0.5, %v287
      %v289 = vsub.f32 1.5, %v288
      %v290 = vmul.f32 %v285, %v289
      %vm291 = vweird.f32 %v281
      %vm292 = vweird.f32 %v285
      %vm293 = vmor %vm291, %vm292
      %v294 = vsel %vm293, %v285, %v290
      %v295 = vrsqrt.pop %v282
      %v296 = vmul.f32 %v295, %v282
      %v297 = vmul.f32 %v296, %v295
      %v298 = vmul.f32 0.5, %v297
      %v299 = vsub.f32 1.5, %v298
      %v300 = vmul.f32 %v295, %v299
      %vm301 = vweird.f32 %v282
      %vm302 = vweird.f32 %v295
      %vm303 = vmor %vm301, %vm302
      %v304 = vsel %vm303, %v295, %v300
      %v305 = vrsqrt.pop %v283
      %v306 = vmul.f32 %v305, %v283
      %v307 = vmul.f32 %v306, %v305
      %v308 = vmul.f32 0.5, %v307
      %v309 = vsub.f32 1.5, %v308
      %v310 = vmul.f32 %v305, %v309
      %vm311 = vweird.f32 %v283
      %vm312 = vweird.f32 %v305
      %vm313 = vmor %vm311, %vm312
      %v314 = vsel %vm313, %v305, %v310
      %v315 = vrsqrt.pop %v284
      %v316 = vmul.f32 %v315, %v284
      %v317 = vmul.f32 %v316, %v315
      %v318 = vmul.f32 0.5, %v317
      %v319 = vsub.f32 1.5, %v318
      %v320 = vmul.f32 %v315, %v319
      %vm321 = vweird.f32 %v284
      %vm322 = vweird.f32 %v315
      %vm323 = vmor %vm321, %vm322
      %v324 = vsel %vm323, %v315, %v320
      %v325 = vmul.f32 %v257, %v294
      %v326 = vmul.f32 %v258, %v304
      %v327 = vmul.f32 %v259, %v314
      %v328 = vmul.f32 %v260, %v324
      %v329 = vld [vmem:[%s1] sm:$0x1]
      %v331 = vperm.slane %v329, 0
      %v333 = vmul.f32 %v325, %v331
      %v334 = vmul.f32 %v326, %v331
      %v335 = vmul.f32 %v327, %v331
      %v336 = vmul.f32 %v328, %v331
      %v337 = vld [vmem:[%s2] sm:$0x1]
      %v339 = vperm.slane %v337, 0
      %v341 = vadd.f32 %v333, %v339
      %v342 = vadd.f32 %v334, %v339
      %v343 = vadd.f32 %v335, %v339
      %v344 = vadd.f32 %v336, %v339
      %v345 = vpack.c.bf16 %v342, %v341
      %v346 = vpack.c.bf16 %v344, %v343
      %v347 = vld [vmem:[%s3] sm:$0xff]
      %v348 = vld [vmem:[%s3 + $0x8] sm:$0xff]
      %v349 = vld [vmem:[%s3 + $0x10] sm:$0xff]
      %v350 = vld [vmem:[%s3 + $0x18] sm:$0xff]
      %v351 = vld [vmem:[%s3 + $0x20] sm:$0xff]
      %v352 = vld [vmem:[%s3 + $0x28] sm:$0xff]
      %v353 = vld [vmem:[%s3 + $0x30] sm:$0xff]
      %v354 = vld [vmem:[%s3 + $0x38] sm:$0xff]
      %v355 = vpack.c.bf16 %v348, %v347
      %v356 = vpack.c.bf16 %v350, %v349
      %v357 = vpack.c.bf16 %v352, %v351
      %v358 = vpack.c.bf16 %v354, %v353
      %v359 = vld [vmem:[%s4] sm:$0x1]
      %v361 = vperm.slane %v359, 0
      %v364 = vsel %vm233, %v345, 0
      %v367 = vsel %vm233, %v346, 0
      %369 = vmatpush.bf16.msra.mxu0 0
      %370 = vmatpush.bf16.msra.mxu0 0
      %371 = vmatpush.bf16.msra.mxu0 0
      %372 = vmatpush.bf16.msra.mxu0 0
      %373 = vmatpush.bf16.msra.mxu0 %v358
      %374 = vmatpush.bf16.msra.mxu0 %v357
      %375 = vmatpush.bf16.msra.mxu0 %v356
      %376 = vmatpush.bf16.msra.mxu0 %v355
      %377 = vmatmul.bf16.gmra.mxu0 %v364
      %v378 = vpop.f32.mrf.mxu0
      %v379 = vadd.f32 %v361, %v378
      %v380 = vpop.f32.mrf.mxu0
      %v381 = vadd.f32 %v361, %v380
      %382 = vmatmul.bf16.gmra.mxu0 %v367
      %v383 = vpop.f32.mrf.mxu0
      %v384 = vadd.f32 %v361, %v383
      %v385 = vpop.f32.mrf.mxu0
      %v386 = vadd.f32 %v361, %v385
      %387 = vdwg.mxu0
      %388 = vst [vmem:[%s226] sm:$0xff] %v379
      %389 = vst [vmem:[%s226 + $0x8] sm:$0xff] %v381
      %390 = vst [vmem:[%s226 + $0x10] sm:$0xff] %v384
      %391 = vst [vmem:[%s226 + $0x18] sm:$0xff] %v386
      %s392 = smul.u32 4, %s16
      %p393 = scmp.lt.s32.totalorder %s392, 7
      %s394 = scalar_select %p393, %s392, 7
      %s395 = smul.addr %s394, 8
      %s396 = scalar_lea.vmem %s5, %s395
      // Predicated region
      $region41: #{fwd.49} parent=39 // pred_check
        %p397 = pneg %p144
      $region42: #{fwd.49} parent=39 // pred_check_branch
        %399 = sbr.rel (%p397) target = $region44
      $region43: #{fwd.49} parent=39 // pred_region
        %s400 = smul.u32 4, %s16
      $region44: #{fwd.49} parent=39 // pred_fallthru
        _
    $region40: #{fwd.49} parent=5 // pred_fallthru
      _
    %p401 = scmp.le.s32.totalorder 2, %s11
    // Predicated region
    $region45: #{fwd.49} parent=5 // pred_check
      %p402 = pneg %p401
    $region46: #{fwd.49} parent=5 // pred_check_branch
      %404 = sbr.rel (%p402) target = $region48
    $region47: #{fwd.49} parent=5 // pred_region
      %s405 = ssub.s32 %s11, 2
      // Predicated region
      $region49: #{fwd.49} parent=47 // pred_check
        %p406 = pneg %p150
      $region50: #{fwd.49} parent=47 // pred_check_branch
        %408 = sbr.rel (%p406) target = $region52
      $region51: #{fwd.49} parent=47 // pred_region
        %s409 = smul.u32 4, %s17
        %p410 = scmp.lt.s32.totalorder %s409, 7
        %s411 = scalar_select %p410, %s409, 7
        %s412 = smul.addr %s411, 8
        %s413 = scalar_lea.vmem %s5, %s412
      $region52: #{fwd.49} parent=47 // pred_fallthru
        _
    $region48: #{fwd.49} parent=5 // pred_fallthru
      _
  $region6: #{fwd.49} parent=0 // loop_footer
    %s15 = sadd.s32 1, %s11
  $region7: #{fwd.49} parent=0 // loop_footer_branch
    %10 = sbr.rel target = $region3
  $region8: #{fwd.49} parent=0 // loop_exit
    _

// kernel: fwd.51
$region0: #{fwd.51}
  #allocation0 [shape = 'u32[]', space=smem, size = 0x4, offset = 0x4, fixed_abs, tag = 'smem constant byte address 0x4 - core index']
  #allocation1 [shape = 'u32[72,128]{1,0:T(1,128)}', space=vmem, size = 0x9000, scoped, tag = 'internal scratch']
  %s0 = inlined_call_operand.vmem [shape: f32[64,64], index: 0, kind: input, shape index: {}]
  %s1 = inlined_call_operand.vmem [shape: f32[64,64], index: 1, kind: input, shape index: {}]
  %s2 = inlined_call_operand.vmem [shape: f32[64,64], index: 2, kind: input, shape index: {}]
  %s3 = inlined_call_operand.vmem [shape: f32[1,64], index: 3, kind: input, shape index: {}, may-alias: {3,5,9}]
  %s4 = inlined_call_operand.vmem [shape: f32[1,64], index: 4, kind: input, shape index: {}]
  %s5 = inlined_call_operand.vmem [shape: f32[1,64], index: 5, kind: input, shape index: {}, may-alias: {3,5,9}]
  %s6 = inlined_call_operand.vmem [shape: f32[64,256], index: 6, kind: input, shape index: {}]
  %s7 = inlined_call_operand.vmem [shape: f32[1,256], index: 7, kind: input, shape index: {}]
  %s8 = inlined_call_operand.vmem [shape: f32[256,64], index: 8, kind: input, shape index: {}]
  %s9 = inlined_call_operand.vmem [shape: f32[1,64], index: 9, kind: input, shape index: {}, may-alias: {3,5,9}]
  %s10 = inlined_call_operand.vmem [shape: f32[64,64], index: 10, kind: output, shape index: {}]
  %s11 = sld [smem:[#allocation0]]
  $region73: #{fwd.51} parent=0
    _
  %s13 = ssub.s32 1, %s11
  %s14 = scalar_select 0, %s13, %s11
  loop: start=0, step=1, limit=4
  $region2: #{fwd.51} parent=0 // loop_pre_header
    _
  $region3: #{fwd.51} parent=0 // loop_header
    %s16 = sphi 0, %s20
    %p17 = scmp.ge.s32.totalorder %s16, 4
    %s26 = sphi 0, %s28
    %s29 = sphi 0, %s26
    %s30 = sphi 0, %s29
    %s46 = sphi 0, %s30
    %s52 = sphi 0, %s54
    %s55 = sphi 0, %s52
    %s56 = sphi 0, %s55
    %s72 = sphi 0, %s56
    %s76 = sphi 0, %s76
    %s78 = sphi 0, %s76
    %s79 = sphi 0, %s78
    %s93 = sphi 0, %s79
    %s97 = sphi 0, %s97
    %s99 = sphi 0, %s97
    %s100 = sphi 0, %s99
    %s114 = sphi 0, %s100
    %s118 = sphi 0, %s118
    %s120 = sphi 0, %s118
    %s121 = sphi 0, %s120
    %s135 = sphi 0, %s121
    %s139 = sphi 0, %s139
    %s141 = sphi 0, %s139
    %s142 = sphi 0, %s141
    %s156 = sphi 0, %s142
    %s160 = sphi 0, %s160
    %s162 = sphi 0, %s160
    %s163 = sphi 0, %s162
    %s177 = sphi 0, %s163
    %s181 = sphi 0, %s181
    %s183 = sphi 0, %s181
    %s184 = sphi 0, %s183
    %s198 = sphi 0, %s184
    %s202 = sphi 0, %s202
    %s204 = sphi 0, %s202
    %s205 = sphi 0, %s204
    %s219 = sphi 0, %s205
    %s223 = sphi 0, %s223
    %s225 = sphi 0, %s223
    %s226 = sphi 0, %s225
    %s240 = sphi 0, %s226
    %s246 = sphi 0, %s248
    %s249 = sphi 0, %s246
    %s250 = sphi 0, %s249
    %s266 = sphi 0, %s250
  $region4: #{fwd.51} parent=0 // loop_header_branch
    %19 = sbr.rel (%p17) target = $region8
  $region5: #{fwd.51} parent=0 // loop_body
    %s21 = ssub.s32 %s16, 1
    %s22 = ssub.s32 %s16, 2
    %s23 = sadd.s32 %s16, 1
    %s24 = ssub.s32 %s16, %s23
    %p25 = scmp.eq.s32.totalorder %s24, 0
    %s27 = sadd.s32 %s26, 1
    %s28 = scalar_select %p25, %s26, %s27
    %p31 = pneg %p25
    %p32 = scmp.eq.s32.totalorder %s16, 1
    %p33 = por %p31, %p32
    %p34 = scmp.ne.s32.totalorder %s26, %s29
    %p35 = scmp.eq.s32.totalorder %s16, 0
    %p36 = por %p34, %p35
    %p37 = scmp.ne.s32.totalorder %s26, %s29
    %p38 = scmp.eq.s32.totalorder %s21, 1
    %p39 = por %p37, %p38
    %p40 = scmp.ne.s32.totalorder %s29, %s30
    %p41 = scmp.eq.s32.totalorder %s21, 0
    %p42 = por %p40, %p41
    %p43 = scmp.ne.s32.totalorder %s29, %s30
    %p44 = scmp.eq.s32.totalorder %s22, 1
    %p45 = por %p43, %p44
    %p47 = scmp.ne.s32.totalorder %s30, %s46
    %p48 = scmp.eq.s32.totalorder %s22, 0
    %p49 = por %p47, %p48
    %s50 = ssub.s32 %s16, %s23
    %p51 = scmp.eq.s32.totalorder %s50, 0
    %s53 = sadd.s32 %s52, 1
    %s54 = scalar_select %p51, %s52, %s53
    %p57 = pneg %p51
    %p58 = scmp.eq.s32.totalorder %s16, 1
    %p59 = por %p57, %p58
    %p60 = scmp.ne.s32.totalorder %s52, %s55
    %p61 = scmp.eq.s32.totalorder %s16, 0
    %p62 = por %p60, %p61
    %p63 = scmp.ne.s32.totalorder %s52, %s55
    %p64 = scmp.eq.s32.totalorder %s21, 1
    %p65 = por %p63, %p64
    %p66 = scmp.ne.s32.totalorder %s55, %s56
    %p67 = scmp.eq.s32.totalorder %s21, 0
    %p68 = por %p66, %p67
    %p69 = scmp.ne.s32.totalorder %s55, %s56
    %p70 = scmp.eq.s32.totalorder %s22, 1
    %p71 = por %p69, %p70
    %p73 = scmp.ne.s32.totalorder %s56, %s72
    %p74 = scmp.eq.s32.totalorder %s22, 0
    %p75 = por %p73, %p74
    %s77 = sadd.s32 %s76, 1
    %p80 = scmp.eq.s32.totalorder %s16, 1
    %p81 = scmp.ne.s32.totalorder %s76, %s78
    %p82 = scmp.eq.s32.totalorder %s16, 0
    %p83 = por %p81, %p82
    %p84 = scmp.ne.s32.totalorder %s76, %s78
    %p85 = scmp.eq.s32.totalorder %s21, 1
    %p86 = por %p84, %p85
    %p87 = scmp.ne.s32.totalorder %s78, %s79
    %p88 = scmp.eq.s32.totalorder %s21, 0
    %p89 = por %p87, %p88
    %p90 = scmp.ne.s32.totalorder %s78, %s79
    %p91 = scmp.eq.s32.totalorder %s22, 1
    %p92 = por %p90, %p91
    %p94 = scmp.ne.s32.totalorder %s79, %s93
    %p95 = scmp.eq.s32.totalorder %s22, 0
    %p96 = por %p94, %p95
    %s98 = sadd.s32 %s97, 1
    %p101 = scmp.eq.s32.totalorder %s16, 1
    %p102 = scmp.ne.s32.totalorder %s97, %s99
    %p103 = scmp.eq.s32.totalorder %s16, 0
    %p104 = por %p102, %p103
    %p105 = scmp.ne.s32.totalorder %s97, %s99
    %p106 = scmp.eq.s32.totalorder %s21, 1
    %p107 = por %p105, %p106
    %p108 = scmp.ne.s32.totalorder %s99, %s100
    %p109 = scmp.eq.s32.totalorder %s21, 0
    %p110 = por %p108, %p109
    %p111 = scmp.ne.s32.totalorder %s99, %s100
    %p112 = scmp.eq.s32.totalorder %s22, 1
    %p113 = por %p111, %p112
    %p115 = scmp.ne.s32.totalorder %s100, %s114
    %p116 = scmp.eq.s32.totalorder %s22, 0
    %p117 = por %p115, %p116
    %s119 = sadd.s32 %s118, 1
    %p122 = scmp.eq.s32.totalorder %s16, 1
    %p123 = scmp.ne.s32.totalorder %s118, %s120
    %p124 = scmp.eq.s32.totalorder %s16, 0
    %p125 = por %p123, %p124
    %p126 = scmp.ne.s32.totalorder %s118, %s120
    %p127 = scmp.eq.s32.totalorder %s21, 1
    %p128 = por %p126, %p127
    %p129 = scmp.ne.s32.totalorder %s120, %s121
    %p130 = scmp.eq.s32.totalorder %s21, 0
    %p131 = por %p129, %p130
    %p132 = scmp.ne.s32.totalorder %s120, %s121
    %p133 = scmp.eq.s32.totalorder %s22, 1
    %p134 = por %p132, %p133
    %p136 = scmp.ne.s32.totalorder %s121, %s135
    %p137 = scmp.eq.s32.totalorder %s22, 0
    %p138 = por %p136, %p137
    %s140 = sadd.s32 %s139, 1
    %p143 = scmp.eq.s32.totalorder %s16, 1
    %p144 = scmp.ne.s32.totalorder %s139, %s141
    %p145 = scmp.eq.s32.totalorder %s16, 0
    %p146 = por %p144, %p145
    %p147 = scmp.ne.s32.totalorder %s139, %s141
    %p148 = scmp.eq.s32.totalorder %s21, 1
    %p149 = por %p147, %p148
    %p150 = scmp.ne.s32.totalorder %s141, %s142
    %p151 = scmp.eq.s32.totalorder %s21, 0
    %p152 = por %p150, %p151
    %p153 = scmp.ne.s32.totalorder %s141, %s142
    %p154 = scmp.eq.s32.totalorder %s22, 1
    %p155 = por %p153, %p154
    %p157 = scmp.ne.s32.totalorder %s142, %s156
    %p158 = scmp.eq.s32.totalorder %s22, 0
    %p159 = por %p157, %p158
    %s161 = sadd.s32 %s160, 1
    %p164 = scmp.eq.s32.totalorder %s16, 1
    %p165 = scmp.ne.s32.totalorder %s160, %s162
    %p166 = scmp.eq.s32.totalorder %s16, 0
    %p167 = por %p165, %p166
    %p168 = scmp.ne.s32.totalorder %s160, %s162
    %p169 = scmp.eq.s32.totalorder %s21, 1
    %p170 = por %p168, %p169
    %p171 = scmp.ne.s32.totalorder %s162, %s163
    %p172 = scmp.eq.s32.totalorder %s21, 0
    %p173 = por %p171, %p172
    %p174 = scmp.ne.s32.totalorder %s162, %s163
    %p175 = scmp.eq.s32.totalorder %s22, 1
    %p176 = por %p174, %p175
    %p178 = scmp.ne.s32.totalorder %s163, %s177
    %p179 = scmp.eq.s32.totalorder %s22, 0
    %p180 = por %p178, %p179
    %s182 = sadd.s32 %s181, 1
    %p185 = scmp.eq.s32.totalorder %s16, 1
    %p186 = scmp.ne.s32.totalorder %s181, %s183
    %p187 = scmp.eq.s32.totalorder %s16, 0
    %p188 = por %p186, %p187
    %p189 = scmp.ne.s32.totalorder %s181, %s183
    %p190 = scmp.eq.s32.totalorder %s21, 1
    %p191 = por %p189, %p190
    %p192 = scmp.ne.s32.totalorder %s183, %s184
    %p193 = scmp.eq.s32.totalorder %s21, 0
    %p194 = por %p192, %p193
    %p195 = scmp.ne.s32.totalorder %s183, %s184
    %p196 = scmp.eq.s32.totalorder %s22, 1
    %p197 = por %p195, %p196
    %p199 = scmp.ne.s32.totalorder %s184, %s198
    %p200 = scmp.eq.s32.totalorder %s22, 0
    %p201 = por %p199, %p200
    %s203 = sadd.s32 %s202, 1
    %p206 = scmp.eq.s32.totalorder %s16, 1
    %p207 = scmp.ne.s32.totalorder %s202, %s204
    %p208 = scmp.eq.s32.totalorder %s16, 0
    %p209 = por %p207, %p208
    %p210 = scmp.ne.s32.totalorder %s202, %s204
    %p211 = scmp.eq.s32.totalorder %s21, 1
    %p212 = por %p210, %p211
    %p213 = scmp.ne.s32.totalorder %s204, %s205
    %p214 = scmp.eq.s32.totalorder %s21, 0
    %p215 = por %p213, %p214
    %p216 = scmp.ne.s32.totalorder %s204, %s205
    %p217 = scmp.eq.s32.totalorder %s22, 1
    %p218 = por %p216, %p217
    %p220 = scmp.ne.s32.totalorder %s205, %s219
    %p221 = scmp.eq.s32.totalorder %s22, 0
    %p222 = por %p220, %p221
    %s224 = sadd.s32 %s223, 1
    %p227 = scmp.eq.s32.totalorder %s16, 1
    %p228 = scmp.ne.s32.totalorder %s223, %s225
    %p229 = scmp.eq.s32.totalorder %s16, 0
    %p230 = por %p228, %p229
    %p231 = scmp.ne.s32.totalorder %s223, %s225
    %p232 = scmp.eq.s32.totalorder %s21, 1
    %p233 = por %p231, %p232
    %p234 = scmp.ne.s32.totalorder %s225, %s226
    %p235 = scmp.eq.s32.totalorder %s21, 0
    %p236 = por %p234, %p235
    %p237 = scmp.ne.s32.totalorder %s225, %s226
    %p238 = scmp.eq.s32.totalorder %s22, 1
    %p239 = por %p237, %p238
    %p241 = scmp.ne.s32.totalorder %s226, %s240
    %p242 = scmp.eq.s32.totalorder %s22, 0
    %p243 = por %p241, %p242
    %s244 = ssub.s32 %s16, %s23
    %p245 = scmp.eq.s32.totalorder %s244, 0
    %s247 = sadd.s32 %s246, 1
    %s248 = scalar_select %p245, %s246, %s247
    %p251 = pneg %p245
    %p252 = scmp.eq.s32.totalorder %s16, 1
    %p253 = por %p251, %p252
    %p254 = scmp.ne.s32.totalorder %s246, %s249
    %p255 = scmp.eq.s32.totalorder %s16, 0
    %p256 = por %p254, %p255
    %p257 = scmp.ne.s32.totalorder %s246, %s249
    %p258 = scmp.eq.s32.totalorder %s21, 1
    %p259 = por %p257, %p258
    %p260 = scmp.ne.s32.totalorder %s249, %s250
    %p261 = scmp.eq.s32.totalorder %s21, 0
    %p262 = por %p260, %p261
    %p263 = scmp.ne.s32.totalorder %s249, %s250
    %p264 = scmp.eq.s32.totalorder %s22, 1
    %p265 = por %p263, %p264
    %p267 = scmp.ne.s32.totalorder %s250, %s266
    %p268 = scmp.eq.s32.totalorder %s22, 0
    %p269 = por %p267, %p268
    %p270 = scmp.le.s32.totalorder 1, %s16
    %p271 = scmp.lt.s32.totalorder %s16, 3
    %p272 = pnand %p270, %p271
    %p273 = pneg %p272
    // Predicated region
    $region9: #{fwd.51} parent=5 // pred_check
      _
    $region10: #{fwd.51} parent=5 // pred_check_branch
      %275 = sbr.rel (%p272) target = $region12
    $region11: #{fwd.51} parent=5 // pred_region
      %s276 = ssub.s32 %s16, 1
      // Predicated region
      $region13: #{fwd.51} parent=11 // pred_check
        %p277 = pneg %p89
      $region14: #{fwd.51} parent=11 // pred_check_branch
        %279 = sbr.rel (%p277) target = $region16
      $region15: #{fwd.51} parent=11 // pred_region
        _
      $region16: #{fwd.51} parent=11 // pred_fallthru
        _
      // Predicated region
      $region17: #{fwd.51} parent=11 // pred_check
        %p280 = pneg %p110
      $region18: #{fwd.51} parent=11 // pred_check_branch
        %282 = sbr.rel (%p280) target = $region20
      $region19: #{fwd.51} parent=11 // pred_region
        _
      $region20: #{fwd.51} parent=11 // pred_fallthru
        _
      // Predicated region
      $region21: #{fwd.51} parent=11 // pred_check
        %p283 = pneg %p131
      $region22: #{fwd.51} parent=11 // pred_check_branch
        %285 = sbr.rel (%p283) target = $region24
      $region23: #{fwd.51} parent=11 // pred_region
        _
      $region24: #{fwd.51} parent=11 // pred_fallthru
        _
      // Predicated region
      $region25: #{fwd.51} parent=11 // pred_check
        %p286 = pneg %p152
      $region26: #{fwd.51} parent=11 // pred_check_branch
        %288 = sbr.rel (%p286) target = $region28
      $region27: #{fwd.51} parent=11 // pred_region
        _
      $region28: #{fwd.51} parent=11 // pred_fallthru
        _
      // Predicated region
      $region29: #{fwd.51} parent=11 // pred_check
        %p289 = pneg %p173
      $region30: #{fwd.51} parent=11 // pred_check_branch
        %291 = sbr.rel (%p289) target = $region32
      $region31: #{fwd.51} parent=11 // pred_region
        _
      $region32: #{fwd.51} parent=11 // pred_fallthru
        _
      // Predicated region
      $region33: #{fwd.51} parent=11 // pred_check
        %p292 = pneg %p194
      $region34: #{fwd.51} parent=11 // pred_check_branch
        %294 = sbr.rel (%p292) target = $region36
      $region35: #{fwd.51} parent=11 // pred_region
        _
      $region36: #{fwd.51} parent=11 // pred_fallthru
        _
      // Predicated region
      $region37: #{fwd.51} parent=11 // pred_check
        %p295 = pneg %p215
      $region38: #{fwd.51} parent=11 // pred_check_branch
        %297 = sbr.rel (%p295) target = $region40
      $region39: #{fwd.51} parent=11 // pred_region
        _
      $region40: #{fwd.51} parent=11 // pred_fallthru
        _
      // Predicated region
      $region41: #{fwd.51} parent=11 // pred_check
        %p298 = pneg %p236
      $region42: #{fwd.51} parent=11 // pred_check_branch
        %300 = sbr.rel (%p298) target = $region44
      $region43: #{fwd.51} parent=11 // pred_region
        _
      $region44: #{fwd.51} parent=11 // pred_fallthru
        _
    $region12: #{fwd.51} parent=5 // pred_fallthru
      _
    %p301 = scmp.lt.s32.totalorder %s16, 2
    // Predicated region
    $region45: #{fwd.51} parent=5 // pred_check
      %p302 = pneg %p301
    $region46: #{fwd.51} parent=5 // pred_check_branch
      %304 = sbr.rel (%p302) target = $region48
    $region47: #{fwd.51} parent=5 // pred_region
      // Predicated region
      $region49: #{fwd.51} parent=47 // pred_check
        %p305 = pneg %p36
      $region50: #{fwd.51} parent=47 // pred_check_branch
        %307 = sbr.rel (%p305) target = $region52
      $region51: #{fwd.51} parent=47 // pred_region
        %s308 = smul.u32 4, %s16
        %p309 = scmp.lt.s32.totalorder %s308, 7
        %s310 = scalar_select %p309, %s308, 7
        %s311 = smul.addr %s310, 8
        %s312 = scalar_lea.vmem %s0, %s311
        %s313 = smul.u32 4, %s16
      $region52: #{fwd.51} parent=47 // pred_fallthru
        _
      // Predicated region
      $region53: #{fwd.51} parent=47 // pred_check
        %p314 = pneg %p62
      $region54: #{fwd.51} parent=47 // pred_check_branch
        %316 = sbr.rel (%p314) target = $region56
      $region55: #{fwd.51} parent=47 // pred_region
        %s317 = smul.u32 4, %s16
        %p318 = scmp.lt.s32.totalorder %s317, 7
        %s319 = scalar_select %p318, %s317, 7
        %s320 = smul.addr %s319, 8
        %s321 = scalar_lea.vmem %s1, %s320
        %s322 = smul.u32 4, %s16
      $region56: #{fwd.51} parent=47 // pred_fallthru
        _
    $region48: #{fwd.51} parent=5 // pred_fallthru
      _
    %p323 = scmp.le.s32.totalorder 1, %s16
    %p324 = scmp.lt.s32.totalorder %s16, 3
    %p325 = pnand %p323, %p324
    %p326 = pneg %p325
    // Predicated region
    $region57: #{fwd.51} parent=5 // pred_check
      _
    $region58: #{fwd.51} parent=5 // pred_check_branch
      %328 = sbr.rel (%p325) target = $region60
    $region59: #{fwd.51} parent=5 // pred_region
      %s329 = ssub.s32 %s16, 1
      %s330 = smul.u32 4, %s21
      %p331 = scmp.lt.s32.totalorder %s330, 7
      %s332 = scalar_select %p331, %s330, 7
      %s333 = smul.addr %s332, 8
      %s334 = scalar_lea.vmem %s0, %s333
      %p335 = pneg %p42
      %p336 = pneg %p39
      %s337 = smul.u32 4, %s21
      %p338 = scmp.lt.s32.totalorder %s337, 7
      %s339 = scalar_select %p338, %s337, 7
      %s340 = smul.addr %s339, 8
      %s341 = scalar_lea.vmem %s1, %s340
      %p342 = pneg %p68
      %p343 = pneg %p65
      %p344 = pneg %p89
      %p345 = pneg %p86
      %p346 = pneg %p110
      %p347 = pneg %p107
      %p348 = pneg %p131
      %p349 = pneg %p128
      %p350 = pneg %p152
      %p351 = pneg %p149
      %p352 = pneg %p173
      %p353 = pneg %p170
      %p354 = pneg %p194
      %p355 = pneg %p191
      %p356 = pneg %p215
      %p357 = pneg %p212
      %p358 = pneg %p236
      %p359 = pneg %p233
      %p360 = pneg %p262
      %p361 = pneg %p259
      %s362 = smul.u32 4, %s21
      %p363 = scmp.lt.s32.totalorder %s362, 7
      %s364 = scalar_select %p363, %s362, 7
      %s365 = smul.addr %s364, 8
      %s366 = scalar_lea.vmem %s10, %s365
      %s367 = smul.u32 4, %s21
      %p368 = scmp.lt.s32.totalorder %s367, 7
      %s369 = scalar_select %p368, %s367, 7
      %s370 = smul.addr %s369, 8
      %s371 = scalar_lea.vmem %s0, %s370
      %s372 = smul.u32 4, %s21
      %s373 = smul.u32 4, %s21
      %p374 = scmp.lt.s32.totalorder %s373, 7
      %s375 = scalar_select %p374, %s373, 7
      %s376 = smul.addr %s375, 8
      %s377 = scalar_lea.vmem %s1, %s376
      %s378 = smul.u32 4, %s21
      %s379 = smul.u32 4, %s21
      %p380 = scmp.lt.s32.totalorder %s379, 7
      %s381 = scalar_select %p380, %s379, 7
      %s382 = smul.addr %s381, 8
      %s383 = scalar_lea.vmem %s10, %s382
      %s384 = smul.u32 4, %s21
      %v386 = vld [vmem:[%s371] sm:$0xff]
      %v387 = vld [vmem:[%s371 + $0x8] sm:$0xff]
      %v388 = vld [vmem:[%s371 + $0x10] sm:$0xff]
      %v389 = vld [vmem:[%s371 + $0x18] sm:$0xff]
      %v390 = vld [vmem:[%s377] sm:$0xff]
      %v391 = vld [vmem:[%s377 + $0x8] sm:$0xff]
      %v392 = vld [vmem:[%s377 + $0x10] sm:$0xff]
      %v393 = vld [vmem:[%s377 + $0x18] sm:$0xff]
      %v394 = vpack.c.bf16 %v391, %v390
      %v395 = vpack.c.bf16 %v393, %v392
      %v396 = vld [vmem:[%s2] sm:$0xff]
      %v397 = vld [vmem:[%s2 + $0x8] sm:$0xff]
      %v398 = vld [vmem:[%s2 + $0x10] sm:$0xff]
      %v399 = vld [vmem:[%s2 + $0x18] sm:$0xff]
      %v400 = vld [vmem:[%s2 + $0x20] sm:$0xff]
      %v401 = vld [vmem:[%s2 + $0x28] sm:$0xff]
      %v402 = vld [vmem:[%s2 + $0x30] sm:$0xff]
      %v403 = vld [vmem:[%s2 + $0x38] sm:$0xff]
      %v404 = vpack.c.bf16 %v397, %v396
      %v405 = vpack.c.bf16 %v399, %v398
      %v406 = vpack.c.bf16 %v401, %v400
      %v407 = vpack.c.bf16 %v403, %v402
      %v408 = vld [vmem:[%s3] sm:$0x1]
      %v410 = vperm.slane %v408, 0
      %vm412 = vcmask 523264
      %v414 = vsel %vm412, %v394, 0
      %v417 = vsel %vm412, %v395, 0
      %419 = vmatpush.bf16.msra.mxu0 0
      %420 = vmatpush.bf16.msra.mxu0 0
      %421 = vmatpush.bf16.msra.mxu0 0
      %422 = vmatpush.bf16.msra.mxu0 0
      %423 = vmatpush.bf16.msra.mxu0 %v407
      %424 = vmatpush.bf16.msra.mxu0 %v406
      %425 = vmatpush.bf16.msra.mxu0 %v405
      %426 = vmatpush.bf16.msra.mxu0 %v404
      %427 = vmatmul.bf16.gmra.mxu0 %v414
      %v428 = vpop.f32.mrf.mxu0
      %v429 = vadd.f32 %v410, %v428
      %v430 = vpop.f32.mrf.mxu0
      %v431 = vadd.f32 %v410, %v430
      %432 = vmatmul.bf16.gmra.mxu0 %v417
      %v433 = vpop.f32.mrf.mxu0
      %v434 = vadd.f32 %v410, %v433
      %v435 = vpop.f32.mrf.mxu0
      %v436 = vadd.f32 %v410, %v435
      %437 = vdwg.mxu0
      %v438 = vadd.f32 %v386, %v429
      %v439 = vadd.f32 %v387, %v431
      %v440 = vadd.f32 %v388, %v434
      %v441 = vadd.f32 %v389, %v436
      %v442 = vsel %vm412, %v438, 0.0
      %443 = vadd.xlane.f32.xlu0 %v442
      %v444 = vpop.xlane.xlu0 %443
      %v445 = vsel %vm412, %v439, 0.0
      %446 = vadd.xlane.f32.xlu0 %v445
      %v447 = vpop.xlane.xlu0 %446
      %v448 = vsel %vm412, %v440, 0.0
      %449 = vadd.xlane.f32.xlu0 %v448
      %v450 = vpop.xlane.xlu0 %449
      %v451 = vsel %vm412, %v441, 0.0
      %452 = vadd.xlane.f32.xlu0 %v451
      %v453 = vpop.xlane.xlu0 %452
      %v454 = vrcp.pop 64.0
      %v455 = vmul.f32 64.0, %v454
      %v456 = vsub.f32 1.0, %v455
      %v457 = vmul.f32 %v454, %v456
      %v458 = vadd.f32 %v454, %v457
      %vm459 = vweird.f32 %v454
      %v460 = vsel %vm459, %v454, %v458
      %v461 = vmul.f32 %v444, %v460
      %v462 = vmul.f32 %v447, %v460
      %v463 = vmul.f32 %v450, %v460
      %v464 = vmul.f32 %v453, %v460
      %v465 = vsub.f32 %v438, %v461
      %v466 = vsub.f32 %v439, %v462
      %v467 = vsub.f32 %v440, %v463
      %v468 = vsub.f32 %v441, %v464
      %v469 = vmul.f32 %v465, %v465
      %v470 = vmul.f32 %v466, %v466
      %v471 = vmul.f32 %v467, %v467
      %v472 = vmul.f32 %v468, %v468
      %v473 = vsel %vm412, %v469, 0.0
      %474 = vadd.xlane.f32.xlu0 %v473
      %v475 = vpop.xlane.xlu0 %474
      %v476 = vsel %vm412, %v470, 0.0
      %477 = vadd.xlane.f32.xlu0 %v476
      %v478 = vpop.xlane.xlu0 %477
      %v479 = vsel %vm412, %v471, 0.0
      %480 = vadd.xlane.f32.xlu0 %v479
      %v481 = vpop.xlane.xlu0 %480
      %v482 = vsel %vm412, %v472, 0.0
      %483 = vadd.xlane.f32.xlu0 %v482
      %v484 = vpop.xlane.xlu0 %483
      %v485 = vmul.f32 %v475, %v460
      %v486 = vmul.f32 %v478, %v460
      %v487 = vmul.f32 %v481, %v460
      %v488 = vmul.f32 %v484, %v460
      %v489 = vadd.f32 %v485, 1e-05
      %v490 = vadd.f32 %v486, 1e-05
      %v491 = vadd.f32 %v487, 1e-05
      %v492 = vadd.f32 %v488, 1e-05
      %v493 = vrsqrt.pop %v489
      %v494 = vmul.f32 %v493, %v489
      %v495 = vmul.f32 %v494, %v493
      %v496 = vmul.f32 0.5, %v495
      %v497 = vsub.f32 1.5, %v496
      %v498 = vmul.f32 %v493, %v497
      %vm499 = vweird.f32 %v489
      %vm500 = vweird.f32 %v493
      %vm501 = vmor %vm499, %vm500
      %v502 = vsel %vm501, %v493, %v498
      %v503 = vrsqrt.pop %v490
      %v504 = vmul.f32 %v503, %v490
      %v505 = vmul.f32 %v504, %v503
      %v506 = vmul.f32 0.5, %v505
      %v507 = vsub.f32 1.5, %v506
      %v508 = vmul.f32 %v503, %v507
      %vm509 = vweird.f32 %v490
      %vm510 = vweird.f32 %v503
      %vm511 = vmor %vm509, %vm510
      %v512 = vsel %vm511, %v503, %v508
      %v513 = vrsqrt.pop %v491
      %v514 = vmul.f32 %v513, %v491
      %v515 = vmul.f32 %v514, %v513
      %v516 = vmul.f32 0.5, %v515
      %v517 = vsub.f32 1.5, %v516
      %v518 = vmul.f32 %v513, %v517
      %vm519 = vweird.f32 %v491
      %vm520 = vweird.f32 %v513
      %vm521 = vmor %vm519, %vm520
      %v522 = vsel %vm521, %v513, %v518
      %v523 = vrsqrt.pop %v492
      %v524 = vmul.f32 %v523, %v492
      %v525 = vmul.f32 %v524, %v523
      %v526 = vmul.f32 0.5, %v525
      %v527 = vsub.f32 1.5, %v526
      %v528 = vmul.f32 %v523, %v527
      %vm529 = vweird.f32 %v492
      %vm530 = vweird.f32 %v523
      %vm531 = vmor %vm529, %vm530
      %v532 = vsel %vm531, %v523, %v528
      %v533 = vmul.f32 %v465, %v502
      %v534 = vmul.f32 %v466, %v512
      %v535 = vmul.f32 %v467, %v522
      %v536 = vmul.f32 %v468, %v532
      %v537 = vld [vmem:[%s4] sm:$0x1]
      %v539 = vperm.slane %v537, 0
      %v541 = vmul.f32 %v533, %v539
      %v542 = vmul.f32 %v534, %v539
      %v543 = vmul.f32 %v535, %v539
      %v544 = vmul.f32 %v536, %v539
      %v545 = vld [vmem:[%s5] sm:$0x1]
      %v547 = vperm.slane %v545, 0
      %v549 = vadd.f32 %v541, %v547
      %v550 = vadd.f32 %v542, %v547
      %v551 = vadd.f32 %v543, %v547
      %v552 = vadd.f32 %v544, %v547
      %v553 = vpack.c.bf16 %v550, %v549
      %v554 = vpack.c.bf16 %v552, %v551
      %v555 = vld [vmem:[%s6] sm:$0xff]
      %v556 = vld [vmem:[%s6 + $0x8] sm:$0xff]
      %v557 = vld [vmem:[%s6 + $0x10] sm:$0xff]
      %v558 = vld [vmem:[%s6 + $0x18] sm:$0xff]
      %v559 = vld [vmem:[%s6 + $0x20] sm:$0xff]
      %v560 = vld [vmem:[%s6 + $0x28] sm:$0xff]
      %v561 = vld [vmem:[%s6 + $0x30] sm:$0xff]
      %v562 = vld [vmem:[%s6 + $0x38] sm:$0xff]
      %v563 = vld [vmem:[%s6 + $0x40] sm:$0xff]
      %v564 = vld [vmem:[%s6 + $0x48] sm:$0xff]
      %v565 = vld [vmem:[%s6 + $0x50] sm:$0xff]
      %v566 = vld [vmem:[%s6 + $0x58] sm:$0xff]
      %v567 = vld [vmem:[%s6 + $0x60] sm:$0xff]
      %v568 = vld [vmem:[%s6 + $0x68] sm:$0xff]
      %v569 = vld [vmem:[%s6 + $0x70] sm:$0xff]
      %v570 = vld [vmem:[%s6 + $0x78] sm:$0xff]
      %v571 = vpack.c.bf16 %v557, %v555
      %v572 = vpack.c.bf16 %v558, %v556
      %v573 = vpack.c.bf16 %v561, %v559
      %v574 = vpack.c.bf16 %v562, %v560
      %v575 = vpack.c.bf16 %v565, %v563
      %v576 = vpack.c.bf16 %v566, %v564
      %v577 = vpack.c.bf16 %v569, %v567
      %v578 = vpack.c.bf16 %v570, %v568
      %v579 = vld [vmem:[%s7] sm:$0x3]
      %v581 = vperm.slane %v579, 0
      %v582 = vperm.slane %v579, 1
      %v586 = vsel %vm412, %v553, 0
      %v589 = vsel %vm412, %v554, 0
      %591 = vmatpush.bf16.msra.mxu0 0
      %592 = vmatpush.bf16.msra.mxu0 0
      %593 = vmatpush.bf16.msra.mxu0 0
      %594 = vmatpush.bf16.msra.mxu0 0
      %595 = vmatpush.bf16.msra.mxu0 %v577
      %596 = vmatpush.bf16.msra.mxu0 %v575
      %597 = vmatpush.bf16.msra.mxu0 %v573
      %598 = vmatpush.bf16.msra.mxu0 %v571
      %599 = vmatmul.bf16.gmra.mxu0 %v586
      %v600 = vpop.f32.mrf.mxu0
      %v601 = vadd.f32 %v581, %v600
      %v602 = vpop.f32.mrf.mxu0
      %v603 = vadd.f32 %v581, %v602
      %604 = vmatmul.bf16.gmra.mxu0 %v589
      %v605 = vpop.f32.mrf.mxu0
      %v606 = vadd.f32 %v581, %v605
      %v607 = vpop.f32.mrf.mxu0
      %v608 = vadd.f32 %v581, %v607
      %609 = vdwg.mxu0
      %610 = vmatpush.bf16.msra.mxu0 0
      %611 = vmatpush.bf16.msra.mxu0 0
      %612 = vmatpush.bf16.msra.mxu0 0
      %613 = vmatpush.bf16.msra.mxu0 0
      %614 = vmatpush.bf16.msra.mxu0 %v578
      %615 = vmatpush.bf16.msra.mxu0 %v576
      %616 = vmatpush.bf16.msra.mxu0 %v574
      %617 = vmatpush.bf16.msra.mxu0 %v572
      %618 = vmatmul.bf16.gmra.mxu0 %v586
      %v619 = vpop.f32.mrf.mxu0
      %v620 = vadd.f32 %v582, %v619
      %v621 = vpop.f32.mrf.mxu0
      %v622 = vadd.f32 %v582, %v621
      %623 = vmatmul.bf16.gmra.mxu0 %v589
      %v624 = vpop.f32.mrf.mxu0
      %v625 = vadd.f32 %v582, %v624
      %v626 = vpop.f32.mrf.mxu0
      %v627 = vadd.f32 %v582, %v626
      %628 = vdwg.mxu0
      %v629 = vmul.f32 %v601, 0.5
      %v630 = vmul.f32 %v620, 0.5
      %v631 = vmul.f32 %v603, 0.5
      %v632 = vmul.f32 %v622, 0.5
      %v633 = vmul.f32 %v606, 0.5
      %v634 = vmul.f32 %v625, 0.5
      %v635 = vmul.f32 %v608, 0.5
      %v636 = vmul.f32 %v627, 0.5
      %v637 = vmul.f32 %v601, 0.70710677
      %v638 = vmul.f32 %v620, 0.70710677
      %v639 = vmul.f32 %v603, 0.70710677
      %v640 = vmul.f32 %v622, 0.70710677
      %v641 = vmul.f32 %v606, 0.70710677
      %v642 = vmul.f32 %v625, 0.70710677
      %v643 = vmul.f32 %v608, 0.70710677
      %v644 = vmul.f32 %v627, 0.70710677
      %v645 = vand.u32 2147483647, %v637
      %v646 = vand.u32 2147483647, %v638
      %v647 = vand.u32 2147483647, %v639
      %v648 = vand.u32 2147483647, %v640
      %v649 = vand.u32 2147483647, %v641
      %v650 = vand.u32 2147483647, %v642
      %v651 = vand.u32 2147483647, %v643
      %v652 = vand.u32 2147483647, %v644
      %v653 = vmul.f32 %v645, 0.3275911
      %v654 = vmul.f32 %v646, 0.3275911
      %v655 = vmul.f32 %v647, 0.3275911
      %v656 = vmul.f32 %v648, 0.3275911
      %v657 = vmul.f32 %v649, 0.3275911
      %v658 = vmul.f32 %v650, 0.3275911
      %v659 = vmul.f32 %v651, 0.3275911
      %v660 = vmul.f32 %v652, 0.3275911
      %v661 = vadd.f32 %v653, 1.0
      %v662 = vadd.f32 %v654, 1.0
      %v663 = vadd.f32 %v655, 1.0
      %v664 = vadd.f32 %v656, 1.0
      %v665 = vadd.f32 %v657, 1.0
      %v666 = vadd.f32 %v658, 1.0
      %v667 = vadd.f32 %v659, 1.0
      %v668 = vadd.f32 %v660, 1.0
      %v669 = vrcp.pop %v661
      %v670 = vmul.f32 %v661, %v669
      %v671 = vsub.f32 1.0, %v670
      %v672 = vmul.f32 %v669, %v671
      %v673 = vadd.f32 %v669, %v672
      %vm674 = vweird.f32 %v661
      %vm675 = vweird.f32 %v669
      %vm676 = vmor %vm674, %vm675
      %v677 = vsel %vm676, %v669, %v673
      %v678 = vand.u32 2147483647, %v661
      %vm679 = vcmp.eq.f32.partialorder %v678, 8.507059e+37
      %v680 = vand.u32 %v661, 2147483648
      %v681 = vor.u32 1.1754944e-38, %v680
      %v682 = vsel %vm679, %v681, %v677
      %v683 = vmul.f32 1.0, %v682
      %v684 = vrcp.pop %v662
      %v685 = vmul.f32 %v662, %v684
      %v686 = vsub.f32 1.0, %v685
      %v687 = vmul.f32 %v684, %v686
      %v688 = vadd.f32 %v684, %v687
      %vm689 = vweird.f32 %v662
      %vm690 = vweird.f32 %v684
      %vm691 = vmor %vm689, %vm690
      %v692 = vsel %vm691, %v684, %v688
      %v693 = vand.u32 2147483647, %v662
      %vm694 = vcmp.eq.f32.partialorder %v693, 8.507059e+37
      %v695 = vand.u32 %v662, 2147483648
      %v696 = vor.u32 1.1754944e-38, %v695
      %v697 = vsel %vm694, %v696, %v692
      %v698 = vmul.f32 1.0, %v697
      %v699 = vrcp.pop %v663
      %v700 = vmul.f32 %v663, %v699
      %v701 = vsub.f32 1.0, %v700
      %v702 = vmul.f32 %v699, %v701
      %v703 = vadd.f32 %v699, %v702
      %vm704 = vweird.f32 %v663
      %vm705 = vweird.f32 %v699
      %vm706 = vmor %vm704, %vm705
      %v707 = vsel %vm706, %v699, %v703
      %v708 = vand.u32 2147483647, %v663
      %vm709 = vcmp.eq.f32.partialorder %v708, 8.507059e+37
      %v710 = vand.u32 %v663, 2147483648
      %v711 = vor.u32 1.1754944e-38, %v710
      %v712 = vsel %vm709, %v711, %v707
      %v713 = vmul.f32 1.0, %v712
      %v714 = vrcp.pop %v664
      %v715 = vmul.f32 %v664, %v714
      %v716 = vsub.f32 1.0, %v715
      %v717 = vmul.f32 %v714, %v716
      %v718 = vadd.f32 %v714, %v717
      %vm719 = vweird.f32 %v664
      %vm720 = vweird.f32 %v714
      %vm721 = vmor %vm719, %vm720
      %v722 = vsel %vm721, %v714, %v718
      %v723 = vand.u32 2147483647, %v664
      %vm724 = vcmp.eq.f32.partialorder %v723, 8.507059e+37
      %v725 = vand.u32 %v664, 2147483648
      %v726 = vor.u32 1.1754944e-38, %v725
      %v727 = vsel %vm724, %v726, %v722
      %v728 = vmul.f32 1.0, %v727
      %v729 = vrcp.pop %v665
      %v730 = vmul.f32 %v665, %v729
      %v731 = vsub.f32 1.0, %v730
      %v732 = vmul.f32 %v729, %v731
      %v733 = vadd.f32 %v729, %v732
      %vm734 = vweird.f32 %v665
      %vm735 = vweird.f32 %v729
      %vm736 = vmor %vm734, %vm735
      %v737 = vsel %vm736, %v729, %v733
      %v738 = vand.u32 2147483647, %v665
      %vm739 = vcmp.eq.f32.partialorder %v738, 8.507059e+37
      %v740 = vand.u32 %v665, 2147483648
      %v741 = vor.u32 1.1754944e-38, %v740
      %v742 = vsel %vm739, %v741, %v737
      %v743 = vmul.f32 1.0, %v742
      %v744 = vrcp.pop %v666
      %v745 = vmul.f32 %v666, %v744
      %v746 = vsub.f32 1.0, %v745
      %v747 = vmul.f32 %v744, %v746
      %v748 = vadd.f32 %v744, %v747
      %vm749 = vweird.f32 %v666
      %vm750 = vweird.f32 %v744
      %vm751 = vmor %vm749, %vm750
      %v752 = vsel %vm751, %v744, %v748
      %v753 = vand.u32 2147483647, %v666
      %vm754 = vcmp.eq.f32.partialorder %v753, 8.507059e+37
      %v755 = vand.u32 %v666, 2147483648
      %v756 = vor.u32 1.1754944e-38, %v755
      %v757 = vsel %vm754, %v756, %v752
      %v758 = vmul.f32 1.0, %v757
      %v759 = vrcp.pop %v667
      %v760 = vmul.f32 %v667, %v759
      %v761 = vsub.f32 1.0, %v760
      %v762 = vmul.f32 %v759, %v761
      %v763 = vadd.f32 %v759, %v762
      %vm764 = vweird.f32 %v667
      %vm765 = vweird.f32 %v759
      %vm766 = vmor %vm764, %vm765
      %v767 = vsel %vm766, %v759, %v763
      %v768 = vand.u32 2147483647, %v667
      %vm769 = vcmp.eq.f32.partialorder %v768, 8.507059e+37
      %v770 = vand.u32 %v667, 2147483648
      %v771 = vor.u32 1.1754944e-38, %v770
      %v772 = vsel %vm769, %v771, %v767
      %v773 = vmul.f32 1.0, %v772
      %v774 = vrcp.pop %v668
      %v775 = vmul.f32 %v668, %v774
      %v776 = vsub.f32 1.0, %v775
      %v777 = vmul.f32 %v774, %v776
      %v778 = vadd.f32 %v774, %v777
      %vm779 = vweird.f32 %v668
      %vm780 = vweird.f32 %v774
      %vm781 = vmor %vm779, %vm780
      %v782 = vsel %vm781, %v774, %v778
      %v783 = vand.u32 2147483647, %v668
      %vm784 = vcmp.eq.f32.partialorder %v783, 8.507059e+37
      %v785 = vand.u32 %v668, 2147483648
      %v786 = vor.u32 1.1754944e-38, %v785
      %v787 = vsel %vm784, %v786, %v782
      %v788 = vmul.f32 1.0, %v787
      %v789 = vmul.f32 %v683, 1.0614054
      %v790 = vmul.f32 %v698, 1.0614054
      %v791 = vmul.f32 %v713, 1.0614054
      %v792 = vmul.f32 %v728, 1.0614054
      %v793 = vmul.f32 %v743, 1.0614054
      %v794 = vmul.f32 %v758, 1.0614054
      %v795 = vmul.f32 %v773, 1.0614054
      %v796 = vmul.f32 %v788, 1.0614054
      %v797 = vadd.f32 %v789, -1.4531521
      %v798 = vadd.f32 %v790, -1.4531521
      %v799 = vadd.f32 %v791, -1.4531521
      %v800 = vadd.f32 %v792, -1.4531521
      %v801 = vadd.f32 %v793, -1.4531521
      %v802 = vadd.f32 %v794, -1.4531521
      %v803 = vadd.f32 %v795, -1.4531521
      %v804 = vadd.f32 %v796, -1.4531521
      %v805 = vmul.f32 %v797, %v683
      %v806 = vmul.f32 %v798, %v698
      %v807 = vmul.f32 %v799, %v713
      %v808 = vmul.f32 %v800, %v728
      %v809 = vmul.f32 %v801, %v743
      %v810 = vmul.f32 %v802, %v758
      %v811 = vmul.f32 %v803, %v773
      %v812 = vmul.f32 %v804, %v788
      %v813 = vadd.f32 %v805, 1.4214138
      %v814 = vadd.f32 %v806, 1.4214138
      %v815 = vadd.f32 %v807, 1.4214138
      %v816 = vadd.f32 %v808, 1.4214138
      %v817 = vadd.f32 %v809, 1.4214138
      %v818 = vadd.f32 %v810, 1.4214138
      %v819 = vadd.f32 %v811, 1.4214138
      %v820 = vadd.f32 %v812, 1.4214138
      %v821 = vmul.f32 %v813, %v683
      %v822 = vmul.f32 %v814, %v698
      %v823 = vmul.f32 %v815, %v713
      %v824 = vmul.f32 %v816, %v728
      %v825 = vmul.f32 %v817, %v743
      %v826 = vmul.f32 %v818, %v758
      %v827 = vmul.f32 %v819, %v773
      %v828 = vmul.f32 %v820, %v788
      %v829 = vadd.f32 %v821, -0.28449672
      %v830 = vadd.f32 %v822, -0.28449672
      %v831 = vadd.f32 %v823, -0.28449672
      %v832 = vadd.f32 %v824, -0.28449672
      %v833 = vadd.f32 %v825, -0.28449672
      %v834 = vadd.f32 %v826, -0.28449672
      %v835 = vadd.f32 %v827, -0.28449672
      %v836 = vadd.f32 %v828, -0.28449672
      %v837 = vmul.f32 %v829, %v683
      %v838 = vmul.f32 %v830, %v698
      %v839 = vmul.f32 %v831, %v713
      %v840 = vmul.f32 %v832, %v728
      %v841 = vmul.f32 %v833, %v743
      %v842 = vmul.f32 %v834, %v758
      %v843 = vmul.f32 %v835, %v773
      %v844 = vmul.f32 %v836, %v788
      %v845 = vadd.f32 %v837, 0.2548296
      %v846 = vadd.f32 %v838, 0.2548296
      %v847 = vadd.f32 %v839, 0.2548296
      %v848 = vadd.f32 %v840, 0.2548296
      %v849 = vadd.f32 %v841, 0.2548296
      %v850 = vadd.f32 %v842, 0.2548296
      %v851 = vadd.f32 %v843, 0.2548296
      %v852 = vadd.f32 %v844, 0.2548296
      %v853 = vmul.f32 %v845, %v683
      %v854 = vmul.f32 %v846, %v698
      %v855 = vmul.f32 %v847, %v713
      %v856 = vmul.f32 %v848, %v728
      %v857 = vmul.f32 %v849, %v743
      %v858 = vmul.f32 %v850, %v758
      %v859 = vmul.f32 %v851, %v773
      %v860 = vmul.f32 %v852, %v788
      %v861 = vsub.f32 0.0, %v645
      %v862 = vsub.f32 0.0, %v646
      %v863 = vsub.f32 0.0, %v647
      %v864 = vsub.f32 0.0, %v648
      %v865 = vsub.f32 0.0, %v649
      %v866 = vsub.f32 0.0, %v650
      %v867 = vsub.f32 0.0, %v651
      %v868 = vsub.f32 0.0, %v652
      %v869 = vmul.f32 %v861, %v645
      %v870 = vmul.f32 %v862, %v646
      %v871 = vmul.f32 %v863, %v647
      %v872 = vmul.f32 %v864, %v648
      %v873 = vmul.f32 %v865, %v649
      %v874 = vmul.f32 %v866, %v650
      %v875 = vmul.f32 %v867, %v651
      %v876 = vmul.f32 %v868, %v652
      %v877 = vmul.f32 %v869, 1.442695
      %v878 = vpow.pop %v877
      %v879 = vmul.f32 %v870, 1.442695
      %v880 = vpow.pop %v879
      %v881 = vmul.f32 %v871, 1.442695
      %v882 = vpow.pop %v881
      %v883 = vmul.f32 %v872, 1.442695
      %v884 = vpow.pop %v883
      %v885 = vmul.f32 %v873, 1.442695
      %v886 = vpow.pop %v885
      %v887 = vmul.f32 %v874, 1.442695
      %v888 = vpow.pop %v887
      %v889 = vmul.f32 %v875, 1.442695
      %v890 = vpow.pop %v889
      %v891 = vmul.f32 %v876, 1.442695
      %v892 = vpow.pop %v891
      %v893 = vmul.f32 %v853, %v878
      %v894 = vmul.f32 %v854, %v880
      %v895 = vmul.f32 %v855, %v882
      %v896 = vmul.f32 %v856, %v884
      %v897 = vmul.f32 %v857, %v886
      %v898 = vmul.f32 %v858, %v888
      %v899 = vmul.f32 %v859, %v890
      %v900 = vmul.f32 %v860, %v892
      %v901 = vsub.f32 1.0, %v893
      %v902 = vsub.f32 1.0, %v894
      %v903 = vsub.f32 1.0, %v895
      %v904 = vsub.f32 1.0, %v896
      %v905 = vsub.f32 1.0, %v897
      %v906 = vsub.f32 1.0, %v898
      %v907 = vsub.f32 1.0, %v899
      %v908 = vsub.f32 1.0, %v900
      %vm909 = vcmp.ge.f32.partialorder %v637, 0.0
      %vm910 = vcmp.ge.f32.partialorder %v638, 0.0
      %vm911 = vcmp.ge.f32.partialorder %v639, 0.0
      %vm912 = vcmp.ge.f32.partialorder %v640, 0.0
      %vm913 = vcmp.ge.f32.partialorder %v641, 0.0
      %vm914 = vcmp.ge.f32.partialorder %v642, 0.0
      %vm915 = vcmp.ge.f32.partialorder %v643, 0.0
      %vm916 = vcmp.ge.f32.partialorder %v644, 0.0
      %v917 = vsub.f32 0.0, %v901
      %v918 = vsub.f32 0.0, %v902
      %v919 = vsub.f32 0.0, %v903
      %v920 = vsub.f32 0.0, %v904
      %v921 = vsub.f32 0.0, %v905
      %v922 = vsub.f32 0.0, %v906
      %v923 = vsub.f32 0.0, %v907
      %v924 = vsub.f32 0.0, %v908
      %v925 = vsel %vm909, %v901, %v917
      %v926 = vsel %vm910, %v902, %v918
      %v927 = vsel %vm911, %v903, %v919
      %v928 = vsel %vm912, %v904, %v920
      %v929 = vsel %vm913, %v905, %v921
      %v930 = vsel %vm914, %v906, %v922
      %v931 = vsel %vm915, %v907, %v923
      %v932 = vsel %vm916, %v908, %v924
      %v933 = vadd.f32 %v925, 1.0
      %v934 = vadd.f32 %v926, 1.0
      %v935 = vadd.f32 %v927, 1.0
      %v936 = vadd.f32 %v928, 1.0
      %v937 = vadd.f32 %v929, 1.0
      %v938 = vadd.f32 %v930, 1.0
      %v939 = vadd.f32 %v931, 1.0
      %v940 = vadd.f32 %v932, 1.0
      %v941 = vmul.f32 %v629, %v933
      %v942 = vmul.f32 %v630, %v934
      %v943 = vmul.f32 %v631, %v935
      %v944 = vmul.f32 %v632, %v936
      %v945 = vmul.f32 %v633, %v937
      %v946 = vmul.f32 %v634, %v938
      %v947 = vmul.f32 %v635, %v939
      %v948 = vmul.f32 %v636, %v940
      %v949 = vpack.c.bf16 %v943, %v941
      %v950 = vpack.c.bf16 %v944, %v942
      %v951 = vpack.c.bf16 %v947, %v945
      %v952 = vpack.c.bf16 %v948, %v946
      %v953 = vld [vmem:[%s8] sm:$0xff]
      %v954 = vld [vmem:[%s8 + $0x8] sm:$0xff]
      %v955 = vld [vmem:[%s8 + $0x10] sm:$0xff]
      %v956 = vld [vmem:[%s8 + $0x18] sm:$0xff]
      %v957 = vld [vmem:[%s8 + $0x20] sm:$0xff]
      %v958 = vld [vmem:[%s8 + $0x28] sm:$0xff]
      %v959 = vld [vmem:[%s8 + $0x30] sm:$0xff]
      %v960 = vld [vmem:[%s8 + $0x38] sm:$0xff]
      %v961 = vld [vmem:[%s8 + $0x40] sm:$0xff]
      %v962 = vld [vmem:[%s8 + $0x48] sm:$0xff]
      %v963 = vld [vmem:[%s8 + $0x50] sm:$0xff]
      %v964 = vld [vmem:[%s8 + $0x58] sm:$0xff]
      %v965 = vld [vmem:[%s8 + $0x60] sm:$0xff]
      %v966 = vld [vmem:[%s8 + $0x68] sm:$0xff]
      %v967 = vld [vmem:[%s8 + $0x70] sm:$0xff]
      %v968 = vld [vmem:[%s8 + $0x78] sm:$0xff]
      %v969 = vld [vmem:[%s8 + $0x80] sm:$0xff]
      %v970 = vld [vmem:[%s8 + $0x88] sm:$0xff]
      %v971 = vld [vmem:[%s8 + $0x90] sm:$0xff]
      %v972 = vld [vmem:[%s8 + $0x98] sm:$0xff]
      %v973 = vld [vmem:[%s8 + $0xa0] sm:$0xff]
      %v974 = vld [vmem:[%s8 + $0xa8] sm:$0xff]
      %v975 = vld [vmem:[%s8 + $0xb0] sm:$0xff]
      %v976 = vld [vmem:[%s8 + $0xb8] sm:$0xff]
      %v977 = vld [vmem:[%s8 + $0xc0] sm:$0xff]
      %v978 = vld [vmem:[%s8 + $0xc8] sm:$0xff]
      %v979 = vld [vmem:[%s8 + $0xd0] sm:$0xff]
      %v980 = vld [vmem:[%s8 + $0xd8] sm:$0xff]
      %v981 = vld [vmem:[%s8 + $0xe0] sm:$0xff]
      %v982 = vld [vmem:[%s8 + $0xe8] sm:$0xff]
      %v983 = vld [vmem:[%s8 + $0xf0] sm:$0xff]
      %v984 = vld [vmem:[%s8 + $0xf8] sm:$0xff]
      %v985 = vpack.c.bf16 %v954, %v953
      %v986 = vpack.c.bf16 %v956, %v955
      %v987 = vpack.c.bf16 %v958, %v957
      %v988 = vpack.c.bf16 %v960, %v959
      %v989 = vpack.c.bf16 %v962, %v961
      %v990 = vpack.c.bf16 %v964, %v963
      %v991 = vpack.c.bf16 %v966, %v965
      %v992 = vpack.c.bf16 %v968, %v967
      %v993 = vpack.c.bf16 %v970, %v969
      %v994 = vpack.c.bf16 %v972, %v971
      %v995 = vpack.c.bf16 %v974, %v973
      %v996 = vpack.c.bf16 %v976, %v975
      %v997 = vpack.c.bf16 %v978, %v977
      %v998 = vpack.c.bf16 %v980, %v979
      %v999 = vpack.c.bf16 %v982, %v981
      %v1000 = vpack.c.bf16 %v984, %v983
      %v1001 = vld [vmem:[%s9] sm:$0x1]
      %v1003 = vperm.slane %v1001, 0
      %1005 = vmatpush.bf16.msra.mxu0 %v992
      %1006 = vmatpush.bf16.msra.mxu0 %v991
      %1007 = vmatpush.bf16.msra.mxu0 %v990
      %1008 = vmatpush.bf16.msra.mxu0 %v989
      %1009 = vmatpush.bf16.msra.mxu0 %v988
      %1010 = vmatpush.bf16.msra.mxu0 %v987
      %1011 = vmatpush.bf16.msra.mxu0 %v986
      %1012 = vmatpush.bf16.msra.mxu0 %v985
      %1013 = vmatmul.bf16.gmra.mxu0 %v949
      %v1014 = vpop.f32.mrf.mxu0
      %v1015 = vadd.f32 %v1003, %v1014
      %v1016 = vpop.f32.mrf.mxu0
      %v1017 = vadd.f32 %v1003, %v1016
      %1018 = vmatmul.bf16.gmra.mxu0 %v951
      %v1019 = vpop.f32.mrf.mxu0
      %v1020 = vadd.f32 %v1003, %v1019
      %v1021 = vpop.f32.mrf.mxu0
      %v1022 = vadd.f32 %v1003, %v1021
      %1023 = vdwg.mxu0
      %1024 = vmatpush.bf16.msra.mxu0 %v1000
      %1025 = vmatpush.bf16.msra.mxu0 %v999
      %1026 = vmatpush.bf16.msra.mxu0 %v998
      %1027 = vmatpush.bf16.msra.mxu0 %v997
      %1028 = vmatpush.bf16.msra.mxu0 %v996
      %1029 = vmatpush.bf16.msra.mxu0 %v995
      %1030 = vmatpush.bf16.msra.mxu0 %v994
      %1031 = vmatpush.bf16.msra.mxu0 %v993
      %1032 = vmatmul.bf16.gmra.mxu0 %v950
      %v1033 = vpop.f32.mrf.mxu0
      %v1034 = vadd.f32 %v1015, %v1033
      %v1035 = vpop.f32.mrf.mxu0
      %v1036 = vadd.f32 %v1017, %v1035
      %1037 = vmatmul.bf16.gmra.mxu0 %v952
      %v1038 = vpop.f32.mrf.mxu0
      %v1039 = vadd.f32 %v1020, %v1038
      %v1040 = vpop.f32.mrf.mxu0
      %v1041 = vadd.f32 %v1022, %v1040
      %1042 = vdwg.mxu0
      %v1043 = vadd.f32 %v438, %v1034
      %v1044 = vadd.f32 %v439, %v1036
      %v1045 = vadd.f32 %v440, %v1039
      %v1046 = vadd.f32 %v441, %v1041
      %1047 = vst.msk [vmem:[%s383] sm:$0xff] %vm412, %v1043
      %1048 = vst.msk [vmem:[%s383 + $0x8] sm:$0xff] %vm412, %v1044
      %1049 = vst.msk [vmem:[%s383 + $0x10] sm:$0xff] %vm412, %v1045
      %1050 = vst.msk [vmem:[%s383 + $0x18] sm:$0xff] %vm412, %v1046
      %s1051 = smul.u32 4, %s21
      %p1052 = scmp.lt.s32.totalorder %s1051, 7
      %s1053 = scalar_select %p1052, %s1051, 7
      %s1054 = smul.addr %s1053, 8
      %s1055 = scalar_lea.vmem %s10, %s1054
      // Predicated region
      $region61: #{fwd.51} parent=59 // pred_check
        %p1056 = pneg %p259
      $region62: #{fwd.51} parent=59 // pred_check_branch
        %1058 = sbr.rel (%p1056) target = $region64
      $region63: #{fwd.51} parent=59 // pred_region
        %s1059 = smul.u32 4, %s21
      $region64: #{fwd.51} parent=59 // pred_fallthru
        _
    $region60: #{fwd.51} parent=5 // pred_fallthru
      _
    %p1060 = scmp.le.s32.totalorder 2, %s16
    // Predicated region
    $region65: #{fwd.51} parent=5 // pred_check
      %p1061 = pneg %p1060
    $region66: #{fwd.51} parent=5 // pred_check_branch
      %1063 = sbr.rel (%p1061) target = $region68
    $region67: #{fwd.51} parent=5 // pred_region
      %s1064 = ssub.s32 %s16, 2
      // Predicated region
      $region69: #{fwd.51} parent=67 // pred_check
        %p1065 = pneg %p265
      $region70: #{fwd.51} parent=67 // pred_check_branch
        %1067 = sbr.rel (%p1065) target = $region72
      $region71: #{fwd.51} parent=67 // pred_region
        %s1068 = smul.u32 4, %s22
        %p1069 = scmp.lt.s32.totalorder %s1068, 7
        %s1070 = scalar_select %p1069, %s1068, 7
        %s1071 = smul.addr %s1070, 8
        %s1072 = scalar_lea.vmem %s10, %s1071
      $region72: #{fwd.51} parent=67 // pred_fallthru
        _
    $region68: #{fwd.51} parent=5 // pred_fallthru
      _
  $region6: #{fwd.51} parent=0 // loop_footer
    %s20 = sadd.s32 1, %s16
  $region7: #{fwd.51} parent=0 // loop_footer_branch
    %15 = sbr.rel target = $region3
  $region8: #{fwd.51} parent=0 // loop_exit
    _

// kernel: fwd.50
$region0: #{fwd.50}
  #allocation0 [shape = 'u32[]', space=smem, size = 0x4, offset = 0x4, fixed_abs, tag = 'smem constant byte address 0x4 - core index']
  #allocation1 [shape = 'u32[72,128]{1,0:T(1,128)}', space=vmem, size = 0x9000, scoped, tag = 'internal scratch']
  %s0 = inlined_call_operand.vmem [shape: f32[64,8,8], index: 0, kind: input, shape index: {}]
  %s1 = inlined_call_operand.vmem [shape: f32[64,8,8], index: 1, kind: input, shape index: {}]
  %s2 = inlined_call_operand.vmem [shape: f32[64,8,8], index: 2, kind: input, shape index: {}]
  %s3 = inlined_call_operand.vmem [shape: f32[64,8,8], index: 3, kind: output, shape index: {}]
  %s4 = sld [smem:[#allocation0]]
  $region45: #{fwd.50} parent=0
    _
  %s6 = ssub.s32 1, %s4
  %s7 = scalar_select 0, %s6, %s4
  loop: start=0, step=1, limit=4
  $region2: #{fwd.50} parent=0 // loop_pre_header
    _
  $region3: #{fwd.50} parent=0 // loop_header
    %s9 = sphi 0, %s13
    %p10 = scmp.ge.s32.totalorder %s9, 4
    %s19 = sphi 0, %s21
    %s22 = sphi 0, %s19
    %s23 = sphi 0, %s22
    %s39 = sphi 0, %s23
    %s45 = sphi 0, %s47
    %s48 = sphi 0, %s45
    %s49 = sphi 0, %s48
    %s65 = sphi 0, %s49
    %s71 = sphi 0, %s73
    %s74 = sphi 0, %s71
    %s75 = sphi 0, %s74
    %s91 = sphi 0, %s75
    %s97 = sphi 0, %s99
    %s100 = sphi 0, %s97
    %s101 = sphi 0, %s100
    %s117 = sphi 0, %s101
  $region4: #{fwd.50} parent=0 // loop_header_branch
    %12 = sbr.rel (%p10) target = $region8
  $region5: #{fwd.50} parent=0 // loop_body
    %s14 = ssub.s32 %s9, 1
    %s15 = ssub.s32 %s9, 2
    %s16 = sadd.s32 %s9, 1
    %s17 = ssub.s32 %s9, %s16
    %p18 = scmp.eq.s32.totalorder %s17, 0
    %s20 = sadd.s32 %s19, 1
    %s21 = scalar_select %p18, %s19, %s20
    %p24 = pneg %p18
    %p25 = scmp.eq.s32.totalorder %s9, 1
    %p26 = por %p24, %p25
    %p27 = scmp.ne.s32.totalorder %s19, %s22
    %p28 = scmp.eq.s32.totalorder %s9, 0
    %p29 = por %p27, %p28
    %p30 = scmp.ne.s32.totalorder %s19, %s22
    %p31 = scmp.eq.s32.totalorder %s14, 1
    %p32 = por %p30, %p31
    %p33 = scmp.ne.s32.totalorder %s22, %s23
    %p34 = scmp.eq.s32.totalorder %s14, 0
    %p35 = por %p33, %p34
    %p36 = scmp.ne.s32.totalorder %s22, %s23
    %p37 = scmp.eq.s32.totalorder %s15, 1
    %p38 = por %p36, %p37
    %p40 = scmp.ne.s32.totalorder %s23, %s39
    %p41 = scmp.eq.s32.totalorder %s15, 0
    %p42 = por %p40, %p41
    %s43 = ssub.s32 %s9, %s16
    %p44 = scmp.eq.s32.totalorder %s43, 0
    %s46 = sadd.s32 %s45, 1
    %s47 = scalar_select %p44, %s45, %s46
    %p50 = pneg %p44
    %p51 = scmp.eq.s32.totalorder %s9, 1
    %p52 = por %p50, %p51
    %p53 = scmp.ne.s32.totalorder %s45, %s48
    %p54 = scmp.eq.s32.totalorder %s9, 0
    %p55 = por %p53, %p54
    %p56 = scmp.ne.s32.totalorder %s45, %s48
    %p57 = scmp.eq.s32.totalorder %s14, 1
    %p58 = por %p56, %p57
    %p59 = scmp.ne.s32.totalorder %s48, %s49
    %p60 = scmp.eq.s32.totalorder %s14, 0
    %p61 = por %p59, %p60
    %p62 = scmp.ne.s32.totalorder %s48, %s49
    %p63 = scmp.eq.s32.totalorder %s15, 1
    %p64 = por %p62, %p63
    %p66 = scmp.ne.s32.totalorder %s49, %s65
    %p67 = scmp.eq.s32.totalorder %s15, 0
    %p68 = por %p66, %p67
    %s69 = ssub.s32 %s9, %s16
    %p70 = scmp.eq.s32.totalorder %s69, 0
    %s72 = sadd.s32 %s71, 1
    %s73 = scalar_select %p70, %s71, %s72
    %p76 = pneg %p70
    %p77 = scmp.eq.s32.totalorder %s9, 1
    %p78 = por %p76, %p77
    %p79 = scmp.ne.s32.totalorder %s71, %s74
    %p80 = scmp.eq.s32.totalorder %s9, 0
    %p81 = por %p79, %p80
    %p82 = scmp.ne.s32.totalorder %s71, %s74
    %p83 = scmp.eq.s32.totalorder %s14, 1
    %p84 = por %p82, %p83
    %p85 = scmp.ne.s32.totalorder %s74, %s75
    %p86 = scmp.eq.s32.totalorder %s14, 0
    %p87 = por %p85, %p86
    %p88 = scmp.ne.s32.totalorder %s74, %s75
    %p89 = scmp.eq.s32.totalorder %s15, 1
    %p90 = por %p88, %p89
    %p92 = scmp.ne.s32.totalorder %s75, %s91
    %p93 = scmp.eq.s32.totalorder %s15, 0
    %p94 = por %p92, %p93
    %s95 = ssub.s32 %s9, %s16
    %p96 = scmp.eq.s32.totalorder %s95, 0
    %s98 = sadd.s32 %s97, 1
    %s99 = scalar_select %p96, %s97, %s98
    %p102 = pneg %p96
    %p103 = scmp.eq.s32.totalorder %s9, 1
    %p104 = por %p102, %p103
    %p105 = scmp.ne.s32.totalorder %s97, %s100
    %p106 = scmp.eq.s32.totalorder %s9, 0
    %p107 = por %p105, %p106
    %p108 = scmp.ne.s32.totalorder %s97, %s100
    %p109 = scmp.eq.s32.totalorder %s14, 1
    %p110 = por %p108, %p109
    %p111 = scmp.ne.s32.totalorder %s100, %s101
    %p112 = scmp.eq.s32.totalorder %s14, 0
    %p113 = por %p111, %p112
    %p114 = scmp.ne.s32.totalorder %s100, %s101
    %p115 = scmp.eq.s32.totalorder %s15, 1
    %p116 = por %p114, %p115
    %p118 = scmp.ne.s32.totalorder %s101, %s117
    %p119 = scmp.eq.s32.totalorder %s15, 0
    %p120 = por %p118, %p119
    %p121 = scmp.le.s32.totalorder 1, %s9
    %p122 = scmp.lt.s32.totalorder %s9, 3
    %p123 = pnand %p121, %p122
    %p124 = pneg %p123
    // Predicated region
    $region9: #{fwd.50} parent=5 // pred_check
      _
    $region10: #{fwd.50} parent=5 // pred_check_branch
      %126 = sbr.rel (%p123) target = $region12
    $region11: #{fwd.50} parent=5 // pred_region
      %s127 = ssub.s32 %s9, 1
    $region12: #{fwd.50} parent=5 // pred_fallthru
      _
    %p128 = scmp.lt.s32.totalorder %s9, 2
    // Predicated region
    $region13: #{fwd.50} parent=5 // pred_check
      %p129 = pneg %p128
    $region14: #{fwd.50} parent=5 // pred_check_branch
      %131 = sbr.rel (%p129) target = $region16
    $region15: #{fwd.50} parent=5 // pred_region
      // Predicated region
      $region17: #{fwd.50} parent=15 // pred_check
        %p132 = pneg %p29
      $region18: #{fwd.50} parent=15 // pred_check_branch
        %134 = sbr.rel (%p132) target = $region20
      $region19: #{fwd.50} parent=15 // pred_region
        %s135 = smul.u32 32, %s9
        %p136 = scmp.lt.s32.totalorder %s135, 63
        %s137 = scalar_select %p136, %s135, 63
        %s138 = smul.addr %s137, 8
        %s139 = scalar_lea.vmem %s0, %s138
        %s140 = smul.u32 32, %s9
      $region20: #{fwd.50} parent=15 // pred_fallthru
        _
      // Predicated region
      $region21: #{fwd.50} parent=15 // pred_check
        %p141 = pneg %p55
      $region22: #{fwd.50} parent=15 // pred_check_branch
        %143 = sbr.rel (%p141) target = $region24
      $region23: #{fwd.50} parent=15 // pred_region
        %s144 = smul.u32 32, %s9
        %p145 = scmp.lt.s32.totalorder %s144, 63
        %s146 = scalar_select %p145, %s144, 63
        %s147 = smul.addr %s146, 8
        %s148 = scalar_lea.vmem %s1, %s147
        %s149 = smul.u32 32, %s9
      $region24: #{fwd.50} parent=15 // pred_fallthru
        _
      // Predicated region
      $region25: #{fwd.50} parent=15 // pred_check
        %p150 = pneg %p81
      $region26: #{fwd.50} parent=15 // pred_check_branch
        %152 = sbr.rel (%p150) target = $region28
      $region27: #{fwd.50} parent=15 // pred_region
        %s153 = smul.u32 32, %s9
        %p154 = scmp.lt.s32.totalorder %s153, 63
        %s155 = scalar_select %p154, %s153, 63
        %s156 = smul.addr %s155, 8
        %s157 = scalar_lea.vmem %s2, %s156
        %s158 = smul.u32 32, %s9
      $region28: #{fwd.50} parent=15 // pred_fallthru
        _
    $region16: #{fwd.50} parent=5 // pred_fallthru
      _
    %p159 = scmp.le.s32.totalorder 1, %s9
    %p160 = scmp.lt.s32.totalorder %s9, 3
    %p161 = pnand %p159, %p160
    %p162 = pneg %p161
    // Predicated region
    $region29: #{fwd.50} parent=5 // pred_check
      _
    $region30: #{fwd.50} parent=5 // pred_check_branch
      %164 = sbr.rel (%p161) target = $region32
    $region31: #{fwd.50} parent=5 // pred_region
      %s165 = ssub.s32 %s9, 1
      %s166 = smul.u32 32, %s14
      %p167 = scmp.lt.s32.totalorder %s166, 63
      %s168 = scalar_select %p167, %s166, 63
      %s169 = smul.addr %s168, 8
      %s170 = scalar_lea.vmem %s0, %s169
      %p171 = pneg %p35
      %p172 = pneg %p32
      %s173 = smul.u32 32, %s14
      %p174 = scmp.lt.s32.totalorder %s173, 63
      %s175 = scalar_select %p174, %s173, 63
      %s176 = smul.addr %s175, 8
      %s177 = scalar_lea.vmem %s1, %s176
      %p178 = pneg %p61
      %p179 = pneg %p58
      %s180 = smul.u32 32, %s14
      %p181 = scmp.lt.s32.totalorder %s180, 63
      %s182 = scalar_select %p181, %s180, 63
      %s183 = smul.addr %s182, 8
      %s184 = scalar_lea.vmem %s2, %s183
      %p185 = pneg %p87
      %p186 = pneg %p84
      %p187 = pneg %p113
      %p188 = pneg %p110
      %s189 = smul.u32 32, %s14
      %p190 = scmp.lt.s32.totalorder %s189, 63
      %s191 = scalar_select %p190, %s189, 63
      %s192 = smul.addr %s191, 8
      %s193 = scalar_lea.vmem %s3, %s192
      %s194 = smul.u32 32, %s14
      %p195 = scmp.lt.s32.totalorder %s194, 63
      %s196 = scalar_select %p195, %s194, 63
      %s197 = smul.addr %s196, 8
      %s198 = scalar_lea.vmem %s0, %s197
      %s199 = smul.u32 32, %s14
      %s200 = smul.u32 32, %s14
      %p201 = scmp.lt.s32.totalorder %s200, 63
      %s202 = scalar_select %p201, %s200, 63
      %s203 = smul.addr %s202, 8
      %s204 = scalar_lea.vmem %s1, %s203
      %s205 = smul.u32 32, %s14
      %s206 = smul.u32 32, %s14
      %p207 = scmp.lt.s32.totalorder %s206, 63
      %s208 = scalar_select %p207, %s206, 63
      %s209 = smul.addr %s208, 8
      %s210 = scalar_lea.vmem %s2, %s209
      %s211 = smul.u32 32, %s14
      %s212 = smul.u32 32, %s14
      %p213 = scmp.lt.s32.totalorder %s212, 63
      %s214 = scalar_select %p213, %s212, 63
      %s215 = smul.addr %s214, 8
      %s216 = scalar_lea.vmem %s3, %s215
      %s217 = smul.u32 32, %s14
      %v219 = vld [vmem:[%s198] sm:$0xff]
      %v220 = vld [vmem:[%s198 + $0x8] sm:$0xff]
      %v221 = vld [vmem:[%s198 + $0x10] sm:$0xff]
      %v222 = vld [vmem:[%s198 + $0x18] sm:$0xff]
      %v223 = vld [vmem:[%s198 + $0x20] sm:$0xff]
      %v224 = vld [vmem:[%s198 + $0x28] sm:$0xff]
      %v225 = vld [vmem:[%s198 + $0x30] sm:$0xff]
      %v226 = vld [vmem:[%s198 + $0x38] sm:$0xff]
      %v227 = vld [vmem:[%s198 + $0x40] sm:$0xff]
      %v228 = vld [vmem:[%s198 + $0x48] sm:$0xff]
      %v229 = vld [vmem:[%s198 + $0x50] sm:$0xff]
      %v230 = vld [vmem:[%s198 + $0x58] sm:$0xff]
      %v231 = vld [vmem:[%s198 + $0x60] sm:$0xff]
      %v232 = vld [vmem:[%s198 + $0x68] sm:$0xff]
      %v233 = vld [vmem:[%s198 + $0x70] sm:$0xff]
      %v234 = vld [vmem:[%s198 + $0x78] sm:$0xff]
      %v235 = vld [vmem:[%s198 + $0x80] sm:$0xff]
      %v236 = vld [vmem:[%s198 + $0x88] sm:$0xff]
      %v237 = vld [vmem:[%s198 + $0x90] sm:$0xff]
      %v238 = vld [vmem:[%s198 + $0x98] sm:$0xff]
      %v239 = vld [vmem:[%s198 + $0xa0] sm:$0xff]
      %v240 = vld [vmem:[%s198 + $0xa8] sm:$0xff]
      %v241 = vld [vmem:[%s198 + $0xb0] sm:$0xff]
      %v242 = vld [vmem:[%s198 + $0xb8] sm:$0xff]
      %v243 = vld [vmem:[%s198 + $0xc0] sm:$0xff]
      %v244 = vld [vmem:[%s198 + $0xc8] sm:$0xff]
      %v245 = vld [vmem:[%s198 + $0xd0] sm:$0xff]
      %v246 = vld [vmem:[%s198 + $0xd8] sm:$0xff]
      %v247 = vld [vmem:[%s198 + $0xe0] sm:$0xff]
      %v248 = vld [vmem:[%s198 + $0xe8] sm:$0xff]
      %v249 = vld [vmem:[%s198 + $0xf0] sm:$0xff]
      %v250 = vld [vmem:[%s198 + $0xf8] sm:$0xff]
      %v251 = vpack.c.bf16 %v219, %v219
      %v252 = vpack.c.bf16 %v220, %v220
      %v253 = vpack.c.bf16 %v221, %v221
      %v254 = vpack.c.bf16 %v222, %v222
      %v255 = vpack.c.bf16 %v223, %v223
      %v256 = vpack.c.bf16 %v224, %v224
      %v257 = vpack.c.bf16 %v225, %v225
      %v258 = vpack.c.bf16 %v226, %v226
      %v259 = vpack.c.bf16 %v227, %v227
      %v260 = vpack.c.bf16 %v228, %v228
      %v261 = vpack.c.bf16 %v229, %v229
      %v262 = vpack.c.bf16 %v230, %v230
      %v263 = vpack.c.bf16 %v231, %v231
      %v264 = vpack.c.bf16 %v232, %v232
      %v265 = vpack.c.bf16 %v233, %v233
      %v266 = vpack.c.bf16 %v234, %v234
      %v267 = vpack.c.bf16 %v235, %v235
      %v268 = vpack.c.bf16 %v236, %v236
      %v269 = vpack.c.bf16 %v237, %v237
      %v270 = vpack.c.bf16 %v238, %v238
      %v271 = vpack.c.bf16 %v239, %v239
      %v272 = vpack.c.bf16 %v240, %v240
      %v273 = vpack.c.bf16 %v241, %v241
      %v274 = vpack.c.bf16 %v242, %v242
      %v275 = vpack.c.bf16 %v243, %v243
      %v276 = vpack.c.bf16 %v244, %v244
      %v277 = vpack.c.bf16 %v245, %v245
      %v278 = vpack.c.bf16 %v246, %v246
      %v279 = vpack.c.bf16 %v247, %v247
      %v280 = vpack.c.bf16 %v248, %v248
      %v281 = vpack.c.bf16 %v249, %v249
      %v282 = vpack.c.bf16 %v250, %v250
      %v283 = vld [vmem:[%s204] sm:$0xff]
      %v284 = vld [vmem:[%s204 + $0x8] sm:$0xff]
      %v285 = vld [vmem:[%s204 + $0x10] sm:$0xff]
      %v286 = vld [vmem:[%s204 + $0x18] sm:$0xff]
      %v287 = vld [vmem:[%s204 + $0x20] sm:$0xff]
      %v288 = vld [vmem:[%s204 + $0x28] sm:$0xff]
      %v289 = vld [vmem:[%s204 + $0x30] sm:$0xff]
      %v290 = vld [vmem:[%s204 + $0x38] sm:$0xff]
      %v291 = vld [vmem:[%s204 + $0x40] sm:$0xff]
      %v292 = vld [vmem:[%s204 + $0x48] sm:$0xff]
      %v293 = vld [vmem:[%s204 + $0x50] sm:$0xff]
      %v294 = vld [vmem:[%s204 + $0x58] sm:$0xff]
      %v295 = vld [vmem:[%s204 + $0x60] sm:$0xff]
      %v296 = vld [vmem:[%s204 + $0x68] sm:$0xff]
      %v297 = vld [vmem:[%s204 + $0x70] sm:$0xff]
      %v298 = vld [vmem:[%s204 + $0x78] sm:$0xff]
      %v299 = vld [vmem:[%s204 + $0x80] sm:$0xff]
      %v300 = vld [vmem:[%s204 + $0x88] sm:$0xff]
      %v301 = vld [vmem:[%s204 + $0x90] sm:$0xff]
      %v302 = vld [vmem:[%s204 + $0x98] sm:$0xff]
      %v303 = vld [vmem:[%s204 + $0xa0] sm:$0xff]
      %v304 = vld [vmem:[%s204 + $0xa8] sm:$0xff]
      %v305 = vld [vmem:[%s204 + $0xb0] sm:$0xff]
      %v306 = vld [vmem:[%s204 + $0xb8] sm:$0xff]
      %v307 = vld [vmem:[%s204 + $0xc0] sm:$0xff]
      %v308 = vld [vmem:[%s204 + $0xc8] sm:$0xff]
      %v309 = vld [vmem:[%s204 + $0xd0] sm:$0xff]
      %v310 = vld [vmem:[%s204 + $0xd8] sm:$0xff]
      %v311 = vld [vmem:[%s204 + $0xe0] sm:$0xff]
      %v312 = vld [vmem:[%s204 + $0xe8] sm:$0xff]
      %v313 = vld [vmem:[%s204 + $0xf0] sm:$0xff]
      %v314 = vld [vmem:[%s204 + $0xf8] sm:$0xff]
      %v315 = vpack.c.bf16 %v283, %v283
      %v316 = vpack.c.bf16 %v284, %v284
      %v317 = vpack.c.bf16 %v285, %v285
      %v318 = vpack.c.bf16 %v286, %v286
      %v319 = vpack.c.bf16 %v287, %v287
      %v320 = vpack.c.bf16 %v288, %v288
      %v321 = vpack.c.bf16 %v289, %v289
      %v322 = vpack.c.bf16 %v290, %v290
      %v323 = vpack.c.bf16 %v291, %v291
      %v324 = vpack.c.bf16 %v292, %v292
      %v325 = vpack.c.bf16 %v293, %v293
      %v326 = vpack.c.bf16 %v294, %v294
      %v327 = vpack.c.bf16 %v295, %v295
      %v328 = vpack.c.bf16 %v296, %v296
      %v329 = vpack.c.bf16 %v297, %v297
      %v330 = vpack.c.bf16 %v298, %v298
      %v331 = vpack.c.bf16 %v299, %v299
      %v332 = vpack.c.bf16 %v300, %v300
      %v333 = vpack.c.bf16 %v301, %v301
      %v334 = vpack.c.bf16 %v302, %v302
      %v335 = vpack.c.bf16 %v303, %v303
      %v336 = vpack.c.bf16 %v304, %v304
      %v337 = vpack.c.bf16 %v305, %v305
      %v338 = vpack.c.bf16 %v306, %v306
      %v339 = vpack.c.bf16 %v307, %v307
      %v340 = vpack.c.bf16 %v308, %v308
      %v341 = vpack.c.bf16 %v309, %v309
      %v342 = vpack.c.bf16 %v310, %v310
      %v343 = vpack.c.bf16 %v311, %v311
      %v344 = vpack.c.bf16 %v312, %v312
      %v345 = vpack.c.bf16 %v313, %v313
      %v346 = vpack.c.bf16 %v314, %v314
      %v347 = vld [vmem:[%s210] sm:$0xff]
      %v348 = vld [vmem:[%s210 + $0x8] sm:$0xff]
      %v349 = vld [vmem:[%s210 + $0x10] sm:$0xff]
      %v350 = vld [vmem:[%s210 + $0x18] sm:$0xff]
      %v351 = vld [vmem:[%s210 + $0x20] sm:$0xff]
      %v352 = vld [vmem:[%s210 + $0x28] sm:$0xff]
      %v353 = vld [vmem:[%s210 + $0x30] sm:$0xff]
      %v354 = vld [vmem:[%s210 + $0x38] sm:$0xff]
      %v355 = vld [vmem:[%s210 + $0x40] sm:$0xff]
      %v356 = vld [vmem:[%s210 + $0x48] sm:$0xff]
      %v357 = vld [vmem:[%s210 + $0x50] sm:$0xff]
      %v358 = vld [vmem:[%s210 + $0x58] sm:$0xff]
      %v359 = vld [vmem:[%s210 + $0x60] sm:$0xff]
      %v360 = vld [vmem:[%s210 + $0x68] sm:$0xff]
      %v361 = vld [vmem:[%s210 + $0x70] sm:$0xff]
      %v362 = vld [vmem:[%s210 + $0x78] sm:$0xff]
      %v363 = vld [vmem:[%s210 + $0x80] sm:$0xff]
      %v364 = vld [vmem:[%s210 + $0x88] sm:$0xff]
      %v365 = vld [vmem:[%s210 + $0x90] sm:$0xff]
      %v366 = vld [vmem:[%s210 + $0x98] sm:$0xff]
      %v367 = vld [vmem:[%s210 + $0xa0] sm:$0xff]
      %v368 = vld [vmem:[%s210 + $0xa8] sm:$0xff]
      %v369 = vld [vmem:[%s210 + $0xb0] sm:$0xff]
      %v370 = vld [vmem:[%s210 + $0xb8] sm:$0xff]
      %v371 = vld [vmem:[%s210 + $0xc0] sm:$0xff]
      %v372 = vld [vmem:[%s210 + $0xc8] sm:$0xff]
      %v373 = vld [vmem:[%s210 + $0xd0] sm:$0xff]
      %v374 = vld [vmem:[%s210 + $0xd8] sm:$0xff]
      %v375 = vld [vmem:[%s210 + $0xe0] sm:$0xff]
      %v376 = vld [vmem:[%s210 + $0xe8] sm:$0xff]
      %v377 = vld [vmem:[%s210 + $0xf0] sm:$0xff]
      %v378 = vld [vmem:[%s210 + $0xf8] sm:$0xff]
      %v379 = vpack.c.bf16 %v347, %v347
      %v380 = vpack.c.bf16 %v348, %v348
      %v381 = vpack.c.bf16 %v349, %v349
      %v382 = vpack.c.bf16 %v350, %v350
      %v383 = vpack.c.bf16 %v351, %v351
      %v384 = vpack.c.bf16 %v352, %v352
      %v385 = vpack.c.bf16 %v353, %v353
      %v386 = vpack.c.bf16 %v354, %v354
      %v387 = vpack.c.bf16 %v355, %v355
      %v388 = vpack.c.bf16 %v356, %v356
      %v389 = vpack.c.bf16 %v357, %v357
      %v390 = vpack.c.bf16 %v358, %v358
      %v391 = vpack.c.bf16 %v359, %v359
      %v392 = vpack.c.bf16 %v360, %v360
      %v393 = vpack.c.bf16 %v361, %v361
      %v394 = vpack.c.bf16 %v362, %v362
      %v395 = vpack.c.bf16 %v363, %v363
      %v396 = vpack.c.bf16 %v364, %v364
      %v397 = vpack.c.bf16 %v365, %v365
      %v398 = vpack.c.bf16 %v366, %v366
      %v399 = vpack.c.bf16 %v367, %v367
      %v400 = vpack.c.bf16 %v368, %v368
      %v401 = vpack.c.bf16 %v369, %v369
      %v402 = vpack.c.bf16 %v370, %v370
      %v403 = vpack.c.bf16 %v371, %v371
      %v404 = vpack.c.bf16 %v372, %v372
      %v405 = vpack.c.bf16 %v373, %v373
      %v406 = vpack.c.bf16 %v374, %v374
      %v407 = vpack.c.bf16 %v375, %v375
      %v408 = vpack.c.bf16 %v376, %v376
      %v409 = vpack.c.bf16 %v377, %v377
      %v410 = vpack.c.bf16 %v378, %v378
      %vm411 = vcmask 64512
      %v413 = vsel %vm411, %v251, 0
      %v416 = vsel %vm411, %v315, 0
      %418 = vmatpush.bf16.xpose.msra.mxu0 0
      %419 = vmatpush.bf16.xpose.msra.mxu0 0
      %420 = vmatpush.bf16.xpose.msra.mxu0 0
      %421 = vmatpush.bf16.xpose.msra.mxu0 0
      %422 = vmatpush.bf16.xpose.msra.mxu0 0
      %423 = vmatpush.bf16.xpose.msra.mxu0 0
      %424 = vmatpush.bf16.xpose.msra.mxu0 0
      %425 = vmatpush.bf16.xpose.msra.mxu0 %v416
      %426 = vmatmul.bf16.gmra.mxu0 %v413
      %v427 = vpop.f32.mrf.mxu0
      %v428 = vadd.f32 0.0, %v427
      %v429 = vpop.f32.mrf.mxu0
      %430 = vdwg.mxu0
      %v432 = vsel %vm411, %v252, 0
      %v435 = vsel %vm411, %v316, 0
      %437 = vmatpush.bf16.xpose.msra.mxu0 0
      %438 = vmatpush.bf16.xpose.msra.mxu0 0
      %439 = vmatpush.bf16.xpose.msra.mxu0 0
      %440 = vmatpush.bf16.xpose.msra.mxu0 0
      %441 = vmatpush.bf16.xpose.msra.mxu0 0
      %442 = vmatpush.bf16.xpose.msra.mxu0 0
      %443 = vmatpush.bf16.xpose.msra.mxu0 0
      %444 = vmatpush.bf16.xpose.msra.mxu0 %v435
      %445 = vmatmul.bf16.gmra.mxu0 %v432
      %v446 = vpop.f32.mrf.mxu0
      %v447 = vadd.f32 0.0, %v446
      %v448 = vpop.f32.mrf.mxu0
      %449 = vdwg.mxu0
      %v451 = vsel %vm411, %v253, 0
      %v454 = vsel %vm411, %v317, 0
      %456 = vmatpush.bf16.xpose.msra.mxu0 0
      %457 = vmatpush.bf16.xpose.msra.mxu0 0
      %458 = vmatpush.bf16.xpose.msra.mxu0 0
      %459 = vmatpush.bf16.xpose.msra.mxu0 0
      %460 = vmatpush.bf16.xpose.msra.mxu0 0
      %461 = vmatpush.bf16.xpose.msra.mxu0 0
      %462 = vmatpush.bf16.xpose.msra.mxu0 0
      %463 = vmatpush.bf16.xpose.msra.mxu0 %v454
      %464 = vmatmul.bf16.gmra.mxu0 %v451
      %v465 = vpop.f32.mrf.mxu0
      %v466 = vadd.f32 0.0, %v465
      %v467 = vpop.f32.mrf.mxu0
      %468 = vdwg.mxu0
      %v470 = vsel %vm411, %v254, 0
      %v473 = vsel %vm411, %v318, 0
      %475 = vmatpush.bf16.xpose.msra.mxu0 0
      %476 = vmatpush.bf16.xpose.msra.mxu0 0
      %477 = vmatpush.bf16.xpose.msra.mxu0 0
      %478 = vmatpush.bf16.xpose.msra.mxu0 0
      %479 = vmatpush.bf16.xpose.msra.mxu0 0
      %480 = vmatpush.bf16.xpose.msra.mxu0 0
      %481 = vmatpush.bf16.xpose.msra.mxu0 0
      %482 = vmatpush.bf16.xpose.msra.mxu0 %v473
      %483 = vmatmul.bf16.gmra.mxu0 %v470
      %v484 = vpop.f32.mrf.mxu0
      %v485 = vadd.f32 0.0, %v484
      %v486 = vpop.f32.mrf.mxu0
      %487 = vdwg.mxu0
      %v489 = vsel %vm411, %v255, 0
      %v492 = vsel %vm411, %v319, 0
      %494 = vmatpush.bf16.xpose.msra.mxu0 0
      %495 = vmatpush.bf16.xpose.msra.mxu0 0
      %496 = vmatpush.bf16.xpose.msra.mxu0 0
      %497 = vmatpush.bf16.xpose.msra.mxu0 0
      %498 = vmatpush.bf16.xpose.msra.mxu0 0
      %499 = vmatpush.bf16.xpose.msra.mxu0 0
      %500 = vmatpush.bf16.xpose.msra.mxu0 0
      %501 = vmatpush.bf16.xpose.msra.mxu0 %v492
      %502 = vmatmul.bf16.gmra.mxu0 %v489
      %v503 = vpop.f32.mrf.mxu0
      %v504 = vadd.f32 0.0, %v503
      %v505 = vpop.f32.mrf.mxu0
      %506 = vdwg.mxu0
      %v508 = vsel %vm411, %v256, 0
      %v511 = vsel %vm411, %v320, 0
      %513 = vmatpush.bf16.xpose.msra.mxu0 0
      %514 = vmatpush.bf16.xpose.msra.mxu0 0
      %515 = vmatpush.bf16.xpose.msra.mxu0 0
      %516 = vmatpush.bf16.xpose.msra.mxu0 0
      %517 = vmatpush.bf16.xpose.msra.mxu0 0
      %518 = vmatpush.bf16.xpose.msra.mxu0 0
      %519 = vmatpush.bf16.xpose.msra.mxu0 0
      %520 = vmatpush.bf16.xpose.msra.mxu0 %v511
      %521 = vmatmul.bf16.gmra.mxu0 %v508
      %v522 = vpop.f32.mrf.mxu0
      %v523 = vadd.f32 0.0, %v522
      %v524 = vpop.f32.mrf.mxu0
      %525 = vdwg.mxu0
      %v527 = vsel %vm411, %v257, 0
      %v530 = vsel %vm411, %v321, 0
      %532 = vmatpush.bf16.xpose.msra.mxu0 0
      %533 = vmatpush.bf16.xpose.msra.mxu0 0
      %534 = vmatpush.bf16.xpose.msra.mxu0 0
      %535 = vmatpush.bf16.xpose.msra.mxu0 0
      %536 = vmatpush.bf16.xpose.msra.mxu0 0
      %537 = vmatpush.bf16.xpose.msra.mxu0 0
      %538 = vmatpush.bf16.xpose.msra.mxu0 0
      %539 = vmatpush.bf16.xpose.msra.mxu0 %v530
      %540 = vmatmul.bf16.gmra.mxu0 %v527
      %v541 = vpop.f32.mrf.mxu0
      %v542 = vadd.f32 0.0, %v541
      %v543 = vpop.f32.mrf.mxu0
      %544 = vdwg.mxu0
      %v546 = vsel %vm411, %v258, 0
      %v549 = vsel %vm411, %v322, 0
      %551 = vmatpush.bf16.xpose.msra.mxu0 0
      %552 = vmatpush.bf16.xpose.msra.mxu0 0
      %553 = vmatpush.bf16.xpose.msra.mxu0 0
      %554 = vmatpush.bf16.xpose.msra.mxu0 0
      %555 = vmatpush.bf16.xpose.msra.mxu0 0
      %556 = vmatpush.bf16.xpose.msra.mxu0 0
      %557 = vmatpush.bf16.xpose.msra.mxu0 0
      %558 = vmatpush.bf16.xpose.msra.mxu0 %v549
      %559 = vmatmul.bf16.gmra.mxu0 %v546
      %v560 = vpop.f32.mrf.mxu0
      %v561 = vadd.f32 0.0, %v560
      %v562 = vpop.f32.mrf.mxu0
      %563 = vdwg.mxu0
      %v565 = vsel %vm411, %v259, 0
      %v568 = vsel %vm411, %v323, 0
      %570 = vmatpush.bf16.xpose.msra.mxu0 0
      %571 = vmatpush.bf16.xpose.msra.mxu0 0
      %572 = vmatpush.bf16.xpose.msra.mxu0 0
      %573 = vmatpush.bf16.xpose.msra.mxu0 0
      %574 = vmatpush.bf16.xpose.msra.mxu0 0
      %575 = vmatpush.bf16.xpose.msra.mxu0 0
      %576 = vmatpush.bf16.xpose.msra.mxu0 0
      %577 = vmatpush.bf16.xpose.msra.mxu0 %v568
      %578 = vmatmul.bf16.gmra.mxu0 %v565
      %v579 = vpop.f32.mrf.mxu0
      %v580 = vadd.f32 0.0, %v579
      %v581 = vpop.f32.mrf.mxu0
      %582 = vdwg.mxu0
      %v584 = vsel %vm411, %v260, 0
      %v587 = vsel %vm411, %v324, 0
      %589 = vmatpush.bf16.xpose.msra.mxu0 0
      %590 = vmatpush.bf16.xpose.msra.mxu0 0
      %591 = vmatpush.bf16.xpose.msra.mxu0 0
      %592 = vmatpush.bf16.xpose.msra.mxu0 0
      %593 = vmatpush.bf16.xpose.msra.mxu0 0
      %594 = vmatpush.bf16.xpose.msra.mxu0 0
      %595 = vmatpush.bf16.xpose.msra.mxu0 0
      %596 = vmatpush.bf16.xpose.msra.mxu0 %v587
      %597 = vmatmul.bf16.gmra.mxu0 %v584
      %v598 = vpop.f32.mrf.mxu0
      %v599 = vadd.f32 0.0, %v598
      %v600 = vpop.f32.mrf.mxu0
      %601 = vdwg.mxu0
      %v603 = vsel %vm411, %v261, 0
      %v606 = vsel %vm411, %v325, 0
      %608 = vmatpush.bf16.xpose.msra.mxu0 0
      %609 = vmatpush.bf16.xpose.msra.mxu0 0
      %610 = vmatpush.bf16.xpose.msra.mxu0 0
      %611 = vmatpush.bf16.xpose.msra.mxu0 0
      %612 = vmatpush.bf16.xpose.msra.mxu0 0
      %613 = vmatpush.bf16.xpose.msra.mxu0 0
      %614 = vmatpush.bf16.xpose.msra.mxu0 0
      %615 = vmatpush.bf16.xpose.msra.mxu0 %v606
      %616 = vmatmul.bf16.gmra.mxu0 %v603
      %v617 = vpop.f32.mrf.mxu0
      %v618 = vadd.f32 0.0, %v617
      %v619 = vpop.f32.mrf.mxu0
      %620 = vdwg.mxu0
      %v622 = vsel %vm411, %v262, 0
      %v625 = vsel %vm411, %v326, 0
      %627 = vmatpush.bf16.xpose.msra.mxu0 0
      %628 = vmatpush.bf16.xpose.msra.mxu0 0
      %629 = vmatpush.bf16.xpose.msra.mxu0 0
      %630 = vmatpush.bf16.xpose.msra.mxu0 0
      %631 = vmatpush.bf16.xpose.msra.mxu0 0
      %632 = vmatpush.bf16.xpose.msra.mxu0 0
      %633 = vmatpush.bf16.xpose.msra.mxu0 0
      %634 = vmatpush.bf16.xpose.msra.mxu0 %v625
      %635 = vmatmul.bf16.gmra.mxu0 %v622
      %v636 = vpop.f32.mrf.mxu0
      %v637 = vadd.f32 0.0, %v636
      %v638 = vpop.f32.mrf.mxu0
      %639 = vdwg.mxu0
      %v641 = vsel %vm411, %v263, 0
      %v644 = vsel %vm411, %v327, 0
      %646 = vmatpush.bf16.xpose.msra.mxu0 0
      %647 = vmatpush.bf16.xpose.msra.mxu0 0
      %648 = vmatpush.bf16.xpose.msra.mxu0 0
      %649 = vmatpush.bf16.xpose.msra.mxu0 0
      %650 = vmatpush.bf16.xpose.msra.mxu0 0
      %651 = vmatpush.bf16.xpose.msra.mxu0 0
      %652 = vmatpush.bf16.xpose.msra.mxu0 0
      %653 = vmatpush.bf16.xpose.msra.mxu0 %v644
      %654 = vmatmul.bf16.gmra.mxu0 %v641
      %v655 = vpop.f32.mrf.mxu0
      %v656 = vadd.f32 0.0, %v655
      %v657 = vpop.f32.mrf.mxu0
      %658 = vdwg.mxu0
      %v660 = vsel %vm411, %v264, 0
      %v663 = vsel %vm411, %v328, 0
      %665 = vmatpush.bf16.xpose.msra.mxu0 0
      %666 = vmatpush.bf16.xpose.msra.mxu0 0
      %667 = vmatpush.bf16.xpose.msra.mxu0 0
      %668 = vmatpush.bf16.xpose.msra.mxu0 0
      %669 = vmatpush.bf16.xpose.msra.mxu0 0
      %670 = vmatpush.bf16.xpose.msra.mxu0 0
      %671 = vmatpush.bf16.xpose.msra.mxu0 0
      %672 = vmatpush.bf16.xpose.msra.mxu0 %v663
      %673 = vmatmul.bf16.gmra.mxu0 %v660
      %v674 = vpop.f32.mrf.mxu0
      %v675 = vadd.f32 0.0, %v674
      %v676 = vpop.f32.mrf.mxu0
      %677 = vdwg.mxu0
      %v679 = vsel %vm411, %v265, 0
      %v682 = vsel %vm411, %v329, 0
      %684 = vmatpush.bf16.xpose.msra.mxu0 0
      %685 = vmatpush.bf16.xpose.msra.mxu0 0
      %686 = vmatpush.bf16.xpose.msra.mxu0 0
      %687 = vmatpush.bf16.xpose.msra.mxu0 0
      %688 = vmatpush.bf16.xpose.msra.mxu0 0
      %689 = vmatpush.bf16.xpose.msra.mxu0 0
      %690 = vmatpush.bf16.xpose.msra.mxu0 0
      %691 = vmatpush.bf16.xpose.msra.mxu0 %v682
      %692 = vmatmul.bf16.gmra.mxu0 %v679
      %v693 = vpop.f32.mrf.mxu0
      %v694 = vadd.f32 0.0, %v693
      %v695 = vpop.f32.mrf.mxu0
      %696 = vdwg.mxu0
      %v698 = vsel %vm411, %v266, 0
      %v701 = vsel %vm411, %v330, 0
      %703 = vmatpush.bf16.xpose.msra.mxu0 0
      %704 = vmatpush.bf16.xpose.msra.mxu0 0
      %705 = vmatpush.bf16.xpose.msra.mxu0 0
      %706 = vmatpush.bf16.xpose.msra.mxu0 0
      %707 = vmatpush.bf16.xpose.msra.mxu0 0
      %708 = vmatpush.bf16.xpose.msra.mxu0 0
      %709 = vmatpush.bf16.xpose.msra.mxu0 0
      %710 = vmatpush.bf16.xpose.msra.mxu0 %v701
      %711 = vmatmul.bf16.gmra.mxu0 %v698
      %v712 = vpop.f32.mrf.mxu0
      %v713 = vadd.f32 0.0, %v712
      %v714 = vpop.f32.mrf.mxu0
      %715 = vdwg.mxu0
      %v717 = vsel %vm411, %v267, 0
      %v720 = vsel %vm411, %v331, 0
      %722 = vmatpush.bf16.xpose.msra.mxu0 0
      %723 = vmatpush.bf16.xpose.msra.mxu0 0
      %724 = vmatpush.bf16.xpose.msra.mxu0 0
      %725 = vmatpush.bf16.xpose.msra.mxu0 0
      %726 = vmatpush.bf16.xpose.msra.mxu0 0
      %727 = vmatpush.bf16.xpose.msra.mxu0 0
      %728 = vmatpush.bf16.xpose.msra.mxu0 0
      %729 = vmatpush.bf16.xpose.msra.mxu0 %v720
      %730 = vmatmul.bf16.gmra.mxu0 %v717
      %v731 = vpop.f32.mrf.mxu0
      %v732 = vadd.f32 0.0, %v731
      %v733 = vpop.f32.mrf.mxu0
      %734 = vdwg.mxu0
      %v736 = vsel %vm411, %v268, 0
      %v739 = vsel %vm411, %v332, 0
      %741 = vmatpush.bf16.xpose.msra.mxu0 0
      %742 = vmatpush.bf16.xpose.msra.mxu0 0
      %743 = vmatpush.bf16.xpose.msra.mxu0 0
      %744 = vmatpush.bf16.xpose.msra.mxu0 0
      %745 = vmatpush.bf16.xpose.msra.mxu0 0
      %746 = vmatpush.bf16.xpose.msra.mxu0 0
      %747 = vmatpush.bf16.xpose.msra.mxu0 0
      %748 = vmatpush.bf16.xpose.msra.mxu0 %v739
      %749 = vmatmul.bf16.gmra.mxu0 %v736
      %v750 = vpop.f32.mrf.mxu0
      %v751 = vadd.f32 0.0, %v750
      %v752 = vpop.f32.mrf.mxu0
      %753 = vdwg.mxu0
      %v755 = vsel %vm411, %v269, 0
      %v758 = vsel %vm411, %v333, 0
      %760 = vmatpush.bf16.xpose.msra.mxu0 0
      %761 = vmatpush.bf16.xpose.msra.mxu0 0
      %762 = vmatpush.bf16.xpose.msra.mxu0 0
      %763 = vmatpush.bf16.xpose.msra.mxu0 0
      %764 = vmatpush.bf16.xpose.msra.mxu0 0
      %765 = vmatpush.bf16.xpose.msra.mxu0 0
      %766 = vmatpush.bf16.xpose.msra.mxu0 0
      %767 = vmatpush.bf16.xpose.msra.mxu0 %v758
      %768 = vmatmul.bf16.gmra.mxu0 %v755
      %v769 = vpop.f32.mrf.mxu0
      %v770 = vadd.f32 0.0, %v769
      %v771 = vpop.f32.mrf.mxu0
      %772 = vdwg.mxu0
      %v774 = vsel %vm411, %v270, 0
      %v777 = vsel %vm411, %v334, 0
      %779 = vmatpush.bf16.xpose.msra.mxu0 0
      %780 = vmatpush.bf16.xpose.msra.mxu0 0
      %781 = vmatpush.bf16.xpose.msra.mxu0 0
      %782 = vmatpush.bf16.xpose.msra.mxu0 0
      %783 = vmatpush.bf16.xpose.msra.mxu0 0
      %784 = vmatpush.bf16.xpose.msra.mxu0 0
      %785 = vmatpush.bf16.xpose.msra.mxu0 0
      %786 = vmatpush.bf16.xpose.msra.mxu0 %v777
      %787 = vmatmul.bf16.gmra.mxu0 %v774
      %v788 = vpop.f32.mrf.mxu0
      %v789 = vadd.f32 0.0, %v788
      %v790 = vpop.f32.mrf.mxu0
      %791 = vdwg.mxu0
      %v793 = vsel %vm411, %v271, 0
      %v796 = vsel %vm411, %v335, 0
      %798 = vmatpush.bf16.xpose.msra.mxu0 0
      %799 = vmatpush.bf16.xpose.msra.mxu0 0
      %800 = vmatpush.bf16.xpose.msra.mxu0 0
      %801 = vmatpush.bf16.xpose.msra.mxu0 0
      %802 = vmatpush.bf16.xpose.msra.mxu0 0
      %803 = vmatpush.bf16.xpose.msra.mxu0 0
      %804 = vmatpush.bf16.xpose.msra.mxu0 0
      %805 = vmatpush.bf16.xpose.msra.mxu0 %v796
      %806 = vmatmul.bf16.gmra.mxu0 %v793
      %v807 = vpop.f32.mrf.mxu0
      %v808 = vadd.f32 0.0, %v807
      %v809 = vpop.f32.mrf.mxu0
      %810 = vdwg.mxu0
      %v812 = vsel %vm411, %v272, 0
      %v815 = vsel %vm411, %v336, 0
      %817 = vmatpush.bf16.xpose.msra.mxu0 0
      %818 = vmatpush.bf16.xpose.msra.mxu0 0
      %819 = vmatpush.bf16.xpose.msra.mxu0 0
      %820 = vmatpush.bf16.xpose.msra.mxu0 0
      %821 = vmatpush.bf16.xpose.msra.mxu0 0
      %822 = vmatpush.bf16.xpose.msra.mxu0 0
      %823 = vmatpush.bf16.xpose.msra.mxu0 0
      %824 = vmatpush.bf16.xpose.msra.mxu0 %v815
      %825 = vmatmul.bf16.gmra.mxu0 %v812
      %v826 = vpop.f32.mrf.mxu0
      %v827 = vadd.f32 0.0, %v826
      %v828 = vpop.f32.mrf.mxu0
      %829 = vdwg.mxu0
      %v831 = vsel %vm411, %v273, 0
      %v834 = vsel %vm411, %v337, 0
      %836 = vmatpush.bf16.xpose.msra.mxu0 0
      %837 = vmatpush.bf16.xpose.msra.mxu0 0
      %838 = vmatpush.bf16.xpose.msra.mxu0 0
      %839 = vmatpush.bf16.xpose.msra.mxu0 0
      %840 = vmatpush.bf16.xpose.msra.mxu0 0
      %841 = vmatpush.bf16.xpose.msra.mxu0 0
      %842 = vmatpush.bf16.xpose.msra.mxu0 0
      %843 = vmatpush.bf16.xpose.msra.mxu0 %v834
      %844 = vmatmul.bf16.gmra.mxu0 %v831
      %v845 = vpop.f32.mrf.mxu0
      %v846 = vadd.f32 0.0, %v845
      %v847 = vpop.f32.mrf.mxu0
      %848 = vdwg.mxu0
      %v850 = vsel %vm411, %v274, 0
      %v853 = vsel %vm411, %v338, 0
      %855 = vmatpush.bf16.xpose.msra.mxu0 0
      %856 = vmatpush.bf16.xpose.msra.mxu0 0
      %857 = vmatpush.bf16.xpose.msra.mxu0 0
      %858 = vmatpush.bf16.xpose.msra.mxu0 0
      %859 = vmatpush.bf16.xpose.msra.mxu0 0
      %860 = vmatpush.bf16.xpose.msra.mxu0 0
      %861 = vmatpush.bf16.xpose.msra.mxu0 0
      %862 = vmatpush.bf16.xpose.msra.mxu0 %v853
      %863 = vmatmul.bf16.gmra.mxu0 %v850
      %v864 = vpop.f32.mrf.mxu0
      %v865 = vadd.f32 0.0, %v864
      %v866 = vpop.f32.mrf.mxu0
      %867 = vdwg.mxu0
      %v869 = vsel %vm411, %v275, 0
      %v872 = vsel %vm411, %v339, 0
      %874 = vmatpush.bf16.xpose.msra.mxu0 0
      %875 = vmatpush.bf16.xpose.msra.mxu0 0
      %876 = vmatpush.bf16.xpose.msra.mxu0 0
      %877 = vmatpush.bf16.xpose.msra.mxu0 0
      %878 = vmatpush.bf16.xpose.msra.mxu0 0
      %879 = vmatpush.bf16.xpose.msra.mxu0 0
      %880 = vmatpush.bf16.xpose.msra.mxu0 0
      %881 = vmatpush.bf16.xpose.msra.mxu0 %v872
      %882 = vmatmul.bf16.gmra.mxu0 %v869
      %v883 = vpop.f32.mrf.mxu0
      %v884 = vadd.f32 0.0, %v883
      %v885 = vpop.f32.mrf.mxu0
      %886 = vdwg.mxu0
      %v888 = vsel %vm411, %v276, 0
      %v891 = vsel %vm411, %v340, 0
      %893 = vmatpush.bf16.xpose.msra.mxu0 0
      %894 = vmatpush.bf16.xpose.msra.mxu0 0
      %895 = vmatpush.bf16.xpose.msra.mxu0 0
      %896 = vmatpush.bf16.xpose.msra.mxu0 0
      %897 = vmatpush.bf16.xpose.msra.mxu0 0
      %898 = vmatpush.bf16.xpose.msra.mxu0 0
      %899 = vmatpush.bf16.xpose.msra.mxu0 0
      %900 = vmatpush.bf16.xpose.msra.mxu0 %v891
      %901 = vmatmul.bf16.gmra.mxu0 %v888
      %v902 = vpop.f32.mrf.mxu0
      %v903 = vadd.f32 0.0, %v902
      %v904 = vpop.f32.mrf.mxu0
      %905 = vdwg.mxu0
      %v907 = vsel %vm411, %v277, 0
      %v910 = vsel %vm411, %v341, 0
      %912 = vmatpush.bf16.xpose.msra.mxu0 0
      %913 = vmatpush.bf16.xpose.msra.mxu0 0
      %914 = vmatpush.bf16.xpose.msra.mxu0 0
      %915 = vmatpush.bf16.xpose.msra.mxu0 0
      %916 = vmatpush.bf16.xpose.msra.mxu0 0
      %917 = vmatpush.bf16.xpose.msra.mxu0 0
      %918 = vmatpush.bf16.xpose.msra.mxu0 0
      %919 = vmatpush.bf16.xpose.msra.mxu0 %v910
      %920 = vmatmul.bf16.gmra.mxu0 %v907
      %v921 = vpop.f32.mrf.mxu0
      %v922 = vadd.f32 0.0, %v921
      %v923 = vpop.f32.mrf.mxu0
      %924 = vdwg.mxu0
      %v926 = vsel %vm411, %v278, 0
      %v929 = vsel %vm411, %v342, 0
      %931 = vmatpush.bf16.xpose.msra.mxu0 0
      %932 = vmatpush.bf16.xpose.msra.mxu0 0
      %933 = vmatpush.bf16.xpose.msra.mxu0 0
      %934 = vmatpush.bf16.xpose.msra.mxu0 0
      %935 = vmatpush.bf16.xpose.msra.mxu0 0
      %936 = vmatpush.bf16.xpose.msra.mxu0 0
      %937 = vmatpush.bf16.xpose.msra.mxu0 0
      %938 = vmatpush.bf16.xpose.msra.mxu0 %v929
      %939 = vmatmul.bf16.gmra.mxu0 %v926
      %v940 = vpop.f32.mrf.mxu0
      %v941 = vadd.f32 0.0, %v940
      %v942 = vpop.f32.mrf.mxu0
      %943 = vdwg.mxu0
      %v945 = vsel %vm411, %v279, 0
      %v948 = vsel %vm411, %v343, 0
      %950 = vmatpush.bf16.xpose.msra.mxu0 0
      %951 = vmatpush.bf16.xpose.msra.mxu0 0
      %952 = vmatpush.bf16.xpose.msra.mxu0 0
      %953 = vmatpush.bf16.xpose.msra.mxu0 0
      %954 = vmatpush.bf16.xpose.msra.mxu0 0
      %955 = vmatpush.bf16.xpose.msra.mxu0 0
      %956 = vmatpush.bf16.xpose.msra.mxu0 0
      %957 = vmatpush.bf16.xpose.msra.mxu0 %v948
      %958 = vmatmul.bf16.gmra.mxu0 %v945
      %v959 = vpop.f32.mrf.mxu0
      %v960 = vadd.f32 0.0, %v959
      %v961 = vpop.f32.mrf.mxu0
      %962 = vdwg.mxu0
      %v964 = vsel %vm411, %v280, 0
      %v967 = vsel %vm411, %v344, 0
      %969 = vmatpush.bf16.xpose.msra.mxu0 0
      %970 = vmatpush.bf16.xpose.msra.mxu0 0
      %971 = vmatpush.bf16.xpose.msra.mxu0 0
      %972 = vmatpush.bf16.xpose.msra.mxu0 0
      %973 = vmatpush.bf16.xpose.msra.mxu0 0
      %974 = vmatpush.bf16.xpose.msra.mxu0 0
      %975 = vmatpush.bf16.xpose.msra.mxu0 0
      %976 = vmatpush.bf16.xpose.msra.mxu0 %v967
      %977 = vmatmul.bf16.gmra.mxu0 %v964
      %v978 = vpop.f32.mrf.mxu0
      %v979 = vadd.f32 0.0, %v978
      %v980 = vpop.f32.mrf.mxu0
      %981 = vdwg.mxu0
      %v983 = vsel %vm411, %v281, 0
      %v986 = vsel %vm411, %v345, 0
      %988 = vmatpush.bf16.xpose.msra.mxu0 0
      %989 = vmatpush.bf16.xpose.msra.mxu0 0
      %990 = vmatpush.bf16.xpose.msra.mxu0 0
      %991 = vmatpush.bf16.xpose.msra.mxu0 0
      %992 = vmatpush.bf16.xpose.msra.mxu0 0
      %993 = vmatpush.bf16.xpose.msra.mxu0 0
      %994 = vmatpush.bf16.xpose.msra.mxu0 0
      %995 = vmatpush.bf16.xpose.msra.mxu0 %v986
      %996 = vmatmul.bf16.gmra.mxu0 %v983
      %v997 = vpop.f32.mrf.mxu0
      %v998 = vadd.f32 0.0, %v997
      %v999 = vpop.f32.mrf.mxu0
      %1000 = vdwg.mxu0
      %v1002 = vsel %vm411, %v282, 0
      %v1005 = vsel %vm411, %v346, 0
      %1007 = vmatpush.bf16.xpose.msra.mxu0 0
      %1008 = vmatpush.bf16.xpose.msra.mxu0 0
      %1009 = vmatpush.bf16.xpose.msra.mxu0 0
      %1010 = vmatpush.bf16.xpose.msra.mxu0 0
      %1011 = vmatpush.bf16.xpose.msra.mxu0 0
      %1012 = vmatpush.bf16.xpose.msra.mxu0 0
      %1013 = vmatpush.bf16.xpose.msra.mxu0 0
      %1014 = vmatpush.bf16.xpose.msra.mxu0 %v1005
      %1015 = vmatmul.bf16.gmra.mxu0 %v1002
      %v1016 = vpop.f32.mrf.mxu0
      %v1017 = vadd.f32 0.0, %v1016
      %v1018 = vpop.f32.mrf.mxu0
      %1019 = vdwg.mxu0
      %v1020 = vmul.f32 %v428, 0.35355338
      %v1021 = vmul.f32 %v447, 0.35355338
      %v1022 = vmul.f32 %v466, 0.35355338
      %v1023 = vmul.f32 %v485, 0.35355338
      %v1024 = vmul.f32 %v504, 0.35355338
      %v1025 = vmul.f32 %v523, 0.35355338
      %v1026 = vmul.f32 %v542, 0.35355338
      %v1027 = vmul.f32 %v561, 0.35355338
      %v1028 = vmul.f32 %v580, 0.35355338
      %v1029 = vmul.f32 %v599, 0.35355338
      %v1030 = vmul.f32 %v618, 0.35355338
      %v1031 = vmul.f32 %v637, 0.35355338
      %v1032 = vmul.f32 %v656, 0.35355338
      %v1033 = vmul.f32 %v675, 0.35355338
      %v1034 = vmul.f32 %v694, 0.35355338
      %v1035 = vmul.f32 %v713, 0.35355338
      %v1036 = vmul.f32 %v732, 0.35355338
      %v1037 = vmul.f32 %v751, 0.35355338
      %v1038 = vmul.f32 %v770, 0.35355338
      %v1039 = vmul.f32 %v789, 0.35355338
      %v1040 = vmul.f32 %v808, 0.35355338
      %v1041 = vmul.f32 %v827, 0.35355338
      %v1042 = vmul.f32 %v846, 0.35355338
      %v1043 = vmul.f32 %v865, 0.35355338
      %v1044 = vmul.f32 %v884, 0.35355338
      %v1045 = vmul.f32 %v903, 0.35355338
      %v1046 = vmul.f32 %v922, 0.35355338
      %v1047 = vmul.f32 %v941, 0.35355338
      %v1048 = vmul.f32 %v960, 0.35355338
      %v1049 = vmul.f32 %v979, 0.35355338
      %v1050 = vmul.f32 %v998, 0.35355338
      %v1051 = vmul.f32 %v1017, 0.35355338
      %v1052 = vsel %vm411, %v1020, -inf
      %1053 = vmax.xlane.f32.xlu0 %v1052
      %v1054 = vpop.xlane.xlu0 %1053
      %v1055 = vsel %vm411, %v1021, -inf
      %1056 = vmax.xlane.f32.xlu0 %v1055
      %v1057 = vpop.xlane.xlu0 %1056
      %v1058 = vsel %vm411, %v1022, -inf
      %1059 = vmax.xlane.f32.xlu0 %v1058
      %v1060 = vpop.xlane.xlu0 %1059
      %v1061 = vsel %vm411, %v1023, -inf
      %1062 = vmax.xlane.f32.xlu0 %v1061
      %v1063 = vpop.xlane.xlu0 %1062
      %v1064 = vsel %vm411, %v1024, -inf
      %1065 = vmax.xlane.f32.xlu0 %v1064
      %v1066 = vpop.xlane.xlu0 %1065
      %v1067 = vsel %vm411, %v1025, -inf
      %1068 = vmax.xlane.f32.xlu0 %v1067
      %v1069 = vpop.xlane.xlu0 %1068
      %v1070 = vsel %vm411, %v1026, -inf
      %1071 = vmax.xlane.f32.xlu0 %v1070
      %v1072 = vpop.xlane.xlu0 %1071
      %v1073 = vsel %vm411, %v1027, -inf
      %1074 = vmax.xlane.f32.xlu0 %v1073
      %v1075 = vpop.xlane.xlu0 %1074
      %v1076 = vsel %vm411, %v1028, -inf
      %1077 = vmax.xlane.f32.xlu0 %v1076
      %v1078 = vpop.xlane.xlu0 %1077
      %v1079 = vsel %vm411, %v1029, -inf
      %1080 = vmax.xlane.f32.xlu0 %v1079
      %v1081 = vpop.xlane.xlu0 %1080
      %v1082 = vsel %vm411, %v1030, -inf
      %1083 = vmax.xlane.f32.xlu0 %v1082
      %v1084 = vpop.xlane.xlu0 %1083
      %v1085 = vsel %vm411, %v1031, -inf
      %1086 = vmax.xlane.f32.xlu0 %v1085
      %v1087 = vpop.xlane.xlu0 %1086
      %v1088 = vsel %vm411, %v1032, -inf
      %1089 = vmax.xlane.f32.xlu0 %v1088
      %v1090 = vpop.xlane.xlu0 %1089
      %v1091 = vsel %vm411, %v1033, -inf
      %1092 = vmax.xlane.f32.xlu0 %v1091
      %v1093 = vpop.xlane.xlu0 %1092
      %v1094 = vsel %vm411, %v1034, -inf
      %1095 = vmax.xlane.f32.xlu0 %v1094
      %v1096 = vpop.xlane.xlu0 %1095
      %v1097 = vsel %vm411, %v1035, -inf
      %1098 = vmax.xlane.f32.xlu0 %v1097
      %v1099 = vpop.xlane.xlu0 %1098
      %v1100 = vsel %vm411, %v1036, -inf
      %1101 = vmax.xlane.f32.xlu0 %v1100
      %v1102 = vpop.xlane.xlu0 %1101
      %v1103 = vsel %vm411, %v1037, -inf
      %1104 = vmax.xlane.f32.xlu0 %v1103
      %v1105 = vpop.xlane.xlu0 %1104
      %v1106 = vsel %vm411, %v1038, -inf
      %1107 = vmax.xlane.f32.xlu0 %v1106
      %v1108 = vpop.xlane.xlu0 %1107
      %v1109 = vsel %vm411, %v1039, -inf
      %1110 = vmax.xlane.f32.xlu0 %v1109
      %v1111 = vpop.xlane.xlu0 %1110
      %v1112 = vsel %vm411, %v1040, -inf
      %1113 = vmax.xlane.f32.xlu0 %v1112
      %v1114 = vpop.xlane.xlu0 %1113
      %v1115 = vsel %vm411, %v1041, -inf
      %1116 = vmax.xlane.f32.xlu0 %v1115
      %v1117 = vpop.xlane.xlu0 %1116
      %v1118 = vsel %vm411, %v1042, -inf
      %1119 = vmax.xlane.f32.xlu0 %v1118
      %v1120 = vpop.xlane.xlu0 %1119
      %v1121 = vsel %vm411, %v1043, -inf
      %1122 = vmax.xlane.f32.xlu0 %v1121
      %v1123 = vpop.xlane.xlu0 %1122
      %v1124 = vsel %vm411, %v1044, -inf
      %1125 = vmax.xlane.f32.xlu0 %v1124
      %v1126 = vpop.xlane.xlu0 %1125
      %v1127 = vsel %vm411, %v1045, -inf
      %1128 = vmax.xlane.f32.xlu0 %v1127
      %v1129 = vpop.xlane.xlu0 %1128
      %v1130 = vsel %vm411, %v1046, -inf
      %1131 = vmax.xlane.f32.xlu0 %v1130
      %v1132 = vpop.xlane.xlu0 %1131
      %v1133 = vsel %vm411, %v1047, -inf
      %1134 = vmax.xlane.f32.xlu0 %v1133
      %v1135 = vpop.xlane.xlu0 %1134
      %v1136 = vsel %vm411, %v1048, -inf
      %1137 = vmax.xlane.f32.xlu0 %v1136
      %v1138 = vpop.xlane.xlu0 %1137
      %v1139 = vsel %vm411, %v1049, -inf
      %1140 = vmax.xlane.f32.xlu0 %v1139
      %v1141 = vpop.xlane.xlu0 %1140
      %v1142 = vsel %vm411, %v1050, -inf
      %1143 = vmax.xlane.f32.xlu0 %v1142
      %v1144 = vpop.xlane.xlu0 %1143
      %v1145 = vsel %vm411, %v1051, -inf
      %1146 = vmax.xlane.f32.xlu0 %v1145
      %v1147 = vpop.xlane.xlu0 %1146
      %v1148 = vsub.f32 %v1020, %v1054
      %v1149 = vsub.f32 %v1021, %v1057
      %v1150 = vsub.f32 %v1022, %v1060
      %v1151 = vsub.f32 %v1023, %v1063
      %v1152 = vsub.f32 %v1024, %v1066
      %v1153 = vsub.f32 %v1025, %v1069
      %v1154 = vsub.f32 %v1026, %v1072
      %v1155 = vsub.f32 %v1027, %v1075
      %v1156 = vsub.f32 %v1028, %v1078
      %v1157 = vsub.f32 %v1029, %v1081
      %v1158 = vsub.f32 %v1030, %v1084
      %v1159 = vsub.f32 %v1031, %v1087
      %v1160 = vsub.f32 %v1032, %v1090
      %v1161 = vsub.f32 %v1033, %v1093
      %v1162 = vsub.f32 %v1034, %v1096
      %v1163 = vsub.f32 %v1035, %v1099
      %v1164 = vsub.f32 %v1036, %v1102
      %v1165 = vsub.f32 %v1037, %v1105
      %v1166 = vsub.f32 %v1038, %v1108
      %v1167 = vsub.f32 %v1039, %v1111
      %v1168 = vsub.f32 %v1040, %v1114
      %v1169 = vsub.f32 %v1041, %v1117
      %v1170 = vsub.f32 %v1042, %v1120
      %v1171 = vsub.f32 %v1043, %v1123
      %v1172 = vsub.f32 %v1044, %v1126
      %v1173 = vsub.f32 %v1045, %v1129
      %v1174 = vsub.f32 %v1046, %v1132
      %v1175 = vsub.f32 %v1047, %v1135
      %v1176 = vsub.f32 %v1048, %v1138
      %v1177 = vsub.f32 %v1049, %v1141
      %v1178 = vsub.f32 %v1050, %v1144
      %v1179 = vsub.f32 %v1051, %v1147
      %v1180 = vmul.f32 %v1148, 1.442695
      %v1181 = vpow.pop %v1180
      %v1182 = vmul.f32 %v1149, 1.442695
      %v1183 = vpow.pop %v1182
      %v1184 = vmul.f32 %v1150, 1.442695
      %v1185 = vpow.pop %v1184
      %v1186 = vmul.f32 %v1151, 1.442695
      %v1187 = vpow.pop %v1186
      %v1188 = vmul.f32 %v1152, 1.442695
      %v1189 = vpow.pop %v1188
      %v1190 = vmul.f32 %v1153, 1.442695
      %v1191 = vpow.pop %v1190
      %v1192 = vmul.f32 %v1154, 1.442695
      %v1193 = vpow.pop %v1192
      %v1194 = vmul.f32 %v1155, 1.442695
      %v1195 = vpow.pop %v1194
      %v1196 = vmul.f32 %v1156, 1.442695
      %v1197 = vpow.pop %v1196
      %v1198 = vmul.f32 %v1157, 1.442695
      %v1199 = vpow.pop %v1198
      %v1200 = vmul.f32 %v1158, 1.442695
      %v1201 = vpow.pop %v1200
      %v1202 = vmul.f32 %v1159, 1.442695
      %v1203 = vpow.pop %v1202
      %v1204 = vmul.f32 %v1160, 1.442695
      %v1205 = vpow.pop %v1204
      %v1206 = vmul.f32 %v1161, 1.442695
      %v1207 = vpow.pop %v1206
      %v1208 = vmul.f32 %v1162, 1.442695
      %v1209 = vpow.pop %v1208
      %v1210 = vmul.f32 %v1163, 1.442695
      %v1211 = vpow.pop %v1210
      %v1212 = vmul.f32 %v1164, 1.442695
      %v1213 = vpow.pop %v1212
      %v1214 = vmul.f32 %v1165, 1.442695
      %v1215 = vpow.pop %v1214
      %v1216 = vmul.f32 %v1166, 1.442695
      %v1217 = vpow.pop %v1216
      %v1218 = vmul.f32 %v1167, 1.442695
      %v1219 = vpow.pop %v1218
      %v1220 = vmul.f32 %v1168, 1.442695
      %v1221 = vpow.pop %v1220
      %v1222 = vmul.f32 %v1169, 1.442695
      %v1223 = vpow.pop %v1222
      %v1224 = vmul.f32 %v1170, 1.442695
      %v1225 = vpow.pop %v1224
      %v1226 = vmul.f32 %v1171, 1.442695
      %v1227 = vpow.pop %v1226
      %v1228 = vmul.f32 %v1172, 1.442695
      %v1229 = vpow.pop %v1228
      %v1230 = vmul.f32 %v1173, 1.442695
      %v1231 = vpow.pop %v1230
      %v1232 = vmul.f32 %v1174, 1.442695
      %v1233 = vpow.pop %v1232
      %v1234 = vmul.f32 %v1175, 1.442695
      %v1235 = vpow.pop %v1234
      %v1236 = vmul.f32 %v1176, 1.442695
      %v1237 = vpow.pop %v1236
      %v1238 = vmul.f32 %v1177, 1.442695
      %v1239 = vpow.pop %v1238
      %v1240 = vmul.f32 %v1178, 1.442695
      %v1241 = vpow.pop %v1240
      %v1242 = vmul.f32 %v1179, 1.442695
      %v1243 = vpow.pop %v1242
      %v1244 = vsel %vm411, %v1181, 0.0
      %1245 = vadd.xlane.f32.xlu0 %v1244
      %v1246 = vpop.xlane.xlu0 %1245
      %v1247 = vsel %vm411, %v1183, 0.0
      %1248 = vadd.xlane.f32.xlu0 %v1247
      %v1249 = vpop.xlane.xlu0 %1248
      %v1250 = vsel %vm411, %v1185, 0.0
      %1251 = vadd.xlane.f32.xlu0 %v1250
      %v1252 = vpop.xlane.xlu0 %1251
      %v1253 = vsel %vm411, %v1187, 0.0
      %1254 = vadd.xlane.f32.xlu0 %v1253
      %v1255 = vpop.xlane.xlu0 %1254
      %v1256 = vsel %vm411, %v1189, 0.0
      %1257 = vadd.xlane.f32.xlu0 %v1256
      %v1258 = vpop.xlane.xlu0 %1257
      %v1259 = vsel %vm411, %v1191, 0.0
      %1260 = vadd.xlane.f32.xlu0 %v1259
      %v1261 = vpop.xlane.xlu0 %1260
      %v1262 = vsel %vm411, %v1193, 0.0
      %1263 = vadd.xlane.f32.xlu0 %v1262
      %v1264 = vpop.xlane.xlu0 %1263
      %v1265 = vsel %vm411, %v1195, 0.0
      %1266 = vadd.xlane.f32.xlu0 %v1265
      %v1267 = vpop.xlane.xlu0 %1266
      %v1268 = vsel %vm411, %v1197, 0.0
      %1269 = vadd.xlane.f32.xlu0 %v1268
      %v1270 = vpop.xlane.xlu0 %1269
      %v1271 = vsel %vm411, %v1199, 0.0
      %1272 = vadd.xlane.f32.xlu0 %v1271
      %v1273 = vpop.xlane.xlu0 %1272
      %v1274 = vsel %vm411, %v1201, 0.0
      %1275 = vadd.xlane.f32.xlu0 %v1274
      %v1276 = vpop.xlane.xlu0 %1275
      %v1277 = vsel %vm411, %v1203, 0.0
      %1278 = vadd.xlane.f32.xlu0 %v1277
      %v1279 = vpop.xlane.xlu0 %1278
      %v1280 = vsel %vm411, %v1205, 0.0
      %1281 = vadd.xlane.f32.xlu0 %v1280
      %v1282 = vpop.xlane.xlu0 %1281
      %v1283 = vsel %vm411, %v1207, 0.0
      %1284 = vadd.xlane.f32.xlu0 %v1283
      %v1285 = vpop.xlane.xlu0 %1284
      %v1286 = vsel %vm411, %v1209, 0.0
      %1287 = vadd.xlane.f32.xlu0 %v1286
      %v1288 = vpop.xlane.xlu0 %1287
      %v1289 = vsel %vm411, %v1211, 0.0
      %1290 = vadd.xlane.f32.xlu0 %v1289
      %v1291 = vpop.xlane.xlu0 %1290
      %v1292 = vsel %vm411, %v1213, 0.0
      %1293 = vadd.xlane.f32.xlu0 %v1292
      %v1294 = vpop.xlane.xlu0 %1293
      %v1295 = vsel %vm411, %v1215, 0.0
      %1296 = vadd.xlane.f32.xlu0 %v1295
      %v1297 = vpop.xlane.xlu0 %1296
      %v1298 = vsel %vm411, %v1217, 0.0
      %1299 = vadd.xlane.f32.xlu0 %v1298
      %v1300 = vpop.xlane.xlu0 %1299
      %v1301 = vsel %vm411, %v1219, 0.0
      %1302 = vadd.xlane.f32.xlu0 %v1301
      %v1303 = vpop.xlane.xlu0 %1302
      %v1304 = vsel %vm411, %v1221, 0.0
      %1305 = vadd.xlane.f32.xlu0 %v1304
      %v1306 = vpop.xlane.xlu0 %1305
      %v1307 = vsel %vm411, %v1223, 0.0
      %1308 = vadd.xlane.f32.xlu0 %v1307
      %v1309 = vpop.xlane.xlu0 %1308
      %v1310 = vsel %vm411, %v1225, 0.0
      %1311 = vadd.xlane.f32.xlu0 %v1310
      %v1312 = vpop.xlane.xlu0 %1311
      %v1313 = vsel %vm411, %v1227, 0.0
      %1314 = vadd.xlane.f32.xlu0 %v1313
      %v1315 = vpop.xlane.xlu0 %1314
      %v1316 = vsel %vm411, %v1229, 0.0
      %1317 = vadd.xlane.f32.xlu0 %v1316
      %v1318 = vpop.xlane.xlu0 %1317
      %v1319 = vsel %vm411, %v1231, 0.0
      %1320 = vadd.xlane.f32.xlu0 %v1319
      %v1321 = vpop.xlane.xlu0 %1320
      %v1322 = vsel %vm411, %v1233, 0.0
      %1323 = vadd.xlane.f32.xlu0 %v1322
      %v1324 = vpop.xlane.xlu0 %1323
      %v1325 = vsel %vm411, %v1235, 0.0
      %1326 = vadd.xlane.f32.xlu0 %v1325
      %v1327 = vpop.xlane.xlu0 %1326
      %v1328 = vsel %vm411, %v1237, 0.0
      %1329 = vadd.xlane.f32.xlu0 %v1328
      %v1330 = vpop.xlane.xlu0 %1329
      %v1331 = vsel %vm411, %v1239, 0.0
      %1332 = vadd.xlane.f32.xlu0 %v1331
      %v1333 = vpop.xlane.xlu0 %1332
      %v1334 = vsel %vm411, %v1241, 0.0
      %1335 = vadd.xlane.f32.xlu0 %v1334
      %v1336 = vpop.xlane.xlu0 %1335
      %v1337 = vsel %vm411, %v1243, 0.0
      %1338 = vadd.xlane.f32.xlu0 %v1337
      %v1339 = vpop.xlane.xlu0 %1338
      %v1340 = vrcp.pop %v1246
      %v1341 = vrcp.pop %v1249
      %v1342 = vrcp.pop %v1252
      %v1343 = vrcp.pop %v1255
      %v1344 = vrcp.pop %v1258
      %v1345 = vrcp.pop %v1261
      %v1346 = vrcp.pop %v1264
      %v1347 = vrcp.pop %v1267
      %v1348 = vrcp.pop %v1270
      %v1349 = vrcp.pop %v1273
      %v1350 = vrcp.pop %v1276
      %v1351 = vrcp.pop %v1279
      %v1352 = vrcp.pop %v1282
      %v1353 = vrcp.pop %v1285
      %v1354 = vrcp.pop %v1288
      %v1355 = vrcp.pop %v1291
      %v1356 = vrcp.pop %v1294
      %v1357 = vrcp.pop %v1297
      %v1358 = vrcp.pop %v1300
      %v1359 = vrcp.pop %v1303
      %v1360 = vrcp.pop %v1306
      %v1361 = vrcp.pop %v1309
      %v1362 = vrcp.pop %v1312
      %v1363 = vrcp.pop %v1315
      %v1364 = vrcp.pop %v1318
      %v1365 = vrcp.pop %v1321
      %v1366 = vrcp.pop %v1324
      %v1367 = vrcp.pop %v1327
      %v1368 = vrcp.pop %v1330
      %v1369 = vrcp.pop %v1333
      %v1370 = vrcp.pop %v1336
      %v1371 = vrcp.pop %v1339
      %v1372 = vmul.f32 %v1181, %v1340
      %v1373 = vmul.f32 %v1183, %v1341
      %v1374 = vmul.f32 %v1185, %v1342
      %v1375 = vmul.f32 %v1187, %v1343
      %v1376 = vmul.f32 %v1189, %v1344
      %v1377 = vmul.f32 %v1191, %v1345
      %v1378 = vmul.f32 %v1193, %v1346
      %v1379 = vmul.f32 %v1195, %v1347
      %v1380 = vmul.f32 %v1197, %v1348
      %v1381 = vmul.f32 %v1199, %v1349
      %v1382 = vmul.f32 %v1201, %v1350
      %v1383 = vmul.f32 %v1203, %v1351
      %v1384 = vmul.f32 %v1205, %v1352
      %v1385 = vmul.f32 %v1207, %v1353
      %v1386 = vmul.f32 %v1209, %v1354
      %v1387 = vmul.f32 %v1211, %v1355
      %v1388 = vmul.f32 %v1213, %v1356
      %v1389 = vmul.f32 %v1215, %v1357
      %v1390 = vmul.f32 %v1217, %v1358
      %v1391 = vmul.f32 %v1219, %v1359
      %v1392 = vmul.f32 %v1221, %v1360
      %v1393 = vmul.f32 %v1223, %v1361
      %v1394 = vmul.f32 %v1225, %v1362
      %v1395 = vmul.f32 %v1227, %v1363
      %v1396 = vmul.f32 %v1229, %v1364
      %v1397 = vmul.f32 %v1231, %v1365
      %v1398 = vmul.f32 %v1233, %v1366
      %v1399 = vmul.f32 %v1235, %v1367
      %v1400 = vmul.f32 %v1237, %v1368
      %v1401 = vmul.f32 %v1239, %v1369
      %v1402 = vmul.f32 %v1241, %v1370
      %v1403 = vmul.f32 %v1243, %v1371
      %v1404 = vpack.c.bf16 %v1372, %v1372
      %v1405 = vpack.c.bf16 %v1373, %v1373
      %v1406 = vpack.c.bf16 %v1374, %v1374
      %v1407 = vpack.c.bf16 %v1375, %v1375
      %v1408 = vpack.c.bf16 %v1376, %v1376
      %v1409 = vpack.c.bf16 %v1377, %v1377
      %v1410 = vpack.c.bf16 %v1378, %v1378
      %v1411 = vpack.c.bf16 %v1379, %v1379
      %v1412 = vpack.c.bf16 %v1380, %v1380
      %v1413 = vpack.c.bf16 %v1381, %v1381
      %v1414 = vpack.c.bf16 %v1382, %v1382
      %v1415 = vpack.c.bf16 %v1383, %v1383
      %v1416 = vpack.c.bf16 %v1384, %v1384
      %v1417 = vpack.c.bf16 %v1385, %v1385
      %v1418 = vpack.c.bf16 %v1386, %v1386
      %v1419 = vpack.c.bf16 %v1387, %v1387
      %v1420 = vpack.c.bf16 %v1388, %v1388
      %v1421 = vpack.c.bf16 %v1389, %v1389
      %v1422 = vpack.c.bf16 %v1390, %v1390
      %v1423 = vpack.c.bf16 %v1391, %v1391
      %v1424 = vpack.c.bf16 %v1392, %v1392
      %v1425 = vpack.c.bf16 %v1393, %v1393
      %v1426 = vpack.c.bf16 %v1394, %v1394
      %v1427 = vpack.c.bf16 %v1395, %v1395
      %v1428 = vpack.c.bf16 %v1396, %v1396
      %v1429 = vpack.c.bf16 %v1397, %v1397
      %v1430 = vpack.c.bf16 %v1398, %v1398
      %v1431 = vpack.c.bf16 %v1399, %v1399
      %v1432 = vpack.c.bf16 %v1400, %v1400
      %v1433 = vpack.c.bf16 %v1401, %v1401
      %v1434 = vpack.c.bf16 %v1402, %v1402
      %v1435 = vpack.c.bf16 %v1403, %v1403
      %v1437 = vsel %vm411, %v1404, 0
      %vm1439 = vcmask 1043456
      %v1441 = vsel %vm1439, %v379, 0
      %1443 = vmatpush.bf16.msra.mxu0 0
      %1444 = vmatpush.bf16.msra.mxu0 0
      %1445 = vmatpush.bf16.msra.mxu0 0
      %1446 = vmatpush.bf16.msra.mxu0 0
      %1447 = vmatpush.bf16.msra.mxu0 0
      %1448 = vmatpush.bf16.msra.mxu0 0
      %1449 = vmatpush.bf16.msra.mxu0 0
      %1450 = vmatpush.bf16.msra.mxu0 %v1441
      %1451 = vmatmul.bf16.gmra.mxu0 %v1437
      %v1452 = vpop.f32.mrf.mxu0
      %v1453 = vadd.f32 0.0, %v1452
      %v1454 = vpop.f32.mrf.mxu0
      %1455 = vdwg.mxu0
      %v1457 = vsel %vm411, %v1405, 0
      %v1460 = vsel %vm1439, %v380, 0
      %1462 = vmatpush.bf16.msra.mxu0 0
      %1463 = vmatpush.bf16.msra.mxu0 0
      %1464 = vmatpush.bf16.msra.mxu0 0
      %1465 = vmatpush.bf16.msra.mxu0 0
      %1466 = vmatpush.bf16.msra.mxu0 0
      %1467 = vmatpush.bf16.msra.mxu0 0
      %1468 = vmatpush.bf16.msra.mxu0 0
      %1469 = vmatpush.bf16.msra.mxu0 %v1460
      %1470 = vmatmul.bf16.gmra.mxu0 %v1457
      %v1471 = vpop.f32.mrf.mxu0
      %v1472 = vadd.f32 0.0, %v1471
      %v1473 = vpop.f32.mrf.mxu0
      %1474 = vdwg.mxu0
      %v1476 = vsel %vm411, %v1406, 0
      %v1479 = vsel %vm1439, %v381, 0
      %1481 = vmatpush.bf16.msra.mxu0 0
      %1482 = vmatpush.bf16.msra.mxu0 0
      %1483 = vmatpush.bf16.msra.mxu0 0
      %1484 = vmatpush.bf16.msra.mxu0 0
      %1485 = vmatpush.bf16.msra.mxu0 0
      %1486 = vmatpush.bf16.msra.mxu0 0
      %1487 = vmatpush.bf16.msra.mxu0 0
      %1488 = vmatpush.bf16.msra.mxu0 %v1479
      %1489 = vmatmul.bf16.gmra.mxu0 %v1476
      %v1490 = vpop.f32.mrf.mxu0
      %v1491 = vadd.f32 0.0, %v1490
      %v1492 = vpop.f32.mrf.mxu0
      %1493 = vdwg.mxu0
      %v1495 = vsel %vm411, %v1407, 0
      %v1498 = vsel %vm1439, %v382, 0
      %1500 = vmatpush.bf16.msra.mxu0 0
      %1501 = vmatpush.bf16.msra.mxu0 0
      %1502 = vmatpush.bf16.msra.mxu0 0
      %1503 = vmatpush.bf16.msra.mxu0 0
      %1504 = vmatpush.bf16.msra.mxu0 0
      %1505 = vmatpush.bf16.msra.mxu0 0
      %1506 = vmatpush.bf16.msra.mxu0 0
      %1507 = vmatpush.bf16.msra.mxu0 %v1498
      %1508 = vmatmul.bf16.gmra.mxu0 %v1495
      %v1509 = vpop.f32.mrf.mxu0
      %v1510 = vadd.f32 0.0, %v1509
      %v1511 = vpop.f32.mrf.mxu0
      %1512 = vdwg.mxu0
      %v1514 = vsel %vm411, %v1408, 0
      %v1517 = vsel %vm1439, %v383, 0
      %1519 = vmatpush.bf16.msra.mxu0 0
      %1520 = vmatpush.bf16.msra.mxu0 0
      %1521 = vmatpush.bf16.msra.mxu0 0
      %1522 = vmatpush.bf16.msra.mxu0 0
      %1523 = vmatpush.bf16.msra.mxu0 0
      %1524 = vmatpush.bf16.msra.mxu0 0
      %1525 = vmatpush.bf16.msra.mxu0 0
      %1526 = vmatpush.bf16.msra.mxu0 %v1517
      %1527 = vmatmul.bf16.gmra.mxu0 %v1514
      %v1528 = vpop.f32.mrf.mxu0
      %v1529 = vadd.f32 0.0, %v1528
      %v1530 = vpop.f32.mrf.mxu0
      %1531 = vdwg.mxu0
      %v1533 = vsel %vm411, %v1409, 0
      %v1536 = vsel %vm1439, %v384, 0
      %1538 = vmatpush.bf16.msra.mxu0 0
      %1539 = vmatpush.bf16.msra.mxu0 0
      %1540 = vmatpush.bf16.msra.mxu0 0
      %1541 = vmatpush.bf16.msra.mxu0 0
      %1542 = vmatpush.bf16.msra.mxu0 0
      %1543 = vmatpush.bf16.msra.mxu0 0
      %1544 = vmatpush.bf16.msra.mxu0 0
      %1545 = vmatpush.bf16.msra.mxu0 %v1536
      %1546 = vmatmul.bf16.gmra.mxu0 %v1533
      %v1547 = vpop.f32.mrf.mxu0
      %v1548 = vadd.f32 0.0, %v1547
      %v1549 = vpop.f32.mrf.mxu0
      %1550 = vdwg.mxu0
      %v1552 = vsel %vm411, %v1410, 0
      %v1555 = vsel %vm1439, %v385, 0
      %1557 = vmatpush.bf16.msra.mxu0 0
      %1558 = vmatpush.bf16.msra.mxu0 0
      %1559 = vmatpush.bf16.msra.mxu0 0
      %1560 = vmatpush.bf16.msra.mxu0 0
      %1561 = vmatpush.bf16.msra.mxu0 0
      %1562 = vmatpush.bf16.msra.mxu0 0
      %1563 = vmatpush.bf16.msra.mxu0 0
      %1564 = vmatpush.bf16.msra.mxu0 %v1555
      %1565 = vmatmul.bf16.gmra.mxu0 %v1552
      %v1566 = vpop.f32.mrf.mxu0
      %v1567 = vadd.f32 0.0, %v1566
      %v1568 = vpop.f32.mrf.mxu0
      %1569 = vdwg.mxu0
      %v1571 = vsel %vm411, %v1411, 0
      %v1574 = vsel %vm1439, %v386, 0
      %1576 = vmatpush.bf16.msra.mxu0 0
      %1577 = vmatpush.bf16.msra.mxu0 0
      %1578 = vmatpush.bf16.msra.mxu0 0
      %1579 = vmatpush.bf16.msra.mxu0 0
      %1580 = vmatpush.bf16.msra.mxu0 0
      %1581 = vmatpush.bf16.msra.mxu0 0
      %1582 = vmatpush.bf16.msra.mxu0 0
      %1583 = vmatpush.bf16.msra.mxu0 %v1574
      %1584 = vmatmul.bf16.gmra.mxu0 %v1571
      %v1585 = vpop.f32.mrf.mxu0
      %v1586 = vadd.f32 0.0, %v1585
      %v1587 = vpop.f32.mrf.mxu0
      %1588 = vdwg.mxu0
      %v1590 = vsel %vm411, %v1412, 0
      %v1593 = vsel %vm1439, %v387, 0
      %1595 = vmatpush.bf16.msra.mxu0 0
      %1596 = vmatpush.bf16.msra.mxu0 0
      %1597 = vmatpush.bf16.msra.mxu0 0
      %1598 = vmatpush.bf16.msra.mxu0 0
      %1599 = vmatpush.bf16.msra.mxu0 0
      %1600 = vmatpush.bf16.msra.mxu0 0
      %1601 = vmatpush.bf16.msra.mxu0 0
      %1602 = vmatpush.bf16.msra.mxu0 %v1593
      %1603 = vmatmul.bf16.gmra.mxu0 %v1590
      %v1604 = vpop.f32.mrf.mxu0
      %v1605 = vadd.f32 0.0, %v1604
      %v1606 = vpop.f32.mrf.mxu0
      %1607 = vdwg.mxu0
      %v1609 = vsel %vm411, %v1413, 0
      %v1612 = vsel %vm1439, %v388, 0
      %1614 = vmatpush.bf16.msra.mxu0 0
      %1615 = vmatpush.bf16.msra.mxu0 0
      %1616 = vmatpush.bf16.msra.mxu0 0
      %1617 = vmatpush.bf16.msra.mxu0 0
      %1618 = vmatpush.bf16.msra.mxu0 0
      %1619 = vmatpush.bf16.msra.mxu0 0
      %1620 = vmatpush.bf16.msra.mxu0 0
      %1621 = vmatpush.bf16.msra.mxu0 %v1612
      %1622 = vmatmul.bf16.gmra.mxu0 %v1609
      %v1623 = vpop.f32.mrf.mxu0
      %v1624 = vadd.f32 0.0, %v1623
      %v1625 = vpop.f32.mrf.mxu0
      %1626 = vdwg.mxu0
      %v1628 = vsel %vm411, %v1414, 0
      %v1631 = vsel %vm1439, %v389, 0
      %1633 = vmatpush.bf16.msra.mxu0 0
      %1634 = vmatpush.bf16.msra.mxu0 0
      %1635 = vmatpush.bf16.msra.mxu0 0
      %1636 = vmatpush.bf16.msra.mxu0 0
      %1637 = vmatpush.bf16.msra.mxu0 0
      %1638 = vmatpush.bf16.msra.mxu0 0
      %1639 = vmatpush.bf16.msra.mxu0 0
      %1640 = vmatpush.bf16.msra.mxu0 %v1631
      %1641 = vmatmul.bf16.gmra.mxu0 %v1628
      %v1642 = vpop.f32.mrf.mxu0
      %v1643 = vadd.f32 0.0, %v1642
      %v1644 = vpop.f32.mrf.mxu0
      %1645 = vdwg.mxu0
      %v1647 = vsel %vm411, %v1415, 0
      %v1650 = vsel %vm1439, %v390, 0
      %1652 = vmatpush.bf16.msra.mxu0 0
      %1653 = vmatpush.bf16.msra.mxu0 0
      %1654 = vmatpush.bf16.msra.mxu0 0
      %1655 = vmatpush.bf16.msra.mxu0 0
      %1656 = vmatpush.bf16.msra.mxu0 0
      %1657 = vmatpush.bf16.msra.mxu0 0
      %1658 = vmatpush.bf16.msra.mxu0 0
      %1659 = vmatpush.bf16.msra.mxu0 %v1650
      %1660 = vmatmul.bf16.gmra.mxu0 %v1647
      %v1661 = vpop.f32.mrf.mxu0
      %v1662 = vadd.f32 0.0, %v1661
      %v1663 = vpop.f32.mrf.mxu0
      %1664 = vdwg.mxu0
      %v1666 = vsel %vm411, %v1416, 0
      %v1669 = vsel %vm1439, %v391, 0
      %1671 = vmatpush.bf16.msra.mxu0 0
      %1672 = vmatpush.bf16.msra.mxu0 0
      %1673 = vmatpush.bf16.msra.mxu0 0
      %1674 = vmatpush.bf16.msra.mxu0 0
      %1675 = vmatpush.bf16.msra.mxu0 0
      %1676 = vmatpush.bf16.msra.mxu0 0
      %1677 = vmatpush.bf16.msra.mxu0 0
      %1678 = vmatpush.bf16.msra.mxu0 %v1669
      %1679 = vmatmul.bf16.gmra.mxu0 %v1666
      %v1680 = vpop.f32.mrf.mxu0
      %v1681 = vadd.f32 0.0, %v1680
      %v1682 = vpop.f32.mrf.mxu0
      %1683 = vdwg.mxu0
      %v1685 = vsel %vm411, %v1417, 0
      %v1688 = vsel %vm1439, %v392, 0
      %1690 = vmatpush.bf16.msra.mxu0 0
      %1691 = vmatpush.bf16.msra.mxu0 0
      %1692 = vmatpush.bf16.msra.mxu0 0
      %1693 = vmatpush.bf16.msra.mxu0 0
      %1694 = vmatpush.bf16.msra.mxu0 0
      %1695 = vmatpush.bf16.msra.mxu0 0
      %1696 = vmatpush.bf16.msra.mxu0 0
      %1697 = vmatpush.bf16.msra.mxu0 %v1688
      %1698 = vmatmul.bf16.gmra.mxu0 %v1685
      %v1699 = vpop.f32.mrf.mxu0
      %v1700 = vadd.f32 0.0, %v1699
      %v1701 = vpop.f32.mrf.mxu0
      %1702 = vdwg.mxu0
      %v1704 = vsel %vm411, %v1418, 0
      %v1707 = vsel %vm1439, %v393, 0
      %1709 = vmatpush.bf16.msra.mxu0 0
      %1710 = vmatpush.bf16.msra.mxu0 0
      %1711 = vmatpush.bf16.msra.mxu0 0
      %1712 = vmatpush.bf16.msra.mxu0 0
      %1713 = vmatpush.bf16.msra.mxu0 0
      %1714 = vmatpush.bf16.msra.mxu0 0
      %1715 = vmatpush.bf16.msra.mxu0 0
      %1716 = vmatpush.bf16.msra.mxu0 %v1707
      %1717 = vmatmul.bf16.gmra.mxu0 %v1704
      %v1718 = vpop.f32.mrf.mxu0
      %v1719 = vadd.f32 0.0, %v1718
      %v1720 = vpop.f32.mrf.mxu0
      %1721 = vdwg.mxu0
      %v1723 = vsel %vm411, %v1419, 0
      %v1726 = vsel %vm1439, %v394, 0
      %1728 = vmatpush.bf16.msra.mxu0 0
      %1729 = vmatpush.bf16.msra.mxu0 0
      %1730 = vmatpush.bf16.msra.mxu0 0
      %1731 = vmatpush.bf16.msra.mxu0 0
      %1732 = vmatpush.bf16.msra.mxu0 0
      %1733 = vmatpush.bf16.msra.mxu0 0
      %1734 = vmatpush.bf16.msra.mxu0 0
      %1735 = vmatpush.bf16.msra.mxu0 %v1726
      %1736 = vmatmul.bf16.gmra.mxu0 %v1723
      %v1737 = vpop.f32.mrf.mxu0
      %v1738 = vadd.f32 0.0, %v1737
      %v1739 = vpop.f32.mrf.mxu0
      %1740 = vdwg.mxu0
      %v1742 = vsel %vm411, %v1420, 0
      %v1745 = vsel %vm1439, %v395, 0
      %1747 = vmatpush.bf16.msra.mxu0 0
      %1748 = vmatpush.bf16.msra.mxu0 0
      %1749 = vmatpush.bf16.msra.mxu0 0
      %1750 = vmatpush.bf16.msra.mxu0 0
      %1751 = vmatpush.bf16.msra.mxu0 0
      %1752 = vmatpush.bf16.msra.mxu0 0
      %1753 = vmatpush.bf16.msra.mxu0 0
      %1754 = vmatpush.bf16.msra.mxu0 %v1745
      %1755 = vmatmul.bf16.gmra.mxu0 %v1742
      %v1756 = vpop.f32.mrf.mxu0
      %v1757 = vadd.f32 0.0, %v1756
      %v1758 = vpop.f32.mrf.mxu0
      %1759 = vdwg.mxu0
      %v1761 = vsel %vm411, %v1421, 0
      %v1764 = vsel %vm1439, %v396, 0
      %1766 = vmatpush.bf16.msra.mxu0 0
      %1767 = vmatpush.bf16.msra.mxu0 0
      %1768 = vmatpush.bf16.msra.mxu0 0
      %1769 = vmatpush.bf16.msra.mxu0 0
      %1770 = vmatpush.bf16.msra.mxu0 0
      %1771 = vmatpush.bf16.msra.mxu0 0
      %1772 = vmatpush.bf16.msra.mxu0 0
      %1773 = vmatpush.bf16.msra.mxu0 %v1764
      %1774 = vmatmul.bf16.gmra.mxu0 %v1761
      %v1775 = vpop.f32.mrf.mxu0
      %v1776 = vadd.f32 0.0, %v1775
      %v1777 = vpop.f32.mrf.mxu0
      %1778 = vdwg.mxu0
      %v1780 = vsel %vm411, %v1422, 0
      %v1783 = vsel %vm1439, %v397, 0
      %1785 = vmatpush.bf16.msra.mxu0 0
      %1786 = vmatpush.bf16.msra.mxu0 0
      %1787 = vmatpush.bf16.msra.mxu0 0
      %1788 = vmatpush.bf16.msra.mxu0 0
      %1789 = vmatpush.bf16.msra.mxu0 0
      %1790 = vmatpush.bf16.msra.mxu0 0
      %1791 = vmatpush.bf16.msra.mxu0 0
      %1792 = vmatpush.bf16.msra.mxu0 %v1783
      %1793 = vmatmul.bf16.gmra.mxu0 %v1780
      %v1794 = vpop.f32.mrf.mxu0
      %v1795 = vadd.f32 0.0, %v1794
      %v1796 = vpop.f32.mrf.mxu0
      %1797 = vdwg.mxu0
      %v1799 = vsel %vm411, %v1423, 0
      %v1802 = vsel %vm1439, %v398, 0
      %1804 = vmatpush.bf16.msra.mxu0 0
      %1805 = vmatpush.bf16.msra.mxu0 0
      %1806 = vmatpush.bf16.msra.mxu0 0
      %1807 = vmatpush.bf16.msra.mxu0 0
      %1808 = vmatpush.bf16.msra.mxu0 0
      %1809 = vmatpush.bf16.msra.mxu0 0
      %1810 = vmatpush.bf16.msra.mxu0 0
      %1811 = vmatpush.bf16.msra.mxu0 %v1802
      %1812 = vmatmul.bf16.gmra.mxu0 %v1799
      %v1813 = vpop.f32.mrf.mxu0
      %v1814 = vadd.f32 0.0, %v1813
      %v1815 = vpop.f32.mrf.mxu0
      %1816 = vdwg.mxu0
      %v1818 = vsel %vm411, %v1424, 0
      %v1821 = vsel %vm1439, %v399, 0
      %1823 = vmatpush.bf16.msra.mxu0 0
      %1824 = vmatpush.bf16.msra.mxu0 0
      %1825 = vmatpush.bf16.msra.mxu0 0
      %1826 = vmatpush.bf16.msra.mxu0 0
      %1827 = vmatpush.bf16.msra.mxu0 0
      %1828 = vmatpush.bf16.msra.mxu0 0
      %1829 = vmatpush.bf16.msra.mxu0 0
      %1830 = vmatpush.bf16.msra.mxu0 %v1821
      %1831 = vmatmul.bf16.gmra.mxu0 %v1818
      %v1832 = vpop.f32.mrf.mxu0
      %v1833 = vadd.f32 0.0, %v1832
      %v1834 = vpop.f32.mrf.mxu0
      %1835 = vdwg.mxu0
      %v1837 = vsel %vm411, %v1425, 0
      %v1840 = vsel %vm1439, %v400, 0
      %1842 = vmatpush.bf16.msra.mxu0 0
      %1843 = vmatpush.bf16.msra.mxu0 0
      %1844 = vmatpush.bf16.msra.mxu0 0
      %1845 = vmatpush.bf16.msra.mxu0 0
      %1846 = vmatpush.bf16.msra.mxu0 0
      %1847 = vmatpush.bf16.msra.mxu0 0
      %1848 = vmatpush.bf16.msra.mxu0 0
      %1849 = vmatpush.bf16.msra.mxu0 %v1840
      %1850 = vmatmul.bf16.gmra.mxu0 %v1837
      %v1851 = vpop.f32.mrf.mxu0
      %v1852 = vadd.f32 0.0, %v1851
      %v1853 = vpop.f32.mrf.mxu0
      %1854 = vdwg.mxu0
      %v1856 = vsel %vm411, %v1426, 0
      %v1859 = vsel %vm1439, %v401, 0
      %1861 = vmatpush.bf16.msra.mxu0 0
      %1862 = vmatpush.bf16.msra.mxu0 0
      %1863 = vmatpush.bf16.msra.mxu0 0
      %1864 = vmatpush.bf16.msra.mxu0 0
      %1865 = vmatpush.bf16.msra.mxu0 0
      %1866 = vmatpush.bf16.msra.mxu0 0
      %1867 = vmatpush.bf16.msra.mxu0 0
      %1868 = vmatpush.bf16.msra.mxu0 %v1859
      %1869 = vmatmul.bf16.gmra.mxu0 %v1856
      %v1870 = vpop.f32.mrf.mxu0
      %v1871 = vadd.f32 0.0, %v1870
      %v1872 = vpop.f32.mrf.mxu0
      %1873 = vdwg.mxu0
      %v1875 = vsel %vm411, %v1427, 0
      %v1878 = vsel %vm1439, %v402, 0
      %1880 = vmatpush.bf16.msra.mxu0 0
      %1881 = vmatpush.bf16.msra.mxu0 0
      %1882 = vmatpush.bf16.msra.mxu0 0
      %1883 = vmatpush.bf16.msra.mxu0 0
      %1884 = vmatpush.bf16.msra.mxu0 0
      %1885 = vmatpush.bf16.msra.mxu0 0
      %1886 = vmatpush.bf16.msra.mxu0 0
      %1887 = vmatpush.bf16.msra.mxu0 %v1878
      %1888 = vmatmul.bf16.gmra.mxu0 %v1875
      %v1889 = vpop.f32.mrf.mxu0
      %v1890 = vadd.f32 0.0, %v1889
      %v1891 = vpop.f32.mrf.mxu0
      %1892 = vdwg.mxu0
      %v1894 = vsel %vm411, %v1428, 0
      %v1897 = vsel %vm1439, %v403, 0
      %1899 = vmatpush.bf16.msra.mxu0 0
      %1900 = vmatpush.bf16.msra.mxu0 0
      %1901 = vmatpush.bf16.msra.mxu0 0
      %1902 = vmatpush.bf16.msra.mxu0 0
      %1903 = vmatpush.bf16.msra.mxu0 0
      %1904 = vmatpush.bf16.msra.mxu0 0
      %1905 = vmatpush.bf16.msra.mxu0 0
      %1906 = vmatpush.bf16.msra.mxu0 %v1897
      %1907 = vmatmul.bf16.gmra.mxu0 %v1894
      %v1908 = vpop.f32.mrf.mxu0
      %v1909 = vadd.f32 0.0, %v1908
      %v1910 = vpop.f32.mrf.mxu0
      %1911 = vdwg.mxu0
      %v1913 = vsel %vm411, %v1429, 0
      %v1916 = vsel %vm1439, %v404, 0
      %1918 = vmatpush.bf16.msra.mxu0 0
      %1919 = vmatpush.bf16.msra.mxu0 0
      %1920 = vmatpush.bf16.msra.mxu0 0
      %1921 = vmatpush.bf16.msra.mxu0 0
      %1922 = vmatpush.bf16.msra.mxu0 0
      %1923 = vmatpush.bf16.msra.mxu0 0
      %1924 = vmatpush.bf16.msra.mxu0 0
      %1925 = vmatpush.bf16.msra.mxu0 %v1916
      %1926 = vmatmul.bf16.gmra.mxu0 %v1913
      %v1927 = vpop.f32.mrf.mxu0
      %v1928 = vadd.f32 0.0, %v1927
      %v1929 = vpop.f32.mrf.mxu0
      %1930 = vdwg.mxu0
      %v1932 = vsel %vm411, %v1430, 0
      %v1935 = vsel %vm1439, %v405, 0
      %1937 = vmatpush.bf16.msra.mxu0 0
      %1938 = vmatpush.bf16.msra.mxu0 0
      %1939 = vmatpush.bf16.msra.mxu0 0
      %1940 = vmatpush.bf16.msra.mxu0 0
      %1941 = vmatpush.bf16.msra.mxu0 0
      %1942 = vmatpush.bf16.msra.mxu0 0
      %1943 = vmatpush.bf16.msra.mxu0 0
      %1944 = vmatpush.bf16.msra.mxu0 %v1935
      %1945 = vmatmul.bf16.gmra.mxu0 %v1932
      %v1946 = vpop.f32.mrf.mxu0
      %v1947 = vadd.f32 0.0, %v1946
      %v1948 = vpop.f32.mrf.mxu0
      %1949 = vdwg.mxu0
      %v1951 = vsel %vm411, %v1431, 0
      %v1954 = vsel %vm1439, %v406, 0
      %1956 = vmatpush.bf16.msra.mxu0 0
      %1957 = vmatpush.bf16.msra.mxu0 0
      %1958 = vmatpush.bf16.msra.mxu0 0
      %1959 = vmatpush.bf16.msra.mxu0 0
      %1960 = vmatpush.bf16.msra.mxu0 0
      %1961 = vmatpush.bf16.msra.mxu0 0
      %1962 = vmatpush.bf16.msra.mxu0 0
      %1963 = vmatpush.bf16.msra.mxu0 %v1954
      %1964 = vmatmul.bf16.gmra.mxu0 %v1951
      %v1965 = vpop.f32.mrf.mxu0
      %v1966 = vadd.f32 0.0, %v1965
      %v1967 = vpop.f32.mrf.mxu0
      %1968 = vdwg.mxu0
      %v1970 = vsel %vm411, %v1432, 0
      %v1973 = vsel %vm1439, %v407, 0
      %1975 = vmatpush.bf16.msra.mxu0 0
      %1976 = vmatpush.bf16.msra.mxu0 0
      %1977 = vmatpush.bf16.msra.mxu0 0
      %1978 = vmatpush.bf16.msra.mxu0 0
      %1979 = vmatpush.bf16.msra.mxu0 0
      %1980 = vmatpush.bf16.msra.mxu0 0
      %1981 = vmatpush.bf16.msra.mxu0 0
      %1982 = vmatpush.bf16.msra.mxu0 %v1973
      %1983 = vmatmul.bf16.gmra.mxu0 %v1970
      %v1984 = vpop.f32.mrf.mxu0
      %v1985 = vadd.f32 0.0, %v1984
      %v1986 = vpop.f32.mrf.mxu0
      %1987 = vdwg.mxu0
      %v1989 = vsel %vm411, %v1433, 0
      %v1992 = vsel %vm1439, %v408, 0
      %1994 = vmatpush.bf16.msra.mxu0 0
      %1995 = vmatpush.bf16.msra.mxu0 0
      %1996 = vmatpush.bf16.msra.mxu0 0
      %1997 = vmatpush.bf16.msra.mxu0 0
      %1998 = vmatpush.bf16.msra.mxu0 0
      %1999 = vmatpush.bf16.msra.mxu0 0
      %2000 = vmatpush.bf16.msra.mxu0 0
      %2001 = vmatpush.bf16.msra.mxu0 %v1992
      %2002 = vmatmul.bf16.gmra.mxu0 %v1989
      %v2003 = vpop.f32.mrf.mxu0
      %v2004 = vadd.f32 0.0, %v2003
      %v2005 = vpop.f32.mrf.mxu0
      %2006 = vdwg.mxu0
      %v2008 = vsel %vm411, %v1434, 0
      %v2011 = vsel %vm1439, %v409, 0
      %2013 = vmatpush.bf16.msra.mxu0 0
      %2014 = vmatpush.bf16.msra.mxu0 0
      %2015 = vmatpush.bf16.msra.mxu0 0
      %2016 = vmatpush.bf16.msra.mxu0 0
      %2017 = vmatpush.bf16.msra.mxu0 0
      %2018 = vmatpush.bf16.msra.mxu0 0
      %2019 = vmatpush.bf16.msra.mxu0 0
      %2020 = vmatpush.bf16.msra.mxu0 %v2011
      %2021 = vmatmul.bf16.gmra.mxu0 %v2008
      %v2022 = vpop.f32.mrf.mxu0
      %v2023 = vadd.f32 0.0, %v2022
      %v2024 = vpop.f32.mrf.mxu0
      %2025 = vdwg.mxu0
      %v2027 = vsel %vm411, %v1435, 0
      %v2030 = vsel %vm1439, %v410, 0
      %2032 = vmatpush.bf16.msra.mxu0 0
      %2033 = vmatpush.bf16.msra.mxu0 0
      %2034 = vmatpush.bf16.msra.mxu0 0
      %2035 = vmatpush.bf16.msra.mxu0 0
      %2036 = vmatpush.bf16.msra.mxu0 0
      %2037 = vmatpush.bf16.msra.mxu0 0
      %2038 = vmatpush.bf16.msra.mxu0 0
      %2039 = vmatpush.bf16.msra.mxu0 %v2030
      %2040 = vmatmul.bf16.gmra.mxu0 %v2027
      %v2041 = vpop.f32.mrf.mxu0
      %v2042 = vadd.f32 0.0, %v2041
      %v2043 = vpop.f32.mrf.mxu0
      %2044 = vdwg.mxu0
      %2045 = vst.msk [vmem:[%s216] sm:$0xff] %vm411, %v1453
      %2046 = vst.msk [vmem:[%s216 + $0x8] sm:$0xff] %vm411, %v1472
      %2047 = vst.msk [vmem:[%s216 + $0x10] sm:$0xff] %vm411, %v1491
      %2048 = vst.msk [vmem:[%s216 + $0x18] sm:$0xff] %vm411, %v1510
      %2049 = vst.msk [vmem:[%s216 + $0x20] sm:$0xff] %vm411, %v1529
      %2050 = vst.msk [vmem:[%s216 + $0x28] sm:$0xff] %vm411, %v1548
      %2051 = vst.msk [vmem:[%s216 + $0x30] sm:$0xff] %vm411, %v1567
      %2052 = vst.msk [vmem:[%s216 + $0x38] sm:$0xff] %vm411, %v1586
      %2053 = vst.msk [vmem:[%s216 + $0x40] sm:$0xff] %vm411, %v1605
      %2054 = vst.msk [vmem:[%s216 + $0x48] sm:$0xff] %vm411, %v1624
      %2055 = vst.msk [vmem:[%s216 + $0x50] sm:$0xff] %vm411, %v1643
      %2056 = vst.msk [vmem:[%s216 + $0x58] sm:$0xff] %vm411, %v1662
      %2057 = vst.msk [vmem:[%s216 + $0x60] sm:$0xff] %vm411, %v1681
      %2058 = vst.msk [vmem:[%s216 + $0x68] sm:$0xff] %vm411, %v1700
      %2059 = vst.msk [vmem:[%s216 + $0x70] sm:$0xff] %vm411, %v1719
      %2060 = vst.msk [vmem:[%s216 + $0x78] sm:$0xff] %vm411, %v1738
      %2061 = vst.msk [vmem:[%s216 + $0x80] sm:$0xff] %vm411, %v1757
      %2062 = vst.msk [vmem:[%s216 + $0x88] sm:$0xff] %vm411, %v1776
      %2063 = vst.msk [vmem:[%s216 + $0x90] sm:$0xff] %vm411, %v1795
      %2064 = vst.msk [vmem:[%s216 + $0x98] sm:$0xff] %vm411, %v1814
      %2065 = vst.msk [vmem:[%s216 + $0xa0] sm:$0xff] %vm411, %v1833
      %2066 = vst.msk [vmem:[%s216 + $0xa8] sm:$0xff] %vm411, %v1852
      %2067 = vst.msk [vmem:[%s216 + $0xb0] sm:$0xff] %vm411, %v1871
      %2068 = vst.msk [vmem:[%s216 + $0xb8] sm:$0xff] %vm411, %v1890
      %2069 = vst.msk [vmem:[%s216 + $0xc0] sm:$0xff] %vm411, %v1909
      %2070 = vst.msk [vmem:[%s216 + $0xc8] sm:$0xff] %vm411, %v1928
      %2071 = vst.msk [vmem:[%s216 + $0xd0] sm:$0xff] %vm411, %v1947
      %2072 = vst.msk [vmem:[%s216 + $0xd8] sm:$0xff] %vm411, %v1966
      %2073 = vst.msk [vmem:[%s216 + $0xe0] sm:$0xff] %vm411, %v1985
      %2074 = vst.msk [vmem:[%s216 + $0xe8] sm:$0xff] %vm411, %v2004
      %2075 = vst.msk [vmem:[%s216 + $0xf0] sm:$0xff] %vm411, %v2023
      %2076 = vst.msk [vmem:[%s216 + $0xf8] sm:$0xff] %vm411, %v2042
      %s2077 = smul.u32 32, %s14
      %p2078 = scmp.lt.s32.totalorder %s2077, 63
      %s2079 = scalar_select %p2078, %s2077, 63
      %s2080 = smul.addr %s2079, 8
      %s2081 = scalar_lea.vmem %s3, %s2080
      // Predicated region
      $region33: #{fwd.50} parent=31 // pred_check
        %p2082 = pneg %p110
      $region34: #{fwd.50} parent=31 // pred_check_branch
        %2084 = sbr.rel (%p2082) target = $region36
      $region35: #{fwd.50} parent=31 // pred_region
        %s2085 = smul.u32 32, %s14
      $region36: #{fwd.50} parent=31 // pred_fallthru
        _
    $region32: #{fwd.50} parent=5 // pred_fallthru
      _
    %p2086 = scmp.le.s32.totalorder 2, %s9
    // Predicated region
    $region37: #{fwd.50} parent=5 // pred_check
      %p2087 = pneg %p2086
    $region38: #{fwd.50} parent=5 // pred_check_branch
      %2089 = sbr.rel (%p2087) target = $region40
    $region39: #{fwd.50} parent=5 // pred_region
      %s2090 = ssub.s32 %s9, 2
      // Predicated region
      $region41: #{fwd.50} parent=39 // pred_check
        %p2091 = pneg %p116
      $region42: #{fwd.50} parent=39 // pred_check_branch
        %2093 = sbr.rel (%p2091) target = $region44
      $region43: #{fwd.50} parent=39 // pred_region
        %s2094 = smul.u32 32, %s15
        %p2095 = scmp.lt.s32.totalorder %s2094, 63
        %s2096 = scalar_select %p2095, %s2094, 63
        %s2097 = smul.addr %s2096, 8
        %s2098 = scalar_lea.vmem %s3, %s2097
      $region44: #{fwd.50} parent=39 // pred_fallthru
        _
    $region40: #{fwd.50} parent=5 // pred_fallthru
      _
  $region6: #{fwd.50} parent=0 // loop_footer
    %s13 = sadd.s32 1, %s9
  $region7: #{fwd.50} parent=0 // loop_footer_branch
    %8 = sbr.rel target = $region3
  $region8: #{fwd.50} parent=0 // loop_exit
    _

// kernel: fwd.72
$region0: #{fwd.72}
  #allocation0 [shape = 'u32[]', space=smem, size = 0x4, offset = 0x4, fixed_abs, tag = 'smem constant byte address 0x4 - core index']
  #allocation1 [shape = 'u32[72,128]{1,0:T(1,128)}', space=vmem, size = 0x9000, scoped, tag = 'internal scratch']
  #allocation2 [shape = 'f32[1,1]{1,0:T(1,128)S(1)}', space=vmem, size = 0x200, scoped, tag = 'scoped memory for fwd.72']
  %s0 = inlined_call_operand.vmem [shape: f32[2,64], index: 0, kind: input, shape index: {}]
  %s1 = inlined_call_operand.vmem [shape: f32[64,32], index: 1, kind: input, shape index: {}]
  %s2 = inlined_call_operand.vmem [shape: f32[1,32], index: 2, kind: input, shape index: {}, may-alias: {2,4,6}]
  %s3 = inlined_call_operand.vmem [shape: f32[32,32], index: 3, kind: input, shape index: {}]
  %s4 = inlined_call_operand.vmem [shape: f32[1,32], index: 4, kind: input, shape index: {}, may-alias: {2,4,6}]
  %s5 = inlined_call_operand.vmem [shape: f32[32,32], index: 5, kind: input, shape index: {}]
  %s6 = inlined_call_operand.vmem [shape: f32[1,32], index: 6, kind: input, shape index: {}, may-alias: {2,4,6}]
  %s7 = inlined_call_operand.vmem [shape: f32[32,1], index: 7, kind: input, shape index: {}]
  %s8 = inlined_call_operand.<no memory space> [shape: f32[1,1], index: 8, kind: input, shape index: {}]
  %s9 = inlined_call_operand.vmem [shape: f32[2,1], index: 9, kind: output, shape index: {}]
  %s10 = sld [smem:[#allocation0]]
  $region46: #{fwd.72} parent=0
    _
  %s12 = ssub.s32 1, %s10
  %s13 = scalar_select 0, %s12, %s10
  %v14 = vstv %s8
  %15 = vst [vmem:[#allocation2] sm:$0x1] %v14
  // Predicated region
  $region2: #{fwd.72} parent=0 // pred_check
    _
  $region3: #{fwd.72} parent=0 // pred_check_branch
    %17 = sbr.rel (0) target = $region5
  $region4: #{fwd.72} parent=0 // pred_region
    _
  $region5: #{fwd.72} parent=0 // pred_fallthru
    _
  // Predicated region
  $region6: #{fwd.72} parent=0 // pred_check
    _
  $region7: #{fwd.72} parent=0 // pred_check_branch
    %19 = sbr.rel (0) target = $region9
  $region8: #{fwd.72} parent=0 // pred_region
    _
  $region9: #{fwd.72} parent=0 // pred_fallthru
    _
  // Predicated region
  $region10: #{fwd.72} parent=0 // pred_check
    _
  $region11: #{fwd.72} parent=0 // pred_check_branch
    %21 = sbr.rel (0) target = $region13
  $region12: #{fwd.72} parent=0 // pred_region
    _
  $region13: #{fwd.72} parent=0 // pred_fallthru
    _
  // Predicated region
  $region14: #{fwd.72} parent=0 // pred_check
    _
  $region15: #{fwd.72} parent=0 // pred_check_branch
    %23 = sbr.rel (0) target = $region17
  $region16: #{fwd.72} parent=0 // pred_region
    _
  $region17: #{fwd.72} parent=0 // pred_fallthru
    _
  // Predicated region
  $region18: #{fwd.72} parent=0 // pred_check
    _
  $region19: #{fwd.72} parent=0 // pred_check_branch
    %25 = sbr.rel (0) target = $region21
  $region20: #{fwd.72} parent=0 // pred_region
    _
  $region21: #{fwd.72} parent=0 // pred_fallthru
    _
  // Predicated region
  $region22: #{fwd.72} parent=0 // pred_check
    _
  $region23: #{fwd.72} parent=0 // pred_check_branch
    %27 = sbr.rel (0) target = $region25
  $region24: #{fwd.72} parent=0 // pred_region
    _
  $region25: #{fwd.72} parent=0 // pred_fallthru
    _
  // Predicated region
  $region26: #{fwd.72} parent=0 // pred_check
    _
  $region27: #{fwd.72} parent=0 // pred_check_branch
    %29 = sbr.rel (0) target = $region29
  $region28: #{fwd.72} parent=0 // pred_region
    _
  $region29: #{fwd.72} parent=0 // pred_fallthru
    _
  // Predicated region
  $region30: #{fwd.72} parent=0 // pred_check
    _
  $region31: #{fwd.72} parent=0 // pred_check_branch
    %31 = sbr.rel (0) target = $region33
  $region32: #{fwd.72} parent=0 // pred_region
    _
  $region33: #{fwd.72} parent=0 // pred_fallthru
    _
  // Predicated region
  $region34: #{fwd.72} parent=0 // pred_check
    _
  $region35: #{fwd.72} parent=0 // pred_check_branch
    %33 = sbr.rel (0) target = $region37
  $region36: #{fwd.72} parent=0 // pred_region
    _
  $region37: #{fwd.72} parent=0 // pred_fallthru
    _
  %v35 = vld [vmem:[%s0] sm:$0x3]
  %v36 = vpack.c.bf16 %v35, %v35
  %v37 = vld [vmem:[%s1] sm:$0xff]
  %v38 = vld [vmem:[%s1 + $0x8] sm:$0xff]
  %v39 = vld [vmem:[%s1 + $0x10] sm:$0xff]
  %v40 = vld [vmem:[%s1 + $0x18] sm:$0xff]
  %v41 = vld [vmem:[%s1 + $0x20] sm:$0xff]
  %v42 = vld [vmem:[%s1 + $0x28] sm:$0xff]
  %v43 = vld [vmem:[%s1 + $0x30] sm:$0xff]
  %v44 = vld [vmem:[%s1 + $0x38] sm:$0xff]
  %v45 = vpack.c.bf16 %v38, %v37
  %v46 = vpack.c.bf16 %v40, %v39
  %v47 = vpack.c.bf16 %v42, %v41
  %v48 = vpack.c.bf16 %v44, %v43
  %v49 = vld [vmem:[%s2] sm:$0x1]
  %v51 = vperm.slane %v49, 0
  %vm53 = vcmask 523264
  %v55 = vsel %vm53, %v36, 0
  %57 = vmatpush.bf16.msra.mxu0 0
  %58 = vmatpush.bf16.msra.mxu0 0
  %59 = vmatpush.bf16.msra.mxu0 0
  %60 = vmatpush.bf16.msra.mxu0 0
  %61 = vmatpush.bf16.msra.mxu0 %v48
  %62 = vmatpush.bf16.msra.mxu0 %v47
  %63 = vmatpush.bf16.msra.mxu0 %v46
  %64 = vmatpush.bf16.msra.mxu0 %v45
  %65 = vmatmul.bf16.gmra.mxu0 %v55
  %v66 = vpop.f32.mrf.mxu0
  %v67 = vadd.f32 %v51, %v66
  %v68 = vpop.f32.mrf.mxu0
  %69 = vdwg.mxu0
  %v70 = vmax.f32 %v67, 0.0
  %v71 = vpack.c.bf16 %v70, %v70
  %v72 = vld [vmem:[%s3] sm:$0xff]
  %v73 = vld [vmem:[%s3 + $0x8] sm:$0xff]
  %v74 = vld [vmem:[%s3 + $0x10] sm:$0xff]
  %v75 = vld [vmem:[%s3 + $0x18] sm:$0xff]
  %v76 = vpack.c.bf16 %v73, %v72
  %v77 = vpack.c.bf16 %v75, %v74
  %v78 = vld [vmem:[%s4] sm:$0x1]
  %v80 = vperm.slane %v78, 0
  %vm82 = vcmask 261120
  %v84 = vsel %vm82, %v71, 0
  %86 = vmatpush.bf16.msra.mxu0 0
  %87 = vmatpush.bf16.msra.mxu0 0
  %88 = vmatpush.bf16.msra.mxu0 0
  %89 = vmatpush.bf16.msra.mxu0 0
  %90 = vmatpush.bf16.msra.mxu0 0
  %91 = vmatpush.bf16.msra.mxu0 0
  %92 = vmatpush.bf16.msra.mxu0 %v77
  %93 = vmatpush.bf16.msra.mxu0 %v76
  %94 = vmatmul.bf16.gmra.mxu0 %v84
  %v95 = vpop.f32.mrf.mxu0
  %v96 = vadd.f32 %v80, %v95
  %v97 = vpop.f32.mrf.mxu0
  %98 = vdwg.mxu0
  %v99 = vmax.f32 %v96, 0.0
  %v100 = vpack.c.bf16 %v99, %v99
  %v101 = vld [vmem:[%s5] sm:$0xff]
  %v102 = vld [vmem:[%s5 + $0x8] sm:$0xff]
  %v103 = vld [vmem:[%s5 + $0x10] sm:$0xff]
  %v104 = vld [vmem:[%s5 + $0x18] sm:$0xff]
  %v105 = vpack.c.bf16 %v102, %v101
  %v106 = vpack.c.bf16 %v104, %v103
  %v107 = vld [vmem:[%s6] sm:$0x1]
  %v109 = vperm.slane %v107, 0
  %v112 = vsel %vm82, %v100, 0
  %114 = vmatpush.bf16.msra.mxu0 0
  %115 = vmatpush.bf16.msra.mxu0 0
  %116 = vmatpush.bf16.msra.mxu0 0
  %117 = vmatpush.bf16.msra.mxu0 0
  %118 = vmatpush.bf16.msra.mxu0 0
  %119 = vmatpush.bf16.msra.mxu0 0
  %120 = vmatpush.bf16.msra.mxu0 %v106
  %121 = vmatpush.bf16.msra.mxu0 %v105
  %122 = vmatmul.bf16.gmra.mxu0 %v112
  %v123 = vpop.f32.mrf.mxu0
  %v124 = vadd.f32 %v109, %v123
  %v125 = vpop.f32.mrf.mxu0
  %126 = vdwg.mxu0
  %v127 = vmax.f32 %v124, 0.0
  %v128 = vpack.c.bf16 %v127, %v127
  %v129 = vld [vmem:[%s7] sm:$0xff]
  %v130 = vld [vmem:[%s7 + $0x8] sm:$0xff]
  %v131 = vld [vmem:[%s7 + $0x10] sm:$0xff]
  %v132 = vld [vmem:[%s7 + $0x18] sm:$0xff]
  %v133 = vpack.c.bf16 %v130, %v129
  %v134 = vpack.c.bf16 %v132, %v131
  %v135 = vld [vmem:[#allocation2] sm:$0x1]
  %v137 = vperm.slane %v135, 0
  %v140 = vsel %vm82, %v128, 0
  %142 = vmatpush.bf16.msra.mxu0 0
  %143 = vmatpush.bf16.msra.mxu0 0
  %144 = vmatpush.bf16.msra.mxu0 0
  %145 = vmatpush.bf16.msra.mxu0 0
  %146 = vmatpush.bf16.msra.mxu0 0
  %147 = vmatpush.bf16.msra.mxu0 0
  %148 = vmatpush.bf16.msra.mxu0 %v134
  %149 = vmatpush.bf16.msra.mxu0 %v133
  %150 = vmatmul.bf16.gmra.mxu0 %v140
  %v151 = vpop.f32.mrf.mxu0
  %v152 = vadd.f32 %v137, %v151
  %v153 = vpop.f32.mrf.mxu0
  %154 = vdwg.mxu0
  %vm155 = vcmask 1024
  %156 = vst.msk [vmem:[%s9] sm:$0x3] %vm155, %v152
  // Predicated region
  $region38: #{fwd.72} parent=0 // pred_check
    _
  $region39: #{fwd.72} parent=0 // pred_check_branch
    %158 = sbr.rel (0) target = $region41
  $region40: #{fwd.72} parent=0 // pred_region
    _
  $region41: #{fwd.72} parent=0 // pred_fallthru
    _
  // Predicated region
  $region42: #{fwd.72} parent=0 // pred_check
    _
  $region43: #{fwd.72} parent=0 // pred_check_branch
    %160 = sbr.rel (0) target = $region45
  $region44: #{fwd.72} parent=0 // pred_region
    _
  $region45: #{fwd.72} parent=0 // pred_fallthru
    _

// kernel: fwd.90
$region0: #{fwd.90}
  #allocation0 [shape = 'u32[]', space=smem, size = 0x4, offset = 0x4, fixed_abs, tag = 'smem constant byte address 0x4 - core index']
  #allocation1 [shape = 'u32[72,128]{1,0:T(1,128)}', space=vmem, size = 0x9000, scoped, tag = 'internal scratch']
  %s0 = inlined_call_operand.vmem [shape: f32[96,64], index: 0, kind: input, shape index: {}]
  %s1 = inlined_call_operand.vmem [shape: f32[1,64], index: 1, kind: input, shape index: {}]
  %s2 = inlined_call_operand.vmem [shape: f32[1,64], index: 2, kind: input, shape index: {}]
  %s3 = inlined_call_operand.vmem [shape: f32[64,64], index: 3, kind: input, shape index: {}]
  %s4 = inlined_call_operand.vmem [shape: f32[1,64], index: 4, kind: input, shape index: {}]
  %s5 = inlined_call_operand.vmem [shape: f32[96,64], index: 5, kind: output, shape index: {}]
  %s6 = sld [smem:[#allocation0]]
  $region53: #{fwd.90} parent=0
    _
  %s8 = ssub.s32 1, %s6
  %s9 = scalar_select 0, %s8, %s6
  loop: start=0, step=1, limit=4
  $region2: #{fwd.90} parent=0 // loop_pre_header
    _
  $region3: #{fwd.90} parent=0 // loop_header
    %s11 = sphi 0, %s15
    %p12 = scmp.ge.s32.totalorder %s11, 4
    %s21 = sphi 0, %s23
    %s24 = sphi 0, %s21
    %s25 = sphi 0, %s24
    %s41 = sphi 0, %s25
    %s45 = sphi 0, %s45
    %s47 = sphi 0, %s45
    %s48 = sphi 0, %s47
    %s62 = sphi 0, %s48
    %s66 = sphi 0, %s66
    %s68 = sphi 0, %s66
    %s69 = sphi 0, %s68
    %s83 = sphi 0, %s69
    %s87 = sphi 0, %s87
    %s89 = sphi 0, %s87
    %s90 = sphi 0, %s89
    %s104 = sphi 0, %s90
    %s108 = sphi 0, %s108
    %s110 = sphi 0, %s108
    %s111 = sphi 0, %s110
    %s125 = sphi 0, %s111
    %s131 = sphi 0, %s133
    %s134 = sphi 0, %s131
    %s135 = sphi 0, %s134
    %s151 = sphi 0, %s135
  $region4: #{fwd.90} parent=0 // loop_header_branch
    %14 = sbr.rel (%p12) target = $region8
  $region5: #{fwd.90} parent=0 // loop_body
    %s16 = ssub.s32 %s11, 1
    %s17 = ssub.s32 %s11, 2
    %s18 = sadd.s32 %s11, 1
    %s19 = ssub.s32 %s11, %s18
    %p20 = scmp.eq.s32.totalorder %s19, 0
    %s22 = sadd.s32 %s21, 1
    %s23 = scalar_select %p20, %s21, %s22
    %p26 = pneg %p20
    %p27 = scmp.eq.s32.totalorder %s11, 1
    %p28 = por %p26, %p27
    %p29 = scmp.ne.s32.totalorder %s21, %s24
    %p30 = scmp.eq.s32.totalorder %s11, 0
    %p31 = por %p29, %p30
    %p32 = scmp.ne.s32.totalorder %s21, %s24
    %p33 = scmp.eq.s32.totalorder %s16, 1
    %p34 = por %p32, %p33
    %p35 = scmp.ne.s32.totalorder %s24, %s25
    %p36 = scmp.eq.s32.totalorder %s16, 0
    %p37 = por %p35, %p36
    %p38 = scmp.ne.s32.totalorder %s24, %s25
    %p39 = scmp.eq.s32.totalorder %s17, 1
    %p40 = por %p38, %p39
    %p42 = scmp.ne.s32.totalorder %s25, %s41
    %p43 = scmp.eq.s32.totalorder %s17, 0
    %p44 = por %p42, %p43
    %s46 = sadd.s32 %s45, 1
    %p49 = scmp.eq.s32.totalorder %s11, 1
    %p50 = scmp.ne.s32.totalorder %s45, %s47
    %p51 = scmp.eq.s32.totalorder %s11, 0
    %p52 = por %p50, %p51
    %p53 = scmp.ne.s32.totalorder %s45, %s47
    %p54 = scmp.eq.s32.totalorder %s16, 1
    %p55 = por %p53, %p54
    %p56 = scmp.ne.s32.totalorder %s47, %s48
    %p57 = scmp.eq.s32.totalorder %s16, 0
    %p58 = por %p56, %p57
    %p59 = scmp.ne.s32.totalorder %s47, %s48
    %p60 = scmp.eq.s32.totalorder %s17, 1
    %p61 = por %p59, %p60
    %p63 = scmp.ne.s32.totalorder %s48, %s62
    %p64 = scmp.eq.s32.totalorder %s17, 0
    %p65 = por %p63, %p64
    %s67 = sadd.s32 %s66, 1
    %p70 = scmp.eq.s32.totalorder %s11, 1
    %p71 = scmp.ne.s32.totalorder %s66, %s68
    %p72 = scmp.eq.s32.totalorder %s11, 0
    %p73 = por %p71, %p72
    %p74 = scmp.ne.s32.totalorder %s66, %s68
    %p75 = scmp.eq.s32.totalorder %s16, 1
    %p76 = por %p74, %p75
    %p77 = scmp.ne.s32.totalorder %s68, %s69
    %p78 = scmp.eq.s32.totalorder %s16, 0
    %p79 = por %p77, %p78
    %p80 = scmp.ne.s32.totalorder %s68, %s69
    %p81 = scmp.eq.s32.totalorder %s17, 1
    %p82 = por %p80, %p81
    %p84 = scmp.ne.s32.totalorder %s69, %s83
    %p85 = scmp.eq.s32.totalorder %s17, 0
    %p86 = por %p84, %p85
    %s88 = sadd.s32 %s87, 1
    %p91 = scmp.eq.s32.totalorder %s11, 1
    %p92 = scmp.ne.s32.totalorder %s87, %s89
    %p93 = scmp.eq.s32.totalorder %s11, 0
    %p94 = por %p92, %p93
    %p95 = scmp.ne.s32.totalorder %s87, %s89
    %p96 = scmp.eq.s32.totalorder %s16, 1
    %p97 = por %p95, %p96
    %p98 = scmp.ne.s32.totalorder %s89, %s90
    %p99 = scmp.eq.s32.totalorder %s16, 0
    %p100 = por %p98, %p99
    %p101 = scmp.ne.s32.totalorder %s89, %s90
    %p102 = scmp.eq.s32.totalorder %s17, 1
    %p103 = por %p101, %p102
    %p105 = scmp.ne.s32.totalorder %s90, %s104
    %p106 = scmp.eq.s32.totalorder %s17, 0
    %p107 = por %p105, %p106
    %s109 = sadd.s32 %s108, 1
    %p112 = scmp.eq.s32.totalorder %s11, 1
    %p113 = scmp.ne.s32.totalorder %s108, %s110
    %p114 = scmp.eq.s32.totalorder %s11, 0
    %p115 = por %p113, %p114
    %p116 = scmp.ne.s32.totalorder %s108, %s110
    %p117 = scmp.eq.s32.totalorder %s16, 1
    %p118 = por %p116, %p117
    %p119 = scmp.ne.s32.totalorder %s110, %s111
    %p120 = scmp.eq.s32.totalorder %s16, 0
    %p121 = por %p119, %p120
    %p122 = scmp.ne.s32.totalorder %s110, %s111
    %p123 = scmp.eq.s32.totalorder %s17, 1
    %p124 = por %p122, %p123
    %p126 = scmp.ne.s32.totalorder %s111, %s125
    %p127 = scmp.eq.s32.totalorder %s17, 0
    %p128 = por %p126, %p127
    %s129 = ssub.s32 %s11, %s18
    %p130 = scmp.eq.s32.totalorder %s129, 0
    %s132 = sadd.s32 %s131, 1
    %s133 = scalar_select %p130, %s131, %s132
    %p136 = pneg %p130
    %p137 = scmp.eq.s32.totalorder %s11, 1
    %p138 = por %p136, %p137
    %p139 = scmp.ne.s32.totalorder %s131, %s134
    %p140 = scmp.eq.s32.totalorder %s11, 0
    %p141 = por %p139, %p140
    %p142 = scmp.ne.s32.totalorder %s131, %s134
    %p143 = scmp.eq.s32.totalorder %s16, 1
    %p144 = por %p142, %p143
    %p145 = scmp.ne.s32.totalorder %s134, %s135
    %p146 = scmp.eq.s32.totalorder %s16, 0
    %p147 = por %p145, %p146
    %p148 = scmp.ne.s32.totalorder %s134, %s135
    %p149 = scmp.eq.s32.totalorder %s17, 1
    %p150 = por %p148, %p149
    %p152 = scmp.ne.s32.totalorder %s135, %s151
    %p153 = scmp.eq.s32.totalorder %s17, 0
    %p154 = por %p152, %p153
    %p155 = scmp.le.s32.totalorder 1, %s11
    %p156 = scmp.lt.s32.totalorder %s11, 3
    %p157 = pnand %p155, %p156
    %p158 = pneg %p157
    // Predicated region
    $region9: #{fwd.90} parent=5 // pred_check
      _
    $region10: #{fwd.90} parent=5 // pred_check_branch
      %160 = sbr.rel (%p157) target = $region12
    $region11: #{fwd.90} parent=5 // pred_region
      %s161 = ssub.s32 %s11, 1
      // Predicated region
      $region13: #{fwd.90} parent=11 // pred_check
        %p162 = pneg %p58
      $region14: #{fwd.90} parent=11 // pred_check_branch
        %164 = sbr.rel (%p162) target = $region16
      $region15: #{fwd.90} parent=11 // pred_region
        _
      $region16: #{fwd.90} parent=11 // pred_fallthru
        _
      // Predicated region
      $region17: #{fwd.90} parent=11 // pred_check
        %p165 = pneg %p79
      $region18: #{fwd.90} parent=11 // pred_check_branch
        %167 = sbr.rel (%p165) target = $region20
      $region19: #{fwd.90} parent=11 // pred_region
        _
      $region20: #{fwd.90} parent=11 // pred_fallthru
        _
      // Predicated region
      $region21: #{fwd.90} parent=11 // pred_check
        %p168 = pneg %p100
      $region22: #{fwd.90} parent=11 // pred_check_branch
        %170 = sbr.rel (%p168) target = $region24
      $region23: #{fwd.90} parent=11 // pred_region
        _
      $region24: #{fwd.90} parent=11 // pred_fallthru
        _
      // Predicated region
      $region25: #{fwd.90} parent=11 // pred_check
        %p171 = pneg %p121
      $region26: #{fwd.90} parent=11 // pred_check_branch
        %173 = sbr.rel (%p171) target = $region28
      $region27: #{fwd.90} parent=11 // pred_region
        _
      $region28: #{fwd.90} parent=11 // pred_fallthru
        _
    $region12: #{fwd.90} parent=5 // pred_fallthru
      _
    %p174 = scmp.lt.s32.totalorder %s11, 2
    // Predicated region
    $region29: #{fwd.90} parent=5 // pred_check
      %p175 = pneg %p174
    $region30: #{fwd.90} parent=5 // pred_check_branch
      %177 = sbr.rel (%p175) target = $region32
    $region31: #{fwd.90} parent=5 // pred_region
      // Predicated region
      $region33: #{fwd.90} parent=31 // pred_check
        %p178 = pneg %p31
      $region34: #{fwd.90} parent=31 // pred_check_branch
        %180 = sbr.rel (%p178) target = $region36
      $region35: #{fwd.90} parent=31 // pred_region
        %s181 = smul.u32 6, %s11
        %p182 = scmp.lt.s32.totalorder %s181, 11
        %s183 = scalar_select %p182, %s181, 11
        %s184 = smul.addr %s183, 8
        %s185 = scalar_lea.vmem %s0, %s184
        %s186 = smul.u32 6, %s11
      $region36: #{fwd.90} parent=31 // pred_fallthru
        _
    $region32: #{fwd.90} parent=5 // pred_fallthru
      _
    %p187 = scmp.le.s32.totalorder 1, %s11
    %p188 = scmp.lt.s32.totalorder %s11, 3
    %p189 = pnand %p187, %p188
    %p190 = pneg %p189
    // Predicated region
    $region37: #{fwd.90} parent=5 // pred_check
      _
    $region38: #{fwd.90} parent=5 // pred_check_branch
      %192 = sbr.rel (%p189) target = $region40
    $region39: #{fwd.90} parent=5 // pred_region
      %s193 = ssub.s32 %s11, 1
      %s194 = smul.u32 6, %s16
      %p195 = scmp.lt.s32.totalorder %s194, 11
      %s196 = scalar_select %p195, %s194, 11
      %s197 = smul.addr %s196, 8
      %s198 = scalar_lea.vmem %s0, %s197
      %p199 = pneg %p37
      %p200 = pneg %p34
      %p201 = pneg %p58
      %p202 = pneg %p55
      %p203 = pneg %p79
      %p204 = pneg %p76
      %p205 = pneg %p100
      %p206 = pneg %p97
      %p207 = pneg %p121
      %p208 = pneg %p118
      %p209 = pneg %p147
      %p210 = pneg %p144
      %s211 = smul.u32 6, %s16
      %p212 = scmp.lt.s32.totalorder %s211, 11
      %s213 = scalar_select %p212, %s211, 11
      %s214 = smul.addr %s213, 8
      %s215 = scalar_lea.vmem %s5, %s214
      %s216 = smul.u32 6, %s16
      %p217 = scmp.lt.s32.totalorder %s216, 11
      %s218 = scalar_select %p217, %s216, 11
      %s219 = smul.addr %s218, 8
      %s220 = scalar_lea.vmem %s0, %s219
      %s221 = smul.u32 6, %s16
      %s222 = smul.u32 6, %s16
      %p223 = scmp.lt.s32.totalorder %s222, 11
      %s224 = scalar_select %p223, %s222, 11
      %s225 = smul.addr %s224, 8
      %s226 = scalar_lea.vmem %s5, %s225
      %s227 = smul.u32 6, %s16
      %v229 = vld [vmem:[%s220] sm:$0xff]
      %v230 = vld [vmem:[%s220 + $0x8] sm:$0xff]
      %v231 = vld [vmem:[%s220 + $0x10] sm:$0xff]
      %v232 = vld [vmem:[%s220 + $0x18] sm:$0xff]
      %v233 = vld [vmem:[%s220 + $0x20] sm:$0xff]
      %v234 = vld [vmem:[%s220 + $0x28] sm:$0xff]
      %vm235 = vcmask 523264
      %v236 = vsel %vm235, %v229, 0.0
      %237 = vadd.xlane.f32.xlu0 %v236
      %v238 = vpop.xlane.xlu0 %237
      %v239 = vsel %vm235, %v230, 0.0
      %240 = vadd.xlane.f32.xlu0 %v239
      %v241 = vpop.xlane.xlu0 %240
      %v242 = vsel %vm235, %v231, 0.0
      %243 = vadd.xlane.f32.xlu0 %v242
      %v244 = vpop.xlane.xlu0 %243
      %v245 = vsel %vm235, %v232, 0.0
      %246 = vadd.xlane.f32.xlu0 %v245
      %v247 = vpop.xlane.xlu0 %246
      %v248 = vsel %vm235, %v233, 0.0
      %249 = vadd.xlane.f32.xlu0 %v248
      %v250 = vpop.xlane.xlu0 %249
      %v251 = vsel %vm235, %v234, 0.0
      %252 = vadd.xlane.f32.xlu0 %v251
      %v253 = vpop.xlane.xlu0 %252
      %v254 = vrcp.pop 64.0
      %v255 = vmul.f32 64.0, %v254
      %v256 = vsub.f32 1.0, %v255
      %v257 = vmul.f32 %v254, %v256
      %v258 = vadd.f32 %v254, %v257
      %vm259 = vweird.f32 %v254
      %v260 = vsel %vm259, %v254, %v258
      %v261 = vmul.f32 %v238, %v260
      %v262 = vmul.f32 %v241, %v260
      %v263 = vmul.f32 %v244, %v260
      %v264 = vmul.f32 %v247, %v260
      %v265 = vmul.f32 %v250, %v260
      %v266 = vmul.f32 %v253, %v260
      %v267 = vsub.f32 %v229, %v261
      %v268 = vsub.f32 %v230, %v262
      %v269 = vsub.f32 %v231, %v263
      %v270 = vsub.f32 %v232, %v264
      %v271 = vsub.f32 %v233, %v265
      %v272 = vsub.f32 %v234, %v266
      %v273 = vmul.f32 %v267, %v267
      %v274 = vmul.f32 %v268, %v268
      %v275 = vmul.f32 %v269, %v269
      %v276 = vmul.f32 %v270, %v270
      %v277 = vmul.f32 %v271, %v271
      %v278 = vmul.f32 %v272, %v272
      %v279 = vsel %vm235, %v273, 0.0
      %280 = vadd.xlane.f32.xlu0 %v279
      %v281 = vpop.xlane.xlu0 %280
      %v282 = vsel %vm235, %v274, 0.0
      %283 = vadd.xlane.f32.xlu0 %v282
      %v284 = vpop.xlane.xlu0 %283
      %v285 = vsel %vm235, %v275, 0.0
      %286 = vadd.xlane.f32.xlu0 %v285
      %v287 = vpop.xlane.xlu0 %286
      %v288 = vsel %vm235, %v276, 0.0
      %289 = vadd.xlane.f32.xlu0 %v288
      %v290 = vpop.xlane.xlu0 %289
      %v291 = vsel %vm235, %v277, 0.0
      %292 = vadd.xlane.f32.xlu0 %v291
      %v293 = vpop.xlane.xlu0 %292
      %v294 = vsel %vm235, %v278, 0.0
      %295 = vadd.xlane.f32.xlu0 %v294
      %v296 = vpop.xlane.xlu0 %295
      %v297 = vmul.f32 %v281, %v260
      %v298 = vmul.f32 %v284, %v260
      %v299 = vmul.f32 %v287, %v260
      %v300 = vmul.f32 %v290, %v260
      %v301 = vmul.f32 %v293, %v260
      %v302 = vmul.f32 %v296, %v260
      %v303 = vadd.f32 %v297, 1e-05
      %v304 = vadd.f32 %v298, 1e-05
      %v305 = vadd.f32 %v299, 1e-05
      %v306 = vadd.f32 %v300, 1e-05
      %v307 = vadd.f32 %v301, 1e-05
      %v308 = vadd.f32 %v302, 1e-05
      %v309 = vrsqrt.pop %v303
      %v310 = vmul.f32 %v309, %v303
      %v311 = vmul.f32 %v310, %v309
      %v312 = vmul.f32 0.5, %v311
      %v313 = vsub.f32 1.5, %v312
      %v314 = vmul.f32 %v309, %v313
      %vm315 = vweird.f32 %v303
      %vm316 = vweird.f32 %v309
      %vm317 = vmor %vm315, %vm316
      %v318 = vsel %vm317, %v309, %v314
      %v319 = vrsqrt.pop %v304
      %v320 = vmul.f32 %v319, %v304
      %v321 = vmul.f32 %v320, %v319
      %v322 = vmul.f32 0.5, %v321
      %v323 = vsub.f32 1.5, %v322
      %v324 = vmul.f32 %v319, %v323
      %vm325 = vweird.f32 %v304
      %vm326 = vweird.f32 %v319
      %vm327 = vmor %vm325, %vm326
      %v328 = vsel %vm327, %v319, %v324
      %v329 = vrsqrt.pop %v305
      %v330 = vmul.f32 %v329, %v305
      %v331 = vmul.f32 %v330, %v329
      %v332 = vmul.f32 0.5, %v331
      %v333 = vsub.f32 1.5, %v332
      %v334 = vmul.f32 %v329, %v333
      %vm335 = vweird.f32 %v305
      %vm336 = vweird.f32 %v329
      %vm337 = vmor %vm335, %vm336
      %v338 = vsel %vm337, %v329, %v334
      %v339 = vrsqrt.pop %v306
      %v340 = vmul.f32 %v339, %v306
      %v341 = vmul.f32 %v340, %v339
      %v342 = vmul.f32 0.5, %v341
      %v343 = vsub.f32 1.5, %v342
      %v344 = vmul.f32 %v339, %v343
      %vm345 = vweird.f32 %v306
      %vm346 = vweird.f32 %v339
      %vm347 = vmor %vm345, %vm346
      %v348 = vsel %vm347, %v339, %v344
      %v349 = vrsqrt.pop %v307
      %v350 = vmul.f32 %v349, %v307
      %v351 = vmul.f32 %v350, %v349
      %v352 = vmul.f32 0.5, %v351
      %v353 = vsub.f32 1.5, %v352
      %v354 = vmul.f32 %v349, %v353
      %vm355 = vweird.f32 %v307
      %vm356 = vweird.f32 %v349
      %vm357 = vmor %vm355, %vm356
      %v358 = vsel %vm357, %v349, %v354
      %v359 = vrsqrt.pop %v308
      %v360 = vmul.f32 %v359, %v308
      %v361 = vmul.f32 %v360, %v359
      %v362 = vmul.f32 0.5, %v361
      %v363 = vsub.f32 1.5, %v362
      %v364 = vmul.f32 %v359, %v363
      %vm365 = vweird.f32 %v308
      %vm366 = vweird.f32 %v359
      %vm367 = vmor %vm365, %vm366
      %v368 = vsel %vm367, %v359, %v364
      %v369 = vmul.f32 %v267, %v318
      %v370 = vmul.f32 %v268, %v328
      %v371 = vmul.f32 %v269, %v338
      %v372 = vmul.f32 %v270, %v348
      %v373 = vmul.f32 %v271, %v358
      %v374 = vmul.f32 %v272, %v368
      %v375 = vld [vmem:[%s1] sm:$0x1]
      %v377 = vperm.slane %v375, 0
      %v379 = vmul.f32 %v369, %v377
      %v380 = vmul.f32 %v370, %v377
      %v381 = vmul.f32 %v371, %v377
      %v382 = vmul.f32 %v372, %v377
      %v383 = vmul.f32 %v373, %v377
      %v384 = vmul.f32 %v374, %v377
      %v385 = vld [vmem:[%s2] sm:$0x1]
      %v387 = vperm.slane %v385, 0
      %v389 = vadd.f32 %v379, %v387
      %v390 = vadd.f32 %v380, %v387
      %v391 = vadd.f32 %v381, %v387
      %v392 = vadd.f32 %v382, %v387
      %v393 = vadd.f32 %v383, %v387
      %v394 = vadd.f32 %v384, %v387
      %v395 = vpack.c.bf16 %v390, %v389
      %v396 = vpack.c.bf16 %v392, %v391
      %v397 = vpack.c.bf16 %v394, %v393
      %v398 = vld [vmem:[%s3] sm:$0xff]
      %v399 = vld [vmem:[%s3 + $0x8] sm:$0xff]
      %v400 = vld [vmem:[%s3 + $0x10] sm:$0xff]
      %v401 = vld [vmem:[%s3 + $0x18] sm:$0xff]
      %v402 = vld [vmem:[%s3 + $0x20] sm:$0xff]
      %v403 = vld [vmem:[%s3 + $0x28] sm:$0xff]
      %v404 = vld [vmem:[%s3 + $0x30] sm:$0xff]
      %v405 = vld [vmem:[%s3 + $0x38] sm:$0xff]
      %v406 = vpack.c.bf16 %v399, %v398
      %v407 = vpack.c.bf16 %v401, %v400
      %v408 = vpack.c.bf16 %v403, %v402
      %v409 = vpack.c.bf16 %v405, %v404
      %v410 = vld [vmem:[%s4] sm:$0x1]
      %v412 = vperm.slane %v410, 0
      %v415 = vsel %vm235, %v395, 0
      %v418 = vsel %vm235, %v396, 0
      %v421 = vsel %vm235, %v397, 0
      %423 = vmatpush.bf16.msra.mxu0 0
      %424 = vmatpush.bf16.msra.mxu0 0
      %425 = vmatpush.bf16.msra.mxu0 0
      %426 = vmatpush.bf16.msra.mxu0 0
      %427 = vmatpush.bf16.msra.mxu0 %v409
      %428 = vmatpush.bf16.msra.mxu0 %v408
      %429 = vmatpush.bf16.msra.mxu0 %v407
      %430 = vmatpush.bf16.msra.mxu0 %v406
      %431 = vmatmul.bf16.gmra.mxu0 %v415
      %v432 = vpop.f32.mrf.mxu0
      %v433 = vadd.f32 %v412, %v432
      %v434 = vpop.f32.mrf.mxu0
      %v435 = vadd.f32 %v412, %v434
      %436 = vmatmul.bf16.gmra.mxu0 %v418
      %v437 = vpop.f32.mrf.mxu0
      %v438 = vadd.f32 %v412, %v437
      %v439 = vpop.f32.mrf.mxu0
      %v440 = vadd.f32 %v412, %v439
      %441 = vmatmul.bf16.gmra.mxu0 %v421
      %v442 = vpop.f32.mrf.mxu0
      %v443 = vadd.f32 %v412, %v442
      %v444 = vpop.f32.mrf.mxu0
      %v445 = vadd.f32 %v412, %v444
      %446 = vdwg.mxu0
      %447 = vst.msk [vmem:[%s226] sm:$0xff] %vm235, %v433
      %448 = vst.msk [vmem:[%s226 + $0x8] sm:$0xff] %vm235, %v435
      %449 = vst.msk [vmem:[%s226 + $0x10] sm:$0xff] %vm235, %v438
      %450 = vst.msk [vmem:[%s226 + $0x18] sm:$0xff] %vm235, %v440
      %451 = vst.msk [vmem:[%s226 + $0x20] sm:$0xff] %vm235, %v443
      %452 = vst.msk [vmem:[%s226 + $0x28] sm:$0xff] %vm235, %v445
      %s453 = smul.u32 6, %s16
      %p454 = scmp.lt.s32.totalorder %s453, 11
      %s455 = scalar_select %p454, %s453, 11
      %s456 = smul.addr %s455, 8
      %s457 = scalar_lea.vmem %s5, %s456
      // Predicated region
      $region41: #{fwd.90} parent=39 // pred_check
        %p458 = pneg %p144
      $region42: #{fwd.90} parent=39 // pred_check_branch
        %460 = sbr.rel (%p458) target = $region44
      $region43: #{fwd.90} parent=39 // pred_region
        %s461 = smul.u32 6, %s16
      $region44: #{fwd.90} parent=39 // pred_fallthru
        _
    $region40: #{fwd.90} parent=5 // pred_fallthru
      _
    %p462 = scmp.le.s32.totalorder 2, %s11
    // Predicated region
    $region45: #{fwd.90} parent=5 // pred_check
      %p463 = pneg %p462
    $region46: #{fwd.90} parent=5 // pred_check_branch
      %465 = sbr.rel (%p463) target = $region48
    $region47: #{fwd.90} parent=5 // pred_region
      %s466 = ssub.s32 %s11, 2
      // Predicated region
      $region49: #{fwd.90} parent=47 // pred_check
        %p467 = pneg %p150
      $region50: #{fwd.90} parent=47 // pred_check_branch
        %469 = sbr.rel (%p467) target = $region52
      $region51: #{fwd.90} parent=47 // pred_region
        %s470 = smul.u32 6, %s17
        %p471 = scmp.lt.s32.totalorder %s470, 11
        %s472 = scalar_select %p471, %s470, 11
        %s473 = smul.addr %s472, 8
        %s474 = scalar_lea.vmem %s5, %s473
      $region52: #{fwd.90} parent=47 // pred_fallthru
        _
    $region48: #{fwd.90} parent=5 // pred_fallthru
      _
  $region6: #{fwd.90} parent=0 // loop_footer
    %s15 = sadd.s32 1, %s11
  $region7: #{fwd.90} parent=0 // loop_footer_branch
    %10 = sbr.rel target = $region3
  $region8: #{fwd.90} parent=0 // loop_exit
    _

// kernel: fwd.93
$region0: #{fwd.93}
  #allocation0 [shape = 'u32[]', space=smem, size = 0x4, offset = 0x4, fixed_abs, tag = 'smem constant byte address 0x4 - core index']
  #allocation1 [shape = 'u32[72,128]{1,0:T(1,128)}', space=vmem, size = 0x9000, scoped, tag = 'internal scratch']
  %s0 = inlined_call_operand.vmem [shape: f32[8,32], index: 0, kind: input, shape index: {}]
  %s1 = inlined_call_operand.vmem [shape: f32[32,27], index: 1, kind: input, shape index: {}]
  %s2 = inlined_call_operand.vmem [shape: f32[1,27], index: 2, kind: input, shape index: {}]
  %s3 = inlined_call_operand.hbm [shape: f32[8,27], index: 3, kind: output, shape index: {}]
  %s4 = sld [smem:[#allocation0]]
  $region22: #{fwd.93} parent=0
    _
  %s6 = ssub.s32 1, %s4
  %s7 = scalar_select 0, %s6, %s4
  $region1: #{fwd.93} parent=0
    #allocation2 [shape = 'u8[4096]{0}', space=vmem, size = 0x1000, scoped, tag = 'output window, operand 0, single buffered']
    #allocation3 [shape = 's32[1]{0}', space=sflag, size = 0x4, scoped, tag = 'scoped memory for fwd.93']
    %8 = vsyncpa [#allocation3], 0
    // Predicated region
    $region2: #{fwd.93} parent=1 // pred_check
      _
    $region3: #{fwd.93} parent=1 // pred_check_branch
      %10 = sbr.rel (0) target = $region5
    $region4: #{fwd.93} parent=1 // pred_region
      _
    $region5: #{fwd.93} parent=1 // pred_fallthru
      _
    // Predicated region
    $region6: #{fwd.93} parent=1 // pred_check
      _
    $region7: #{fwd.93} parent=1 // pred_check_branch
      %12 = sbr.rel (0) target = $region9
    $region8: #{fwd.93} parent=1 // pred_region
      _
    $region9: #{fwd.93} parent=1 // pred_fallthru
      _
    // Predicated region
    $region10: #{fwd.93} parent=1 // pred_check
      _
    $region11: #{fwd.93} parent=1 // pred_check_branch
      %14 = sbr.rel (0) target = $region13
    $region12: #{fwd.93} parent=1 // pred_region
      _
    $region13: #{fwd.93} parent=1 // pred_fallthru
      _
    %v16 = vld [vmem:[%s0] sm:$0xff]
    %v17 = vmax.f32 %v16, 0.0
    %v18 = vpack.c.bf16 %v17, %v17
    %v19 = vld [vmem:[%s1] sm:$0xff]
    %v20 = vld [vmem:[%s1 + $0x8] sm:$0xff]
    %v21 = vld [vmem:[%s1 + $0x10] sm:$0xff]
    %v22 = vld [vmem:[%s1 + $0x18] sm:$0xff]
    %v23 = vpack.c.bf16 %v20, %v19
    %v24 = vpack.c.bf16 %v22, %v21
    %v25 = vld [vmem:[%s2] sm:$0x1]
    %v27 = vperm.slane %v25, 0
    %vm29 = vcmask 261120
    %v31 = vsel %vm29, %v18, 0
    %33 = vmatpush.bf16.msra.mxu0 0
    %34 = vmatpush.bf16.msra.mxu0 0
    %35 = vmatpush.bf16.msra.mxu0 0
    %36 = vmatpush.bf16.msra.mxu0 0
    %37 = vmatpush.bf16.msra.mxu0 0
    %38 = vmatpush.bf16.msra.mxu0 0
    %39 = vmatpush.bf16.msra.mxu0 %v24
    %40 = vmatpush.bf16.msra.mxu0 %v23
    %41 = vmatmul.bf16.gmra.mxu0 %v31
    %v42 = vpop.f32.mrf.mxu0
    %v43 = vadd.f32 %v27, %v42
    %v44 = vpop.f32.mrf.mxu0
    %45 = vdwg.mxu0
    %vm46 = vcmask 220160
    %47 = vst.msk [vmem:[#allocation2] sm:$0xff] %vm46, %v43
    // Predicated region
    $region14: #{fwd.93} parent=1 // pred_check
      _
    $region15: #{fwd.93} parent=1 // pred_check_branch
      %49 = sbr.rel (0) target = $region17
    $region16: #{fwd.93} parent=1 // pred_region
      %51 = vsyncadd [#allocation3], 0
      %s53 = sshll.u32 [#allocation2], 4
      %s54 = int_to_ptr.vmem [resolvable:$true] %s53
      %s55 = sshll.u32 %s3, 4
      %s56 = int_to_ptr.hbm [resolvable:$true] %s55
      %58 = dma.vmem_to_hbm [thread:$0]  %s54, 128, %s56, [#allocation3]
    $region17: #{fwd.93} parent=1 // pred_fallthru
      _
    // Predicated region
    $region18: #{fwd.93} parent=1 // pred_check
      _
    $region19: #{fwd.93} parent=1 // pred_check_branch
      %60 = sbr.rel (0) target = $region21
    $region20: #{fwd.93} parent=1 // pred_region
      %62 = dma.done [#allocation3], 128
    $region21: #{fwd.93} parent=1 // pred_fallthru
      _
    %63 = vsyncpa [#allocation3], 1

// kernel: fwd.81
$region0: #{fwd.81}
  #allocation0 [shape = 'u32[]', space=smem, size = 0x4, offset = 0x4, fixed_abs, tag = 'smem constant byte address 0x4 - core index']
  #allocation1 [shape = 'u32[72,128]{1,0:T(1,128)}', space=vmem, size = 0x9000, scoped, tag = 'internal scratch']
  %s0 = inlined_call_operand.vmem [shape: f32[8,4,8], index: 0, kind: input, shape index: {}]
  %s1 = inlined_call_operand.vmem [shape: f32[8,48,8], index: 1, kind: input, shape index: {}]
  %s2 = inlined_call_operand.vmem [shape: f32[8,48,8], index: 2, kind: input, shape index: {}]
  %s3 = inlined_call_operand.vmem [shape: f32[8,4,8], index: 3, kind: output, shape index: {}]
  %s4 = sld [smem:[#allocation0]]
  $region45: #{fwd.81} parent=0
    _
  %s6 = ssub.s32 1, %s4
  %s7 = scalar_select 0, %s6, %s4
  loop: start=0, step=1, limit=4
  $region2: #{fwd.81} parent=0 // loop_pre_header
    _
  $region3: #{fwd.81} parent=0 // loop_header
    %s9 = sphi 0, %s13
    %p10 = scmp.ge.s32.totalorder %s9, 4
    %s19 = sphi 0, %s21
    %s22 = sphi 0, %s19
    %s23 = sphi 0, %s22
    %s39 = sphi 0, %s23
    %s45 = sphi 0, %s47
    %s48 = sphi 0, %s45
    %s49 = sphi 0, %s48
    %s65 = sphi 0, %s49
    %s71 = sphi 0, %s73
    %s74 = sphi 0, %s71
    %s75 = sphi 0, %s74
    %s91 = sphi 0, %s75
    %s97 = sphi 0, %s99
    %s100 = sphi 0, %s97
    %s101 = sphi 0, %s100
    %s117 = sphi 0, %s101
  $region4: #{fwd.81} parent=0 // loop_header_branch
    %12 = sbr.rel (%p10) target = $region8
  $region5: #{fwd.81} parent=0 // loop_body
    %s14 = ssub.s32 %s9, 1
    %s15 = ssub.s32 %s9, 2
    %s16 = sadd.s32 %s9, 1
    %s17 = ssub.s32 %s9, %s16
    %p18 = scmp.eq.s32.totalorder %s17, 0
    %s20 = sadd.s32 %s19, 1
    %s21 = scalar_select %p18, %s19, %s20
    %p24 = pneg %p18
    %p25 = scmp.eq.s32.totalorder %s9, 1
    %p26 = por %p24, %p25
    %p27 = scmp.ne.s32.totalorder %s19, %s22
    %p28 = scmp.eq.s32.totalorder %s9, 0
    %p29 = por %p27, %p28
    %p30 = scmp.ne.s32.totalorder %s19, %s22
    %p31 = scmp.eq.s32.totalorder %s14, 1
    %p32 = por %p30, %p31
    %p33 = scmp.ne.s32.totalorder %s22, %s23
    %p34 = scmp.eq.s32.totalorder %s14, 0
    %p35 = por %p33, %p34
    %p36 = scmp.ne.s32.totalorder %s22, %s23
    %p37 = scmp.eq.s32.totalorder %s15, 1
    %p38 = por %p36, %p37
    %p40 = scmp.ne.s32.totalorder %s23, %s39
    %p41 = scmp.eq.s32.totalorder %s15, 0
    %p42 = por %p40, %p41
    %s43 = ssub.s32 %s9, %s16
    %p44 = scmp.eq.s32.totalorder %s43, 0
    %s46 = sadd.s32 %s45, 1
    %s47 = scalar_select %p44, %s45, %s46
    %p50 = pneg %p44
    %p51 = scmp.eq.s32.totalorder %s9, 1
    %p52 = por %p50, %p51
    %p53 = scmp.ne.s32.totalorder %s45, %s48
    %p54 = scmp.eq.s32.totalorder %s9, 0
    %p55 = por %p53, %p54
    %p56 = scmp.ne.s32.totalorder %s45, %s48
    %p57 = scmp.eq.s32.totalorder %s14, 1
    %p58 = por %p56, %p57
    %p59 = scmp.ne.s32.totalorder %s48, %s49
    %p60 = scmp.eq.s32.totalorder %s14, 0
    %p61 = por %p59, %p60
    %p62 = scmp.ne.s32.totalorder %s48, %s49
    %p63 = scmp.eq.s32.totalorder %s15, 1
    %p64 = por %p62, %p63
    %p66 = scmp.ne.s32.totalorder %s49, %s65
    %p67 = scmp.eq.s32.totalorder %s15, 0
    %p68 = por %p66, %p67
    %s69 = ssub.s32 %s9, %s16
    %p70 = scmp.eq.s32.totalorder %s69, 0
    %s72 = sadd.s32 %s71, 1
    %s73 = scalar_select %p70, %s71, %s72
    %p76 = pneg %p70
    %p77 = scmp.eq.s32.totalorder %s9, 1
    %p78 = por %p76, %p77
    %p79 = scmp.ne.s32.totalorder %s71, %s74
    %p80 = scmp.eq.s32.totalorder %s9, 0
    %p81 = por %p79, %p80
    %p82 = scmp.ne.s32.totalorder %s71, %s74
    %p83 = scmp.eq.s32.totalorder %s14, 1
    %p84 = por %p82, %p83
    %p85 = scmp.ne.s32.totalorder %s74, %s75
    %p86 = scmp.eq.s32.totalorder %s14, 0
    %p87 = por %p85, %p86
    %p88 = scmp.ne.s32.totalorder %s74, %s75
    %p89 = scmp.eq.s32.totalorder %s15, 1
    %p90 = por %p88, %p89
    %p92 = scmp.ne.s32.totalorder %s75, %s91
    %p93 = scmp.eq.s32.totalorder %s15, 0
    %p94 = por %p92, %p93
    %s95 = ssub.s32 %s9, %s16
    %p96 = scmp.eq.s32.totalorder %s95, 0
    %s98 = sadd.s32 %s97, 1
    %s99 = scalar_select %p96, %s97, %s98
    %p102 = pneg %p96
    %p103 = scmp.eq.s32.totalorder %s9, 1
    %p104 = por %p102, %p103
    %p105 = scmp.ne.s32.totalorder %s97, %s100
    %p106 = scmp.eq.s32.totalorder %s9, 0
    %p107 = por %p105, %p106
    %p108 = scmp.ne.s32.totalorder %s97, %s100
    %p109 = scmp.eq.s32.totalorder %s14, 1
    %p110 = por %p108, %p109
    %p111 = scmp.ne.s32.totalorder %s100, %s101
    %p112 = scmp.eq.s32.totalorder %s14, 0
    %p113 = por %p111, %p112
    %p114 = scmp.ne.s32.totalorder %s100, %s101
    %p115 = scmp.eq.s32.totalorder %s15, 1
    %p116 = por %p114, %p115
    %p118 = scmp.ne.s32.totalorder %s101, %s117
    %p119 = scmp.eq.s32.totalorder %s15, 0
    %p120 = por %p118, %p119
    %p121 = scmp.le.s32.totalorder 1, %s9
    %p122 = scmp.lt.s32.totalorder %s9, 3
    %p123 = pnand %p121, %p122
    %p124 = pneg %p123
    // Predicated region
    $region9: #{fwd.81} parent=5 // pred_check
      _
    $region10: #{fwd.81} parent=5 // pred_check_branch
      %126 = sbr.rel (%p123) target = $region12
    $region11: #{fwd.81} parent=5 // pred_region
      %s127 = ssub.s32 %s9, 1
    $region12: #{fwd.81} parent=5 // pred_fallthru
      _
    %p128 = scmp.lt.s32.totalorder %s9, 2
    // Predicated region
    $region13: #{fwd.81} parent=5 // pred_check
      %p129 = pneg %p128
    $region14: #{fwd.81} parent=5 // pred_check_branch
      %131 = sbr.rel (%p129) target = $region16
    $region15: #{fwd.81} parent=5 // pred_region
      // Predicated region
      $region17: #{fwd.81} parent=15 // pred_check
        %p132 = pneg %p29
      $region18: #{fwd.81} parent=15 // pred_check_branch
        %134 = sbr.rel (%p132) target = $region20
      $region19: #{fwd.81} parent=15 // pred_region
        %s135 = smul.u32 4, %s9
        %p136 = scmp.lt.s32.totalorder %s135, 7
        %s137 = scalar_select %p136, %s135, 7
        %s138 = smul.addr %s137, 4
        %s139 = scalar_lea.vmem %s0, %s138
        %s140 = smul.u32 4, %s9
      $region20: #{fwd.81} parent=15 // pred_fallthru
        _
      // Predicated region
      $region21: #{fwd.81} parent=15 // pred_check
        %p141 = pneg %p55
      $region22: #{fwd.81} parent=15 // pred_check_branch
        %143 = sbr.rel (%p141) target = $region24
      $region23: #{fwd.81} parent=15 // pred_region
        %s144 = smul.u32 4, %s9
        %p145 = scmp.lt.s32.totalorder %s144, 7
        %s146 = scalar_select %p145, %s144, 7
        %s147 = smul.addr %s146, 6
        %s148 = smul.addr %s147, 8
        %s149 = scalar_lea.vmem %s1, %s148
        %s150 = smul.u32 4, %s9
      $region24: #{fwd.81} parent=15 // pred_fallthru
        _
      // Predicated region
      $region25: #{fwd.81} parent=15 // pred_check
        %p151 = pneg %p81
      $region26: #{fwd.81} parent=15 // pred_check_branch
        %153 = sbr.rel (%p151) target = $region28
      $region27: #{fwd.81} parent=15 // pred_region
        %s154 = smul.u32 4, %s9
        %p155 = scmp.lt.s32.totalorder %s154, 7
        %s156 = scalar_select %p155, %s154, 7
        %s157 = smul.addr %s156, 6
        %s158 = smul.addr %s157, 8
        %s159 = scalar_lea.vmem %s2, %s158
        %s160 = smul.u32 4, %s9
      $region28: #{fwd.81} parent=15 // pred_fallthru
        _
    $region16: #{fwd.81} parent=5 // pred_fallthru
      _
    %p161 = scmp.le.s32.totalorder 1, %s9
    %p162 = scmp.lt.s32.totalorder %s9, 3
    %p163 = pnand %p161, %p162
    %p164 = pneg %p163
    // Predicated region
    $region29: #{fwd.81} parent=5 // pred_check
      _
    $region30: #{fwd.81} parent=5 // pred_check_branch
      %166 = sbr.rel (%p163) target = $region32
    $region31: #{fwd.81} parent=5 // pred_region
      %s167 = ssub.s32 %s9, 1
      %s168 = smul.u32 4, %s14
      %p169 = scmp.lt.s32.totalorder %s168, 7
      %s170 = scalar_select %p169, %s168, 7
      %s171 = smul.addr %s170, 4
      %s172 = scalar_lea.vmem %s0, %s171
      %p173 = pneg %p35
      %p174 = pneg %p32
      %s175 = smul.u32 4, %s14
      %p176 = scmp.lt.s32.totalorder %s175, 7
      %s177 = scalar_select %p176, %s175, 7
      %s178 = smul.addr %s177, 6
      %s179 = smul.addr %s178, 8
      %s180 = scalar_lea.vmem %s1, %s179
      %p181 = pneg %p61
      %p182 = pneg %p58
      %s183 = smul.u32 4, %s14
      %p184 = scmp.lt.s32.totalorder %s183, 7
      %s185 = scalar_select %p184, %s183, 7
      %s186 = smul.addr %s185, 6
      %s187 = smul.addr %s186, 8
      %s188 = scalar_lea.vmem %s2, %s187
      %p189 = pneg %p87
      %p190 = pneg %p84
      %p191 = pneg %p113
      %p192 = pneg %p110
      %s193 = smul.u32 4, %s14
      %p194 = scmp.lt.s32.totalorder %s193, 7
      %s195 = scalar_select %p194, %s193, 7
      %s196 = smul.addr %s195, 4
      %s197 = scalar_lea.vmem %s3, %s196
      %s198 = smul.u32 4, %s14
      %p199 = scmp.lt.s32.totalorder %s198, 7
      %s200 = scalar_select %p199, %s198, 7
      %s201 = smul.addr %s200, 4
      %s202 = scalar_lea.vmem %s0, %s201
      %s203 = smul.u32 4, %s14
      %s204 = smul.u32 4, %s14
      %p205 = scmp.lt.s32.totalorder %s204, 7
      %s206 = scalar_select %p205, %s204, 7
      %s207 = smul.addr %s206, 6
      %s208 = smul.addr %s207, 8
      %s209 = scalar_lea.vmem %s1, %s208
      %s210 = smul.u32 4, %s14
      %s211 = smul.u32 4, %s14
      %p212 = scmp.lt.s32.totalorder %s211, 7
      %s213 = scalar_select %p212, %s211, 7
      %s214 = smul.addr %s213, 6
      %s215 = smul.addr %s214, 8
      %s216 = scalar_lea.vmem %s2, %s215
      %s217 = smul.u32 4, %s14
      %s218 = smul.u32 4, %s14
      %p219 = scmp.lt.s32.totalorder %s218, 7
      %s220 = scalar_select %p219, %s218, 7
      %s221 = smul.addr %s220, 4
      %s222 = scalar_lea.vmem %s3, %s221
      %s223 = smul.u32 4, %s14
      %v225 = vld [vmem:[%s202] sm:$0xf]
      %v226 = vld [vmem:[%s202 + $0x4] sm:$0xf]
      %v227 = vld [vmem:[%s202 + $0x8] sm:$0xf]
      %v228 = vld [vmem:[%s202 + $0xc] sm:$0xf]
      %v229 = vpack.c.bf16 %v225, %v225
      %v230 = vpack.c.bf16 %v226, %v226
      %v231 = vpack.c.bf16 %v227, %v227
      %v232 = vpack.c.bf16 %v228, %v228
      %v233 = vld [vmem:[%s209] sm:$0xff]
      %v234 = vld [vmem:[%s209 + $0x8] sm:$0xff]
      %v235 = vld [vmem:[%s209 + $0x10] sm:$0xff]
      %v236 = vld [vmem:[%s209 + $0x18] sm:$0xff]
      %v237 = vld [vmem:[%s209 + $0x20] sm:$0xff]
      %v238 = vld [vmem:[%s209 + $0x28] sm:$0xff]
      %v239 = vld [vmem:[%s209 + $0x30] sm:$0xff]
      %v240 = vld [vmem:[%s209 + $0x38] sm:$0xff]
      %v241 = vld [vmem:[%s209 + $0x40] sm:$0xff]
      %v242 = vld [vmem:[%s209 + $0x48] sm:$0xff]
      %v243 = vld [vmem:[%s209 + $0x50] sm:$0xff]
      %v244 = vld [vmem:[%s209 + $0x58] sm:$0xff]
      %v245 = vld [vmem:[%s209 + $0x60] sm:$0xff]
      %v246 = vld [vmem:[%s209 + $0x68] sm:$0xff]
      %v247 = vld [vmem:[%s209 + $0x70] sm:$0xff]
      %v248 = vld [vmem:[%s209 + $0x78] sm:$0xff]
      %v249 = vld [vmem:[%s209 + $0x80] sm:$0xff]
      %v250 = vld [vmem:[%s209 + $0x88] sm:$0xff]
      %v251 = vld [vmem:[%s209 + $0x90] sm:$0xff]
      %v252 = vld [vmem:[%s209 + $0x98] sm:$0xff]
      %v253 = vld [vmem:[%s209 + $0xa0] sm:$0xff]
      %v254 = vld [vmem:[%s209 + $0xa8] sm:$0xff]
      %v255 = vld [vmem:[%s209 + $0xb0] sm:$0xff]
      %v256 = vld [vmem:[%s209 + $0xb8] sm:$0xff]
      %v257 = vpack.c.bf16 %v233, %v233
      %v258 = vpack.c.bf16 %v234, %v234
      %v259 = vpack.c.bf16 %v235, %v235
      %v260 = vpack.c.bf16 %v236, %v236
      %v261 = vpack.c.bf16 %v237, %v237
      %v262 = vpack.c.bf16 %v238, %v238
      %v263 = vpack.c.bf16 %v239, %v239
      %v264 = vpack.c.bf16 %v240, %v240
      %v265 = vpack.c.bf16 %v241, %v241
      %v266 = vpack.c.bf16 %v242, %v242
      %v267 = vpack.c.bf16 %v243, %v243
      %v268 = vpack.c.bf16 %v244, %v244
      %v269 = vpack.c.bf16 %v245, %v245
      %v270 = vpack.c.bf16 %v246, %v246
      %v271 = vpack.c.bf16 %v247, %v247
      %v272 = vpack.c.bf16 %v248, %v248
      %v273 = vpack.c.bf16 %v249, %v249
      %v274 = vpack.c.bf16 %v250, %v250
      %v275 = vpack.c.bf16 %v251, %v251
      %v276 = vpack.c.bf16 %v252, %v252
      %v277 = vpack.c.bf16 %v253, %v253
      %v278 = vpack.c.bf16 %v254, %v254
      %v279 = vpack.c.bf16 %v255, %v255
      %v280 = vpack.c.bf16 %v256, %v256
      %v281 = vld [vmem:[%s216] sm:$0xff]
      %v282 = vld [vmem:[%s216 + $0x8] sm:$0xff]
      %v283 = vld [vmem:[%s216 + $0x10] sm:$0xff]
      %v284 = vld [vmem:[%s216 + $0x18] sm:$0xff]
      %v285 = vld [vmem:[%s216 + $0x20] sm:$0xff]
      %v286 = vld [vmem:[%s216 + $0x28] sm:$0xff]
      %v287 = vld [vmem:[%s216 + $0x30] sm:$0xff]
      %v288 = vld [vmem:[%s216 + $0x38] sm:$0xff]
      %v289 = vld [vmem:[%s216 + $0x40] sm:$0xff]
      %v290 = vld [vmem:[%s216 + $0x48] sm:$0xff]
      %v291 = vld [vmem:[%s216 + $0x50] sm:$0xff]
      %v292 = vld [vmem:[%s216 + $0x58] sm:$0xff]
      %v293 = vld [vmem:[%s216 + $0x60] sm:$0xff]
      %v294 = vld [vmem:[%s216 + $0x68] sm:$0xff]
      %v295 = vld [vmem:[%s216 + $0x70] sm:$0xff]
      %v296 = vld [vmem:[%s216 + $0x78] sm:$0xff]
      %v297 = vld [vmem:[%s216 + $0x80] sm:$0xff]
      %v298 = vld [vmem:[%s216 + $0x88] sm:$0xff]
      %v299 = vld [vmem:[%s216 + $0x90] sm:$0xff]
      %v300 = vld [vmem:[%s216 + $0x98] sm:$0xff]
      %v301 = vld [vmem:[%s216 + $0xa0] sm:$0xff]
      %v302 = vld [vmem:[%s216 + $0xa8] sm:$0xff]
      %v303 = vld [vmem:[%s216 + $0xb0] sm:$0xff]
      %v304 = vld [vmem:[%s216 + $0xb8] sm:$0xff]
      %v305 = vpack.c.bf16 %v281, %v281
      %v306 = vpack.c.bf16 %v282, %v282
      %v307 = vpack.c.bf16 %v283, %v283
      %v308 = vpack.c.bf16 %v284, %v284
      %v309 = vpack.c.bf16 %v285, %v285
      %v310 = vpack.c.bf16 %v286, %v286
      %v311 = vpack.c.bf16 %v287, %v287
      %v312 = vpack.c.bf16 %v288, %v288
      %v313 = vpack.c.bf16 %v289, %v289
      %v314 = vpack.c.bf16 %v290, %v290
      %v315 = vpack.c.bf16 %v291, %v291
      %v316 = vpack.c.bf16 %v292, %v292
      %v317 = vpack.c.bf16 %v293, %v293
      %v318 = vpack.c.bf16 %v294, %v294
      %v319 = vpack.c.bf16 %v295, %v295
      %v320 = vpack.c.bf16 %v296, %v296
      %v321 = vpack.c.bf16 %v297, %v297
      %v322 = vpack.c.bf16 %v298, %v298
      %v323 = vpack.c.bf16 %v299, %v299
      %v324 = vpack.c.bf16 %v300, %v300
      %v325 = vpack.c.bf16 %v301, %v301
      %v326 = vpack.c.bf16 %v302, %v302
      %v327 = vpack.c.bf16 %v303, %v303
      %v328 = vpack.c.bf16 %v304, %v304
      %v335 = vunpack.c.l.b16 %v257
      %v336 = vunpack.c.l.b16 %v258
      %v337 = vunpack.c.l.b16 %v259
      %v338 = vunpack.c.l.b16 %v260
      %v339 = vunpack.c.l.b16 %v261
      %v340 = vunpack.c.l.b16 %v262
      %v341 = vpack.c.b16 %v336, %v335
      %v342 = vpack.c.b16 %v338, %v337
      %v343 = vpack.c.b16 %v340, %v339
      %vm344 = vcmask 64512
      %v346 = vsel %vm344, %v229, 0
      %v349 = vsel %vm344, %v341, 0
      %v352 = vsel %vm344, %v342, 0
      %v355 = vsel %vm344, %v343, 0
      %357 = vmatpush.bf16.xpose.msra.mxu0 0
      %358 = vmatpush.bf16.xpose.msra.mxu0 0
      %359 = vmatpush.bf16.xpose.msra.mxu0 0
      %360 = vmatpush.bf16.xpose.msra.mxu0 0
      %361 = vmatpush.bf16.xpose.msra.mxu0 0
      %362 = vmatpush.bf16.xpose.msra.mxu0 %v355
      %363 = vmatpush.bf16.xpose.msra.mxu0 %v352
      %364 = vmatpush.bf16.xpose.msra.mxu0 %v349
      %365 = vmatmul.bf16.gmra.mxu0 %v346
      %v366 = vpop.f32.mrf.mxu0
      %v367 = vadd.f32 0.0, %v366
      %v368 = vpop.f32.mrf.mxu0
      %369 = vdwg.mxu0
      %v376 = vunpack.c.l.b16 %v263
      %v377 = vunpack.c.l.b16 %v264
      %v378 = vunpack.c.l.b16 %v265
      %v379 = vunpack.c.l.b16 %v266
      %v380 = vunpack.c.l.b16 %v267
      %v381 = vunpack.c.l.b16 %v268
      %v382 = vpack.c.b16 %v377, %v376
      %v383 = vpack.c.b16 %v379, %v378
      %v384 = vpack.c.b16 %v381, %v380
      %v386 = vsel %vm344, %v230, 0
      %v389 = vsel %vm344, %v382, 0
      %v392 = vsel %vm344, %v383, 0
      %v395 = vsel %vm344, %v384, 0
      %397 = vmatpush.bf16.xpose.msra.mxu0 0
      %398 = vmatpush.bf16.xpose.msra.mxu0 0
      %399 = vmatpush.bf16.xpose.msra.mxu0 0
      %400 = vmatpush.bf16.xpose.msra.mxu0 0
      %401 = vmatpush.bf16.xpose.msra.mxu0 0
      %402 = vmatpush.bf16.xpose.msra.mxu0 %v395
      %403 = vmatpush.bf16.xpose.msra.mxu0 %v392
      %404 = vmatpush.bf16.xpose.msra.mxu0 %v389
      %405 = vmatmul.bf16.gmra.mxu0 %v386
      %v406 = vpop.f32.mrf.mxu0
      %v407 = vadd.f32 0.0, %v406
      %v408 = vpop.f32.mrf.mxu0
      %409 = vdwg.mxu0
      %v416 = vunpack.c.l.b16 %v269
      %v417 = vunpack.c.l.b16 %v270
      %v418 = vunpack.c.l.b16 %v271
      %v419 = vunpack.c.l.b16 %v272
      %v420 = vunpack.c.l.b16 %v273
      %v421 = vunpack.c.l.b16 %v274
      %v422 = vpack.c.b16 %v417, %v416
      %v423 = vpack.c.b16 %v419, %v418
      %v424 = vpack.c.b16 %v421, %v420
      %v426 = vsel %vm344, %v231, 0
      %v429 = vsel %vm344, %v422, 0
      %v432 = vsel %vm344, %v423, 0
      %v435 = vsel %vm344, %v424, 0
      %437 = vmatpush.bf16.xpose.msra.mxu0 0
      %438 = vmatpush.bf16.xpose.msra.mxu0 0
      %439 = vmatpush.bf16.xpose.msra.mxu0 0
      %440 = vmatpush.bf16.xpose.msra.mxu0 0
      %441 = vmatpush.bf16.xpose.msra.mxu0 0
      %442 = vmatpush.bf16.xpose.msra.mxu0 %v435
      %443 = vmatpush.bf16.xpose.msra.mxu0 %v432
      %444 = vmatpush.bf16.xpose.msra.mxu0 %v429
      %445 = vmatmul.bf16.gmra.mxu0 %v426
      %v446 = vpop.f32.mrf.mxu0
      %v447 = vadd.f32 0.0, %v446
      %v448 = vpop.f32.mrf.mxu0
      %449 = vdwg.mxu0
      %v456 = vunpack.c.l.b16 %v275
      %v457 = vunpack.c.l.b16 %v276
      %v458 = vunpack.c.l.b16 %v277
      %v459 = vunpack.c.l.b16 %v278
      %v460 = vunpack.c.l.b16 %v279
      %v461 = vunpack.c.l.b16 %v280
      %v462 = vpack.c.b16 %v457, %v456
      %v463 = vpack.c.b16 %v459, %v458
      %v464 = vpack.c.b16 %v461, %v460
      %v466 = vsel %vm344, %v232, 0
      %v469 = vsel %vm344, %v462, 0
      %v472 = vsel %vm344, %v463, 0
      %v475 = vsel %vm344, %v464, 0
      %477 = vmatpush.bf16.xpose.msra.mxu0 0
      %478 = vmatpush.bf16.xpose.msra.mxu0 0
      %479 = vmatpush.bf16.xpose.msra.mxu0 0
      %480 = vmatpush.bf16.xpose.msra.mxu0 0
      %481 = vmatpush.bf16.xpose.msra.mxu0 0
      %482 = vmatpush.bf16.xpose.msra.mxu0 %v475
      %483 = vmatpush.bf16.xpose.msra.mxu0 %v472
      %484 = vmatpush.bf16.xpose.msra.mxu0 %v469
      %485 = vmatmul.bf16.gmra.mxu0 %v466
      %v486 = vpop.f32.mrf.mxu0
      %v487 = vadd.f32 0.0, %v486
      %v488 = vpop.f32.mrf.mxu0
      %489 = vdwg.mxu0
      %v490 = vmul.f32 %v367, 0.35355338
      %v491 = vmul.f32 %v407, 0.35355338
      %v492 = vmul.f32 %v447, 0.35355338
      %v493 = vmul.f32 %v487, 0.35355338
      %vm494 = vcmask 388096
      %v495 = vsel %vm494, %v490, -inf
      %496 = vmax.xlane.f32.xlu0 %v495
      %v497 = vpop.xlane.xlu0 %496
      %v498 = vsel %vm494, %v491, -inf
      %499 = vmax.xlane.f32.xlu0 %v498
      %v500 = vpop.xlane.xlu0 %499
      %v501 = vsel %vm494, %v492, -inf
      %502 = vmax.xlane.f32.xlu0 %v501
      %v503 = vpop.xlane.xlu0 %502
      %v504 = vsel %vm494, %v493, -inf
      %505 = vmax.xlane.f32.xlu0 %v504
      %v506 = vpop.xlane.xlu0 %505
      %v507 = vsub.f32 %v490, %v497
      %v508 = vsub.f32 %v491, %v500
      %v509 = vsub.f32 %v492, %v503
      %v510 = vsub.f32 %v493, %v506
      %v511 = vmul.f32 %v507, 1.442695
      %v512 = vpow.pop %v511
      %v513 = vmul.f32 %v508, 1.442695
      %v514 = vpow.pop %v513
      %v515 = vmul.f32 %v509, 1.442695
      %v516 = vpow.pop %v515
      %v517 = vmul.f32 %v510, 1.442695
      %v518 = vpow.pop %v517
      %v519 = vsel %vm494, %v512, 0.0
      %520 = vadd.xlane.f32.xlu0 %v519
      %v521 = vpop.xlane.xlu0 %520
      %v522 = vsel %vm494, %v514, 0.0
      %523 = vadd.xlane.f32.xlu0 %v522
      %v524 = vpop.xlane.xlu0 %523
      %v525 = vsel %vm494, %v516, 0.0
      %526 = vadd.xlane.f32.xlu0 %v525
      %v527 = vpop.xlane.xlu0 %526
      %v528 = vsel %vm494, %v518, 0.0
      %529 = vadd.xlane.f32.xlu0 %v528
      %v530 = vpop.xlane.xlu0 %529
      %v531 = vrcp.pop %v521
      %v532 = vrcp.pop %v524
      %v533 = vrcp.pop %v527
      %v534 = vrcp.pop %v530
      %v535 = vmul.f32 %v512, %v531
      %v536 = vmul.f32 %v514, %v532
      %v537 = vmul.f32 %v516, %v533
      %v538 = vmul.f32 %v518, %v534
      %v539 = vpack.c.bf16 %v535, %v535
      %v540 = vpack.c.bf16 %v536, %v536
      %v541 = vpack.c.bf16 %v537, %v537
      %v542 = vpack.c.bf16 %v538, %v538
      %v549 = vunpack.c.l.b16 %v305
      %v550 = vunpack.c.l.b16 %v306
      %v551 = vunpack.c.l.b16 %v307
      %v552 = vunpack.c.l.b16 %v308
      %v553 = vunpack.c.l.b16 %v309
      %v554 = vunpack.c.l.b16 %v310
      %v555 = vpack.c.b16 %v550, %v549
      %v556 = vpack.c.b16 %v552, %v551
      %v557 = vpack.c.b16 %v554, %v553
      %vm561 = vcmask 392192
      %v563 = vsel %vm561, %v539, 0
      %565 = vmatpush.bf16.msra.mxu0 0
      %566 = vmatpush.bf16.msra.mxu0 0
      %567 = vmatpush.bf16.msra.mxu0 0
      %568 = vmatpush.bf16.msra.mxu0 0
      %569 = vmatpush.bf16.msra.mxu0 0
      %570 = vmatpush.bf16.msra.mxu0 %v557
      %571 = vmatpush.bf16.msra.mxu0 %v556
      %572 = vmatpush.bf16.msra.mxu0 %v555
      %573 = vmatmul.bf16.gmra.mxu0 %v563
      %v574 = vpop.f32.mrf.mxu0
      %v575 = vadd.f32 0.0, %v574
      %v576 = vpop.f32.mrf.mxu0
      %577 = vdwg.mxu0
      %v584 = vunpack.c.l.b16 %v311
      %v585 = vunpack.c.l.b16 %v312
      %v586 = vunpack.c.l.b16 %v313
      %v587 = vunpack.c.l.b16 %v314
      %v588 = vunpack.c.l.b16 %v315
      %v589 = vunpack.c.l.b16 %v316
      %v590 = vpack.c.b16 %v585, %v584
      %v591 = vpack.c.b16 %v587, %v586
      %v592 = vpack.c.b16 %v589, %v588
      %v597 = vsel %vm561, %v540, 0
      %599 = vmatpush.bf16.msra.mxu0 0
      %600 = vmatpush.bf16.msra.mxu0 0
      %601 = vmatpush.bf16.msra.mxu0 0
      %602 = vmatpush.bf16.msra.mxu0 0
      %603 = vmatpush.bf16.msra.mxu0 0
      %604 = vmatpush.bf16.msra.mxu0 %v592
      %605 = vmatpush.bf16.msra.mxu0 %v591
      %606 = vmatpush.bf16.msra.mxu0 %v590
      %607 = vmatmul.bf16.gmra.mxu0 %v597
      %v608 = vpop.f32.mrf.mxu0
      %v609 = vadd.f32 0.0, %v608
      %v610 = vpop.f32.mrf.mxu0
      %611 = vdwg.mxu0
      %v618 = vunpack.c.l.b16 %v317
      %v619 = vunpack.c.l.b16 %v318
      %v620 = vunpack.c.l.b16 %v319
      %v621 = vunpack.c.l.b16 %v320
      %v622 = vunpack.c.l.b16 %v321
      %v623 = vunpack.c.l.b16 %v322
      %v624 = vpack.c.b16 %v619, %v618
      %v625 = vpack.c.b16 %v621, %v620
      %v626 = vpack.c.b16 %v623, %v622
      %v631 = vsel %vm561, %v541, 0
      %633 = vmatpush.bf16.msra.mxu0 0
      %634 = vmatpush.bf16.msra.mxu0 0
      %635 = vmatpush.bf16.msra.mxu0 0
      %636 = vmatpush.bf16.msra.mxu0 0
      %637 = vmatpush.bf16.msra.mxu0 0
      %638 = vmatpush.bf16.msra.mxu0 %v626
      %639 = vmatpush.bf16.msra.mxu0 %v625
      %640 = vmatpush.bf16.msra.mxu0 %v624
      %641 = vmatmul.bf16.gmra.mxu0 %v631
      %v642 = vpop.f32.mrf.mxu0
      %v643 = vadd.f32 0.0, %v642
      %v644 = vpop.f32.mrf.mxu0
      %645 = vdwg.mxu0
      %v652 = vunpack.c.l.b16 %v323
      %v653 = vunpack.c.l.b16 %v324
      %v654 = vunpack.c.l.b16 %v325
      %v655 = vunpack.c.l.b16 %v326
      %v656 = vunpack.c.l.b16 %v327
      %v657 = vunpack.c.l.b16 %v328
      %v658 = vpack.c.b16 %v653, %v652
      %v659 = vpack.c.b16 %v655, %v654
      %v660 = vpack.c.b16 %v657, %v656
      %v665 = vsel %vm561, %v542, 0
      %667 = vmatpush.bf16.msra.mxu0 0
      %668 = vmatpush.bf16.msra.mxu0 0
      %669 = vmatpush.bf16.msra.mxu0 0
      %670 = vmatpush.bf16.msra.mxu0 0
      %671 = vmatpush.bf16.msra.mxu0 0
      %672 = vmatpush.bf16.msra.mxu0 %v660
      %673 = vmatpush.bf16.msra.mxu0 %v659
      %674 = vmatpush.bf16.msra.mxu0 %v658
      %675 = vmatmul.bf16.gmra.mxu0 %v665
      %v676 = vpop.f32.mrf.mxu0
      %v677 = vadd.f32 0.0, %v676
      %v678 = vpop.f32.mrf.mxu0
      %679 = vdwg.mxu0
      %vm680 = vcmask 60416
      %681 = vst.msk [vmem:[%s222] sm:$0xf] %vm680, %v575
      %682 = vst.msk [vmem:[%s222 + $0x4] sm:$0xf] %vm680, %v609
      %683 = vst.msk [vmem:[%s222 + $0x8] sm:$0xf] %vm680, %v643
      %684 = vst.msk [vmem:[%s222 + $0xc] sm:$0xf] %vm680, %v677
      %s685 = smul.u32 4, %s14
      %p686 = scmp.lt.s32.totalorder %s685, 7
      %s687 = scalar_select %p686, %s685, 7
      %s688 = smul.addr %s687, 4
      %s689 = scalar_lea.vmem %s3, %s688
      // Predicated region
      $region33: #{fwd.81} parent=31 // pred_check
        %p690 = pneg %p110
      $region34: #{fwd.81} parent=31 // pred_check_branch
        %692 = sbr.rel (%p690) target = $region36
      $region35: #{fwd.81} parent=31 // pred_region
        %s693 = smul.u32 4, %s14
      $region36: #{fwd.81} parent=31 // pred_fallthru
        _
    $region32: #{fwd.81} parent=5 // pred_fallthru
      _
    %p694 = scmp.le.s32.totalorder 2, %s9
    // Predicated region
    $region37: #{fwd.81} parent=5 // pred_check
      %p695 = pneg %p694
    $region38: #{fwd.81} parent=5 // pred_check_branch
      %697 = sbr.rel (%p695) target = $region40
    $region39: #{fwd.81} parent=5 // pred_region
      %s698 = ssub.s32 %s9, 2
      // Predicated region
      $region41: #{fwd.81} parent=39 // pred_check
        %p699 = pneg %p116
      $region42: #{fwd.81} parent=39 // pred_check_branch
        %701 = sbr.rel (%p699) target = $region44
      $region43: #{fwd.81} parent=39 // pred_region
        %s702 = smul.u32 4, %s15
        %p703 = scmp.lt.s32.totalorder %s702, 7
        %s704 = scalar_select %p703, %s702, 7
        %s705 = smul.addr %s704, 4
        %s706 = scalar_lea.vmem %s3, %s705
      $region44: #{fwd.81} parent=39 // pred_fallthru
        _
    $region40: #{fwd.81} parent=5 // pred_fallthru
      _
  $region6: #{fwd.81} parent=0 // loop_footer
    %s13 = sadd.s32 1, %s9
  $region7: #{fwd.81} parent=0 // loop_footer_branch
    %8 = sbr.rel target = $region3
  $region8: #{fwd.81} parent=0 // loop_exit
    _

</llo_original>
